<compile_context>
chip_gen: v7x
topology: tpu7x:2x2x1
jax: 0.10.0
libtpu: 0.0.40
codegen_flags: <defaults>
</compile_context>

<pallas_src>
import jax
import jax.numpy as jnp
from jax.experimental import pallas as pl
from jax.experimental.pallas import tpu as pltpu


def _round_up(x, m):
    return -(-x // m) * m


def _make_kernel(time_chunk, Hp, Ep):
    f32, bf16 = jnp.float32, jnp.bfloat16

    def kernel(visatt_ref, sp_ref, emb_ref, h0_ref, c0_ref,
               w_ha_ref, w_aw_ref,
               w_img_ref, b_img_ref,
               w_ih_ref, w_hh_ref, b_lstm_ref,
               w_fc_ref, b_fc_ref,
               logit_ref,
               h_sc, c_sc):
        @pl.when(pl.program_id(0) == 0)
        def _():
            h_sc[...] = h0_ref[...]
            c_sc[...] = c0_ref[...]

        spatial = sp_ref[...]            # (Bp, P, Dimg) fp32
        vis_att = visatt_ref[...]        # (Bp, P, Ap)   fp32 (spatial@W_va + b_va + b_ha, hoisted)
        w_ha = w_ha_ref[...]             # (Hp, Ap)      bf16
        w_aw = w_aw_ref[...]             # (1, Ap)       fp32
        w_img = w_img_ref[...]           # (Dimg, Hp+Ep) bf16  fused [image2hidden | image2embed]
        w_ih = w_ih_ref[...]             # (Ep, 4Hp)     bf16
        w_hh = w_hh_ref[...]             # (Hp, 4Hp)     bf16
        w_fc = w_fc_ref[...]             # (Hp, Vp)      bf16
        b_fc = b_fc_ref[...]             # (1, Vp)       fp32  (stride-0 sublane broadcast add)

        Bp = spatial.shape[0]
        # Hoist the small bias broadcasts out of the unrolled loop (JAX does not CSE them).
        b_img = jnp.broadcast_to(b_img_ref[...], (Bp, b_img_ref.shape[-1]))
        b_lstm = jnp.broadcast_to(b_lstm_ref[...], (Bp, b_lstm_ref.shape[-1]))

        h = h_sc[...]                    # (Bp, Hp) fp32 recurrent state
        c = c_sc[...]                    # (Bp, Hp) fp32

        # TODO(synk): at realistic H/V switch to lax.fori_loop(..., unroll=k) carrying (h, c)
        # to bound vreg live ranges; fully unrolled is fine at these toy sizes.
        for t in range(time_chunk):
            # ---- Spatial attention (visual projection precomputed & hoisted) ----
            hid_att = jnp.dot(h.astype(bf16), w_ha, preferred_element_type=f32)   # (Bp, Ap)
            att = jnp.tanh(vis_att + hid_att[:, None, :])                          # (Bp, P, Ap)
            alpha = jnp.sum(att * w_aw, axis=-1)                                   # (Bp, P)
            # (b_aw dropped: constant shift, softmax-invariant)
            alpha = alpha - jnp.max(alpha, axis=1, keepdims=True)
            ea = jnp.exp(alpha)
            att_w = ea * pl.reciprocal(jnp.sum(ea, axis=1, keepdims=True), approx=False)
            # Context on VPU/XLU (mul + sublane reduce); keeps the MXU free for LSTM/fc.
            ctx = jnp.sum(spatial * att_w[:, :, None], axis=1)                     # (Bp, Dimg) fp32

            # ---- Fused visual projections [image2hidden | image2embed] ----
            vis = jnp.dot(ctx.astype(bf16), w_img, preferred_element_type=f32) + b_img
            vis_hidden = vis[:, :Hp]      # lane-aligned free view
            vis_embed = vis[:, Hp:]       # lane-aligned free view

            # ---- LSTM cell (PyTorch gate order i, f, g, o); no activation concat ----
            x_t = emb_ref[t] + vis_embed                                            # (Bp, Ep) fp32
            gates = (jnp.dot(x_t.astype(bf16), w_ih, preferred_element_type=f32)
                     + jnp.dot(h.astype(bf16), w_hh, preferred_element_type=f32)
                     + b_lstm)                                                      # (Bp, 4Hp) fp32
            i_g = jax.nn.sigmoid(gates[:, 0 * Hp:1 * Hp])
            f_g = jax.nn.sigmoid(gates[:, 1 * Hp:2 * Hp])
            g_g = jnp.tanh(gates[:, 2 * Hp:3 * Hp])
            o_g = jax.nn.sigmoid(gates[:, 3 * Hp:4 * Hp])
            c = f_g * c + i_g * g_g
            h = o_g * jnp.tanh(c)

            # TODO(synk): nn.Dropout(0.5) is identity in eval mode; training-mode dropout not implemented.
            pred = (jnp.dot((h + vis_hidden).astype(bf16), w_fc,
                            preferred_element_type=f32) + b_fc)                    # (Bp, Vp)
            # (B, T, V)-major store: lane-dense HBM writeback, no wrapper transpose pass.
            logit_ref[:, t, :] = pred.astype(logit_ref.dtype)

        h_sc[...] = h
        c_sc[...] = c

    return kernel


def run_decoder(params, global_feats, spatial, cap, T):
    B, P, Dimg = spatial.shape
    E = params['embed'].shape[1]
    H = params['w_hh_t'].shape[0]
    V = params['w_fc_t'].shape[1]
    A = params['w_va_t'].shape[1]

    # One grid step runs `time_chunk` decode steps (amortizes per-grid-step overhead);
    # 8 keeps the output block's sublane dim tile-aligned, else fall back to one full-T chunk.
    time_chunk = 8 if T % 8 == 0 else T
    n_chunks = T // time_chunk

    # TPU padding: batch -> 8 (sublanes); H/E/A/V -> 128 (lanes) so gate slices,
    # the vis split and the logit store are tile-aligned.
    Bp = _round_up(B, 8)
    Hp = _round_up(H, 128)
    Ep = _round_up(E, 128)
    Ap = _round_up(A, 128)
    Vp = _round_up(V, 128)
    bf16 = jnp.bfloat16

    # ---- glue in plain JAX (fp32) ----
    # weight-normed init linears (at init, weight_norm(Linear) == Linear)
    h0 = global_feats @ params['w_init_h_t'] + params['b_init_h']          # (B, H)
    c0 = global_feats @ params['w_init_c_t'] + params['b_init_c']          # (B, H)
    emb = jnp.transpose(params['embed'][cap], (1, 0, 2))                   # (T, B, E)
    # Hoisted loop-invariant visual attention projection, with b_va and b_ha folded in.
    vis_att = (spatial.reshape(B * P, Dimg) @ params['w_va_t']).reshape(B, P, A)
    vis_att = vis_att + params['b_va'] + params['b_ha']                    # (B, P, A)

    pad = jnp.pad
    dB, dH, dE, dA, dV = Bp - B, Hp - H, Ep - E, Ap - A, Vp - V

    spatial_p = pad(spatial, ((0, dB), (0, 0), (0, 0)))
    vis_att_p = pad(vis_att, ((0, dB), (0, 0), (0, dA)))
    emb_p = pad(emb, ((0, 0), (0, dB), (0, dE)))
    h0_p = pad(h0, ((0, dB), (0, dH)))
    c0_p = pad(c0, ((0, dB), (0, dH)))

    # bf16 MXU weights (fp32 accumulation in-kernel). Per-gate padding keeps padded
    # lanes exactly zero through the recurrence, so results match the unpadded math.
    w_ha_p = pad(params['w_ha_t'], ((0, dH), (0, dA))).astype(bf16)               # (Hp, Ap)
    w_aw_p = pad(params['w_aw'], ((0, 0), (0, dA)))                               # (1, Ap) fp32
    w_img_p = jnp.concatenate(
        [pad(params['w_i2h_t'], ((0, 0), (0, dH))),
         pad(params['w_i2e_t'], ((0, 0), (0, dE)))], axis=1).astype(bf16)         # (Dimg, Hp+Ep)
    b_img_p = jnp.concatenate(
        [pad(params['b_i2h'], ((0, 0), (0, dH))),
         pad(params['b_i2e'], ((0, 0), (0, dE)))], axis=1)                        # (1, Hp+Ep)
    w_ih_p = pad(params['w_ih_t'].reshape(E, 4, H),
                 ((0, dE), (0, 0), (0, dH))).reshape(Ep, 4 * Hp).astype(bf16)     # (Ep, 4Hp)
    w_hh_p = pad(params['w_hh_t'].reshape(H, 4, H),
                 ((0, dH), (0, 0), (0, dH))).reshape(Hp, 4 * Hp).astype(bf16)     # (Hp, 4Hp)
    b_lstm_p = pad((params['b_ih'] + params['b_hh']).reshape(1, 4, H),
                   ((0, 0), (0, 0), (0, dH))).reshape(1, 4 * Hp)                  # (1, 4Hp)
    w_fc_p = pad(params['w_fc_t'], ((0, dH), (0, dV))).astype(bf16)               # (Hp, Vp)
    b_fc_p = pad(params['b_fc'], ((0, 0), (0, dV)))                               # (1, Vp)

    inv2 = lambda shape: pl.BlockSpec(shape, lambda c: (0, 0))
    inv3 = lambda shape: pl.BlockSpec(shape, lambda c: (0, 0, 0))

    grid_spec = pltpu.PrefetchScalarGridSpec(
        num_scalar_prefetch=0,
        grid=(n_chunks,),
        in_specs=[
            inv3((Bp, P, Ap)),                                          # vis_att (hoisted)
            inv3((Bp, P, Dimg)),                                        # spatial features
            pl.BlockSpec((time_chunk, Bp, Ep), lambda c: (c, 0, 0)),    # embeddings chunk
            inv2((Bp, Hp)), inv2((Bp, Hp)),                             # h0, c0
            inv2((Hp, Ap)),                                             # hidden2att weight (bf16)
            inv2((1, Ap)),                                              # att2weight row
            inv2((Dimg, Hp + Ep)), inv2((1, Hp + Ep)),                  # fused image2{hidden,embed}
            inv2((Ep, 4 * Hp)), inv2((Hp, 4 * Hp)), inv2((1, 4 * Hp)),  # LSTM W_ih, W_hh, bias
            inv2((Hp, Vp)), inv2((1, Vp)),                              # fc (vocab-padded)
        ],
        out_specs=pl.BlockSpec((Bp, time_chunk, Vp), lambda c: (0, c, 0)),
        scratch_shapes=[pltpu.VMEM((Bp, Hp), jnp.float32),              # h carry
                        pltpu.VMEM((Bp, Hp), jnp.float32)],             # c carry
    )

    # Explicit scoped-VMEM limit sized from the actual resident set (double-buffered
    # pipeline blocks + fp32 h/c scratch), with headroom; capped below v7x physical.
    invariant = [vis_att_p, spatial_p, h0_p, c0_p, w_ha_p, w_aw_p, w_img_p, b_img_p,
                 w_ih_p, w_hh_p, b_lstm_p, w_fc_p, b_fc_p]
    block_bytes = sum(int(a.size) * a.dtype.itemsize for a in invariant)
    block_bytes += time_chunk * Bp * Ep * 4            # embedding chunk
    block_bytes += time_chunk * Bp * Vp * 4            # logit chunk
    vmem_limit = int(min(max(4 * (2 * block_bytes + 2 * Bp * Hp * 4), 8 << 20), 48 << 20))
    # TODO(synk): at realistic sizes, single-buffer the invariant weights, vocab-tile the
    #   fc projection, keep spatial/vis_att in HBM with a pixel-tile pipeline, and add a
    #   leading 'parallel' batch-tile grid axis for v7x's second TensorCore.

    logit_btv = pl.pallas_call(
        _make_kernel(time_chunk, Hp, Ep),
        out_shape=jax.ShapeDtypeStruct((Bp, T, Vp), jnp.float32),
        grid_spec=grid_spec,
        compiler_params=pltpu.CompilerParams(
            dimension_semantics=("arbitrary",),     # time recurrence is sequential
            vmem_limit_bytes=vmem_limit,
        ),
    )(vis_att_p, spatial_p, emb_p, h0_p, c0_p,
      w_ha_p, w_aw_p, w_img_p, b_img_p,
      w_ih_p, w_hh_p, b_lstm_p, w_fc_p, b_fc_p)

    return logit_btv[:B, :, :V]                         # (B, T, V); no transpose pass


def reference(params, global_feats, spatial, cap, T):
    """Pure-JAX fp32 reference reproducing the PyTorch forward pass (eval mode)."""
    h = global_feats @ params['w_init_h_t'] + params['b_init_h']
    c = global_feats @ params['w_init_c_t'] + params['b_init_c']
    emb = params['embed'][cap]
    H = h.shape[-1]
    logits = []
    for t in range(T):
        vis_att = jnp.einsum('bpd,da->bpa', spatial, params['w_va_t']) + params['b_va']
        hid_att = h @ params['w_ha_t'] + params['b_ha']
        att = jnp.tanh(vis_att + hid_att[:, None, :])
        alpha = jnp.sum(att * params['w_aw'], axis=-1) + params['b_aw']
        att_w = jax.nn.softmax(alpha, axis=1)
        ctx = jnp.sum(spatial * att_w[:, :, None], axis=1)
        vh = ctx @ params['w_i2h_t'] + params['b_i2h']
        ve = ctx @ params['w_i2e_t'] + params['b_i2e']
        x = emb[:, t] + ve
        gates = (x @ params['w_ih_t'] + params['b_ih']
                 + h @ params['w_hh_t'] + params['b_hh'])
        i_g = jax.nn.sigmoid(gates[:, :H])
        f_g = jax.nn.sigmoid(gates[:, H:2 * H])
        g_g = jnp.tanh(gates[:, 2 * H:3 * H])
        o_g = jax.nn.sigmoid(gates[:, 3 * H:])
        c = f_g * c + i_g * g_g
        h = o_g * jnp.tanh(c)
        logits.append((h + vh) @ params['w_fc_t'] + params['b_fc'])
    return jnp.stack(logits, axis=1)


def make_params(key, *, image_dim, embed_dim, hidden_dim, att_dim, vocab_size):
    ks = jax.random.split(key, 24)
    u = lambda k, shape, s=0.1: jax.random.uniform(k, shape, jnp.float32, -s, s)
    return {
        'embed':      u(ks[0], (vocab_size, embed_dim)),
        'w_init_h_t': u(ks[1], (image_dim, hidden_dim)),
        'b_init_h':   u(ks[2], (1, hidden_dim)),
        'w_init_c_t': u(ks[3], (image_dim, hidden_dim)),
        'b_init_c':   u(ks[4], (1, hidden_dim)),
        'w_va_t':     u(ks[5], (image_dim, att_dim)),
        'b_va':       u(ks[6], (1, att_dim)),
        'w_ha_t':     u(ks[7], (hidden_dim, att_dim)),
        'b_ha':       u(ks[8], (1, att_dim)),
        'w_aw':       u(ks[9], (1, att_dim)),
        'b_aw':       u(ks[10], (1, 1)),
        'w_i2h_t':    u(ks[11], (image_dim, hidden_dim)),
        'b_i2h':      u(ks[12], (1, hidden_dim)),
        'w_i2e_t':    u(ks[13], (image_dim, embed_dim)),
        'b_i2e':      u(ks[14], (1, embed_dim)),
        'w_ih_t':     u(ks[15], (embed_dim, 4 * hidden_dim)),
        'w_hh_t':     u(ks[16], (hidden_dim, 4 * hidden_dim)),
        'b_ih':       u(ks[17], (1, 4 * hidden_dim)),
        'b_hh':       u(ks[18], (1, 4 * hidden_dim)),
        'w_fc_t':     u(ks[19], (hidden_dim, vocab_size)),
        'b_fc':       jnp.zeros((1, vocab_size), jnp.float32),   # fc.bias filled with 0
    }


if __name__ == "__main__":
    B, P = 2, 16
    image_dim, embed_dim, hidden_dim, att_dim = 32, 32, 32, 32
    vocab_size, T = 64, 8

    key = jax.random.PRNGKey(0)
    k_par, k_gf, k_sp, k_cap = jax.random.split(key, 4)
    params = make_params(k_par, image_dim=image_dim, embed_dim=embed_dim,
                         hidden_dim=hidden_dim, att_dim=att_dim,
                         vocab_size=vocab_size)

    global_features = jax.random.normal(k_gf, (B, image_dim), jnp.float32)
    spatial_features = jax.random.normal(k_sp, (B, P, image_dim), jnp.float32)
    cap = jax.random.randint(k_cap, (B, T), 0, vocab_size)
    cap_len = [T, T - 2]                 # max(cap_len) == T

    out = run_decoder(params, global_features, spatial_features, cap, max(cap_len))
    out = jax.block_until_ready(out)

    ref = reference(params, global_features, spatial_features, cap, max(cap_len))
    assert out.shape == (B, T, vocab_size)
    err = float(jnp.max(jnp.abs(out - ref)))
    # Tolerance re-derived for bf16 MXU operands (fp32 accumulation / recurrent state /
    # softmax): logits at these magnitudes drift by O(1e-2) over the 8-step recurrence.
    assert jnp.allclose(out, ref, rtol=5e-2, atol=5e-2), f"max abs err {err}"

    print("KERNEL_OK")
</pallas_src>

<mosaic_0001>
module attributes {stable_mosaic.version = 11 : i64} {
  func.func @kernel(%arg0: i32, %arg1: memref<8x16x128xf32, #tpu.memory_space<vmem>>, %arg2: memref<8x16x32xf32, #tpu.memory_space<vmem>>, %arg3: memref<8x8x128xf32, #tpu.memory_space<vmem>>, %arg4: memref<8x128xf32, #tpu.memory_space<vmem>>, %arg5: memref<8x128xf32, #tpu.memory_space<vmem>>, %arg6: memref<128x128xbf16, #tpu.memory_space<vmem>>, %arg7: memref<1x128xf32, #tpu.memory_space<vmem>>, %arg8: memref<32x256xbf16, #tpu.memory_space<vmem>>, %arg9: memref<1x256xf32, #tpu.memory_space<vmem>>, %arg10: memref<128x512xbf16, #tpu.memory_space<vmem>>, %arg11: memref<128x512xbf16, #tpu.memory_space<vmem>>, %arg12: memref<1x512xf32, #tpu.memory_space<vmem>>, %arg13: memref<128x128xbf16, #tpu.memory_space<vmem>>, %arg14: memref<1x128xf32, #tpu.memory_space<vmem>>, %arg15: memref<8x8x128xf32, #tpu.memory_space<vmem>>, %arg16: memref<8x128xf32, #tpu.memory_space<vmem>>, %arg17: memref<8x128xf32, #tpu.memory_space<vmem>>) attributes {dimension_semantics = [#tpu.dimension_semantics<arbitrary>], iteration_bounds = array<i64: 1>, scalar_prefetch = 0 : i64, scratch_operands = 2 : i64, tpu.core_type = #tpu.core_type<tc>, window_params = [{pipeline_mode = #tpu.pipeline_mode<synchronous>, transform_indices = @transform_0, window_bounds = array<i64: 8, 16, 128>}, {pipeline_mode = #tpu.pipeline_mode<synchronous>, transform_indices = @transform_1, window_bounds = array<i64: 8, 16, 32>}, {transform_indices = @transform_2, window_bounds = array<i64: 8, 8, 128>}, {pipeline_mode = #tpu.pipeline_mode<synchronous>, transform_indices = @transform_3, window_bounds = array<i64: 8, 128>}, {pipeline_mode = #tpu.pipeline_mode<synchronous>, transform_indices = @transform_4, window_bounds = array<i64: 8, 128>}, {pipeline_mode = #tpu.pipeline_mode<synchronous>, transform_indices = @transform_5, window_bounds = array<i64: 128, 128>}, {pipeline_mode = #tpu.pipeline_mode<synchronous>, transform_indices = @transform_6, window_bounds = array<i64: 1, 128>}, {pipeline_mode = #tpu.pipeline_mode<synchronous>, transform_indices = @transform_7, window_bounds = array<i64: 32, 256>}, {pipeline_mode = #tpu.pipeline_mode<synchronous>, transform_indices = @transform_8, window_bounds = array<i64: 1, 256>}, {pipeline_mode = #tpu.pipeline_mode<synchronous>, transform_indices = @transform_9, window_bounds = array<i64: 128, 512>}, {pipeline_mode = #tpu.pipeline_mode<synchronous>, transform_indices = @transform_10, window_bounds = array<i64: 128, 512>}, {pipeline_mode = #tpu.pipeline_mode<synchronous>, transform_indices = @transform_11, window_bounds = array<i64: 1, 512>}, {pipeline_mode = #tpu.pipeline_mode<synchronous>, transform_indices = @transform_12, window_bounds = array<i64: 128, 128>}, {pipeline_mode = #tpu.pipeline_mode<synchronous>, transform_indices = @transform_13, window_bounds = array<i64: 1, 128>}, {transform_indices = @transform_14, window_bounds = array<i64: 8, 8, 128>}]} {
    %c0_i32 = arith.constant 0 : i32
    %0 = arith.cmpi eq, %arg0, %c0_i32 : i32
    %1 = arith.extui %0 : i1 to i32
    %c0_i32_0 = arith.constant 0 : i32
    %2 = arith.cmpi ne, %1, %c0_i32_0 : i32
    scf.if %2 {
      %c0_168 = arith.constant 0 : index
      %c0_169 = arith.constant 0 : index
      %590 = vector.load %arg4[%c0_168, %c0_169] : memref<8x128xf32, #tpu.memory_space<vmem>>, vector<8x128xf32>
      %c0_170 = arith.constant 0 : index
      %c0_171 = arith.constant 0 : index
      %591 = vector.load %arg16[%c0_170, %c0_171] : memref<8x128xf32, #tpu.memory_space<vmem>>, vector<8x128xf32>
      tpu.vector_store %arg16[%c0_170, %c0_171], %590 {strides = array<i32>} : memref<8x128xf32, #tpu.memory_space<vmem>>, vector<8x128xf32>,
      %c0_172 = arith.constant 0 : index
      %c0_173 = arith.constant 0 : index
      %592 = vector.load %arg5[%c0_172, %c0_173] : memref<8x128xf32, #tpu.memory_space<vmem>>, vector<8x128xf32>
      %c0_174 = arith.constant 0 : index
      %c0_175 = arith.constant 0 : index
      %593 = vector.load %arg17[%c0_174, %c0_175] : memref<8x128xf32, #tpu.memory_space<vmem>>, vector<8x128xf32>
      tpu.vector_store %arg17[%c0_174, %c0_175], %592 {strides = array<i32>} : memref<8x128xf32, #tpu.memory_space<vmem>>, vector<8x128xf32>,
    } else {
    }
    %c0 = arith.constant 0 : index
    %c0_1 = arith.constant 0 : index
    %c0_2 = arith.constant 0 : index
    %3 = vector.load %arg2[%c0, %c0_1, %c0_2] : memref<8x16x32xf32, #tpu.memory_space<vmem>>, vector<8x16x32xf32>
    %c0_3 = arith.constant 0 : index
    %c0_4 = arith.constant 0 : index
    %c0_5 = arith.constant 0 : index
    %4 = vector.load %arg1[%c0_3, %c0_4, %c0_5] : memref<8x16x128xf32, #tpu.memory_space<vmem>>, vector<8x16x128xf32>
    %c0_6 = arith.constant 0 : index
    %c0_7 = arith.constant 0 : index
    %5 = vector.load %arg6[%c0_6, %c0_7] : memref<128x128xbf16, #tpu.memory_space<vmem>>, vector<128x128xbf16>
    %c0_8 = arith.constant 0 : index
    %c0_9 = arith.constant 0 : index
    %6 = vector.load %arg7[%c0_8, %c0_9] : memref<1x128xf32, #tpu.memory_space<vmem>>, vector<1x128xf32>
    %c0_10 = arith.constant 0 : index
    %c0_11 = arith.constant 0 : index
    %7 = vector.load %arg8[%c0_10, %c0_11] : memref<32x256xbf16, #tpu.memory_space<vmem>>, vector<32x256xbf16>
    %c0_12 = arith.constant 0 : index
    %c0_13 = arith.constant 0 : index
    %8 = vector.load %arg10[%c0_12, %c0_13] : memref<128x512xbf16, #tpu.memory_space<vmem>>, vector<128x512xbf16>
    %c0_14 = arith.constant 0 : index
    %c0_15 = arith.constant 0 : index
    %9 = vector.load %arg11[%c0_14, %c0_15] : memref<128x512xbf16, #tpu.memory_space<vmem>>, vector<128x512xbf16>
    %c0_16 = arith.constant 0 : index
    %c0_17 = arith.constant 0 : index
    %10 = vector.load %arg13[%c0_16, %c0_17] : memref<128x128xbf16, #tpu.memory_space<vmem>>, vector<128x128xbf16>
    %c0_18 = arith.constant 0 : index
    %c0_19 = arith.constant 0 : index
    %11 = vector.load %arg14[%c0_18, %c0_19] : memref<1x128xf32, #tpu.memory_space<vmem>>, vector<1x128xf32>
    %c0_20 = arith.constant 0 : index
    %c0_21 = arith.constant 0 : index
    %12 = vector.load %arg9[%c0_20, %c0_21] : memref<1x256xf32, #tpu.memory_space<vmem>>, vector<1x256xf32>
    %13 = vector.shape_cast %12 : vector<1x256xf32> to vector<1x256xf32>
    %14 = vector.broadcast %13 : vector<1x256xf32> to vector<8x256xf32>
    %c0_22 = arith.constant 0 : index
    %c0_23 = arith.constant 0 : index
    %15 = vector.load %arg12[%c0_22, %c0_23] : memref<1x512xf32, #tpu.memory_space<vmem>>, vector<1x512xf32>
    %16 = vector.shape_cast %15 : vector<1x512xf32> to vector<1x512xf32>
    %17 = vector.broadcast %16 : vector<1x512xf32> to vector<8x512xf32>
    %c0_24 = arith.constant 0 : index
    %c0_25 = arith.constant 0 : index
    %18 = vector.load %arg16[%c0_24, %c0_25] : memref<8x128xf32, #tpu.memory_space<vmem>>, vector<8x128xf32>
    %c0_26 = arith.constant 0 : index
    %c0_27 = arith.constant 0 : index
    %19 = vector.load %arg17[%c0_26, %c0_27] : memref<8x128xf32, #tpu.memory_space<vmem>>, vector<8x128xf32>
    %20 = arith.truncf %18 : vector<8x128xf32> to vector<8x128xbf16>
    %cst = arith.constant dense<0.000000e+00> : vector<8x128xf32>
    %21 = tpu.matmul %20, %5, %cst {dimension_numbers = #tpu.dot_dimension_numbers<[1], [0], [0], [1], [0, 0, 1, 1], [], []>} : vector<8x128xbf16>, vector<128x128xbf16>, vector<8x128xf32> -> vector<8x128xf32>
    %22 = vector.shape_cast %21 : vector<8x128xf32> to vector<8x1x128xf32>
    %23 = vector.broadcast %22 : vector<8x1x128xf32> to vector<8x16x128xf32>
    %24 = arith.addf %4, %23 : vector<8x16x128xf32>
    %25 = math.tanh %24 : vector<8x16x128xf32>
    %26 = vector.shape_cast %6 : vector<1x128xf32> to vector<1x1x128xf32>
    %27 = vector.broadcast %26 : vector<1x1x128xf32> to vector<8x16x128xf32>
    %28 = arith.mulf %25, %27 : vector<8x16x128xf32>
    %cst_28 = arith.constant dense<0.000000e+00> : vector<8x16xf32>
    %29 = vector.multi_reduction <add>, %28, %cst_28 [2] : vector<8x16x128xf32> to vector<8x16xf32>
    %cst_29 = arith.constant dense<0xFF800000> : vector<8xf32>
    %30 = vector.multi_reduction <maximumf>, %29, %cst_29 [1] : vector<8x16xf32> to vector<8xf32>
    %31 = vector.shape_cast %30 : vector<8xf32> to vector<8x1xf32>
    %32 = vector.broadcast %31 : vector<8x1xf32> to vector<8x16xf32>
    %33 = arith.subf %29, %32 : vector<8x16xf32>
    %34 = math.exp %33 : vector<8x16xf32>
    %cst_30 = arith.constant dense<0.000000e+00> : vector<8xf32>
    %35 = vector.multi_reduction <add>, %34, %cst_30 [1] : vector<8x16xf32> to vector<8xf32>
    %36 = vector.shape_cast %35 : vector<8xf32> to vector<8x1xf32>
    %37 = tpu.reciprocal %36 : vector<8x1xf32> -> vector<8x1xf32>
    %38 = vector.broadcast %37 : vector<8x1xf32> to vector<8x16xf32>
    %39 = arith.mulf %34, %38 : vector<8x16xf32>
    %40 = vector.shape_cast %39 : vector<8x16xf32> to vector<8x16x1xf32>
    %41 = vector.broadcast %40 : vector<8x16x1xf32> to vector<8x16x32xf32>
    %42 = arith.mulf %3, %41 : vector<8x16x32xf32>
    %cst_31 = arith.constant dense<0.000000e+00> : vector<8x32xf32>
    %43 = vector.multi_reduction <add>, %42, %cst_31 [1] : vector<8x16x32xf32> to vector<8x32xf32>
    %44 = arith.truncf %43 : vector<8x32xf32> to vector<8x32xbf16>
    %cst_32 = arith.constant dense<0.000000e+00> : vector<8x256xf32>
    %45 = tpu.matmul %44, %7, %cst_32 {dimension_numbers = #tpu.dot_dimension_numbers<[1], [0], [0], [1], [0, 0, 1, 1], [], []>} : vector<8x32xbf16>, vector<32x256xbf16>, vector<8x256xf32> -> vector<8x256xf32>
    %46 = arith.addf %45, %14 : vector<8x256xf32>
    %47 = vector.extract_strided_slice %46 {offsets = [0, 0], sizes = [8, 128], strides = [1, 1]} : vector<8x256xf32> to vector<8x128xf32>
    %48 = vector.extract_strided_slice %46 {offsets = [0, 128], sizes = [8, 128], strides = [1, 1]} : vector<8x256xf32> to vector<8x128xf32>
    %c0_33 = arith.constant 0 : index
    %c0_34 = arith.constant 0 : index
    %c0_35 = arith.constant 0 : index
    %49 = vector.load %arg3[%c0_33, %c0_34, %c0_35] : memref<8x8x128xf32, #tpu.memory_space<vmem>>, vector<1x8x128xf32>
    %50 = vector.shape_cast %49 : vector<1x8x128xf32> to vector<8x128xf32>
    %51 = arith.addf %50, %48 : vector<8x128xf32>
    %52 = arith.truncf %51 : vector<8x128xf32> to vector<8x128xbf16>
    %cst_36 = arith.constant dense<0.000000e+00> : vector<8x512xf32>
    %53 = tpu.matmul %52, %8, %cst_36 {dimension_numbers = #tpu.dot_dimension_numbers<[1], [0], [0], [1], [0, 0, 1, 1], [], []>} : vector<8x128xbf16>, vector<128x512xbf16>, vector<8x512xf32> -> vector<8x512xf32>
    %54 = arith.truncf %18 : vector<8x128xf32> to vector<8x128xbf16>
    %cst_37 = arith.constant dense<0.000000e+00> : vector<8x512xf32>
    %55 = tpu.matmul %54, %9, %cst_37 {dimension_numbers = #tpu.dot_dimension_numbers<[1], [0], [0], [1], [0, 0, 1, 1], [], []>} : vector<8x128xbf16>, vector<128x512xbf16>, vector<8x512xf32> -> vector<8x512xf32>
    %56 = arith.addf %53, %55 : vector<8x512xf32>
    %57 = arith.addf %56, %17 : vector<8x512xf32>
    %58 = vector.extract_strided_slice %57 {offsets = [0, 0], sizes = [8, 128], strides = [1, 1]} : vector<8x512xf32> to vector<8x128xf32>
    %59 = arith.negf %58 : vector<8x128xf32>
    %60 = math.exp %59 : vector<8x128xf32>
    %cst_38 = arith.constant 1.000000e+00 : f32
    %61 = vector.broadcast %cst_38 : f32 to vector<8x128xf32>
    %62 = arith.addf %61, %60 : vector<8x128xf32>
    %63 = arith.divf %61, %62 : vector<8x128xf32>
    %64 = vector.extract_strided_slice %57 {offsets = [0, 128], sizes = [8, 128], strides = [1, 1]} : vector<8x512xf32> to vector<8x128xf32>
    %65 = arith.negf %64 : vector<8x128xf32>
    %66 = math.exp %65 : vector<8x128xf32>
    %cst_39 = arith.constant 1.000000e+00 : f32
    %67 = vector.broadcast %cst_39 : f32 to vector<8x128xf32>
    %68 = arith.addf %67, %66 : vector<8x128xf32>
    %69 = arith.divf %67, %68 : vector<8x128xf32>
    %70 = vector.extract_strided_slice %57 {offsets = [0, 256], sizes = [8, 128], strides = [1, 1]} : vector<8x512xf32> to vector<8x128xf32>
    %71 = math.tanh %70 : vector<8x128xf32>
    %72 = vector.extract_strided_slice %57 {offsets = [0, 384], sizes = [8, 128], strides = [1, 1]} : vector<8x512xf32> to vector<8x128xf32>
    %73 = arith.negf %72 : vector<8x128xf32>
    %74 = math.exp %73 : vector<8x128xf32>
    %cst_40 = arith.constant 1.000000e+00 : f32
    %75 = vector.broadcast %cst_40 : f32 to vector<8x128xf32>
    %76 = arith.addf %75, %74 : vector<8x128xf32>
    %77 = arith.divf %75, %76 : vector<8x128xf32>
    %78 = arith.mulf %69, %19 : vector<8x128xf32>
    %79 = arith.mulf %63, %71 : vector<8x128xf32>
    %80 = arith.addf %78, %79 : vector<8x128xf32>
    %81 = math.tanh %80 : vector<8x128xf32>
    %82 = arith.mulf %77, %81 : vector<8x128xf32>
    %83 = arith.addf %82, %47 : vector<8x128xf32>
    %84 = arith.truncf %83 : vector<8x128xf32> to vector<8x128xbf16>
    %cst_41 = arith.constant dense<0.000000e+00> : vector<8x128xf32>
    %85 = tpu.matmul %84, %10, %cst_41 {dimension_numbers = #tpu.dot_dimension_numbers<[1], [0], [0], [1], [0, 0, 1, 1], [], []>} : vector<8x128xbf16>, vector<128x128xbf16>, vector<8x128xf32> -> vector<8x128xf32>
    %86 = vector.broadcast %11 : vector<1x128xf32> to vector<8x128xf32>
    %87 = arith.addf %85, %86 : vector<8x128xf32>
    %c0_42 = arith.constant 0 : index
    %c0_43 = arith.constant 0 : index
    %c0_44 = arith.constant 0 : index
    %88 = vector.load %arg15[%c0_42, %c0_43, %c0_44] : memref<8x8x128xf32, #tpu.memory_space<vmem>>, vector<8x1x128xf32>
    %89 = vector.shape_cast %88 : vector<8x1x128xf32> to vector<8x128xf32>
    %90 = vector.shape_cast %87 : vector<8x128xf32> to vector<8x1x128xf32>
    tpu.vector_store %arg15[%c0_42, %c0_43, %c0_44], %90 {strides = array<i32>} : memref<8x8x128xf32, #tpu.memory_space<vmem>>, vector<8x1x128xf32>,
    %91 = arith.truncf %82 : vector<8x128xf32> to vector<8x128xbf16>
    %cst_45 = arith.constant dense<0.000000e+00> : vector<8x128xf32>
    %92 = tpu.matmul %91, %5, %cst_45 {dimension_numbers = #tpu.dot_dimension_numbers<[1], [0], [0], [1], [0, 0, 1, 1], [], []>} : vector<8x128xbf16>, vector<128x128xbf16>, vector<8x128xf32> -> vector<8x128xf32>
    %93 = vector.shape_cast %92 : vector<8x128xf32> to vector<8x1x128xf32>
    %94 = vector.broadcast %93 : vector<8x1x128xf32> to vector<8x16x128xf32>
    %95 = arith.addf %4, %94 : vector<8x16x128xf32>
    %96 = math.tanh %95 : vector<8x16x128xf32>
    %97 = vector.shape_cast %6 : vector<1x128xf32> to vector<1x1x128xf32>
    %98 = vector.broadcast %97 : vector<1x1x128xf32> to vector<8x16x128xf32>
    %99 = arith.mulf %96, %98 : vector<8x16x128xf32>
    %cst_46 = arith.constant dense<0.000000e+00> : vector<8x16xf32>
    %100 = vector.multi_reduction <add>, %99, %cst_46 [2] : vector<8x16x128xf32> to vector<8x16xf32>
    %cst_47 = arith.constant dense<0xFF800000> : vector<8xf32>
    %101 = vector.multi_reduction <maximumf>, %100, %cst_47 [1] : vector<8x16xf32> to vector<8xf32>
    %102 = vector.shape_cast %101 : vector<8xf32> to vector<8x1xf32>
    %103 = vector.broadcast %102 : vector<8x1xf32> to vector<8x16xf32>
    %104 = arith.subf %100, %103 : vector<8x16xf32>
    %105 = math.exp %104 : vector<8x16xf32>
    %cst_48 = arith.constant dense<0.000000e+00> : vector<8xf32>
    %106 = vector.multi_reduction <add>, %105, %cst_48 [1] : vector<8x16xf32> to vector<8xf32>
    %107 = vector.shape_cast %106 : vector<8xf32> to vector<8x1xf32>
    %108 = tpu.reciprocal %107 : vector<8x1xf32> -> vector<8x1xf32>
    %109 = vector.broadcast %108 : vector<8x1xf32> to vector<8x16xf32>
    %110 = arith.mulf %105, %109 : vector<8x16xf32>
    %111 = vector.shape_cast %110 : vector<8x16xf32> to vector<8x16x1xf32>
    %112 = vector.broadcast %111 : vector<8x16x1xf32> to vector<8x16x32xf32>
    %113 = arith.mulf %3, %112 : vector<8x16x32xf32>
    %cst_49 = arith.constant dense<0.000000e+00> : vector<8x32xf32>
    %114 = vector.multi_reduction <add>, %113, %cst_49 [1] : vector<8x16x32xf32> to vector<8x32xf32>
    %115 = arith.truncf %114 : vector<8x32xf32> to vector<8x32xbf16>
    %cst_50 = arith.constant dense<0.000000e+00> : vector<8x256xf32>
    %116 = tpu.matmul %115, %7, %cst_50 {dimension_numbers = #tpu.dot_dimension_numbers<[1], [0], [0], [1], [0, 0, 1, 1], [], []>} : vector<8x32xbf16>, vector<32x256xbf16>, vector<8x256xf32> -> vector<8x256xf32>
    %117 = arith.addf %116, %14 : vector<8x256xf32>
    %118 = vector.extract_strided_slice %117 {offsets = [0, 0], sizes = [8, 128], strides = [1, 1]} : vector<8x256xf32> to vector<8x128xf32>
    %119 = vector.extract_strided_slice %117 {offsets = [0, 128], sizes = [8, 128], strides = [1, 1]} : vector<8x256xf32> to vector<8x128xf32>
    %c1 = arith.constant 1 : index
    %c0_51 = arith.constant 0 : index
    %c0_52 = arith.constant 0 : index
    %120 = vector.load %arg3[%c1, %c0_51, %c0_52] : memref<8x8x128xf32, #tpu.memory_space<vmem>>, vector<1x8x128xf32>
    %121 = vector.shape_cast %120 : vector<1x8x128xf32> to vector<8x128xf32>
    %122 = arith.addf %121, %119 : vector<8x128xf32>
    %123 = arith.truncf %122 : vector<8x128xf32> to vector<8x128xbf16>
    %cst_53 = arith.constant dense<0.000000e+00> : vector<8x512xf32>
    %124 = tpu.matmul %123, %8, %cst_53 {dimension_numbers = #tpu.dot_dimension_numbers<[1], [0], [0], [1], [0, 0, 1, 1], [], []>} : vector<8x128xbf16>, vector<128x512xbf16>, vector<8x512xf32> -> vector<8x512xf32>
    %125 = arith.truncf %82 : vector<8x128xf32> to vector<8x128xbf16>
    %cst_54 = arith.constant dense<0.000000e+00> : vector<8x512xf32>
    %126 = tpu.matmul %125, %9, %cst_54 {dimension_numbers = #tpu.dot_dimension_numbers<[1], [0], [0], [1], [0, 0, 1, 1], [], []>} : vector<8x128xbf16>, vector<128x512xbf16>, vector<8x512xf32> -> vector<8x512xf32>
    %127 = arith.addf %124, %126 : vector<8x512xf32>
    %128 = arith.addf %127, %17 : vector<8x512xf32>
    %129 = vector.extract_strided_slice %128 {offsets = [0, 0], sizes = [8, 128], strides = [1, 1]} : vector<8x512xf32> to vector<8x128xf32>
    %130 = arith.negf %129 : vector<8x128xf32>
    %131 = math.exp %130 : vector<8x128xf32>
    %cst_55 = arith.constant 1.000000e+00 : f32
    %132 = vector.broadcast %cst_55 : f32 to vector<8x128xf32>
    %133 = arith.addf %132, %131 : vector<8x128xf32>
    %134 = arith.divf %132, %133 : vector<8x128xf32>
    %135 = vector.extract_strided_slice %128 {offsets = [0, 128], sizes = [8, 128], strides = [1, 1]} : vector<8x512xf32> to vector<8x128xf32>
    %136 = arith.negf %135 : vector<8x128xf32>
    %137 = math.exp %136 : vector<8x128xf32>
    %cst_56 = arith.constant 1.000000e+00 : f32
    %138 = vector.broadcast %cst_56 : f32 to vector<8x128xf32>
    %139 = arith.addf %138, %137 : vector<8x128xf32>
    %140 = arith.divf %138, %139 : vector<8x128xf32>
    %141 = vector.extract_strided_slice %128 {offsets = [0, 256], sizes = [8, 128], strides = [1, 1]} : vector<8x512xf32> to vector<8x128xf32>
    %142 = math.tanh %141 : vector<8x128xf32>
    %143 = vector.extract_strided_slice %128 {offsets = [0, 384], sizes = [8, 128], strides = [1, 1]} : vector<8x512xf32> to vector<8x128xf32>
    %144 = arith.negf %143 : vector<8x128xf32>
    %145 = math.exp %144 : vector<8x128xf32>
    %cst_57 = arith.constant 1.000000e+00 : f32
    %146 = vector.broadcast %cst_57 : f32 to vector<8x128xf32>
    %147 = arith.addf %146, %145 : vector<8x128xf32>
    %148 = arith.divf %146, %147 : vector<8x128xf32>
    %149 = arith.mulf %140, %80 : vector<8x128xf32>
    %150 = arith.mulf %134, %142 : vector<8x128xf32>
    %151 = arith.addf %149, %150 : vector<8x128xf32>
    %152 = math.tanh %151 : vector<8x128xf32>
    %153 = arith.mulf %148, %152 : vector<8x128xf32>
    %154 = arith.addf %153, %118 : vector<8x128xf32>
    %155 = arith.truncf %154 : vector<8x128xf32> to vector<8x128xbf16>
    %cst_58 = arith.constant dense<0.000000e+00> : vector<8x128xf32>
    %156 = tpu.matmul %155, %10, %cst_58 {dimension_numbers = #tpu.dot_dimension_numbers<[1], [0], [0], [1], [0, 0, 1, 1], [], []>} : vector<8x128xbf16>, vector<128x128xbf16>, vector<8x128xf32> -> vector<8x128xf32>
    %157 = vector.broadcast %11 : vector<1x128xf32> to vector<8x128xf32>
    %158 = arith.addf %156, %157 : vector<8x128xf32>
    %c0_59 = arith.constant 0 : index
    %c1_60 = arith.constant 1 : index
    %c0_61 = arith.constant 0 : index
    %159 = vector.load %arg15[%c0_59, %c1_60, %c0_61] : memref<8x8x128xf32, #tpu.memory_space<vmem>>, vector<8x1x128xf32>
    %160 = vector.shape_cast %159 : vector<8x1x128xf32> to vector<8x128xf32>
    %161 = vector.shape_cast %158 : vector<8x128xf32> to vector<8x1x128xf32>
    tpu.vector_store %arg15[%c0_59, %c1_60, %c0_61], %161 {strides = array<i32>} : memref<8x8x128xf32, #tpu.memory_space<vmem>>, vector<8x1x128xf32>,
    %162 = arith.truncf %153 : vector<8x128xf32> to vector<8x128xbf16>
    %cst_62 = arith.constant dense<0.000000e+00> : vector<8x128xf32>
    %163 = tpu.matmul %162, %5, %cst_62 {dimension_numbers = #tpu.dot_dimension_numbers<[1], [0], [0], [1], [0, 0, 1, 1], [], []>} : vector<8x128xbf16>, vector<128x128xbf16>, vector<8x128xf32> -> vector<8x128xf32>
    %164 = vector.shape_cast %163 : vector<8x128xf32> to vector<8x1x128xf32>
    %165 = vector.broadcast %164 : vector<8x1x128xf32> to vector<8x16x128xf32>
    %166 = arith.addf %4, %165 : vector<8x16x128xf32>
    %167 = math.tanh %166 : vector<8x16x128xf32>
    %168 = vector.shape_cast %6 : vector<1x128xf32> to vector<1x1x128xf32>
    %169 = vector.broadcast %168 : vector<1x1x128xf32> to vector<8x16x128xf32>
    %170 = arith.mulf %167, %169 : vector<8x16x128xf32>
    %cst_63 = arith.constant dense<0.000000e+00> : vector<8x16xf32>
    %171 = vector.multi_reduction <add>, %170, %cst_63 [2] : vector<8x16x128xf32> to vector<8x16xf32>
    %cst_64 = arith.constant dense<0xFF800000> : vector<8xf32>
    %172 = vector.multi_reduction <maximumf>, %171, %cst_64 [1] : vector<8x16xf32> to vector<8xf32>
    %173 = vector.shape_cast %172 : vector<8xf32> to vector<8x1xf32>
    %174 = vector.broadcast %173 : vector<8x1xf32> to vector<8x16xf32>
    %175 = arith.subf %171, %174 : vector<8x16xf32>
    %176 = math.exp %175 : vector<8x16xf32>
    %cst_65 = arith.constant dense<0.000000e+00> : vector<8xf32>
    %177 = vector.multi_reduction <add>, %176, %cst_65 [1] : vector<8x16xf32> to vector<8xf32>
    %178 = vector.shape_cast %177 : vector<8xf32> to vector<8x1xf32>
    %179 = tpu.reciprocal %178 : vector<8x1xf32> -> vector<8x1xf32>
    %180 = vector.broadcast %179 : vector<8x1xf32> to vector<8x16xf32>
    %181 = arith.mulf %176, %180 : vector<8x16xf32>
    %182 = vector.shape_cast %181 : vector<8x16xf32> to vector<8x16x1xf32>
    %183 = vector.broadcast %182 : vector<8x16x1xf32> to vector<8x16x32xf32>
    %184 = arith.mulf %3, %183 : vector<8x16x32xf32>
    %cst_66 = arith.constant dense<0.000000e+00> : vector<8x32xf32>
    %185 = vector.multi_reduction <add>, %184, %cst_66 [1] : vector<8x16x32xf32> to vector<8x32xf32>
    %186 = arith.truncf %185 : vector<8x32xf32> to vector<8x32xbf16>
    %cst_67 = arith.constant dense<0.000000e+00> : vector<8x256xf32>
    %187 = tpu.matmul %186, %7, %cst_67 {dimension_numbers = #tpu.dot_dimension_numbers<[1], [0], [0], [1], [0, 0, 1, 1], [], []>} : vector<8x32xbf16>, vector<32x256xbf16>, vector<8x256xf32> -> vector<8x256xf32>
    %188 = arith.addf %187, %14 : vector<8x256xf32>
    %189 = vector.extract_strided_slice %188 {offsets = [0, 0], sizes = [8, 128], strides = [1, 1]} : vector<8x256xf32> to vector<8x128xf32>
    %190 = vector.extract_strided_slice %188 {offsets = [0, 128], sizes = [8, 128], strides = [1, 1]} : vector<8x256xf32> to vector<8x128xf32>
    %c2 = arith.constant 2 : index
    %c0_68 = arith.constant 0 : index
    %c0_69 = arith.constant 0 : index
    %191 = vector.load %arg3[%c2, %c0_68, %c0_69] : memref<8x8x128xf32, #tpu.memory_space<vmem>>, vector<1x8x128xf32>
    %192 = vector.shape_cast %191 : vector<1x8x128xf32> to vector<8x128xf32>
    %193 = arith.addf %192, %190 : vector<8x128xf32>
    %194 = arith.truncf %193 : vector<8x128xf32> to vector<8x128xbf16>
    %cst_70 = arith.constant dense<0.000000e+00> : vector<8x512xf32>
    %195 = tpu.matmul %194, %8, %cst_70 {dimension_numbers = #tpu.dot_dimension_numbers<[1], [0], [0], [1], [0, 0, 1, 1], [], []>} : vector<8x128xbf16>, vector<128x512xbf16>, vector<8x512xf32> -> vector<8x512xf32>
    %196 = arith.truncf %153 : vector<8x128xf32> to vector<8x128xbf16>
    %cst_71 = arith.constant dense<0.000000e+00> : vector<8x512xf32>
    %197 = tpu.matmul %196, %9, %cst_71 {dimension_numbers = #tpu.dot_dimension_numbers<[1], [0], [0], [1], [0, 0, 1, 1], [], []>} : vector<8x128xbf16>, vector<128x512xbf16>, vector<8x512xf32> -> vector<8x512xf32>
    %198 = arith.addf %195, %197 : vector<8x512xf32>
    %199 = arith.addf %198, %17 : vector<8x512xf32>
    %200 = vector.extract_strided_slice %199 {offsets = [0, 0], sizes = [8, 128], strides = [1, 1]} : vector<8x512xf32> to vector<8x128xf32>
    %201 = arith.negf %200 : vector<8x128xf32>
    %202 = math.exp %201 : vector<8x128xf32>
    %cst_72 = arith.constant 1.000000e+00 : f32
    %203 = vector.broadcast %cst_72 : f32 to vector<8x128xf32>
    %204 = arith.addf %203, %202 : vector<8x128xf32>
    %205 = arith.divf %203, %204 : vector<8x128xf32>
    %206 = vector.extract_strided_slice %199 {offsets = [0, 128], sizes = [8, 128], strides = [1, 1]} : vector<8x512xf32> to vector<8x128xf32>
    %207 = arith.negf %206 : vector<8x128xf32>
    %208 = math.exp %207 : vector<8x128xf32>
    %cst_73 = arith.constant 1.000000e+00 : f32
    %209 = vector.broadcast %cst_73 : f32 to vector<8x128xf32>
    %210 = arith.addf %209, %208 : vector<8x128xf32>
    %211 = arith.divf %209, %210 : vector<8x128xf32>
    %212 = vector.extract_strided_slice %199 {offsets = [0, 256], sizes = [8, 128], strides = [1, 1]} : vector<8x512xf32> to vector<8x128xf32>
    %213 = math.tanh %212 : vector<8x128xf32>
    %214 = vector.extract_strided_slice %199 {offsets = [0, 384], sizes = [8, 128], strides = [1, 1]} : vector<8x512xf32> to vector<8x128xf32>
    %215 = arith.negf %214 : vector<8x128xf32>
    %216 = math.exp %215 : vector<8x128xf32>
    %cst_74 = arith.constant 1.000000e+00 : f32
    %217 = vector.broadcast %cst_74 : f32 to vector<8x128xf32>
    %218 = arith.addf %217, %216 : vector<8x128xf32>
    %219 = arith.divf %217, %218 : vector<8x128xf32>
    %220 = arith.mulf %211, %151 : vector<8x128xf32>
    %221 = arith.mulf %205, %213 : vector<8x128xf32>
    %222 = arith.addf %220, %221 : vector<8x128xf32>
    %223 = math.tanh %222 : vector<8x128xf32>
    %224 = arith.mulf %219, %223 : vector<8x128xf32>
    %225 = arith.addf %224, %189 : vector<8x128xf32>
    %226 = arith.truncf %225 : vector<8x128xf32> to vector<8x128xbf16>
    %cst_75 = arith.constant dense<0.000000e+00> : vector<8x128xf32>
    %227 = tpu.matmul %226, %10, %cst_75 {dimension_numbers = #tpu.dot_dimension_numbers<[1], [0], [0], [1], [0, 0, 1, 1], [], []>} : vector<8x128xbf16>, vector<128x128xbf16>, vector<8x128xf32> -> vector<8x128xf32>
    %228 = vector.broadcast %11 : vector<1x128xf32> to vector<8x128xf32>
    %229 = arith.addf %227, %228 : vector<8x128xf32>
    %c0_76 = arith.constant 0 : index
    %c2_77 = arith.constant 2 : index
    %c0_78 = arith.constant 0 : index
    %230 = vector.load %arg15[%c0_76, %c2_77, %c0_78] : memref<8x8x128xf32, #tpu.memory_space<vmem>>, vector<8x1x128xf32>
    %231 = vector.shape_cast %230 : vector<8x1x128xf32> to vector<8x128xf32>
    %232 = vector.shape_cast %229 : vector<8x128xf32> to vector<8x1x128xf32>
    tpu.vector_store %arg15[%c0_76, %c2_77, %c0_78], %232 {strides = array<i32>} : memref<8x8x128xf32, #tpu.memory_space<vmem>>, vector<8x1x128xf32>,
    %233 = arith.truncf %224 : vector<8x128xf32> to vector<8x128xbf16>
    %cst_79 = arith.constant dense<0.000000e+00> : vector<8x128xf32>
    %234 = tpu.matmul %233, %5, %cst_79 {dimension_numbers = #tpu.dot_dimension_numbers<[1], [0], [0], [1], [0, 0, 1, 1], [], []>} : vector<8x128xbf16>, vector<128x128xbf16>, vector<8x128xf32> -> vector<8x128xf32>
    %235 = vector.shape_cast %234 : vector<8x128xf32> to vector<8x1x128xf32>
    %236 = vector.broadcast %235 : vector<8x1x128xf32> to vector<8x16x128xf32>
    %237 = arith.addf %4, %236 : vector<8x16x128xf32>
    %238 = math.tanh %237 : vector<8x16x128xf32>
    %239 = vector.shape_cast %6 : vector<1x128xf32> to vector<1x1x128xf32>
    %240 = vector.broadcast %239 : vector<1x1x128xf32> to vector<8x16x128xf32>
    %241 = arith.mulf %238, %240 : vector<8x16x128xf32>
    %cst_80 = arith.constant dense<0.000000e+00> : vector<8x16xf32>
    %242 = vector.multi_reduction <add>, %241, %cst_80 [2] : vector<8x16x128xf32> to vector<8x16xf32>
    %cst_81 = arith.constant dense<0xFF800000> : vector<8xf32>
    %243 = vector.multi_reduction <maximumf>, %242, %cst_81 [1] : vector<8x16xf32> to vector<8xf32>
    %244 = vector.shape_cast %243 : vector<8xf32> to vector<8x1xf32>
    %245 = vector.broadcast %244 : vector<8x1xf32> to vector<8x16xf32>
    %246 = arith.subf %242, %245 : vector<8x16xf32>
    %247 = math.exp %246 : vector<8x16xf32>
    %cst_82 = arith.constant dense<0.000000e+00> : vector<8xf32>
    %248 = vector.multi_reduction <add>, %247, %cst_82 [1] : vector<8x16xf32> to vector<8xf32>
    %249 = vector.shape_cast %248 : vector<8xf32> to vector<8x1xf32>
    %250 = tpu.reciprocal %249 : vector<8x1xf32> -> vector<8x1xf32>
    %251 = vector.broadcast %250 : vector<8x1xf32> to vector<8x16xf32>
    %252 = arith.mulf %247, %251 : vector<8x16xf32>
    %253 = vector.shape_cast %252 : vector<8x16xf32> to vector<8x16x1xf32>
    %254 = vector.broadcast %253 : vector<8x16x1xf32> to vector<8x16x32xf32>
    %255 = arith.mulf %3, %254 : vector<8x16x32xf32>
    %cst_83 = arith.constant dense<0.000000e+00> : vector<8x32xf32>
    %256 = vector.multi_reduction <add>, %255, %cst_83 [1] : vector<8x16x32xf32> to vector<8x32xf32>
    %257 = arith.truncf %256 : vector<8x32xf32> to vector<8x32xbf16>
    %cst_84 = arith.constant dense<0.000000e+00> : vector<8x256xf32>
    %258 = tpu.matmul %257, %7, %cst_84 {dimension_numbers = #tpu.dot_dimension_numbers<[1], [0], [0], [1], [0, 0, 1, 1], [], []>} : vector<8x32xbf16>, vector<32x256xbf16>, vector<8x256xf32> -> vector<8x256xf32>
    %259 = arith.addf %258, %14 : vector<8x256xf32>
    %260 = vector.extract_strided_slice %259 {offsets = [0, 0], sizes = [8, 128], strides = [1, 1]} : vector<8x256xf32> to vector<8x128xf32>
    %261 = vector.extract_strided_slice %259 {offsets = [0, 128], sizes = [8, 128], strides = [1, 1]} : vector<8x256xf32> to vector<8x128xf32>
    %c3 = arith.constant 3 : index
    %c0_85 = arith.constant 0 : index
    %c0_86 = arith.constant 0 : index
    %262 = vector.load %arg3[%c3, %c0_85, %c0_86] : memref<8x8x128xf32, #tpu.memory_space<vmem>>, vector<1x8x128xf32>
    %263 = vector.shape_cast %262 : vector<1x8x128xf32> to vector<8x128xf32>
    %264 = arith.addf %263, %261 : vector<8x128xf32>
    %265 = arith.truncf %264 : vector<8x128xf32> to vector<8x128xbf16>
    %cst_87 = arith.constant dense<0.000000e+00> : vector<8x512xf32>
    %266 = tpu.matmul %265, %8, %cst_87 {dimension_numbers = #tpu.dot_dimension_numbers<[1], [0], [0], [1], [0, 0, 1, 1], [], []>} : vector<8x128xbf16>, vector<128x512xbf16>, vector<8x512xf32> -> vector<8x512xf32>
    %267 = arith.truncf %224 : vector<8x128xf32> to vector<8x128xbf16>
    %cst_88 = arith.constant dense<0.000000e+00> : vector<8x512xf32>
    %268 = tpu.matmul %267, %9, %cst_88 {dimension_numbers = #tpu.dot_dimension_numbers<[1], [0], [0], [1], [0, 0, 1, 1], [], []>} : vector<8x128xbf16>, vector<128x512xbf16>, vector<8x512xf32> -> vector<8x512xf32>
    %269 = arith.addf %266, %268 : vector<8x512xf32>
    %270 = arith.addf %269, %17 : vector<8x512xf32>
    %271 = vector.extract_strided_slice %270 {offsets = [0, 0], sizes = [8, 128], strides = [1, 1]} : vector<8x512xf32> to vector<8x128xf32>
    %272 = arith.negf %271 : vector<8x128xf32>
    %273 = math.exp %272 : vector<8x128xf32>
    %cst_89 = arith.constant 1.000000e+00 : f32
    %274 = vector.broadcast %cst_89 : f32 to vector<8x128xf32>
    %275 = arith.addf %274, %273 : vector<8x128xf32>
    %276 = arith.divf %274, %275 : vector<8x128xf32>
    %277 = vector.extract_strided_slice %270 {offsets = [0, 128], sizes = [8, 128], strides = [1, 1]} : vector<8x512xf32> to vector<8x128xf32>
    %278 = arith.negf %277 : vector<8x128xf32>
    %279 = math.exp %278 : vector<8x128xf32>
    %cst_90 = arith.constant 1.000000e+00 : f32
    %280 = vector.broadcast %cst_90 : f32 to vector<8x128xf32>
    %281 = arith.addf %280, %279 : vector<8x128xf32>
    %282 = arith.divf %280, %281 : vector<8x128xf32>
    %283 = vector.extract_strided_slice %270 {offsets = [0, 256], sizes = [8, 128], strides = [1, 1]} : vector<8x512xf32> to vector<8x128xf32>
    %284 = math.tanh %283 : vector<8x128xf32>
    %285 = vector.extract_strided_slice %270 {offsets = [0, 384], sizes = [8, 128], strides = [1, 1]} : vector<8x512xf32> to vector<8x128xf32>
    %286 = arith.negf %285 : vector<8x128xf32>
    %287 = math.exp %286 : vector<8x128xf32>
    %cst_91 = arith.constant 1.000000e+00 : f32
    %288 = vector.broadcast %cst_91 : f32 to vector<8x128xf32>
    %289 = arith.addf %288, %287 : vector<8x128xf32>
    %290 = arith.divf %288, %289 : vector<8x128xf32>
    %291 = arith.mulf %282, %222 : vector<8x128xf32>
    %292 = arith.mulf %276, %284 : vector<8x128xf32>
    %293 = arith.addf %291, %292 : vector<8x128xf32>
    %294 = math.tanh %293 : vector<8x128xf32>
    %295 = arith.mulf %290, %294 : vector<8x128xf32>
    %296 = arith.addf %295, %260 : vector<8x128xf32>
    %297 = arith.truncf %296 : vector<8x128xf32> to vector<8x128xbf16>
    %cst_92 = arith.constant dense<0.000000e+00> : vector<8x128xf32>
    %298 = tpu.matmul %297, %10, %cst_92 {dimension_numbers = #tpu.dot_dimension_numbers<[1], [0], [0], [1], [0, 0, 1, 1], [], []>} : vector<8x128xbf16>, vector<128x128xbf16>, vector<8x128xf32> -> vector<8x128xf32>
    %299 = vector.broadcast %11 : vector<1x128xf32> to vector<8x128xf32>
    %300 = arith.addf %298, %299 : vector<8x128xf32>
    %c0_93 = arith.constant 0 : index
    %c3_94 = arith.constant 3 : index
    %c0_95 = arith.constant 0 : index
    %301 = vector.load %arg15[%c0_93, %c3_94, %c0_95] : memref<8x8x128xf32, #tpu.memory_space<vmem>>, vector<8x1x128xf32>
    %302 = vector.shape_cast %301 : vector<8x1x128xf32> to vector<8x128xf32>
    %303 = vector.shape_cast %300 : vector<8x128xf32> to vector<8x1x128xf32>
    tpu.vector_store %arg15[%c0_93, %c3_94, %c0_95], %303 {strides = array<i32>} : memref<8x8x128xf32, #tpu.memory_space<vmem>>, vector<8x1x128xf32>,
    %304 = arith.truncf %295 : vector<8x128xf32> to vector<8x128xbf16>
    %cst_96 = arith.constant dense<0.000000e+00> : vector<8x128xf32>
    %305 = tpu.matmul %304, %5, %cst_96 {dimension_numbers = #tpu.dot_dimension_numbers<[1], [0], [0], [1], [0, 0, 1, 1], [], []>} : vector<8x128xbf16>, vector<128x128xbf16>, vector<8x128xf32> -> vector<8x128xf32>
    %306 = vector.shape_cast %305 : vector<8x128xf32> to vector<8x1x128xf32>
    %307 = vector.broadcast %306 : vector<8x1x128xf32> to vector<8x16x128xf32>
    %308 = arith.addf %4, %307 : vector<8x16x128xf32>
    %309 = math.tanh %308 : vector<8x16x128xf32>
    %310 = vector.shape_cast %6 : vector<1x128xf32> to vector<1x1x128xf32>
    %311 = vector.broadcast %310 : vector<1x1x128xf32> to vector<8x16x128xf32>
    %312 = arith.mulf %309, %311 : vector<8x16x128xf32>
    %cst_97 = arith.constant dense<0.000000e+00> : vector<8x16xf32>
    %313 = vector.multi_reduction <add>, %312, %cst_97 [2] : vector<8x16x128xf32> to vector<8x16xf32>
    %cst_98 = arith.constant dense<0xFF800000> : vector<8xf32>
    %314 = vector.multi_reduction <maximumf>, %313, %cst_98 [1] : vector<8x16xf32> to vector<8xf32>
    %315 = vector.shape_cast %314 : vector<8xf32> to vector<8x1xf32>
    %316 = vector.broadcast %315 : vector<8x1xf32> to vector<8x16xf32>
    %317 = arith.subf %313, %316 : vector<8x16xf32>
    %318 = math.exp %317 : vector<8x16xf32>
    %cst_99 = arith.constant dense<0.000000e+00> : vector<8xf32>
    %319 = vector.multi_reduction <add>, %318, %cst_99 [1] : vector<8x16xf32> to vector<8xf32>
    %320 = vector.shape_cast %319 : vector<8xf32> to vector<8x1xf32>
    %321 = tpu.reciprocal %320 : vector<8x1xf32> -> vector<8x1xf32>
    %322 = vector.broadcast %321 : vector<8x1xf32> to vector<8x16xf32>
    %323 = arith.mulf %318, %322 : vector<8x16xf32>
    %324 = vector.shape_cast %323 : vector<8x16xf32> to vector<8x16x1xf32>
    %325 = vector.broadcast %324 : vector<8x16x1xf32> to vector<8x16x32xf32>
    %326 = arith.mulf %3, %325 : vector<8x16x32xf32>
    %cst_100 = arith.constant dense<0.000000e+00> : vector<8x32xf32>
    %327 = vector.multi_reduction <add>, %326, %cst_100 [1] : vector<8x16x32xf32> to vector<8x32xf32>
    %328 = arith.truncf %327 : vector<8x32xf32> to vector<8x32xbf16>
    %cst_101 = arith.constant dense<0.000000e+00> : vector<8x256xf32>
    %329 = tpu.matmul %328, %7, %cst_101 {dimension_numbers = #tpu.dot_dimension_numbers<[1], [0], [0], [1], [0, 0, 1, 1], [], []>} : vector<8x32xbf16>, vector<32x256xbf16>, vector<8x256xf32> -> vector<8x256xf32>
    %330 = arith.addf %329, %14 : vector<8x256xf32>
    %331 = vector.extract_strided_slice %330 {offsets = [0, 0], sizes = [8, 128], strides = [1, 1]} : vector<8x256xf32> to vector<8x128xf32>
    %332 = vector.extract_strided_slice %330 {offsets = [0, 128], sizes = [8, 128], strides = [1, 1]} : vector<8x256xf32> to vector<8x128xf32>
    %c4 = arith.constant 4 : index
    %c0_102 = arith.constant 0 : index
    %c0_103 = arith.constant 0 : index
    %333 = vector.load %arg3[%c4, %c0_102, %c0_103] : memref<8x8x128xf32, #tpu.memory_space<vmem>>, vector<1x8x128xf32>
    %334 = vector.shape_cast %333 : vector<1x8x128xf32> to vector<8x128xf32>
    %335 = arith.addf %334, %332 : vector<8x128xf32>
    %336 = arith.truncf %335 : vector<8x128xf32> to vector<8x128xbf16>
    %cst_104 = arith.constant dense<0.000000e+00> : vector<8x512xf32>
    %337 = tpu.matmul %336, %8, %cst_104 {dimension_numbers = #tpu.dot_dimension_numbers<[1], [0], [0], [1], [0, 0, 1, 1], [], []>} : vector<8x128xbf16>, vector<128x512xbf16>, vector<8x512xf32> -> vector<8x512xf32>
    %338 = arith.truncf %295 : vector<8x128xf32> to vector<8x128xbf16>
    %cst_105 = arith.constant dense<0.000000e+00> : vector<8x512xf32>
    %339 = tpu.matmul %338, %9, %cst_105 {dimension_numbers = #tpu.dot_dimension_numbers<[1], [0], [0], [1], [0, 0, 1, 1], [], []>} : vector<8x128xbf16>, vector<128x512xbf16>, vector<8x512xf32> -> vector<8x512xf32>
    %340 = arith.addf %337, %339 : vector<8x512xf32>
    %341 = arith.addf %340, %17 : vector<8x512xf32>
    %342 = vector.extract_strided_slice %341 {offsets = [0, 0], sizes = [8, 128], strides = [1, 1]} : vector<8x512xf32> to vector<8x128xf32>
    %343 = arith.negf %342 : vector<8x128xf32>
    %344 = math.exp %343 : vector<8x128xf32>
    %cst_106 = arith.constant 1.000000e+00 : f32
    %345 = vector.broadcast %cst_106 : f32 to vector<8x128xf32>
    %346 = arith.addf %345, %344 : vector<8x128xf32>
    %347 = arith.divf %345, %346 : vector<8x128xf32>
    %348 = vector.extract_strided_slice %341 {offsets = [0, 128], sizes = [8, 128], strides = [1, 1]} : vector<8x512xf32> to vector<8x128xf32>
    %349 = arith.negf %348 : vector<8x128xf32>
    %350 = math.exp %349 : vector<8x128xf32>
    %cst_107 = arith.constant 1.000000e+00 : f32
    %351 = vector.broadcast %cst_107 : f32 to vector<8x128xf32>
    %352 = arith.addf %351, %350 : vector<8x128xf32>
    %353 = arith.divf %351, %352 : vector<8x128xf32>
    %354 = vector.extract_strided_slice %341 {offsets = [0, 256], sizes = [8, 128], strides = [1, 1]} : vector<8x512xf32> to vector<8x128xf32>
    %355 = math.tanh %354 : vector<8x128xf32>
    %356 = vector.extract_strided_slice %341 {offsets = [0, 384], sizes = [8, 128], strides = [1, 1]} : vector<8x512xf32> to vector<8x128xf32>
    %357 = arith.negf %356 : vector<8x128xf32>
    %358 = math.exp %357 : vector<8x128xf32>
    %cst_108 = arith.constant 1.000000e+00 : f32
    %359 = vector.broadcast %cst_108 : f32 to vector<8x128xf32>
    %360 = arith.addf %359, %358 : vector<8x128xf32>
    %361 = arith.divf %359, %360 : vector<8x128xf32>
    %362 = arith.mulf %353, %293 : vector<8x128xf32>
    %363 = arith.mulf %347, %355 : vector<8x128xf32>
    %364 = arith.addf %362, %363 : vector<8x128xf32>
    %365 = math.tanh %364 : vector<8x128xf32>
    %366 = arith.mulf %361, %365 : vector<8x128xf32>
    %367 = arith.addf %366, %331 : vector<8x128xf32>
    %368 = arith.truncf %367 : vector<8x128xf32> to vector<8x128xbf16>
    %cst_109 = arith.constant dense<0.000000e+00> : vector<8x128xf32>
    %369 = tpu.matmul %368, %10, %cst_109 {dimension_numbers = #tpu.dot_dimension_numbers<[1], [0], [0], [1], [0, 0, 1, 1], [], []>} : vector<8x128xbf16>, vector<128x128xbf16>, vector<8x128xf32> -> vector<8x128xf32>
    %370 = vector.broadcast %11 : vector<1x128xf32> to vector<8x128xf32>
    %371 = arith.addf %369, %370 : vector<8x128xf32>
    %c0_110 = arith.constant 0 : index
    %c4_111 = arith.constant 4 : index
    %c0_112 = arith.constant 0 : index
    %372 = vector.load %arg15[%c0_110, %c4_111, %c0_112] : memref<8x8x128xf32, #tpu.memory_space<vmem>>, vector<8x1x128xf32>
    %373 = vector.shape_cast %372 : vector<8x1x128xf32> to vector<8x128xf32>
    %374 = vector.shape_cast %371 : vector<8x128xf32> to vector<8x1x128xf32>
    tpu.vector_store %arg15[%c0_110, %c4_111, %c0_112], %374 {strides = array<i32>} : memref<8x8x128xf32, #tpu.memory_space<vmem>>, vector<8x1x128xf32>,
    %375 = arith.truncf %366 : vector<8x128xf32> to vector<8x128xbf16>
    %cst_113 = arith.constant dense<0.000000e+00> : vector<8x128xf32>
    %376 = tpu.matmul %375, %5, %cst_113 {dimension_numbers = #tpu.dot_dimension_numbers<[1], [0], [0], [1], [0, 0, 1, 1], [], []>} : vector<8x128xbf16>, vector<128x128xbf16>, vector<8x128xf32> -> vector<8x128xf32>
    %377 = vector.shape_cast %376 : vector<8x128xf32> to vector<8x1x128xf32>
    %378 = vector.broadcast %377 : vector<8x1x128xf32> to vector<8x16x128xf32>
    %379 = arith.addf %4, %378 : vector<8x16x128xf32>
    %380 = math.tanh %379 : vector<8x16x128xf32>
    %381 = vector.shape_cast %6 : vector<1x128xf32> to vector<1x1x128xf32>
    %382 = vector.broadcast %381 : vector<1x1x128xf32> to vector<8x16x128xf32>
    %383 = arith.mulf %380, %382 : vector<8x16x128xf32>
    %cst_114 = arith.constant dense<0.000000e+00> : vector<8x16xf32>
    %384 = vector.multi_reduction <add>, %383, %cst_114 [2] : vector<8x16x128xf32> to vector<8x16xf32>
    %cst_115 = arith.constant dense<0xFF800000> : vector<8xf32>
    %385 = vector.multi_reduction <maximumf>, %384, %cst_115 [1] : vector<8x16xf32> to vector<8xf32>
    %386 = vector.shape_cast %385 : vector<8xf32> to vector<8x1xf32>
    %387 = vector.broadcast %386 : vector<8x1xf32> to vector<8x16xf32>
    %388 = arith.subf %384, %387 : vector<8x16xf32>
    %389 = math.exp %388 : vector<8x16xf32>
    %cst_116 = arith.constant dense<0.000000e+00> : vector<8xf32>
    %390 = vector.multi_reduction <add>, %389, %cst_116 [1] : vector<8x16xf32> to vector<8xf32>
    %391 = vector.shape_cast %390 : vector<8xf32> to vector<8x1xf32>
    %392 = tpu.reciprocal %391 : vector<8x1xf32> -> vector<8x1xf32>
    %393 = vector.broadcast %392 : vector<8x1xf32> to vector<8x16xf32>
    %394 = arith.mulf %389, %393 : vector<8x16xf32>
    %395 = vector.shape_cast %394 : vector<8x16xf32> to vector<8x16x1xf32>
    %396 = vector.broadcast %395 : vector<8x16x1xf32> to vector<8x16x32xf32>
    %397 = arith.mulf %3, %396 : vector<8x16x32xf32>
    %cst_117 = arith.constant dense<0.000000e+00> : vector<8x32xf32>
    %398 = vector.multi_reduction <add>, %397, %cst_117 [1] : vector<8x16x32xf32> to vector<8x32xf32>
    %399 = arith.truncf %398 : vector<8x32xf32> to vector<8x32xbf16>
    %cst_118 = arith.constant dense<0.000000e+00> : vector<8x256xf32>
    %400 = tpu.matmul %399, %7, %cst_118 {dimension_numbers = #tpu.dot_dimension_numbers<[1], [0], [0], [1], [0, 0, 1, 1], [], []>} : vector<8x32xbf16>, vector<32x256xbf16>, vector<8x256xf32> -> vector<8x256xf32>
    %401 = arith.addf %400, %14 : vector<8x256xf32>
    %402 = vector.extract_strided_slice %401 {offsets = [0, 0], sizes = [8, 128], strides = [1, 1]} : vector<8x256xf32> to vector<8x128xf32>
    %403 = vector.extract_strided_slice %401 {offsets = [0, 128], sizes = [8, 128], strides = [1, 1]} : vector<8x256xf32> to vector<8x128xf32>
    %c5 = arith.constant 5 : index
    %c0_119 = arith.constant 0 : index
    %c0_120 = arith.constant 0 : index
    %404 = vector.load %arg3[%c5, %c0_119, %c0_120] : memref<8x8x128xf32, #tpu.memory_space<vmem>>, vector<1x8x128xf32>
    %405 = vector.shape_cast %404 : vector<1x8x128xf32> to vector<8x128xf32>
    %406 = arith.addf %405, %403 : vector<8x128xf32>
    %407 = arith.truncf %406 : vector<8x128xf32> to vector<8x128xbf16>
    %cst_121 = arith.constant dense<0.000000e+00> : vector<8x512xf32>
    %408 = tpu.matmul %407, %8, %cst_121 {dimension_numbers = #tpu.dot_dimension_numbers<[1], [0], [0], [1], [0, 0, 1, 1], [], []>} : vector<8x128xbf16>, vector<128x512xbf16>, vector<8x512xf32> -> vector<8x512xf32>
    %409 = arith.truncf %366 : vector<8x128xf32> to vector<8x128xbf16>
    %cst_122 = arith.constant dense<0.000000e+00> : vector<8x512xf32>
    %410 = tpu.matmul %409, %9, %cst_122 {dimension_numbers = #tpu.dot_dimension_numbers<[1], [0], [0], [1], [0, 0, 1, 1], [], []>} : vector<8x128xbf16>, vector<128x512xbf16>, vector<8x512xf32> -> vector<8x512xf32>
    %411 = arith.addf %408, %410 : vector<8x512xf32>
    %412 = arith.addf %411, %17 : vector<8x512xf32>
    %413 = vector.extract_strided_slice %412 {offsets = [0, 0], sizes = [8, 128], strides = [1, 1]} : vector<8x512xf32> to vector<8x128xf32>
    %414 = arith.negf %413 : vector<8x128xf32>
    %415 = math.exp %414 : vector<8x128xf32>
    %cst_123 = arith.constant 1.000000e+00 : f32
    %416 = vector.broadcast %cst_123 : f32 to vector<8x128xf32>
    %417 = arith.addf %416, %415 : vector<8x128xf32>
    %418 = arith.divf %416, %417 : vector<8x128xf32>
    %419 = vector.extract_strided_slice %412 {offsets = [0, 128], sizes = [8, 128], strides = [1, 1]} : vector<8x512xf32> to vector<8x128xf32>
    %420 = arith.negf %419 : vector<8x128xf32>
    %421 = math.exp %420 : vector<8x128xf32>
    %cst_124 = arith.constant 1.000000e+00 : f32
    %422 = vector.broadcast %cst_124 : f32 to vector<8x128xf32>
    %423 = arith.addf %422, %421 : vector<8x128xf32>
    %424 = arith.divf %422, %423 : vector<8x128xf32>
    %425 = vector.extract_strided_slice %412 {offsets = [0, 256], sizes = [8, 128], strides = [1, 1]} : vector<8x512xf32> to vector<8x128xf32>
    %426 = math.tanh %425 : vector<8x128xf32>
    %427 = vector.extract_strided_slice %412 {offsets = [0, 384], sizes = [8, 128], strides = [1, 1]} : vector<8x512xf32> to vector<8x128xf32>
    %428 = arith.negf %427 : vector<8x128xf32>
    %429 = math.exp %428 : vector<8x128xf32>
    %cst_125 = arith.constant 1.000000e+00 : f32
    %430 = vector.broadcast %cst_125 : f32 to vector<8x128xf32>
    %431 = arith.addf %430, %429 : vector<8x128xf32>
    %432 = arith.divf %430, %431 : vector<8x128xf32>
    %433 = arith.mulf %424, %364 : vector<8x128xf32>
    %434 = arith.mulf %418, %426 : vector<8x128xf32>
    %435 = arith.addf %433, %434 : vector<8x128xf32>
    %436 = math.tanh %435 : vector<8x128xf32>
    %437 = arith.mulf %432, %436 : vector<8x128xf32>
    %438 = arith.addf %437, %402 : vector<8x128xf32>
    %439 = arith.truncf %438 : vector<8x128xf32> to vector<8x128xbf16>
    %cst_126 = arith.constant dense<0.000000e+00> : vector<8x128xf32>
    %440 = tpu.matmul %439, %10, %cst_126 {dimension_numbers = #tpu.dot_dimension_numbers<[1], [0], [0], [1], [0, 0, 1, 1], [], []>} : vector<8x128xbf16>, vector<128x128xbf16>, vector<8x128xf32> -> vector<8x128xf32>
    %441 = vector.broadcast %11 : vector<1x128xf32> to vector<8x128xf32>
    %442 = arith.addf %440, %441 : vector<8x128xf32>
    %c0_127 = arith.constant 0 : index
    %c5_128 = arith.constant 5 : index
    %c0_129 = arith.constant 0 : index
    %443 = vector.load %arg15[%c0_127, %c5_128, %c0_129] : memref<8x8x128xf32, #tpu.memory_space<vmem>>, vector<8x1x128xf32>
    %444 = vector.shape_cast %443 : vector<8x1x128xf32> to vector<8x128xf32>
    %445 = vector.shape_cast %442 : vector<8x128xf32> to vector<8x1x128xf32>
    tpu.vector_store %arg15[%c0_127, %c5_128, %c0_129], %445 {strides = array<i32>} : memref<8x8x128xf32, #tpu.memory_space<vmem>>, vector<8x1x128xf32>,
    %446 = arith.truncf %437 : vector<8x128xf32> to vector<8x128xbf16>
    %cst_130 = arith.constant dense<0.000000e+00> : vector<8x128xf32>
    %447 = tpu.matmul %446, %5, %cst_130 {dimension_numbers = #tpu.dot_dimension_numbers<[1], [0], [0], [1], [0, 0, 1, 1], [], []>} : vector<8x128xbf16>, vector<128x128xbf16>, vector<8x128xf32> -> vector<8x128xf32>
    %448 = vector.shape_cast %447 : vector<8x128xf32> to vector<8x1x128xf32>
    %449 = vector.broadcast %448 : vector<8x1x128xf32> to vector<8x16x128xf32>
    %450 = arith.addf %4, %449 : vector<8x16x128xf32>
    %451 = math.tanh %450 : vector<8x16x128xf32>
    %452 = vector.shape_cast %6 : vector<1x128xf32> to vector<1x1x128xf32>
    %453 = vector.broadcast %452 : vector<1x1x128xf32> to vector<8x16x128xf32>
    %454 = arith.mulf %451, %453 : vector<8x16x128xf32>
    %cst_131 = arith.constant dense<0.000000e+00> : vector<8x16xf32>
    %455 = vector.multi_reduction <add>, %454, %cst_131 [2] : vector<8x16x128xf32> to vector<8x16xf32>
    %cst_132 = arith.constant dense<0xFF800000> : vector<8xf32>
    %456 = vector.multi_reduction <maximumf>, %455, %cst_132 [1] : vector<8x16xf32> to vector<8xf32>
    %457 = vector.shape_cast %456 : vector<8xf32> to vector<8x1xf32>
    %458 = vector.broadcast %457 : vector<8x1xf32> to vector<8x16xf32>
    %459 = arith.subf %455, %458 : vector<8x16xf32>
    %460 = math.exp %459 : vector<8x16xf32>
    %cst_133 = arith.constant dense<0.000000e+00> : vector<8xf32>
    %461 = vector.multi_reduction <add>, %460, %cst_133 [1] : vector<8x16xf32> to vector<8xf32>
    %462 = vector.shape_cast %461 : vector<8xf32> to vector<8x1xf32>
    %463 = tpu.reciprocal %462 : vector<8x1xf32> -> vector<8x1xf32>
    %464 = vector.broadcast %463 : vector<8x1xf32> to vector<8x16xf32>
    %465 = arith.mulf %460, %464 : vector<8x16xf32>
    %466 = vector.shape_cast %465 : vector<8x16xf32> to vector<8x16x1xf32>
    %467 = vector.broadcast %466 : vector<8x16x1xf32> to vector<8x16x32xf32>
    %468 = arith.mulf %3, %467 : vector<8x16x32xf32>
    %cst_134 = arith.constant dense<0.000000e+00> : vector<8x32xf32>
    %469 = vector.multi_reduction <add>, %468, %cst_134 [1] : vector<8x16x32xf32> to vector<8x32xf32>
    %470 = arith.truncf %469 : vector<8x32xf32> to vector<8x32xbf16>
    %cst_135 = arith.constant dense<0.000000e+00> : vector<8x256xf32>
    %471 = tpu.matmul %470, %7, %cst_135 {dimension_numbers = #tpu.dot_dimension_numbers<[1], [0], [0], [1], [0, 0, 1, 1], [], []>} : vector<8x32xbf16>, vector<32x256xbf16>, vector<8x256xf32> -> vector<8x256xf32>
    %472 = arith.addf %471, %14 : vector<8x256xf32>
    %473 = vector.extract_strided_slice %472 {offsets = [0, 0], sizes = [8, 128], strides = [1, 1]} : vector<8x256xf32> to vector<8x128xf32>
    %474 = vector.extract_strided_slice %472 {offsets = [0, 128], sizes = [8, 128], strides = [1, 1]} : vector<8x256xf32> to vector<8x128xf32>
    %c6 = arith.constant 6 : index
    %c0_136 = arith.constant 0 : index
    %c0_137 = arith.constant 0 : index
    %475 = vector.load %arg3[%c6, %c0_136, %c0_137] : memref<8x8x128xf32, #tpu.memory_space<vmem>>, vector<1x8x128xf32>
    %476 = vector.shape_cast %475 : vector<1x8x128xf32> to vector<8x128xf32>
    %477 = arith.addf %476, %474 : vector<8x128xf32>
    %478 = arith.truncf %477 : vector<8x128xf32> to vector<8x128xbf16>
    %cst_138 = arith.constant dense<0.000000e+00> : vector<8x512xf32>
    %479 = tpu.matmul %478, %8, %cst_138 {dimension_numbers = #tpu.dot_dimension_numbers<[1], [0], [0], [1], [0, 0, 1, 1], [], []>} : vector<8x128xbf16>, vector<128x512xbf16>, vector<8x512xf32> -> vector<8x512xf32>
    %480 = arith.truncf %437 : vector<8x128xf32> to vector<8x128xbf16>
    %cst_139 = arith.constant dense<0.000000e+00> : vector<8x512xf32>
    %481 = tpu.matmul %480, %9, %cst_139 {dimension_numbers = #tpu.dot_dimension_numbers<[1], [0], [0], [1], [0, 0, 1, 1], [], []>} : vector<8x128xbf16>, vector<128x512xbf16>, vector<8x512xf32> -> vector<8x512xf32>
    %482 = arith.addf %479, %481 : vector<8x512xf32>
    %483 = arith.addf %482, %17 : vector<8x512xf32>
    %484 = vector.extract_strided_slice %483 {offsets = [0, 0], sizes = [8, 128], strides = [1, 1]} : vector<8x512xf32> to vector<8x128xf32>
    %485 = arith.negf %484 : vector<8x128xf32>
    %486 = math.exp %485 : vector<8x128xf32>
    %cst_140 = arith.constant 1.000000e+00 : f32
    %487 = vector.broadcast %cst_140 : f32 to vector<8x128xf32>
    %488 = arith.addf %487, %486 : vector<8x128xf32>
    %489 = arith.divf %487, %488 : vector<8x128xf32>
    %490 = vector.extract_strided_slice %483 {offsets = [0, 128], sizes = [8, 128], strides = [1, 1]} : vector<8x512xf32> to vector<8x128xf32>
    %491 = arith.negf %490 : vector<8x128xf32>
    %492 = math.exp %491 : vector<8x128xf32>
    %cst_141 = arith.constant 1.000000e+00 : f32
    %493 = vector.broadcast %cst_141 : f32 to vector<8x128xf32>
    %494 = arith.addf %493, %492 : vector<8x128xf32>
    %495 = arith.divf %493, %494 : vector<8x128xf32>
    %496 = vector.extract_strided_slice %483 {offsets = [0, 256], sizes = [8, 128], strides = [1, 1]} : vector<8x512xf32> to vector<8x128xf32>
    %497 = math.tanh %496 : vector<8x128xf32>
    %498 = vector.extract_strided_slice %483 {offsets = [0, 384], sizes = [8, 128], strides = [1, 1]} : vector<8x512xf32> to vector<8x128xf32>
    %499 = arith.negf %498 : vector<8x128xf32>
    %500 = math.exp %499 : vector<8x128xf32>
    %cst_142 = arith.constant 1.000000e+00 : f32
    %501 = vector.broadcast %cst_142 : f32 to vector<8x128xf32>
    %502 = arith.addf %501, %500 : vector<8x128xf32>
    %503 = arith.divf %501, %502 : vector<8x128xf32>
    %504 = arith.mulf %495, %435 : vector<8x128xf32>
    %505 = arith.mulf %489, %497 : vector<8x128xf32>
    %506 = arith.addf %504, %505 : vector<8x128xf32>
    %507 = math.tanh %506 : vector<8x128xf32>
    %508 = arith.mulf %503, %507 : vector<8x128xf32>
    %509 = arith.addf %508, %473 : vector<8x128xf32>
    %510 = arith.truncf %509 : vector<8x128xf32> to vector<8x128xbf16>
    %cst_143 = arith.constant dense<0.000000e+00> : vector<8x128xf32>
    %511 = tpu.matmul %510, %10, %cst_143 {dimension_numbers = #tpu.dot_dimension_numbers<[1], [0], [0], [1], [0, 0, 1, 1], [], []>} : vector<8x128xbf16>, vector<128x128xbf16>, vector<8x128xf32> -> vector<8x128xf32>
    %512 = vector.broadcast %11 : vector<1x128xf32> to vector<8x128xf32>
    %513 = arith.addf %511, %512 : vector<8x128xf32>
    %c0_144 = arith.constant 0 : index
    %c6_145 = arith.constant 6 : index
    %c0_146 = arith.constant 0 : index
    %514 = vector.load %arg15[%c0_144, %c6_145, %c0_146] : memref<8x8x128xf32, #tpu.memory_space<vmem>>, vector<8x1x128xf32>
    %515 = vector.shape_cast %514 : vector<8x1x128xf32> to vector<8x128xf32>
    %516 = vector.shape_cast %513 : vector<8x128xf32> to vector<8x1x128xf32>
    tpu.vector_store %arg15[%c0_144, %c6_145, %c0_146], %516 {strides = array<i32>} : memref<8x8x128xf32, #tpu.memory_space<vmem>>, vector<8x1x128xf32>,
    %517 = arith.truncf %508 : vector<8x128xf32> to vector<8x128xbf16>
    %cst_147 = arith.constant dense<0.000000e+00> : vector<8x128xf32>
    %518 = tpu.matmul %517, %5, %cst_147 {dimension_numbers = #tpu.dot_dimension_numbers<[1], [0], [0], [1], [0, 0, 1, 1], [], []>} : vector<8x128xbf16>, vector<128x128xbf16>, vector<8x128xf32> -> vector<8x128xf32>
    %519 = vector.shape_cast %518 : vector<8x128xf32> to vector<8x1x128xf32>
    %520 = vector.broadcast %519 : vector<8x1x128xf32> to vector<8x16x128xf32>
    %521 = arith.addf %4, %520 : vector<8x16x128xf32>
    %522 = math.tanh %521 : vector<8x16x128xf32>
    %523 = vector.shape_cast %6 : vector<1x128xf32> to vector<1x1x128xf32>
    %524 = vector.broadcast %523 : vector<1x1x128xf32> to vector<8x16x128xf32>
    %525 = arith.mulf %522, %524 : vector<8x16x128xf32>
    %cst_148 = arith.constant dense<0.000000e+00> : vector<8x16xf32>
    %526 = vector.multi_reduction <add>, %525, %cst_148 [2] : vector<8x16x128xf32> to vector<8x16xf32>
    %cst_149 = arith.constant dense<0xFF800000> : vector<8xf32>
    %527 = vector.multi_reduction <maximumf>, %526, %cst_149 [1] : vector<8x16xf32> to vector<8xf32>
    %528 = vector.shape_cast %527 : vector<8xf32> to vector<8x1xf32>
    %529 = vector.broadcast %528 : vector<8x1xf32> to vector<8x16xf32>
    %530 = arith.subf %526, %529 : vector<8x16xf32>
    %531 = math.exp %530 : vector<8x16xf32>
    %cst_150 = arith.constant dense<0.000000e+00> : vector<8xf32>
    %532 = vector.multi_reduction <add>, %531, %cst_150 [1] : vector<8x16xf32> to vector<8xf32>
    %533 = vector.shape_cast %532 : vector<8xf32> to vector<8x1xf32>
    %534 = tpu.reciprocal %533 : vector<8x1xf32> -> vector<8x1xf32>
    %535 = vector.broadcast %534 : vector<8x1xf32> to vector<8x16xf32>
    %536 = arith.mulf %531, %535 : vector<8x16xf32>
    %537 = vector.shape_cast %536 : vector<8x16xf32> to vector<8x16x1xf32>
    %538 = vector.broadcast %537 : vector<8x16x1xf32> to vector<8x16x32xf32>
    %539 = arith.mulf %3, %538 : vector<8x16x32xf32>
    %cst_151 = arith.constant dense<0.000000e+00> : vector<8x32xf32>
    %540 = vector.multi_reduction <add>, %539, %cst_151 [1] : vector<8x16x32xf32> to vector<8x32xf32>
    %541 = arith.truncf %540 : vector<8x32xf32> to vector<8x32xbf16>
    %cst_152 = arith.constant dense<0.000000e+00> : vector<8x256xf32>
    %542 = tpu.matmul %541, %7, %cst_152 {dimension_numbers = #tpu.dot_dimension_numbers<[1], [0], [0], [1], [0, 0, 1, 1], [], []>} : vector<8x32xbf16>, vector<32x256xbf16>, vector<8x256xf32> -> vector<8x256xf32>
    %543 = arith.addf %542, %14 : vector<8x256xf32>
    %544 = vector.extract_strided_slice %543 {offsets = [0, 0], sizes = [8, 128], strides = [1, 1]} : vector<8x256xf32> to vector<8x128xf32>
    %545 = vector.extract_strided_slice %543 {offsets = [0, 128], sizes = [8, 128], strides = [1, 1]} : vector<8x256xf32> to vector<8x128xf32>
    %c7 = arith.constant 7 : index
    %c0_153 = arith.constant 0 : index
    %c0_154 = arith.constant 0 : index
    %546 = vector.load %arg3[%c7, %c0_153, %c0_154] : memref<8x8x128xf32, #tpu.memory_space<vmem>>, vector<1x8x128xf32>
    %547 = vector.shape_cast %546 : vector<1x8x128xf32> to vector<8x128xf32>
    %548 = arith.addf %547, %545 : vector<8x128xf32>
    %549 = arith.truncf %548 : vector<8x128xf32> to vector<8x128xbf16>
    %cst_155 = arith.constant dense<0.000000e+00> : vector<8x512xf32>
    %550 = tpu.matmul %549, %8, %cst_155 {dimension_numbers = #tpu.dot_dimension_numbers<[1], [0], [0], [1], [0, 0, 1, 1], [], []>} : vector<8x128xbf16>, vector<128x512xbf16>, vector<8x512xf32> -> vector<8x512xf32>
    %551 = arith.truncf %508 : vector<8x128xf32> to vector<8x128xbf16>
    %cst_156 = arith.constant dense<0.000000e+00> : vector<8x512xf32>
    %552 = tpu.matmul %551, %9, %cst_156 {dimension_numbers = #tpu.dot_dimension_numbers<[1], [0], [0], [1], [0, 0, 1, 1], [], []>} : vector<8x128xbf16>, vector<128x512xbf16>, vector<8x512xf32> -> vector<8x512xf32>
    %553 = arith.addf %550, %552 : vector<8x512xf32>
    %554 = arith.addf %553, %17 : vector<8x512xf32>
    %555 = vector.extract_strided_slice %554 {offsets = [0, 0], sizes = [8, 128], strides = [1, 1]} : vector<8x512xf32> to vector<8x128xf32>
    %556 = arith.negf %555 : vector<8x128xf32>
    %557 = math.exp %556 : vector<8x128xf32>
    %cst_157 = arith.constant 1.000000e+00 : f32
    %558 = vector.broadcast %cst_157 : f32 to vector<8x128xf32>
    %559 = arith.addf %558, %557 : vector<8x128xf32>
    %560 = arith.divf %558, %559 : vector<8x128xf32>
    %561 = vector.extract_strided_slice %554 {offsets = [0, 128], sizes = [8, 128], strides = [1, 1]} : vector<8x512xf32> to vector<8x128xf32>
    %562 = arith.negf %561 : vector<8x128xf32>
    %563 = math.exp %562 : vector<8x128xf32>
    %cst_158 = arith.constant 1.000000e+00 : f32
    %564 = vector.broadcast %cst_158 : f32 to vector<8x128xf32>
    %565 = arith.addf %564, %563 : vector<8x128xf32>
    %566 = arith.divf %564, %565 : vector<8x128xf32>
    %567 = vector.extract_strided_slice %554 {offsets = [0, 256], sizes = [8, 128], strides = [1, 1]} : vector<8x512xf32> to vector<8x128xf32>
    %568 = math.tanh %567 : vector<8x128xf32>
    %569 = vector.extract_strided_slice %554 {offsets = [0, 384], sizes = [8, 128], strides = [1, 1]} : vector<8x512xf32> to vector<8x128xf32>
    %570 = arith.negf %569 : vector<8x128xf32>
    %571 = math.exp %570 : vector<8x128xf32>
    %cst_159 = arith.constant 1.000000e+00 : f32
    %572 = vector.broadcast %cst_159 : f32 to vector<8x128xf32>
    %573 = arith.addf %572, %571 : vector<8x128xf32>
    %574 = arith.divf %572, %573 : vector<8x128xf32>
    %575 = arith.mulf %566, %506 : vector<8x128xf32>
    %576 = arith.mulf %560, %568 : vector<8x128xf32>
    %577 = arith.addf %575, %576 : vector<8x128xf32>
    %578 = math.tanh %577 : vector<8x128xf32>
    %579 = arith.mulf %574, %578 : vector<8x128xf32>
    %580 = arith.addf %579, %544 : vector<8x128xf32>
    %581 = arith.truncf %580 : vector<8x128xf32> to vector<8x128xbf16>
    %cst_160 = arith.constant dense<0.000000e+00> : vector<8x128xf32>
    %582 = tpu.matmul %581, %10, %cst_160 {dimension_numbers = #tpu.dot_dimension_numbers<[1], [0], [0], [1], [0, 0, 1, 1], [], []>} : vector<8x128xbf16>, vector<128x128xbf16>, vector<8x128xf32> -> vector<8x128xf32>
    %583 = vector.broadcast %11 : vector<1x128xf32> to vector<8x128xf32>
    %584 = arith.addf %582, %583 : vector<8x128xf32>
    %c0_161 = arith.constant 0 : index
    %c7_162 = arith.constant 7 : index
    %c0_163 = arith.constant 0 : index
    %585 = vector.load %arg15[%c0_161, %c7_162, %c0_163] : memref<8x8x128xf32, #tpu.memory_space<vmem>>, vector<8x1x128xf32>
    %586 = vector.shape_cast %585 : vector<8x1x128xf32> to vector<8x128xf32>
    %587 = vector.shape_cast %584 : vector<8x128xf32> to vector<8x1x128xf32>
    tpu.vector_store %arg15[%c0_161, %c7_162, %c0_163], %587 {strides = array<i32>} : memref<8x8x128xf32, #tpu.memory_space<vmem>>, vector<8x1x128xf32>,
    %c0_164 = arith.constant 0 : index
    %c0_165 = arith.constant 0 : index
    %588 = vector.load %arg16[%c0_164, %c0_165] : memref<8x128xf32, #tpu.memory_space<vmem>>, vector<8x128xf32>
    tpu.vector_store %arg16[%c0_164, %c0_165], %579 {strides = array<i32>} : memref<8x128xf32, #tpu.memory_space<vmem>>, vector<8x128xf32>,
    %c0_166 = arith.constant 0 : index
    %c0_167 = arith.constant 0 : index
    %589 = vector.load %arg17[%c0_166, %c0_167] : memref<8x128xf32, #tpu.memory_space<vmem>>, vector<8x128xf32>
    tpu.vector_store %arg17[%c0_166, %c0_167], %577 {strides = array<i32>} : memref<8x128xf32, #tpu.memory_space<vmem>>, vector<8x128xf32>,
    return
  }
  func.func @transform_0(%arg0: i32) -> (i32, i32, i32) {
    %c0_i32 = arith.constant 0 : i32
    %c0_i32_0 = arith.constant 0 : i32
    %c0_i32_1 = arith.constant 0 : i32
    %c0_i32_2 = arith.constant 0 : i32
    return %c0_i32, %c0_i32_0, %c0_i32_1 : i32, i32, i32
  }
  func.func @transform_1(%arg0: i32) -> (i32, i32, i32) {
    %c0_i32 = arith.constant 0 : i32
    %c0_i32_0 = arith.constant 0 : i32
    %c0_i32_1 = arith.constant 0 : i32
    %c0_i32_2 = arith.constant 0 : i32
    return %c0_i32, %c0_i32_0, %c0_i32_1 : i32, i32, i32
  }
  func.func @transform_2(%arg0: i32) -> (i32, i32, i32) {
    %c0_i32 = arith.constant 0 : i32
    %c0_i32_0 = arith.constant 0 : i32
    %c0_i32_1 = arith.constant 0 : i32
    return %arg0, %c0_i32, %c0_i32_0 : i32, i32, i32
  }
  func.func @transform_3(%arg0: i32) -> (i32, i32) {
    %c0_i32 = arith.constant 0 : i32
    %c0_i32_0 = arith.constant 0 : i32
    %c0_i32_1 = arith.constant 0 : i32
    return %c0_i32, %c0_i32_0 : i32, i32
  }
  func.func @transform_4(%arg0: i32) -> (i32, i32) {
    %c0_i32 = arith.constant 0 : i32
    %c0_i32_0 = arith.constant 0 : i32
    %c0_i32_1 = arith.constant 0 : i32
    return %c0_i32, %c0_i32_0 : i32, i32
  }
  func.func @transform_5(%arg0: i32) -> (i32, i32) {
    %c0_i32 = arith.constant 0 : i32
    %c0_i32_0 = arith.constant 0 : i32
    %c0_i32_1 = arith.constant 0 : i32
    return %c0_i32, %c0_i32_0 : i32, i32
  }
  func.func @transform_6(%arg0: i32) -> (i32, i32) {
    %c0_i32 = arith.constant 0 : i32
    %c0_i32_0 = arith.constant 0 : i32
    %c0_i32_1 = arith.constant 0 : i32
    return %c0_i32, %c0_i32_0 : i32, i32
  }
  func.func @transform_7(%arg0: i32) -> (i32, i32) {
    %c0_i32 = arith.constant 0 : i32
    %c0_i32_0 = arith.constant 0 : i32
    %c0_i32_1 = arith.constant 0 : i32
    return %c0_i32, %c0_i32_0 : i32, i32
  }
  func.func @transform_8(%arg0: i32) -> (i32, i32) {
    %c0_i32 = arith.constant 0 : i32
    %c0_i32_0 = arith.constant 0 : i32
    %c0_i32_1 = arith.constant 0 : i32
    return %c0_i32, %c0_i32_0 : i32, i32
  }
  func.func @transform_9(%arg0: i32) -> (i32, i32) {
    %c0_i32 = arith.constant 0 : i32
    %c0_i32_0 = arith.constant 0 : i32
    %c0_i32_1 = arith.constant 0 : i32
    return %c0_i32, %c0_i32_0 : i32, i32
  }
  func.func @transform_10(%arg0: i32) -> (i32, i32) {
    %c0_i32 = arith.constant 0 : i32
    %c0_i32_0 = arith.constant 0 : i32
    %c0_i32_1 = arith.constant 0 : i32
    return %c0_i32, %c0_i32_0 : i32, i32
  }
  func.func @transform_11(%arg0: i32) -> (i32, i32) {
    %c0_i32 = arith.constant 0 : i32
    %c0_i32_0 = arith.constant 0 : i32
    %c0_i32_1 = arith.constant 0 : i32
    return %c0_i32, %c0_i32_0 : i32, i32
  }
  func.func @transform_12(%arg0: i32) -> (i32, i32) {
    %c0_i32 = arith.constant 0 : i32
    %c0_i32_0 = arith.constant 0 : i32
    %c0_i32_1 = arith.constant 0 : i32
    return %c0_i32, %c0_i32_0 : i32, i32
  }
  func.func @transform_13(%arg0: i32) -> (i32, i32) {
    %c0_i32 = arith.constant 0 : i32
    %c0_i32_0 = arith.constant 0 : i32
    %c0_i32_1 = arith.constant 0 : i32
    return %c0_i32, %c0_i32_0 : i32, i32
  }
  func.func @transform_14(%arg0: i32) -> (i32, i32, i32) {
    %c0_i32 = arith.constant 0 : i32
    %c0_i32_0 = arith.constant 0 : i32
    %c0_i32_1 = arith.constant 0 : i32
    return %c0_i32, %arg0, %c0_i32_0 : i32, i32, i32
  }
}

</mosaic_0001>

<llo_original>
// kernel: tpu_custom_call.1
$region0: #{tpu_custom_call.1}
  #allocation0 [shape = 'u32[]', space=smem, size = 0x4, offset = 0x4, fixed_abs, tag = 'smem constant byte address 0x4 - core index']
  #allocation1 [shape = 'u32[144,128]{1,0:T(1,128)}', space=vmem, size = 0x12000, scoped, tag = 'internal scratch']
  #allocation2 [shape = 'f32[8,128]{1,0:T(8,128)}', space=vmem, size = 0x1000, scoped, tag = 'scratch operand']
  #allocation3 [shape = 'f32[8,128]{1,0:T(8,128)}', space=vmem, size = 0x1000, scoped, tag = 'scratch operand']
  %s0 = inlined_call_operand.hbm [shape: f32[8,16,128], index: 0, kind: input, shape index: {}]
  %s1 = inlined_call_operand.hbm [shape: f32[8,16,32], index: 1, kind: input, shape index: {}]
  %s2 = inlined_call_operand.hbm [shape: f32[8,8,128], index: 2, kind: input, shape index: {}]
  %s3 = inlined_call_operand.vmem [shape: f32[8,128], index: 3, kind: input, shape index: {}]
  %s4 = inlined_call_operand.hbm [shape: f32[8,128], index: 4, kind: input, shape index: {}]
  %s5 = inlined_call_operand.hbm [shape: bf16[128,128], index: 5, kind: input, shape index: {}]
  %s6 = inlined_call_operand.vmem [shape: f32[1,128], index: 6, kind: input, shape index: {}]
  %s7 = inlined_call_operand.hbm [shape: bf16[32,256], index: 7, kind: input, shape index: {}]
  %s8 = inlined_call_operand.vmem [shape: f32[1,256], index: 8, kind: input, shape index: {}]
  %s9 = inlined_call_operand.hbm [shape: bf16[128,512], index: 9, kind: input, shape index: {}]
  %s10 = inlined_call_operand.hbm [shape: bf16[128,512], index: 10, kind: input, shape index: {}]
  %s11 = inlined_call_operand.vmem [shape: f32[1,512], index: 11, kind: input, shape index: {}]
  %s12 = inlined_call_operand.hbm [shape: bf16[128,128], index: 12, kind: input, shape index: {}]
  %s13 = inlined_call_operand.vmem [shape: f32[1,128], index: 13, kind: input, shape index: {}]
  %s14 = inlined_call_operand.hbm [shape: f32[8,8,128], index: 14, kind: output, shape index: {}]
  %s15 = sld [smem:[#allocation0]]
  $region106: #{tpu_custom_call.1} parent=0
    _
  %s17 = ssub.s32 1, %s15
  %s18 = scalar_select 0, %s17, %s15
  $region1: #{tpu_custom_call.1} parent=0
    #allocation4 [shape = 'u8[65536]{0}', space=vmem, size = 0x10000, scoped, tag = 'input window, operand 0, single buffered']
    #allocation5 [shape = 's32[1]{0}', space=sflag, size = 0x4, scoped, tag = 'scoped memory for tpu_custom_call.1']
    #allocation6 [shape = 's32[1]{0}', space=sflag, size = 0x4, scoped, tag = 'scoped memory for tpu_custom_call.1']
    #allocation7 [shape = 'u8[65536]{0}', space=vmem, size = 0x10000, scoped, tag = 'input window, operand 1, single buffered']
    #allocation8 [shape = 's32[1]{0}', space=sflag, size = 0x4, scoped, tag = 'scoped memory for tpu_custom_call.1']
    #allocation9 [shape = 'u8[32768]{0}', space=vmem, size = 0x8000, scoped, tag = 'input window, operand 2, single buffered']
    #allocation10 [shape = 'u8[4096]{0}', space=vmem, size = 0x1000, scoped, tag = 'input window, operand 4, single buffered']
    #allocation11 [shape = 's32[1]{0}', space=sflag, size = 0x4, scoped, tag = 'scoped memory for tpu_custom_call.1']
    #allocation12 [shape = 'u8[32768]{0}', space=vmem, size = 0x8000, scoped, tag = 'input window, operand 5, single buffered']
    #allocation13 [shape = 'u8[16384]{0}', space=vmem, size = 0x4000, scoped, tag = 'input window, operand 7, single buffered']
    #allocation14 [shape = 's32[1]{0}', space=sflag, size = 0x4, scoped, tag = 'scoped memory for tpu_custom_call.1']
    #allocation15 [shape = 'u8[131072]{0}', space=vmem, size = 0x20000, scoped, tag = 'input window, operand 9, single buffered']
    #allocation16 [shape = 'u8[131072]{0}', space=vmem, size = 0x20000, scoped, tag = 'input window, operand 10, single buffered']
    #allocation17 [shape = 's32[1]{0}', space=sflag, size = 0x4, scoped, tag = 'scoped memory for tpu_custom_call.1']
    #allocation18 [shape = 'u8[32768]{0}', space=vmem, size = 0x8000, scoped, tag = 'input window, operand 12, single buffered']
    #allocation19 [shape = 'u8[32768]{0}', space=vmem, size = 0x8000, scoped, tag = 'output window, operand 0, single buffered']
    %19 = vsyncpa [#allocation5], 0
    %20 = vsyncpa [#allocation8], 0
    %21 = vsyncpa [#allocation11], 0
    %22 = vsyncpa [#allocation14], 0
    %23 = vsyncpa [#allocation17], 0
    %24 = vsyncpa [#allocation6], 0
    // Predicated region
    $region2: #{tpu_custom_call.1} parent=1 // pred_check
      _
    $region3: #{tpu_custom_call.1} parent=1 // pred_check_branch
      %26 = sbr.rel (0) target = $region5
    $region4: #{tpu_custom_call.1} parent=1 // pred_region
      %s28 = ssub.s32 2048, 2048
      %29 = vsyncadd [#allocation5], %s28
      %s30 = sshll.u32 [#allocation4], 4
      %s31 = int_to_ptr.vmem [resolvable:$true] %s30
      %36 = dma.hbm_to_vmem [thread:$0]  %s0, 2048, %s31, [#allocation5], 128, 128, 8
    $region5: #{tpu_custom_call.1} parent=1 // pred_fallthru
      _
    // Predicated region
    $region6: #{tpu_custom_call.1} parent=1 // pred_check
      _
    $region7: #{tpu_custom_call.1} parent=1 // pred_check_branch
      %38 = sbr.rel (0) target = $region9
    $region8: #{tpu_custom_call.1} parent=1 // pred_region
      %s40 = ssub.s32 2048, 2048
      %41 = vsyncadd [#allocation8], %s40
      %s42 = sshll.u32 [#allocation7], 4
      %s43 = int_to_ptr.vmem [resolvable:$true] %s42
      %48 = dma.hbm_to_vmem [thread:$0]  %s1, 2048, %s43, [#allocation8], 128, 128, 8
    $region9: #{tpu_custom_call.1} parent=1 // pred_fallthru
      _
    // Predicated region
    $region10: #{tpu_custom_call.1} parent=1 // pred_check
      _
    $region11: #{tpu_custom_call.1} parent=1 // pred_check_branch
      %50 = sbr.rel (0) target = $region13
    $region12: #{tpu_custom_call.1} parent=1 // pred_region
      %s52 = ssub.s32 1024, 1024
      %53 = vsyncadd [#allocation8], %s52
      %s54 = sshll.u32 [#allocation9], 4
      %s55 = int_to_ptr.vmem [resolvable:$true] %s54
      %60 = dma.hbm_to_vmem [thread:$0]  %s2, 1024, %s55, [#allocation8], 128, 128, 8
    $region13: #{tpu_custom_call.1} parent=1 // pred_fallthru
      _
    // Predicated region
    $region14: #{tpu_custom_call.1} parent=1 // pred_check
      _
    $region15: #{tpu_custom_call.1} parent=1 // pred_check_branch
      %62 = sbr.rel (0) target = $region17
    $region16: #{tpu_custom_call.1} parent=1 // pred_region
      _
    $region17: #{tpu_custom_call.1} parent=1 // pred_fallthru
      _
    // Predicated region
    $region18: #{tpu_custom_call.1} parent=1 // pred_check
      _
    $region19: #{tpu_custom_call.1} parent=1 // pred_check_branch
      %64 = sbr.rel (0) target = $region21
    $region20: #{tpu_custom_call.1} parent=1 // pred_region
      %s66 = ssub.s32 128, 128
      %67 = vsyncadd [#allocation11], %s66
      %s69 = sshll.u32 [#allocation10], 4
      %s70 = int_to_ptr.vmem [resolvable:$true] %s69
      %72 = dma.hbm_to_vmem [thread:$0]  %s4, 128, %s70, [#allocation11]
    $region21: #{tpu_custom_call.1} parent=1 // pred_fallthru
      _
    // Predicated region
    $region22: #{tpu_custom_call.1} parent=1 // pred_check
      _
    $region23: #{tpu_custom_call.1} parent=1 // pred_check_branch
      %74 = sbr.rel (0) target = $region25
    $region24: #{tpu_custom_call.1} parent=1 // pred_region
      %s76 = ssub.s32 1024, 1024
      %77 = vsyncadd [#allocation11], %s76
      %s78 = sshll.u32 [#allocation12], 4
      %s79 = int_to_ptr.vmem [resolvable:$true] %s78
      %84 = dma.hbm_to_vmem [thread:$0]  %s5, 1024, %s79, [#allocation11], 64, 64, 4
    $region25: #{tpu_custom_call.1} parent=1 // pred_fallthru
      _
    // Predicated region
    $region26: #{tpu_custom_call.1} parent=1 // pred_check
      _
    $region27: #{tpu_custom_call.1} parent=1 // pred_check_branch
      %86 = sbr.rel (0) target = $region29
    $region28: #{tpu_custom_call.1} parent=1 // pred_region
      _
    $region29: #{tpu_custom_call.1} parent=1 // pred_fallthru
      _
    // Predicated region
    $region30: #{tpu_custom_call.1} parent=1 // pred_check
      _
    $region31: #{tpu_custom_call.1} parent=1 // pred_check_branch
      %88 = sbr.rel (0) target = $region33
    $region32: #{tpu_custom_call.1} parent=1 // pred_region
      %s90 = ssub.s32 512, 512
      %91 = vsyncadd [#allocation14], %s90
      %s92 = sshll.u32 [#allocation13], 4
      %s93 = int_to_ptr.vmem [resolvable:$true] %s92
      %98 = dma.hbm_to_vmem [thread:$0]  %s7, 512, %s93, [#allocation14], 128, 128, 8
    $region33: #{tpu_custom_call.1} parent=1 // pred_fallthru
      _
    // Predicated region
    $region34: #{tpu_custom_call.1} parent=1 // pred_check
      _
    $region35: #{tpu_custom_call.1} parent=1 // pred_check_branch
      %100 = sbr.rel (0) target = $region37
    $region36: #{tpu_custom_call.1} parent=1 // pred_region
      _
    $region37: #{tpu_custom_call.1} parent=1 // pred_fallthru
      _
    // Predicated region
    $region38: #{tpu_custom_call.1} parent=1 // pred_check
      _
    $region39: #{tpu_custom_call.1} parent=1 // pred_check_branch
      %102 = sbr.rel (0) target = $region41
    $region40: #{tpu_custom_call.1} parent=1 // pred_region
      %s104 = ssub.s32 4096, 4096
      %105 = vsyncadd [#allocation14], %s104
      %s106 = sshll.u32 [#allocation15], 4
      %s107 = int_to_ptr.vmem [resolvable:$true] %s106
      %112 = dma.hbm_to_vmem [thread:$0]  %s9, 4096, %s107, [#allocation14], 256, 256, 16
    $region41: #{tpu_custom_call.1} parent=1 // pred_fallthru
      _
    // Predicated region
    $region42: #{tpu_custom_call.1} parent=1 // pred_check
      _
    $region43: #{tpu_custom_call.1} parent=1 // pred_check_branch
      %114 = sbr.rel (0) target = $region45
    $region44: #{tpu_custom_call.1} parent=1 // pred_region
      %s116 = ssub.s32 4096, 4096
      %117 = vsyncadd [#allocation17], %s116
      %s118 = sshll.u32 [#allocation16], 4
      %s119 = int_to_ptr.vmem [resolvable:$true] %s118
      %124 = dma.hbm_to_vmem [thread:$0]  %s10, 4096, %s119, [#allocation17], 256, 256, 16
    $region45: #{tpu_custom_call.1} parent=1 // pred_fallthru
      _
    // Predicated region
    $region46: #{tpu_custom_call.1} parent=1 // pred_check
      _
    $region47: #{tpu_custom_call.1} parent=1 // pred_check_branch
      %126 = sbr.rel (0) target = $region49
    $region48: #{tpu_custom_call.1} parent=1 // pred_region
      _
    $region49: #{tpu_custom_call.1} parent=1 // pred_fallthru
      _
    // Predicated region
    $region50: #{tpu_custom_call.1} parent=1 // pred_check
      _
    $region51: #{tpu_custom_call.1} parent=1 // pred_check_branch
      %128 = sbr.rel (0) target = $region53
    $region52: #{tpu_custom_call.1} parent=1 // pred_region
      %s130 = ssub.s32 1024, 1024
      %131 = vsyncadd [#allocation17], %s130
      %s132 = sshll.u32 [#allocation18], 4
      %s133 = int_to_ptr.vmem [resolvable:$true] %s132
      %138 = dma.hbm_to_vmem [thread:$0]  %s12, 1024, %s133, [#allocation17], 64, 64, 4
    $region53: #{tpu_custom_call.1} parent=1 // pred_fallthru
      _
    // Predicated region
    $region54: #{tpu_custom_call.1} parent=1 // pred_check
      _
    $region55: #{tpu_custom_call.1} parent=1 // pred_check_branch
      %140 = sbr.rel (0) target = $region57
    $region56: #{tpu_custom_call.1} parent=1 // pred_region
      _
    $region57: #{tpu_custom_call.1} parent=1 // pred_fallthru
      _
    // Predicated region
    $region58: #{tpu_custom_call.1} parent=1 // pred_check
      _
    $region59: #{tpu_custom_call.1} parent=1 // pred_check_branch
      %142 = sbr.rel (0) target = $region61
    $region60: #{tpu_custom_call.1} parent=1 // pred_region
      %143 = dma.done [#allocation5], 2048
    $region61: #{tpu_custom_call.1} parent=1 // pred_fallthru
      _
    // Predicated region
    $region62: #{tpu_custom_call.1} parent=1 // pred_check
      _
    $region63: #{tpu_custom_call.1} parent=1 // pred_check_branch
      %145 = sbr.rel (0) target = $region65
    $region64: #{tpu_custom_call.1} parent=1 // pred_region
      %146 = dma.done [#allocation8], 2048
    $region65: #{tpu_custom_call.1} parent=1 // pred_fallthru
      _
    // Predicated region
    $region66: #{tpu_custom_call.1} parent=1 // pred_check
      _
    $region67: #{tpu_custom_call.1} parent=1 // pred_check_branch
      %148 = sbr.rel (0) target = $region69
    $region68: #{tpu_custom_call.1} parent=1 // pred_region
      %149 = dma.done [#allocation8], 1024
    $region69: #{tpu_custom_call.1} parent=1 // pred_fallthru
      _
    // Predicated region
    $region70: #{tpu_custom_call.1} parent=1 // pred_check
      _
    $region71: #{tpu_custom_call.1} parent=1 // pred_check_branch
      %151 = sbr.rel (0) target = $region73
    $region72: #{tpu_custom_call.1} parent=1 // pred_region
      %152 = dma.done [#allocation11], 128
    $region73: #{tpu_custom_call.1} parent=1 // pred_fallthru
      _
    // Predicated region
    $region74: #{tpu_custom_call.1} parent=1 // pred_check
      _
    $region75: #{tpu_custom_call.1} parent=1 // pred_check_branch
      %154 = sbr.rel (0) target = $region77
    $region76: #{tpu_custom_call.1} parent=1 // pred_region
      %155 = dma.done [#allocation11], 1024
    $region77: #{tpu_custom_call.1} parent=1 // pred_fallthru
      _
    // Predicated region
    $region78: #{tpu_custom_call.1} parent=1 // pred_check
      _
    $region79: #{tpu_custom_call.1} parent=1 // pred_check_branch
      %157 = sbr.rel (0) target = $region81
    $region80: #{tpu_custom_call.1} parent=1 // pred_region
      %158 = dma.done [#allocation14], 512
    $region81: #{tpu_custom_call.1} parent=1 // pred_fallthru
      _
    // Predicated region
    $region82: #{tpu_custom_call.1} parent=1 // pred_check
      _
    $region83: #{tpu_custom_call.1} parent=1 // pred_check_branch
      %160 = sbr.rel (0) target = $region85
    $region84: #{tpu_custom_call.1} parent=1 // pred_region
      %161 = dma.done [#allocation14], 4096
    $region85: #{tpu_custom_call.1} parent=1 // pred_fallthru
      _
    // Predicated region
    $region86: #{tpu_custom_call.1} parent=1 // pred_check
      _
    $region87: #{tpu_custom_call.1} parent=1 // pred_check_branch
      %163 = sbr.rel (0) target = $region89
    $region88: #{tpu_custom_call.1} parent=1 // pred_region
      %164 = dma.done [#allocation17], 4096
    $region89: #{tpu_custom_call.1} parent=1 // pred_fallthru
      _
    // Predicated region
    $region90: #{tpu_custom_call.1} parent=1 // pred_check
      _
    $region91: #{tpu_custom_call.1} parent=1 // pred_check_branch
      %166 = sbr.rel (0) target = $region93
    $region92: #{tpu_custom_call.1} parent=1 // pred_region
      %167 = dma.done [#allocation17], 1024
    $region93: #{tpu_custom_call.1} parent=1 // pred_fallthru
      _
    %p169 = scmp.eq.s32.totalorder 0, 0
    // Predicated region
    $region94: #{tpu_custom_call.1} parent=1 // pred_check
      %p170 = pneg %p169
    $region95: #{tpu_custom_call.1} parent=1 // pred_check_branch
      %172 = sbr.rel (%p170) target = $region97
    $region96: #{tpu_custom_call.1} parent=1 // pred_region
      %v173 = vld [vmem:[%s3] sm:$0xff]
      %174 = vst [vmem:[#allocation2] sm:$0xff] %v173
      %v175 = vld [vmem:[#allocation10] sm:$0xff]
      %176 = vst [vmem:[#allocation3] sm:$0xff] %v175
    $region97: #{tpu_custom_call.1} parent=1 // pred_fallthru
      _
    %v177 = vld [vmem:[#allocation7] sm:$0xff]
    %v178 = vld [vmem:[#allocation7 + $0x8] sm:$0xff]
    %v179 = vld [vmem:[#allocation7 + $0x10] sm:$0xff]
    %v180 = vld [vmem:[#allocation7 + $0x18] sm:$0xff]
    %v181 = vld [vmem:[#allocation7 + $0x20] sm:$0xff]
    %v182 = vld [vmem:[#allocation7 + $0x28] sm:$0xff]
    %v183 = vld [vmem:[#allocation7 + $0x30] sm:$0xff]
    %v184 = vld [vmem:[#allocation7 + $0x38] sm:$0xff]
    %v185 = vld [vmem:[#allocation7 + $0x40] sm:$0xff]
    %v186 = vld [vmem:[#allocation7 + $0x48] sm:$0xff]
    %v187 = vld [vmem:[#allocation7 + $0x50] sm:$0xff]
    %v188 = vld [vmem:[#allocation7 + $0x58] sm:$0xff]
    %v189 = vld [vmem:[#allocation7 + $0x60] sm:$0xff]
    %v190 = vld [vmem:[#allocation7 + $0x68] sm:$0xff]
    %v191 = vld [vmem:[#allocation7 + $0x70] sm:$0xff]
    %v192 = vld [vmem:[#allocation7 + $0x78] sm:$0xff]
    %v193 = vld [vmem:[#allocation4] sm:$0xff]
    %v194 = vld [vmem:[#allocation4 + $0x8] sm:$0xff]
    %v195 = vld [vmem:[#allocation4 + $0x10] sm:$0xff]
    %v196 = vld [vmem:[#allocation4 + $0x18] sm:$0xff]
    %v197 = vld [vmem:[#allocation4 + $0x20] sm:$0xff]
    %v198 = vld [vmem:[#allocation4 + $0x28] sm:$0xff]
    %v199 = vld [vmem:[#allocation4 + $0x30] sm:$0xff]
    %v200 = vld [vmem:[#allocation4 + $0x38] sm:$0xff]
    %v201 = vld [vmem:[#allocation4 + $0x40] sm:$0xff]
    %v202 = vld [vmem:[#allocation4 + $0x48] sm:$0xff]
    %v203 = vld [vmem:[#allocation4 + $0x50] sm:$0xff]
    %v204 = vld [vmem:[#allocation4 + $0x58] sm:$0xff]
    %v205 = vld [vmem:[#allocation4 + $0x60] sm:$0xff]
    %v206 = vld [vmem:[#allocation4 + $0x68] sm:$0xff]
    %v207 = vld [vmem:[#allocation4 + $0x70] sm:$0xff]
    %v208 = vld [vmem:[#allocation4 + $0x78] sm:$0xff]
    %v209 = vld [vmem:[#allocation12] sm:$0xf]
    %v210 = vld [vmem:[#allocation12 + $0x4] sm:$0xf]
    %v211 = vld [vmem:[#allocation12 + $0x8] sm:$0xf]
    %v212 = vld [vmem:[#allocation12 + $0xc] sm:$0xf]
    %v213 = vld [vmem:[#allocation12 + $0x10] sm:$0xf]
    %v214 = vld [vmem:[#allocation12 + $0x14] sm:$0xf]
    %v215 = vld [vmem:[#allocation12 + $0x18] sm:$0xf]
    %v216 = vld [vmem:[#allocation12 + $0x1c] sm:$0xf]
    %v217 = vld [vmem:[#allocation12 + $0x20] sm:$0xf]
    %v218 = vld [vmem:[#allocation12 + $0x24] sm:$0xf]
    %v219 = vld [vmem:[#allocation12 + $0x28] sm:$0xf]
    %v220 = vld [vmem:[#allocation12 + $0x2c] sm:$0xf]
    %v221 = vld [vmem:[#allocation12 + $0x30] sm:$0xf]
    %v222 = vld [vmem:[#allocation12 + $0x34] sm:$0xf]
    %v223 = vld [vmem:[#allocation12 + $0x38] sm:$0xf]
    %v224 = vld [vmem:[#allocation12 + $0x3c] sm:$0xf]
    %v225 = vld [vmem:[%s6] sm:$0x1]
    %v226 = vld [vmem:[#allocation13] sm:$0xff]
    %v227 = vld [vmem:[#allocation13 + $0x8] sm:$0xff]
    %v228 = vld [vmem:[#allocation13 + $0x10] sm:$0xff]
    %v229 = vld [vmem:[#allocation13 + $0x18] sm:$0xff]
    %v230 = vld [vmem:[#allocation15] sm:$0xff]
    %v231 = vld [vmem:[#allocation15 + $0x8] sm:$0xff]
    %v232 = vld [vmem:[#allocation15 + $0x10] sm:$0xff]
    %v233 = vld [vmem:[#allocation15 + $0x18] sm:$0xff]
    %v234 = vld [vmem:[#allocation15 + $0x20] sm:$0xff]
    %v235 = vld [vmem:[#allocation15 + $0x28] sm:$0xff]
    %v236 = vld [vmem:[#allocation15 + $0x30] sm:$0xff]
    %v237 = vld [vmem:[#allocation15 + $0x38] sm:$0xff]
    %v238 = vld [vmem:[#allocation15 + $0x40] sm:$0xff]
    %v239 = vld [vmem:[#allocation15 + $0x48] sm:$0xff]
    %v240 = vld [vmem:[#allocation15 + $0x50] sm:$0xff]
    %v241 = vld [vmem:[#allocation15 + $0x58] sm:$0xff]
    %v242 = vld [vmem:[#allocation15 + $0x60] sm:$0xff]
    %v243 = vld [vmem:[#allocation15 + $0x68] sm:$0xff]
    %v244 = vld [vmem:[#allocation15 + $0x70] sm:$0xff]
    %v245 = vld [vmem:[#allocation15 + $0x78] sm:$0xff]
    %v246 = vld [vmem:[#allocation15 + $0x80] sm:$0xff]
    %v247 = vld [vmem:[#allocation15 + $0x88] sm:$0xff]
    %v248 = vld [vmem:[#allocation15 + $0x90] sm:$0xff]
    %v249 = vld [vmem:[#allocation15 + $0x98] sm:$0xff]
    %v250 = vld [vmem:[#allocation15 + $0xa0] sm:$0xff]
    %v251 = vld [vmem:[#allocation15 + $0xa8] sm:$0xff]
    %v252 = vld [vmem:[#allocation15 + $0xb0] sm:$0xff]
    %v253 = vld [vmem:[#allocation15 + $0xb8] sm:$0xff]
    %v254 = vld [vmem:[#allocation15 + $0xc0] sm:$0xff]
    %v255 = vld [vmem:[#allocation15 + $0xc8] sm:$0xff]
    %v256 = vld [vmem:[#allocation15 + $0xd0] sm:$0xff]
    %v257 = vld [vmem:[#allocation15 + $0xd8] sm:$0xff]
    %v258 = vld [vmem:[#allocation15 + $0xe0] sm:$0xff]
    %v259 = vld [vmem:[#allocation15 + $0xe8] sm:$0xff]
    %v260 = vld [vmem:[#allocation15 + $0xf0] sm:$0xff]
    %v261 = vld [vmem:[#allocation15 + $0xf8] sm:$0xff]
    %v262 = vld [vmem:[#allocation16] sm:$0xff]
    %v263 = vld [vmem:[#allocation16 + $0x8] sm:$0xff]
    %v264 = vld [vmem:[#allocation16 + $0x10] sm:$0xff]
    %v265 = vld [vmem:[#allocation16 + $0x18] sm:$0xff]
    %v266 = vld [vmem:[#allocation16 + $0x20] sm:$0xff]
    %v267 = vld [vmem:[#allocation16 + $0x28] sm:$0xff]
    %v268 = vld [vmem:[#allocation16 + $0x30] sm:$0xff]
    %v269 = vld [vmem:[#allocation16 + $0x38] sm:$0xff]
    %v270 = vld [vmem:[#allocation16 + $0x40] sm:$0xff]
    %v271 = vld [vmem:[#allocation16 + $0x48] sm:$0xff]
    %v272 = vld [vmem:[#allocation16 + $0x50] sm:$0xff]
    %v273 = vld [vmem:[#allocation16 + $0x58] sm:$0xff]
    %v274 = vld [vmem:[#allocation16 + $0x60] sm:$0xff]
    %v275 = vld [vmem:[#allocation16 + $0x68] sm:$0xff]
    %v276 = vld [vmem:[#allocation16 + $0x70] sm:$0xff]
    %v277 = vld [vmem:[#allocation16 + $0x78] sm:$0xff]
    %v278 = vld [vmem:[#allocation16 + $0x80] sm:$0xff]
    %v279 = vld [vmem:[#allocation16 + $0x88] sm:$0xff]
    %v280 = vld [vmem:[#allocation16 + $0x90] sm:$0xff]
    %v281 = vld [vmem:[#allocation16 + $0x98] sm:$0xff]
    %v282 = vld [vmem:[#allocation16 + $0xa0] sm:$0xff]
    %v283 = vld [vmem:[#allocation16 + $0xa8] sm:$0xff]
    %v284 = vld [vmem:[#allocation16 + $0xb0] sm:$0xff]
    %v285 = vld [vmem:[#allocation16 + $0xb8] sm:$0xff]
    %v286 = vld [vmem:[#allocation16 + $0xc0] sm:$0xff]
    %v287 = vld [vmem:[#allocation16 + $0xc8] sm:$0xff]
    %v288 = vld [vmem:[#allocation16 + $0xd0] sm:$0xff]
    %v289 = vld [vmem:[#allocation16 + $0xd8] sm:$0xff]
    %v290 = vld [vmem:[#allocation16 + $0xe0] sm:$0xff]
    %v291 = vld [vmem:[#allocation16 + $0xe8] sm:$0xff]
    %v292 = vld [vmem:[#allocation16 + $0xf0] sm:$0xff]
    %v293 = vld [vmem:[#allocation16 + $0xf8] sm:$0xff]
    %v294 = vld [vmem:[#allocation18] sm:$0xf]
    %v295 = vld [vmem:[#allocation18 + $0x4] sm:$0xf]
    %v296 = vld [vmem:[#allocation18 + $0x8] sm:$0xf]
    %v297 = vld [vmem:[#allocation18 + $0xc] sm:$0xf]
    %v298 = vld [vmem:[#allocation18 + $0x10] sm:$0xf]
    %v299 = vld [vmem:[#allocation18 + $0x14] sm:$0xf]
    %v300 = vld [vmem:[#allocation18 + $0x18] sm:$0xf]
    %v301 = vld [vmem:[#allocation18 + $0x1c] sm:$0xf]
    %v302 = vld [vmem:[#allocation18 + $0x20] sm:$0xf]
    %v303 = vld [vmem:[#allocation18 + $0x24] sm:$0xf]
    %v304 = vld [vmem:[#allocation18 + $0x28] sm:$0xf]
    %v305 = vld [vmem:[#allocation18 + $0x2c] sm:$0xf]
    %v306 = vld [vmem:[#allocation18 + $0x30] sm:$0xf]
    %v307 = vld [vmem:[#allocation18 + $0x34] sm:$0xf]
    %v308 = vld [vmem:[#allocation18 + $0x38] sm:$0xf]
    %v309 = vld [vmem:[#allocation18 + $0x3c] sm:$0xf]
    %v310 = vld [vmem:[%s13] sm:$0x1]
    %v311 = vld [vmem:[%s8] sm:$0x3]
    %v313 = vlaneseq
    %v314 = vshrl.u32 %v313, 7
    %v315 = vsub.s32 0, %v314
    %v316 = vrot.slane %v311, %v315
    %v317 = vlaneseq
    %v318 = vshrl.u32 %v317, 7
    %v319 = vsub.s32 1, %v318
    %v320 = vrot.slane %v311, %v319
    %v323 = vld [vmem:[%s11] sm:$0xf]
    %v325 = vlaneseq
    %v326 = vshrl.u32 %v325, 7
    %v327 = vsub.s32 0, %v326
    %v328 = vrot.slane %v323, %v327
    %v329 = vlaneseq
    %v330 = vshrl.u32 %v329, 7
    %v331 = vsub.s32 1, %v330
    %v332 = vrot.slane %v323, %v331
    %v333 = vlaneseq
    %v334 = vshrl.u32 %v333, 7
    %v335 = vsub.s32 2, %v334
    %v336 = vrot.slane %v323, %v335
    %v337 = vlaneseq
    %v338 = vshrl.u32 %v337, 7
    %v339 = vsub.s32 3, %v338
    %v340 = vrot.slane %v323, %v339
    %v345 = vld [vmem:[#allocation2] sm:$0xff]
    %v346 = vld [vmem:[#allocation3] sm:$0xff]
    %v347 = vpack.c.bf16 %v345, %v345
    %v364 = vunpack.c.l.b16 %v209
    %v365 = vunpack.c.l.b16 %v210
    %v366 = vunpack.c.l.b16 %v211
    %v367 = vunpack.c.l.b16 %v212
    %v368 = vunpack.c.l.b16 %v213
    %v369 = vunpack.c.l.b16 %v214
    %v370 = vunpack.c.l.b16 %v215
    %v371 = vunpack.c.l.b16 %v216
    %v372 = vunpack.c.l.b16 %v217
    %v373 = vunpack.c.l.b16 %v218
    %v374 = vunpack.c.l.b16 %v219
    %v375 = vunpack.c.l.b16 %v220
    %v376 = vunpack.c.l.b16 %v221
    %v377 = vunpack.c.l.b16 %v222
    %v378 = vunpack.c.l.b16 %v223
    %v379 = vunpack.c.l.b16 %v224
    %v380 = vpack.c.b16 %v365, %v364
    %v381 = vpack.c.b16 %v367, %v366
    %v382 = vpack.c.b16 %v369, %v368
    %v383 = vpack.c.b16 %v371, %v370
    %v384 = vpack.c.b16 %v373, %v372
    %v385 = vpack.c.b16 %v375, %v374
    %v386 = vpack.c.b16 %v377, %v376
    %v387 = vpack.c.b16 %v379, %v378
    %396 = vmatprep.subr.bf16.mxu0 0
    %397 = vmatpush1.bf16.msra.mxu0 %v380
    %398 = vmatprep.subr.bf16.mxu0 0
    %399 = vmatpush1.bf16.msra.mxu0 %v381
    %400 = vmatprep.subr.bf16.mxu0 0
    %401 = vmatpush1.bf16.msra.mxu0 %v382
    %402 = vmatprep.subr.bf16.mxu0 0
    %403 = vmatpush1.bf16.msra.mxu0 %v383
    %404 = vmatprep.subr.bf16.mxu0 0
    %405 = vmatpush1.bf16.msra.mxu0 %v384
    %406 = vmatprep.subr.bf16.mxu0 0
    %407 = vmatpush1.bf16.msra.mxu0 %v385
    %408 = vmatprep.subr.bf16.mxu0 0
    %409 = vmatpush1.bf16.msra.mxu0 %v386
    %410 = vmatprep.subr.bf16.mxu0 0
    %411 = vmatpush1.bf16.msra.mxu0 %v387
    %412 = vmatprep.subr.bf16.mxu0 0
    %413 = vmatpush1.bf16.msra.mxu0 0
    %414 = vmatprep.subr.bf16.mxu0 0
    %415 = vmatpush1.bf16.msra.mxu0 0
    %416 = vmatprep.subr.bf16.mxu0 0
    %417 = vmatpush1.bf16.msra.mxu0 0
    %418 = vmatprep.subr.bf16.mxu0 0
    %419 = vmatpush1.bf16.msra.mxu0 0
    %420 = vmatprep.subr.bf16.mxu0 0
    %421 = vmatpush1.bf16.msra.mxu0 0
    %422 = vmatprep.subr.bf16.mxu0 0
    %423 = vmatpush1.bf16.msra.mxu0 0
    %424 = vmatprep.subr.bf16.mxu0 0
    %425 = vmatpush1.bf16.msra.mxu0 0
    %426 = vmatprep.subr.bf16.mxu0 0
    %427 = vmatpush1.bf16.msra.mxu0 0
    %428 = vmatprep.mubr.bf16.mxu0 0
    %429 = vmatmul.mubr.bf16.gmra.mrb[0].mxu0 %v347
    %v430 = vpop.f32.mrb[0].mxu0
    %v431 = vadd.f32 0.0, %v430
    %v432 = vpop.f32.mrb[0].mxu0
    %v433 = vpop.f32.mrb[0].mxu0
    %v434 = vpop.f32.mrb[0].mxu0
    %435 = vdwg.mxu0
    %v437 = vcombine.high %v431, %v431
    %v439 = vunpack.c.l.s4 1966171168
    %v440 = vunpack.c.0.s8 %v439
    %v441 = vlaneseq
    %v442 = vshrl.u32 %v441, 7
    %v443 = vsub.s32 %v440, %v442
    %v444 = vrot.slane %v431, %v443
    %v446 = vunpack.c.l.s4 1966171168
    %v447 = vunpack.c.0.s8 %v446
    %v448 = vlaneseq
    %v449 = vshrl.u32 %v448, 7
    %v450 = vsub.s32 %v447, %v449
    %v451 = vrot.slane %v437, %v450
    %v452 = vcombine.high %v444, %v444
    %v453 = vcombine.high %v451, %v451
    %v455 = vunpack.c.l.s4 1966171168
    %v456 = vunpack.c.0.s8 %v455
    %v457 = vlaneseq
    %v458 = vshrl.u32 %v457, 7
    %v459 = vsub.s32 %v456, %v458
    %v460 = vrot.slane %v444, %v459
    %v462 = vunpack.c.l.s4 1966171168
    %v463 = vunpack.c.0.s8 %v462
    %v464 = vlaneseq
    %v465 = vshrl.u32 %v464, 7
    %v466 = vsub.s32 %v463, %v465
    %v467 = vrot.slane %v451, %v466
    %v469 = vunpack.c.l.s4 1966171168
    %v470 = vunpack.c.0.s8 %v469
    %v471 = vlaneseq
    %v472 = vshrl.u32 %v471, 7
    %v473 = vsub.s32 %v470, %v472
    %v474 = vrot.slane %v452, %v473
    %v476 = vunpack.c.l.s4 1966171168
    %v477 = vunpack.c.0.s8 %v476
    %v478 = vlaneseq
    %v479 = vshrl.u32 %v478, 7
    %v480 = vsub.s32 %v477, %v479
    %v481 = vrot.slane %v453, %v480
    %v482 = vcombine.high %v460, %v460
    %v483 = vcombine.high %v467, %v467
    %v484 = vcombine.high %v474, %v474
    %v485 = vcombine.high %v481, %v481
    %v486 = vlaneseq
    %v487 = vshrl.u32 %v486, 7
    %v488 = vsub.s32 0, %v487
    %v489 = vrot.slane %v460, %v488
    %v490 = vlaneseq
    %v491 = vshrl.u32 %v490, 7
    %v492 = vsub.s32 0, %v491
    %v493 = vrot.slane %v474, %v492
    %v494 = vlaneseq
    %v495 = vshrl.u32 %v494, 7
    %v496 = vsub.s32 0, %v495
    %v497 = vrot.slane %v482, %v496
    %v498 = vlaneseq
    %v499 = vshrl.u32 %v498, 7
    %v500 = vsub.s32 0, %v499
    %v501 = vrot.slane %v484, %v500
    %v502 = vlaneseq
    %v503 = vshrl.u32 %v502, 7
    %v504 = vsub.s32 0, %v503
    %v505 = vrot.slane %v467, %v504
    %v506 = vlaneseq
    %v507 = vshrl.u32 %v506, 7
    %v508 = vsub.s32 0, %v507
    %v509 = vrot.slane %v481, %v508
    %v510 = vlaneseq
    %v511 = vshrl.u32 %v510, 7
    %v512 = vsub.s32 0, %v511
    %v513 = vrot.slane %v483, %v512
    %v514 = vlaneseq
    %v515 = vshrl.u32 %v514, 7
    %v516 = vsub.s32 0, %v515
    %v517 = vrot.slane %v485, %v516
    %v526 = vadd.f32 %v193, %v489
    %v527 = vadd.f32 %v194, %v489
    %v528 = vadd.f32 %v195, %v493
    %v529 = vadd.f32 %v196, %v493
    %v530 = vadd.f32 %v197, %v497
    %v531 = vadd.f32 %v198, %v497
    %v532 = vadd.f32 %v199, %v501
    %v533 = vadd.f32 %v200, %v501
    %v534 = vadd.f32 %v201, %v505
    %v535 = vadd.f32 %v202, %v505
    %v536 = vadd.f32 %v203, %v509
    %v537 = vadd.f32 %v204, %v509
    %v538 = vadd.f32 %v205, %v513
    %v539 = vadd.f32 %v206, %v513
    %v540 = vadd.f32 %v207, %v517
    %v541 = vadd.f32 %v208, %v517
    %v542 = vtanh.pop %v526
    %v543 = vtanh.pop %v527
    %v544 = vtanh.pop %v528
    %v545 = vtanh.pop %v529
    %v546 = vtanh.pop %v530
    %v547 = vtanh.pop %v531
    %v548 = vtanh.pop %v532
    %v549 = vtanh.pop %v533
    %v550 = vtanh.pop %v534
    %v551 = vtanh.pop %v535
    %v552 = vtanh.pop %v536
    %v553 = vtanh.pop %v537
    %v554 = vtanh.pop %v538
    %v555 = vtanh.pop %v539
    %v556 = vtanh.pop %v540
    %v557 = vtanh.pop %v541
    %v559 = vlaneseq
    %v560 = vshrl.u32 %v559, 7
    %v561 = vsub.s32 0, %v560
    %v562 = vrot.slane %v225, %v561
    %v564 = vmul.f32 %v542, %v562
    %v565 = vmul.f32 %v543, %v562
    %v566 = vmul.f32 %v544, %v562
    %v567 = vmul.f32 %v545, %v562
    %v568 = vmul.f32 %v546, %v562
    %v569 = vmul.f32 %v547, %v562
    %v570 = vmul.f32 %v548, %v562
    %v571 = vmul.f32 %v549, %v562
    %v572 = vmul.f32 %v550, %v562
    %v573 = vmul.f32 %v551, %v562
    %v574 = vmul.f32 %v552, %v562
    %v575 = vmul.f32 %v553, %v562
    %v576 = vmul.f32 %v554, %v562
    %v577 = vmul.f32 %v555, %v562
    %v578 = vmul.f32 %v556, %v562
    %v579 = vmul.f32 %v557, %v562
    %580 = vadd.xlane.f32.xlu0 %v564
    %v581 = vpop.xlane.xlu0 %580
    %582 = vadd.xlane.f32.xlu0 %v565
    %v583 = vpop.xlane.xlu0 %582
    %584 = vadd.xlane.f32.xlu0 %v566
    %v585 = vpop.xlane.xlu0 %584
    %586 = vadd.xlane.f32.xlu0 %v567
    %v587 = vpop.xlane.xlu0 %586
    %588 = vadd.xlane.f32.xlu0 %v568
    %v589 = vpop.xlane.xlu0 %588
    %590 = vadd.xlane.f32.xlu0 %v569
    %v591 = vpop.xlane.xlu0 %590
    %592 = vadd.xlane.f32.xlu0 %v570
    %v593 = vpop.xlane.xlu0 %592
    %594 = vadd.xlane.f32.xlu0 %v571
    %v595 = vpop.xlane.xlu0 %594
    %596 = vadd.xlane.f32.xlu0 %v572
    %v597 = vpop.xlane.xlu0 %596
    %598 = vadd.xlane.f32.xlu0 %v573
    %v599 = vpop.xlane.xlu0 %598
    %600 = vadd.xlane.f32.xlu0 %v574
    %v601 = vpop.xlane.xlu0 %600
    %602 = vadd.xlane.f32.xlu0 %v575
    %v603 = vpop.xlane.xlu0 %602
    %604 = vadd.xlane.f32.xlu0 %v576
    %v605 = vpop.xlane.xlu0 %604
    %606 = vadd.xlane.f32.xlu0 %v577
    %v607 = vpop.xlane.xlu0 %606
    %608 = vadd.xlane.f32.xlu0 %v578
    %v609 = vpop.xlane.xlu0 %608
    %610 = vadd.xlane.f32.xlu0 %v579
    %v611 = vpop.xlane.xlu0 %610
    %v628 = vlaneseq
    %v629 = vand.u32 %v628, 127
    %v630 = vlaneseq
    %v631 = vshrl.u32 %v630, 7
    %v632 = vsub.s32 %v629, %v631
    %v633 = vrot.slane %v581, %v632
    %v634 = vadd.s32 %v629, 4294967288
    %v635 = vlaneseq
    %v636 = vshrl.u32 %v635, 7
    %v637 = vsub.s32 %v634, %v636
    %v638 = vrot.slane %v583, %v637
    %vm639 = vcmask 130112
    %v640 = vsel %vm639, %v638, %v633
    %v641 = vlaneseq
    %v642 = vshrl.u32 %v641, 7
    %v643 = vsub.s32 %v629, %v642
    %v644 = vrot.slane %v585, %v643
    %v645 = vlaneseq
    %v646 = vshrl.u32 %v645, 7
    %v647 = vsub.s32 %v634, %v646
    %v648 = vrot.slane %v587, %v647
    %v649 = vsel %vm639, %v648, %v644
    %v650 = vlaneseq
    %v651 = vshrl.u32 %v650, 7
    %v652 = vsub.s32 %v629, %v651
    %v653 = vrot.slane %v589, %v652
    %v654 = vlaneseq
    %v655 = vshrl.u32 %v654, 7
    %v656 = vsub.s32 %v634, %v655
    %v657 = vrot.slane %v591, %v656
    %v658 = vsel %vm639, %v657, %v653
    %v659 = vlaneseq
    %v660 = vshrl.u32 %v659, 7
    %v661 = vsub.s32 %v629, %v660
    %v662 = vrot.slane %v593, %v661
    %v663 = vlaneseq
    %v664 = vshrl.u32 %v663, 7
    %v665 = vsub.s32 %v634, %v664
    %v666 = vrot.slane %v595, %v665
    %v667 = vsel %vm639, %v666, %v662
    %v668 = vlaneseq
    %v669 = vshrl.u32 %v668, 7
    %v670 = vsub.s32 %v629, %v669
    %v671 = vrot.slane %v597, %v670
    %v672 = vlaneseq
    %v673 = vshrl.u32 %v672, 7
    %v674 = vsub.s32 %v634, %v673
    %v675 = vrot.slane %v599, %v674
    %v676 = vsel %vm639, %v675, %v671
    %v677 = vlaneseq
    %v678 = vshrl.u32 %v677, 7
    %v679 = vsub.s32 %v629, %v678
    %v680 = vrot.slane %v601, %v679
    %v681 = vlaneseq
    %v682 = vshrl.u32 %v681, 7
    %v683 = vsub.s32 %v634, %v682
    %v684 = vrot.slane %v603, %v683
    %v685 = vsel %vm639, %v684, %v680
    %v686 = vlaneseq
    %v687 = vshrl.u32 %v686, 7
    %v688 = vsub.s32 %v629, %v687
    %v689 = vrot.slane %v605, %v688
    %v690 = vlaneseq
    %v691 = vshrl.u32 %v690, 7
    %v692 = vsub.s32 %v634, %v691
    %v693 = vrot.slane %v607, %v692
    %v694 = vsel %vm639, %v693, %v689
    %v695 = vlaneseq
    %v696 = vshrl.u32 %v695, 7
    %v697 = vsub.s32 %v629, %v696
    %v698 = vrot.slane %v609, %v697
    %v699 = vlaneseq
    %v700 = vshrl.u32 %v699, 7
    %v701 = vsub.s32 %v634, %v700
    %v702 = vrot.slane %v611, %v701
    %v703 = vsel %vm639, %v702, %v698
    %vm704 = vcmask 1041409
    %v705 = vsel %vm704, %v649, %v640
    %vm706 = vcmask 1042434
    %v707 = vsel %vm706, %v658, %v705
    %vm708 = vcmask 1043459
    %v709 = vsel %vm708, %v667, %v707
    %vm710 = vcmask 1044484
    %v711 = vsel %vm710, %v676, %v709
    %vm712 = vcmask 1045509
    %v713 = vsel %vm712, %v685, %v711
    %vm714 = vcmask 1046534
    %v715 = vsel %vm714, %v694, %v713
    %vm716 = vcmask 1047559
    %v717 = vsel %vm716, %v703, %v715
    %vm719 = vcmask 130048
    %v720 = vsel %vm719, %v717, -inf
    %721 = vmax.xlane.f32.xlu0 %v720
    %v722 = vpop.xlane.xlu0 %721
    %v724 = vlaneseq
    %v725 = vshrl.u32 %v724, 7
    %v726 = vsub.s32 0, %v725
    %v727 = vrot.slane %v722, %v726
    %v728 = vlaneseq
    %v729 = vshrl.u32 %v728, 7
    %v730 = vsub.s32 1, %v729
    %v731 = vrot.slane %v722, %v730
    %v732 = vlaneseq
    %v733 = vshrl.u32 %v732, 7
    %v734 = vsub.s32 2, %v733
    %v735 = vrot.slane %v722, %v734
    %v736 = vlaneseq
    %v737 = vshrl.u32 %v736, 7
    %v738 = vsub.s32 3, %v737
    %v739 = vrot.slane %v722, %v738
    %v740 = vlaneseq
    %v741 = vshrl.u32 %v740, 7
    %v742 = vsub.s32 4, %v741
    %v743 = vrot.slane %v722, %v742
    %v744 = vlaneseq
    %v745 = vshrl.u32 %v744, 7
    %v746 = vsub.s32 5, %v745
    %v747 = vrot.slane %v722, %v746
    %v748 = vlaneseq
    %v749 = vshrl.u32 %v748, 7
    %v750 = vsub.s32 6, %v749
    %v751 = vrot.slane %v722, %v750
    %v752 = vlaneseq
    %v753 = vshrl.u32 %v752, 7
    %v754 = vsub.s32 7, %v753
    %v755 = vrot.slane %v722, %v754
    %v764 = vsub.f32 %v581, %v727
    %v765 = vsub.f32 %v583, %v727
    %v766 = vsub.f32 %v585, %v731
    %v767 = vsub.f32 %v587, %v731
    %v768 = vsub.f32 %v589, %v735
    %v769 = vsub.f32 %v591, %v735
    %v770 = vsub.f32 %v593, %v739
    %v771 = vsub.f32 %v595, %v739
    %v772 = vsub.f32 %v597, %v743
    %v773 = vsub.f32 %v599, %v743
    %v774 = vsub.f32 %v601, %v747
    %v775 = vsub.f32 %v603, %v747
    %v776 = vsub.f32 %v605, %v751
    %v777 = vsub.f32 %v607, %v751
    %v778 = vsub.f32 %v609, %v755
    %v779 = vsub.f32 %v611, %v755
    %v780 = vmul.f32 %v764, 1.442695
    %v781 = vpow.pop %v780
    %v782 = vmul.f32 %v765, 1.442695
    %v783 = vpow.pop %v782
    %v784 = vmul.f32 %v766, 1.442695
    %v785 = vpow.pop %v784
    %v786 = vmul.f32 %v767, 1.442695
    %v787 = vpow.pop %v786
    %v788 = vmul.f32 %v768, 1.442695
    %v789 = vpow.pop %v788
    %v790 = vmul.f32 %v769, 1.442695
    %v791 = vpow.pop %v790
    %v792 = vmul.f32 %v770, 1.442695
    %v793 = vpow.pop %v792
    %v794 = vmul.f32 %v771, 1.442695
    %v795 = vpow.pop %v794
    %v796 = vmul.f32 %v772, 1.442695
    %v797 = vpow.pop %v796
    %v798 = vmul.f32 %v773, 1.442695
    %v799 = vpow.pop %v798
    %v800 = vmul.f32 %v774, 1.442695
    %v801 = vpow.pop %v800
    %v802 = vmul.f32 %v775, 1.442695
    %v803 = vpow.pop %v802
    %v804 = vmul.f32 %v776, 1.442695
    %v805 = vpow.pop %v804
    %v806 = vmul.f32 %v777, 1.442695
    %v807 = vpow.pop %v806
    %v808 = vmul.f32 %v778, 1.442695
    %v809 = vpow.pop %v808
    %v810 = vmul.f32 %v779, 1.442695
    %v811 = vpow.pop %v810
    %828 = vset.pattern.permute.xlu0 0
    %829 = vperm.xlu0 %828, %v781
    %v830 = vpop.permute.xlu0 %829
    %831 = vset.pattern.permute.xlu0 0
    %832 = vperm.xlu0 %831, %v783
    %v833 = vpop.permute.xlu0 %832
    %834 = vset.pattern.permute.xlu0 0
    %835 = vperm.xlu0 %834, %v785
    %v836 = vpop.permute.xlu0 %835
    %837 = vset.pattern.permute.xlu0 0
    %838 = vperm.xlu0 %837, %v787
    %v839 = vpop.permute.xlu0 %838
    %840 = vset.pattern.permute.xlu0 0
    %841 = vperm.xlu0 %840, %v789
    %v842 = vpop.permute.xlu0 %841
    %843 = vset.pattern.permute.xlu0 0
    %844 = vperm.xlu0 %843, %v791
    %v845 = vpop.permute.xlu0 %844
    %846 = vset.pattern.permute.xlu0 0
    %847 = vperm.xlu0 %846, %v793
    %v848 = vpop.permute.xlu0 %847
    %849 = vset.pattern.permute.xlu0 0
    %850 = vperm.xlu0 %849, %v795
    %v851 = vpop.permute.xlu0 %850
    %852 = vset.pattern.permute.xlu0 0
    %853 = vperm.xlu0 %852, %v797
    %v854 = vpop.permute.xlu0 %853
    %855 = vset.pattern.permute.xlu0 0
    %856 = vperm.xlu0 %855, %v799
    %v857 = vpop.permute.xlu0 %856
    %858 = vset.pattern.permute.xlu0 0
    %859 = vperm.xlu0 %858, %v801
    %v860 = vpop.permute.xlu0 %859
    %861 = vset.pattern.permute.xlu0 0
    %862 = vperm.xlu0 %861, %v803
    %v863 = vpop.permute.xlu0 %862
    %864 = vset.pattern.permute.xlu0 0
    %865 = vperm.xlu0 %864, %v805
    %v866 = vpop.permute.xlu0 %865
    %867 = vset.pattern.permute.xlu0 0
    %868 = vperm.xlu0 %867, %v807
    %v869 = vpop.permute.xlu0 %868
    %870 = vset.pattern.permute.xlu0 0
    %871 = vperm.xlu0 %870, %v809
    %v872 = vpop.permute.xlu0 %871
    %873 = vset.pattern.permute.xlu0 0
    %874 = vperm.xlu0 %873, %v811
    %v875 = vpop.permute.xlu0 %874
    %v876 = vlaneseq
    %v877 = vshrl.u32 %v876, 7
    %v878 = vsub.s32 %v629, %v877
    %v879 = vrot.slane %v830, %v878
    %v880 = vlaneseq
    %v881 = vshrl.u32 %v880, 7
    %v882 = vsub.s32 %v634, %v881
    %v883 = vrot.slane %v833, %v882
    %v884 = vsel %vm639, %v883, %v879
    %v885 = vlaneseq
    %v886 = vshrl.u32 %v885, 7
    %v887 = vsub.s32 %v629, %v886
    %v888 = vrot.slane %v836, %v887
    %v889 = vlaneseq
    %v890 = vshrl.u32 %v889, 7
    %v891 = vsub.s32 %v634, %v890
    %v892 = vrot.slane %v839, %v891
    %v893 = vsel %vm639, %v892, %v888
    %v894 = vlaneseq
    %v895 = vshrl.u32 %v894, 7
    %v896 = vsub.s32 %v629, %v895
    %v897 = vrot.slane %v842, %v896
    %v898 = vlaneseq
    %v899 = vshrl.u32 %v898, 7
    %v900 = vsub.s32 %v634, %v899
    %v901 = vrot.slane %v845, %v900
    %v902 = vsel %vm639, %v901, %v897
    %v903 = vlaneseq
    %v904 = vshrl.u32 %v903, 7
    %v905 = vsub.s32 %v629, %v904
    %v906 = vrot.slane %v848, %v905
    %v907 = vlaneseq
    %v908 = vshrl.u32 %v907, 7
    %v909 = vsub.s32 %v634, %v908
    %v910 = vrot.slane %v851, %v909
    %v911 = vsel %vm639, %v910, %v906
    %v912 = vlaneseq
    %v913 = vshrl.u32 %v912, 7
    %v914 = vsub.s32 %v629, %v913
    %v915 = vrot.slane %v854, %v914
    %v916 = vlaneseq
    %v917 = vshrl.u32 %v916, 7
    %v918 = vsub.s32 %v634, %v917
    %v919 = vrot.slane %v857, %v918
    %v920 = vsel %vm639, %v919, %v915
    %v921 = vlaneseq
    %v922 = vshrl.u32 %v921, 7
    %v923 = vsub.s32 %v629, %v922
    %v924 = vrot.slane %v860, %v923
    %v925 = vlaneseq
    %v926 = vshrl.u32 %v925, 7
    %v927 = vsub.s32 %v634, %v926
    %v928 = vrot.slane %v863, %v927
    %v929 = vsel %vm639, %v928, %v924
    %v930 = vlaneseq
    %v931 = vshrl.u32 %v930, 7
    %v932 = vsub.s32 %v629, %v931
    %v933 = vrot.slane %v866, %v932
    %v934 = vlaneseq
    %v935 = vshrl.u32 %v934, 7
    %v936 = vsub.s32 %v634, %v935
    %v937 = vrot.slane %v869, %v936
    %v938 = vsel %vm639, %v937, %v933
    %v939 = vlaneseq
    %v940 = vshrl.u32 %v939, 7
    %v941 = vsub.s32 %v629, %v940
    %v942 = vrot.slane %v872, %v941
    %v943 = vlaneseq
    %v944 = vshrl.u32 %v943, 7
    %v945 = vsub.s32 %v634, %v944
    %v946 = vrot.slane %v875, %v945
    %v947 = vsel %vm639, %v946, %v942
    %v948 = vsel %vm704, %v893, %v884
    %v949 = vsel %vm706, %v902, %v948
    %v950 = vsel %vm708, %v911, %v949
    %v951 = vsel %vm710, %v920, %v950
    %v952 = vsel %vm712, %v929, %v951
    %v953 = vsel %vm714, %v938, %v952
    %v954 = vsel %vm716, %v947, %v953
    %v956 = vsel %vm719, %v954, 0.0
    %957 = vadd.xlane.f32.xlu0 %v956
    %v958 = vpop.xlane.xlu0 %957
    %v959 = vrcp.pop %v958
    %v961 = vlaneseq
    %v962 = vshrl.u32 %v961, 7
    %v963 = vsub.s32 0, %v962
    %v964 = vrot.slane %v959, %v963
    %v965 = vlaneseq
    %v966 = vshrl.u32 %v965, 7
    %v967 = vsub.s32 1, %v966
    %v968 = vrot.slane %v959, %v967
    %v969 = vlaneseq
    %v970 = vshrl.u32 %v969, 7
    %v971 = vsub.s32 2, %v970
    %v972 = vrot.slane %v959, %v971
    %v973 = vlaneseq
    %v974 = vshrl.u32 %v973, 7
    %v975 = vsub.s32 3, %v974
    %v976 = vrot.slane %v959, %v975
    %v977 = vlaneseq
    %v978 = vshrl.u32 %v977, 7
    %v979 = vsub.s32 4, %v978
    %v980 = vrot.slane %v959, %v979
    %v981 = vlaneseq
    %v982 = vshrl.u32 %v981, 7
    %v983 = vsub.s32 5, %v982
    %v984 = vrot.slane %v959, %v983
    %v985 = vlaneseq
    %v986 = vshrl.u32 %v985, 7
    %v987 = vsub.s32 6, %v986
    %v988 = vrot.slane %v959, %v987
    %v989 = vlaneseq
    %v990 = vshrl.u32 %v989, 7
    %v991 = vsub.s32 7, %v990
    %v992 = vrot.slane %v959, %v991
    %v1001 = vmul.f32 %v781, %v964
    %v1002 = vmul.f32 %v783, %v964
    %v1003 = vmul.f32 %v785, %v968
    %v1004 = vmul.f32 %v787, %v968
    %v1005 = vmul.f32 %v789, %v972
    %v1006 = vmul.f32 %v791, %v972
    %v1007 = vmul.f32 %v793, %v976
    %v1008 = vmul.f32 %v795, %v976
    %v1009 = vmul.f32 %v797, %v980
    %v1010 = vmul.f32 %v799, %v980
    %v1011 = vmul.f32 %v801, %v984
    %v1012 = vmul.f32 %v803, %v984
    %v1013 = vmul.f32 %v805, %v988
    %v1014 = vmul.f32 %v807, %v988
    %v1015 = vmul.f32 %v809, %v992
    %v1016 = vmul.f32 %v811, %v992
    %1018 = vset.pattern.permute.xlu0 0
    %1019 = vperm.xlu0 %1018, %v1001
    %v1020 = vpop.permute.xlu0 %1019
    %1023 = vset.pattern.permute.xlu0 0
    %1024 = vperm.xlu0 %1023, %v1002
    %v1025 = vpop.permute.xlu0 %1024
    %1028 = vset.pattern.permute.xlu0 0
    %1029 = vperm.xlu0 %1028, %v1003
    %v1030 = vpop.permute.xlu0 %1029
    %1033 = vset.pattern.permute.xlu0 0
    %1034 = vperm.xlu0 %1033, %v1004
    %v1035 = vpop.permute.xlu0 %1034
    %1038 = vset.pattern.permute.xlu0 0
    %1039 = vperm.xlu0 %1038, %v1005
    %v1040 = vpop.permute.xlu0 %1039
    %1043 = vset.pattern.permute.xlu0 0
    %1044 = vperm.xlu0 %1043, %v1006
    %v1045 = vpop.permute.xlu0 %1044
    %1048 = vset.pattern.permute.xlu0 0
    %1049 = vperm.xlu0 %1048, %v1007
    %v1050 = vpop.permute.xlu0 %1049
    %1053 = vset.pattern.permute.xlu0 0
    %1054 = vperm.xlu0 %1053, %v1008
    %v1055 = vpop.permute.xlu0 %1054
    %1058 = vset.pattern.permute.xlu0 0
    %1059 = vperm.xlu0 %1058, %v1009
    %v1060 = vpop.permute.xlu0 %1059
    %1063 = vset.pattern.permute.xlu0 0
    %1064 = vperm.xlu0 %1063, %v1010
    %v1065 = vpop.permute.xlu0 %1064
    %1068 = vset.pattern.permute.xlu0 0
    %1069 = vperm.xlu0 %1068, %v1011
    %v1070 = vpop.permute.xlu0 %1069
    %1073 = vset.pattern.permute.xlu0 0
    %1074 = vperm.xlu0 %1073, %v1012
    %v1075 = vpop.permute.xlu0 %1074
    %1078 = vset.pattern.permute.xlu0 0
    %1079 = vperm.xlu0 %1078, %v1013
    %v1080 = vpop.permute.xlu0 %1079
    %1083 = vset.pattern.permute.xlu0 0
    %1084 = vperm.xlu0 %1083, %v1014
    %v1085 = vpop.permute.xlu0 %1084
    %1088 = vset.pattern.permute.xlu0 0
    %1089 = vperm.xlu0 %1088, %v1015
    %v1090 = vpop.permute.xlu0 %1089
    %1093 = vset.pattern.permute.xlu0 0
    %1094 = vperm.xlu0 %1093, %v1016
    %v1095 = vpop.permute.xlu0 %1094
    %v1097 = vmul.f32 %v177, %v1020
    %v1098 = vmul.f32 %v178, %v1025
    %v1099 = vmul.f32 %v179, %v1030
    %v1100 = vmul.f32 %v180, %v1035
    %v1101 = vmul.f32 %v181, %v1040
    %v1102 = vmul.f32 %v182, %v1045
    %v1103 = vmul.f32 %v183, %v1050
    %v1104 = vmul.f32 %v184, %v1055
    %v1105 = vmul.f32 %v185, %v1060
    %v1106 = vmul.f32 %v186, %v1065
    %v1107 = vmul.f32 %v187, %v1070
    %v1108 = vmul.f32 %v188, %v1075
    %v1109 = vmul.f32 %v189, %v1080
    %v1110 = vmul.f32 %v190, %v1085
    %v1111 = vmul.f32 %v191, %v1090
    %v1112 = vmul.f32 %v192, %v1095
    %vm1113 = vcmask 261120
    %v1114 = vsel %vm1113, %v1097, 0.0
    %v1115 = vsel %vm1113, %v1098, 0.0
    %v1116 = vadd.f32 %v1114, %v1115
    %v1117 = vrot.slane %v1116, 4
    %v1118 = vadd.f32 %v1116, %v1117
    %v1119 = vrot.slane %v1118, 2
    %v1120 = vadd.f32 %v1118, %v1119
    %v1121 = vrot.slane %v1120, 1
    %v1122 = vadd.f32 %v1120, %v1121
    %v1123 = vsel %vm1113, %v1099, 0.0
    %v1124 = vsel %vm1113, %v1100, 0.0
    %v1125 = vadd.f32 %v1123, %v1124
    %v1126 = vrot.slane %v1125, 4
    %v1127 = vadd.f32 %v1125, %v1126
    %v1128 = vrot.slane %v1127, 2
    %v1129 = vadd.f32 %v1127, %v1128
    %v1130 = vrot.slane %v1129, 1
    %v1131 = vadd.f32 %v1129, %v1130
    %v1132 = vsel %vm1113, %v1101, 0.0
    %v1133 = vsel %vm1113, %v1102, 0.0
    %v1134 = vadd.f32 %v1132, %v1133
    %v1135 = vrot.slane %v1134, 4
    %v1136 = vadd.f32 %v1134, %v1135
    %v1137 = vrot.slane %v1136, 2
    %v1138 = vadd.f32 %v1136, %v1137
    %v1139 = vrot.slane %v1138, 1
    %v1140 = vadd.f32 %v1138, %v1139
    %v1141 = vsel %vm1113, %v1103, 0.0
    %v1142 = vsel %vm1113, %v1104, 0.0
    %v1143 = vadd.f32 %v1141, %v1142
    %v1144 = vrot.slane %v1143, 4
    %v1145 = vadd.f32 %v1143, %v1144
    %v1146 = vrot.slane %v1145, 2
    %v1147 = vadd.f32 %v1145, %v1146
    %v1148 = vrot.slane %v1147, 1
    %v1149 = vadd.f32 %v1147, %v1148
    %v1150 = vsel %vm1113, %v1105, 0.0
    %v1151 = vsel %vm1113, %v1106, 0.0
    %v1152 = vadd.f32 %v1150, %v1151
    %v1153 = vrot.slane %v1152, 4
    %v1154 = vadd.f32 %v1152, %v1153
    %v1155 = vrot.slane %v1154, 2
    %v1156 = vadd.f32 %v1154, %v1155
    %v1157 = vrot.slane %v1156, 1
    %v1158 = vadd.f32 %v1156, %v1157
    %v1159 = vsel %vm1113, %v1107, 0.0
    %v1160 = vsel %vm1113, %v1108, 0.0
    %v1161 = vadd.f32 %v1159, %v1160
    %v1162 = vrot.slane %v1161, 4
    %v1163 = vadd.f32 %v1161, %v1162
    %v1164 = vrot.slane %v1163, 2
    %v1165 = vadd.f32 %v1163, %v1164
    %v1166 = vrot.slane %v1165, 1
    %v1167 = vadd.f32 %v1165, %v1166
    %v1168 = vsel %vm1113, %v1109, 0.0
    %v1169 = vsel %vm1113, %v1110, 0.0
    %v1170 = vadd.f32 %v1168, %v1169
    %v1171 = vrot.slane %v1170, 4
    %v1172 = vadd.f32 %v1170, %v1171
    %v1173 = vrot.slane %v1172, 2
    %v1174 = vadd.f32 %v1172, %v1173
    %v1175 = vrot.slane %v1174, 1
    %v1176 = vadd.f32 %v1174, %v1175
    %v1177 = vsel %vm1113, %v1111, 0.0
    %v1178 = vsel %vm1113, %v1112, 0.0
    %v1179 = vadd.f32 %v1177, %v1178
    %v1180 = vrot.slane %v1179, 4
    %v1181 = vadd.f32 %v1179, %v1180
    %v1182 = vrot.slane %v1181, 2
    %v1183 = vadd.f32 %v1181, %v1182
    %v1184 = vrot.slane %v1183, 1
    %v1185 = vadd.f32 %v1183, %v1184
    %v1186 = vpack.c.bf16 %v1122, %v1122
    %v1187 = vpack.c.bf16 %v1131, %v1131
    %v1188 = vpack.c.bf16 %v1140, %v1140
    %v1189 = vpack.c.bf16 %v1149, %v1149
    %v1190 = vpack.c.bf16 %v1158, %v1158
    %v1191 = vpack.c.bf16 %v1167, %v1167
    %v1192 = vpack.c.bf16 %v1176, %v1176
    %v1193 = vpack.c.bf16 %v1185, %v1185
    %v1202 = vunpack.c.l.b16 %v1186
    %v1203 = vunpack.c.l.b16 %v1187
    %v1204 = vunpack.c.l.b16 %v1188
    %v1205 = vunpack.c.l.b16 %v1189
    %v1206 = vunpack.c.l.b16 %v1190
    %v1207 = vunpack.c.l.b16 %v1191
    %v1208 = vunpack.c.l.b16 %v1192
    %v1209 = vunpack.c.l.b16 %v1193
    %v1210 = vsel %vm704, %v1203, %v1202
    %v1211 = vsel %vm706, %v1204, %v1210
    %v1212 = vsel %vm708, %v1205, %v1211
    %v1213 = vsel %vm710, %v1206, %v1212
    %v1214 = vsel %vm712, %v1207, %v1213
    %v1215 = vsel %vm714, %v1208, %v1214
    %v1216 = vsel %vm716, %v1209, %v1215
    %v1217 = vpack.c.b16 %v1216, %v1216
    %v1222 = vunpack.c.l.b16 %v226
    %v1223 = vunpack.c.h.b16 %v226
    %v1224 = vunpack.c.l.b16 %v227
    %v1225 = vunpack.c.h.b16 %v227
    %v1226 = vunpack.c.l.b16 %v228
    %v1227 = vunpack.c.h.b16 %v228
    %v1228 = vunpack.c.l.b16 %v229
    %v1229 = vunpack.c.h.b16 %v229
    %v1230 = vpack.c.b16 %v1224, %v1222
    %v1231 = vpack.c.b16 %v1225, %v1223
    %v1232 = vpack.c.b16 %v1228, %v1226
    %v1233 = vpack.c.b16 %v1229, %v1227
    %v1239 = vsel %vm1113, %v1217, 0
    %1241 = vmatprep.subr.bf16.mxu0 %v1231
    %1242 = vmatpush1.bf16.msra.mxu0 %v1230
    %1243 = vmatprep.subr.bf16.mxu0 %v1233
    %1244 = vmatpush1.bf16.msra.mxu0 %v1232
    %1245 = vmatprep.subr.bf16.mxu0 0
    %1246 = vmatpush1.bf16.msra.mxu0 0
    %1247 = vmatprep.subr.bf16.mxu0 0
    %1248 = vmatpush1.bf16.msra.mxu0 0
    %1249 = vmatprep.subr.bf16.mxu0 0
    %1250 = vmatpush1.bf16.msra.mxu0 0
    %1251 = vmatprep.subr.bf16.mxu0 0
    %1252 = vmatpush1.bf16.msra.mxu0 0
    %1253 = vmatprep.subr.bf16.mxu0 0
    %1254 = vmatpush1.bf16.msra.mxu0 0
    %1255 = vmatprep.subr.bf16.mxu0 0
    %1256 = vmatpush1.bf16.msra.mxu0 0
    %1257 = vmatprep.subr.bf16.mxu0 0
    %1258 = vmatpush1.bf16.msra.mxu0 0
    %1259 = vmatprep.subr.bf16.mxu0 0
    %1260 = vmatpush1.bf16.msra.mxu0 0
    %1261 = vmatprep.subr.bf16.mxu0 0
    %1262 = vmatpush1.bf16.msra.mxu0 0
    %1263 = vmatprep.subr.bf16.mxu0 0
    %1264 = vmatpush1.bf16.msra.mxu0 0
    %1265 = vmatprep.subr.bf16.mxu0 0
    %1266 = vmatpush1.bf16.msra.mxu0 0
    %1267 = vmatprep.subr.bf16.mxu0 0
    %1268 = vmatpush1.bf16.msra.mxu0 0
    %1269 = vmatprep.subr.bf16.mxu0 0
    %1270 = vmatpush1.bf16.msra.mxu0 0
    %1271 = vmatprep.subr.bf16.mxu0 0
    %1272 = vmatpush1.bf16.msra.mxu0 0
    %1273 = vmatprep.mubr.bf16.mxu0 0
    %1274 = vmatmul.mubr.bf16.gmra.mrb[0].mxu0 %v1239
    %v1275 = vpop.f32.mrb[0].mxu0
    %v1276 = vadd.f32 %v316, %v1275
    %v1277 = vpop.f32.mrb[0].mxu0
    %v1278 = vadd.f32 %v320, %v1277
    %v1279 = vpop.f32.mrb[0].mxu0
    %v1280 = vpop.f32.mrb[0].mxu0
    %1281 = vdwg.mxu0
    %v1282 = vld [vmem:[#allocation9] sm:$0xff]
    %v1283 = vadd.f32 %v1282, %v1278
    %v1284 = vpack.c.bf16 %v1283, %v1283
    %v1317 = vunpack.c.l.b16 %v262
    %v1318 = vunpack.c.h.b16 %v262
    %v1319 = vunpack.c.l.b16 %v263
    %v1320 = vunpack.c.h.b16 %v263
    %v1321 = vunpack.c.l.b16 %v264
    %v1322 = vunpack.c.h.b16 %v264
    %v1323 = vunpack.c.l.b16 %v265
    %v1324 = vunpack.c.h.b16 %v265
    %v1325 = vunpack.c.l.b16 %v266
    %v1326 = vunpack.c.h.b16 %v266
    %v1327 = vunpack.c.l.b16 %v267
    %v1328 = vunpack.c.h.b16 %v267
    %v1329 = vunpack.c.l.b16 %v268
    %v1330 = vunpack.c.h.b16 %v268
    %v1331 = vunpack.c.l.b16 %v269
    %v1332 = vunpack.c.h.b16 %v269
    %v1333 = vunpack.c.l.b16 %v270
    %v1334 = vunpack.c.h.b16 %v270
    %v1335 = vunpack.c.l.b16 %v271
    %v1336 = vunpack.c.h.b16 %v271
    %v1337 = vunpack.c.l.b16 %v272
    %v1338 = vunpack.c.h.b16 %v272
    %v1339 = vunpack.c.l.b16 %v273
    %v1340 = vunpack.c.h.b16 %v273
    %v1341 = vunpack.c.l.b16 %v274
    %v1342 = vunpack.c.h.b16 %v274
    %v1343 = vunpack.c.l.b16 %v275
    %v1344 = vunpack.c.h.b16 %v275
    %v1345 = vunpack.c.l.b16 %v276
    %v1346 = vunpack.c.h.b16 %v276
    %v1347 = vunpack.c.l.b16 %v277
    %v1348 = vunpack.c.h.b16 %v277
    %v1349 = vunpack.c.l.b16 %v278
    %v1350 = vunpack.c.h.b16 %v278
    %v1351 = vunpack.c.l.b16 %v279
    %v1352 = vunpack.c.h.b16 %v279
    %v1353 = vunpack.c.l.b16 %v280
    %v1354 = vunpack.c.h.b16 %v280
    %v1355 = vunpack.c.l.b16 %v281
    %v1356 = vunpack.c.h.b16 %v281
    %v1357 = vunpack.c.l.b16 %v282
    %v1358 = vunpack.c.h.b16 %v282
    %v1359 = vunpack.c.l.b16 %v283
    %v1360 = vunpack.c.h.b16 %v283
    %v1361 = vunpack.c.l.b16 %v284
    %v1362 = vunpack.c.h.b16 %v284
    %v1363 = vunpack.c.l.b16 %v285
    %v1364 = vunpack.c.h.b16 %v285
    %v1365 = vunpack.c.l.b16 %v286
    %v1366 = vunpack.c.h.b16 %v286
    %v1367 = vunpack.c.l.b16 %v287
    %v1368 = vunpack.c.h.b16 %v287
    %v1369 = vunpack.c.l.b16 %v288
    %v1370 = vunpack.c.h.b16 %v288
    %v1371 = vunpack.c.l.b16 %v289
    %v1372 = vunpack.c.h.b16 %v289
    %v1373 = vunpack.c.l.b16 %v290
    %v1374 = vunpack.c.h.b16 %v290
    %v1375 = vunpack.c.l.b16 %v291
    %v1376 = vunpack.c.h.b16 %v291
    %v1377 = vunpack.c.l.b16 %v292
    %v1378 = vunpack.c.h.b16 %v292
    %v1379 = vunpack.c.l.b16 %v293
    %v1380 = vunpack.c.h.b16 %v293
    %v1381 = vpack.c.b16 %v1321, %v1317
    %v1382 = vpack.c.b16 %v1322, %v1318
    %v1383 = vpack.c.b16 %v1323, %v1319
    %v1384 = vpack.c.b16 %v1324, %v1320
    %v1385 = vpack.c.b16 %v1329, %v1325
    %v1386 = vpack.c.b16 %v1330, %v1326
    %v1387 = vpack.c.b16 %v1331, %v1327
    %v1388 = vpack.c.b16 %v1332, %v1328
    %v1389 = vpack.c.b16 %v1337, %v1333
    %v1390 = vpack.c.b16 %v1338, %v1334
    %v1391 = vpack.c.b16 %v1339, %v1335
    %v1392 = vpack.c.b16 %v1340, %v1336
    %v1393 = vpack.c.b16 %v1345, %v1341
    %v1394 = vpack.c.b16 %v1346, %v1342
    %v1395 = vpack.c.b16 %v1347, %v1343
    %v1396 = vpack.c.b16 %v1348, %v1344
    %v1397 = vpack.c.b16 %v1353, %v1349
    %v1398 = vpack.c.b16 %v1354, %v1350
    %v1399 = vpack.c.b16 %v1355, %v1351
    %v1400 = vpack.c.b16 %v1356, %v1352
    %v1401 = vpack.c.b16 %v1361, %v1357
    %v1402 = vpack.c.b16 %v1362, %v1358
    %v1403 = vpack.c.b16 %v1363, %v1359
    %v1404 = vpack.c.b16 %v1364, %v1360
    %v1405 = vpack.c.b16 %v1369, %v1365
    %v1406 = vpack.c.b16 %v1370, %v1366
    %v1407 = vpack.c.b16 %v1371, %v1367
    %v1408 = vpack.c.b16 %v1372, %v1368
    %v1409 = vpack.c.b16 %v1377, %v1373
    %v1410 = vpack.c.b16 %v1378, %v1374
    %v1411 = vpack.c.b16 %v1379, %v1375
    %v1412 = vpack.c.b16 %v1380, %v1376
    %1445 = vmatprep.subr.bf16.mxu0 %v1382
    %1446 = vmatpush1.bf16.msra.mxu0 %v1381
    %1447 = vmatprep.subr.bf16.mxu0 %v1386
    %1448 = vmatpush1.bf16.msra.mxu0 %v1385
    %1449 = vmatprep.subr.bf16.mxu0 %v1390
    %1450 = vmatpush1.bf16.msra.mxu0 %v1389
    %1451 = vmatprep.subr.bf16.mxu0 %v1394
    %1452 = vmatpush1.bf16.msra.mxu0 %v1393
    %1453 = vmatprep.subr.bf16.mxu0 %v1398
    %1454 = vmatpush1.bf16.msra.mxu0 %v1397
    %1455 = vmatprep.subr.bf16.mxu0 %v1402
    %1456 = vmatpush1.bf16.msra.mxu0 %v1401
    %1457 = vmatprep.subr.bf16.mxu0 %v1406
    %1458 = vmatpush1.bf16.msra.mxu0 %v1405
    %1459 = vmatprep.subr.bf16.mxu0 %v1410
    %1460 = vmatpush1.bf16.msra.mxu0 %v1409
    %1461 = vmatprep.subr.bf16.mxu0 0
    %1462 = vmatpush1.bf16.msra.mxu0 0
    %1463 = vmatprep.subr.bf16.mxu0 0
    %1464 = vmatpush1.bf16.msra.mxu0 0
    %1465 = vmatprep.subr.bf16.mxu0 0
    %1466 = vmatpush1.bf16.msra.mxu0 0
    %1467 = vmatprep.subr.bf16.mxu0 0
    %1468 = vmatpush1.bf16.msra.mxu0 0
    %1469 = vmatprep.subr.bf16.mxu0 0
    %1470 = vmatpush1.bf16.msra.mxu0 0
    %1471 = vmatprep.subr.bf16.mxu0 0
    %1472 = vmatpush1.bf16.msra.mxu0 0
    %1473 = vmatprep.subr.bf16.mxu0 0
    %1474 = vmatpush1.bf16.msra.mxu0 0
    %1475 = vmatprep.subr.bf16.mxu0 0
    %1476 = vmatpush1.bf16.msra.mxu0 0
    %1477 = vmatprep.mubr.bf16.mxu0 0
    %1478 = vmatmul.mubr.bf16.gmra.mrb[0].mxu0 %v347
    %v1479 = vpop.f32.mrb[0].mxu0
    %v1480 = vadd.f32 0.0, %v1479
    %v1481 = vpop.f32.mrb[0].mxu0
    %v1482 = vadd.f32 0.0, %v1481
    %v1483 = vpop.f32.mrb[0].mxu0
    %v1484 = vpop.f32.mrb[0].mxu0
    %1485 = vdwg.mxu0
    %1486 = vmatprep.subr.bf16.mxu0 %v1384
    %1487 = vmatpush1.bf16.msra.mxu0 %v1383
    %1488 = vmatprep.subr.bf16.mxu0 %v1388
    %1489 = vmatpush1.bf16.msra.mxu0 %v1387
    %1490 = vmatprep.subr.bf16.mxu0 %v1392
    %1491 = vmatpush1.bf16.msra.mxu0 %v1391
    %1492 = vmatprep.subr.bf16.mxu0 %v1396
    %1493 = vmatpush1.bf16.msra.mxu0 %v1395
    %1494 = vmatprep.subr.bf16.mxu0 %v1400
    %1495 = vmatpush1.bf16.msra.mxu0 %v1399
    %1496 = vmatprep.subr.bf16.mxu0 %v1404
    %1497 = vmatpush1.bf16.msra.mxu0 %v1403
    %1498 = vmatprep.subr.bf16.mxu0 %v1408
    %1499 = vmatpush1.bf16.msra.mxu0 %v1407
    %1500 = vmatprep.subr.bf16.mxu0 %v1412
    %1501 = vmatpush1.bf16.msra.mxu0 %v1411
    %1502 = vmatprep.subr.bf16.mxu0 0
    %1503 = vmatpush1.bf16.msra.mxu0 0
    %1504 = vmatprep.subr.bf16.mxu0 0
    %1505 = vmatpush1.bf16.msra.mxu0 0
    %1506 = vmatprep.subr.bf16.mxu0 0
    %1507 = vmatpush1.bf16.msra.mxu0 0
    %1508 = vmatprep.subr.bf16.mxu0 0
    %1509 = vmatpush1.bf16.msra.mxu0 0
    %1510 = vmatprep.subr.bf16.mxu0 0
    %1511 = vmatpush1.bf16.msra.mxu0 0
    %1512 = vmatprep.subr.bf16.mxu0 0
    %1513 = vmatpush1.bf16.msra.mxu0 0
    %1514 = vmatprep.subr.bf16.mxu0 0
    %1515 = vmatpush1.bf16.msra.mxu0 0
    %1516 = vmatprep.subr.bf16.mxu0 0
    %1517 = vmatpush1.bf16.msra.mxu0 0
    %1518 = vmatprep.mubr.bf16.mxu0 0
    %1519 = vmatmul.mubr.bf16.gmra.mrb[0].mxu0 %v347
    %v1520 = vpop.f32.mrb[0].mxu0
    %v1521 = vadd.f32 0.0, %v1520
    %v1522 = vpop.f32.mrb[0].mxu0
    %v1523 = vadd.f32 0.0, %v1522
    %v1524 = vpop.f32.mrb[0].mxu0
    %v1525 = vpop.f32.mrb[0].mxu0
    %1526 = vdwg.mxu0
    %v1559 = vunpack.c.l.b16 %v230
    %v1560 = vunpack.c.h.b16 %v230
    %v1561 = vunpack.c.l.b16 %v231
    %v1562 = vunpack.c.h.b16 %v231
    %v1563 = vunpack.c.l.b16 %v232
    %v1564 = vunpack.c.h.b16 %v232
    %v1565 = vunpack.c.l.b16 %v233
    %v1566 = vunpack.c.h.b16 %v233
    %v1567 = vunpack.c.l.b16 %v234
    %v1568 = vunpack.c.h.b16 %v234
    %v1569 = vunpack.c.l.b16 %v235
    %v1570 = vunpack.c.h.b16 %v235
    %v1571 = vunpack.c.l.b16 %v236
    %v1572 = vunpack.c.h.b16 %v236
    %v1573 = vunpack.c.l.b16 %v237
    %v1574 = vunpack.c.h.b16 %v237
    %v1575 = vunpack.c.l.b16 %v238
    %v1576 = vunpack.c.h.b16 %v238
    %v1577 = vunpack.c.l.b16 %v239
    %v1578 = vunpack.c.h.b16 %v239
    %v1579 = vunpack.c.l.b16 %v240
    %v1580 = vunpack.c.h.b16 %v240
    %v1581 = vunpack.c.l.b16 %v241
    %v1582 = vunpack.c.h.b16 %v241
    %v1583 = vunpack.c.l.b16 %v242
    %v1584 = vunpack.c.h.b16 %v242
    %v1585 = vunpack.c.l.b16 %v243
    %v1586 = vunpack.c.h.b16 %v243
    %v1587 = vunpack.c.l.b16 %v244
    %v1588 = vunpack.c.h.b16 %v244
    %v1589 = vunpack.c.l.b16 %v245
    %v1590 = vunpack.c.h.b16 %v245
    %v1591 = vunpack.c.l.b16 %v246
    %v1592 = vunpack.c.h.b16 %v246
    %v1593 = vunpack.c.l.b16 %v247
    %v1594 = vunpack.c.h.b16 %v247
    %v1595 = vunpack.c.l.b16 %v248
    %v1596 = vunpack.c.h.b16 %v248
    %v1597 = vunpack.c.l.b16 %v249
    %v1598 = vunpack.c.h.b16 %v249
    %v1599 = vunpack.c.l.b16 %v250
    %v1600 = vunpack.c.h.b16 %v250
    %v1601 = vunpack.c.l.b16 %v251
    %v1602 = vunpack.c.h.b16 %v251
    %v1603 = vunpack.c.l.b16 %v252
    %v1604 = vunpack.c.h.b16 %v252
    %v1605 = vunpack.c.l.b16 %v253
    %v1606 = vunpack.c.h.b16 %v253
    %v1607 = vunpack.c.l.b16 %v254
    %v1608 = vunpack.c.h.b16 %v254
    %v1609 = vunpack.c.l.b16 %v255
    %v1610 = vunpack.c.h.b16 %v255
    %v1611 = vunpack.c.l.b16 %v256
    %v1612 = vunpack.c.h.b16 %v256
    %v1613 = vunpack.c.l.b16 %v257
    %v1614 = vunpack.c.h.b16 %v257
    %v1615 = vunpack.c.l.b16 %v258
    %v1616 = vunpack.c.h.b16 %v258
    %v1617 = vunpack.c.l.b16 %v259
    %v1618 = vunpack.c.h.b16 %v259
    %v1619 = vunpack.c.l.b16 %v260
    %v1620 = vunpack.c.h.b16 %v260
    %v1621 = vunpack.c.l.b16 %v261
    %v1622 = vunpack.c.h.b16 %v261
    %v1623 = vpack.c.b16 %v1563, %v1559
    %v1624 = vpack.c.b16 %v1564, %v1560
    %v1625 = vpack.c.b16 %v1565, %v1561
    %v1626 = vpack.c.b16 %v1566, %v1562
    %v1627 = vpack.c.b16 %v1571, %v1567
    %v1628 = vpack.c.b16 %v1572, %v1568
    %v1629 = vpack.c.b16 %v1573, %v1569
    %v1630 = vpack.c.b16 %v1574, %v1570
    %v1631 = vpack.c.b16 %v1579, %v1575
    %v1632 = vpack.c.b16 %v1580, %v1576
    %v1633 = vpack.c.b16 %v1581, %v1577
    %v1634 = vpack.c.b16 %v1582, %v1578
    %v1635 = vpack.c.b16 %v1587, %v1583
    %v1636 = vpack.c.b16 %v1588, %v1584
    %v1637 = vpack.c.b16 %v1589, %v1585
    %v1638 = vpack.c.b16 %v1590, %v1586
    %v1639 = vpack.c.b16 %v1595, %v1591
    %v1640 = vpack.c.b16 %v1596, %v1592
    %v1641 = vpack.c.b16 %v1597, %v1593
    %v1642 = vpack.c.b16 %v1598, %v1594
    %v1643 = vpack.c.b16 %v1603, %v1599
    %v1644 = vpack.c.b16 %v1604, %v1600
    %v1645 = vpack.c.b16 %v1605, %v1601
    %v1646 = vpack.c.b16 %v1606, %v1602
    %v1647 = vpack.c.b16 %v1611, %v1607
    %v1648 = vpack.c.b16 %v1612, %v1608
    %v1649 = vpack.c.b16 %v1613, %v1609
    %v1650 = vpack.c.b16 %v1614, %v1610
    %v1651 = vpack.c.b16 %v1619, %v1615
    %v1652 = vpack.c.b16 %v1620, %v1616
    %v1653 = vpack.c.b16 %v1621, %v1617
    %v1654 = vpack.c.b16 %v1622, %v1618
    %1687 = vmatprep.subr.bf16.mxu0 %v1624
    %1688 = vmatpush1.bf16.msra.mxu0 %v1623
    %1689 = vmatprep.subr.bf16.mxu0 %v1628
    %1690 = vmatpush1.bf16.msra.mxu0 %v1627
    %1691 = vmatprep.subr.bf16.mxu0 %v1632
    %1692 = vmatpush1.bf16.msra.mxu0 %v1631
    %1693 = vmatprep.subr.bf16.mxu0 %v1636
    %1694 = vmatpush1.bf16.msra.mxu0 %v1635
    %1695 = vmatprep.subr.bf16.mxu0 %v1640
    %1696 = vmatpush1.bf16.msra.mxu0 %v1639
    %1697 = vmatprep.subr.bf16.mxu0 %v1644
    %1698 = vmatpush1.bf16.msra.mxu0 %v1643
    %1699 = vmatprep.subr.bf16.mxu0 %v1648
    %1700 = vmatpush1.bf16.msra.mxu0 %v1647
    %1701 = vmatprep.subr.bf16.mxu0 %v1652
    %1702 = vmatpush1.bf16.msra.mxu0 %v1651
    %1703 = vmatprep.subr.bf16.mxu0 0
    %1704 = vmatpush1.bf16.msra.mxu0 0
    %1705 = vmatprep.subr.bf16.mxu0 0
    %1706 = vmatpush1.bf16.msra.mxu0 0
    %1707 = vmatprep.subr.bf16.mxu0 0
    %1708 = vmatpush1.bf16.msra.mxu0 0
    %1709 = vmatprep.subr.bf16.mxu0 0
    %1710 = vmatpush1.bf16.msra.mxu0 0
    %1711 = vmatprep.subr.bf16.mxu0 0
    %1712 = vmatpush1.bf16.msra.mxu0 0
    %1713 = vmatprep.subr.bf16.mxu0 0
    %1714 = vmatpush1.bf16.msra.mxu0 0
    %1715 = vmatprep.subr.bf16.mxu0 0
    %1716 = vmatpush1.bf16.msra.mxu0 0
    %1717 = vmatprep.subr.bf16.mxu0 0
    %1718 = vmatpush1.bf16.msra.mxu0 0
    %1719 = vmatprep.mubr.bf16.mxu0 0
    %1720 = vmatmul.mubr.bf16.gmra.mrb[0].mxu0 %v1284
    %v1721 = vpop.f32.mrb[0].mxu0
    %v1722 = vadd.f32 %v1480, %v1721
    %v1723 = vpop.f32.mrb[0].mxu0
    %v1724 = vadd.f32 %v1482, %v1723
    %v1725 = vpop.f32.mrb[0].mxu0
    %v1726 = vpop.f32.mrb[0].mxu0
    %1727 = vdwg.mxu0
    %1728 = vmatprep.subr.bf16.mxu0 %v1626
    %1729 = vmatpush1.bf16.msra.mxu0 %v1625
    %1730 = vmatprep.subr.bf16.mxu0 %v1630
    %1731 = vmatpush1.bf16.msra.mxu0 %v1629
    %1732 = vmatprep.subr.bf16.mxu0 %v1634
    %1733 = vmatpush1.bf16.msra.mxu0 %v1633
    %1734 = vmatprep.subr.bf16.mxu0 %v1638
    %1735 = vmatpush1.bf16.msra.mxu0 %v1637
    %1736 = vmatprep.subr.bf16.mxu0 %v1642
    %1737 = vmatpush1.bf16.msra.mxu0 %v1641
    %1738 = vmatprep.subr.bf16.mxu0 %v1646
    %1739 = vmatpush1.bf16.msra.mxu0 %v1645
    %1740 = vmatprep.subr.bf16.mxu0 %v1650
    %1741 = vmatpush1.bf16.msra.mxu0 %v1649
    %1742 = vmatprep.subr.bf16.mxu0 %v1654
    %1743 = vmatpush1.bf16.msra.mxu0 %v1653
    %1744 = vmatprep.subr.bf16.mxu0 0
    %1745 = vmatpush1.bf16.msra.mxu0 0
    %1746 = vmatprep.subr.bf16.mxu0 0
    %1747 = vmatpush1.bf16.msra.mxu0 0
    %1748 = vmatprep.subr.bf16.mxu0 0
    %1749 = vmatpush1.bf16.msra.mxu0 0
    %1750 = vmatprep.subr.bf16.mxu0 0
    %1751 = vmatpush1.bf16.msra.mxu0 0
    %1752 = vmatprep.subr.bf16.mxu0 0
    %1753 = vmatpush1.bf16.msra.mxu0 0
    %1754 = vmatprep.subr.bf16.mxu0 0
    %1755 = vmatpush1.bf16.msra.mxu0 0
    %1756 = vmatprep.subr.bf16.mxu0 0
    %1757 = vmatpush1.bf16.msra.mxu0 0
    %1758 = vmatprep.subr.bf16.mxu0 0
    %1759 = vmatpush1.bf16.msra.mxu0 0
    %1760 = vmatprep.mubr.bf16.mxu0 0
    %1761 = vmatmul.mubr.bf16.gmra.mrb[0].mxu0 %v1284
    %v1762 = vpop.f32.mrb[0].mxu0
    %v1763 = vadd.f32 %v1521, %v1762
    %v1764 = vpop.f32.mrb[0].mxu0
    %v1765 = vadd.f32 %v1523, %v1764
    %v1766 = vpop.f32.mrb[0].mxu0
    %v1767 = vpop.f32.mrb[0].mxu0
    %1768 = vdwg.mxu0
    %v1769 = vadd.f32 %v1722, %v328
    %v1770 = vadd.f32 %v1724, %v332
    %v1771 = vadd.f32 %v1763, %v336
    %v1772 = vadd.f32 %v1765, %v340
    %v1773 = vxor.u32 %v1769, 2147483648
    %v1774 = vmul.f32 %v1773, 1.442695
    %v1775 = vpow.pop %v1774
    %v1776 = vadd.f32 %v1775, 1.0
    %v1777 = vrcp.pop %v1776
    %v1778 = vmul.f32 1.0, %v1777
    %v1779 = vxor.u32 %v1770, 2147483648
    %v1780 = vmul.f32 %v1779, 1.442695
    %v1781 = vpow.pop %v1780
    %v1782 = vadd.f32 %v1781, 1.0
    %v1783 = vrcp.pop %v1782
    %v1784 = vmul.f32 1.0, %v1783
    %v1785 = vtanh.pop %v1771
    %v1786 = vxor.u32 %v1772, 2147483648
    %v1787 = vmul.f32 %v1786, 1.442695
    %v1788 = vpow.pop %v1787
    %v1789 = vadd.f32 %v1788, 1.0
    %v1790 = vrcp.pop %v1789
    %v1791 = vmul.f32 1.0, %v1790
    %v1792 = vmul.f32 %v1784, %v346
    %v1793 = vmul.f32 %v1778, %v1785
    %v1794 = vadd.f32 %v1792, %v1793
    %v1795 = vtanh.pop %v1794
    %v1796 = vmul.f32 %v1791, %v1795
    %v1797 = vadd.f32 %v1796, %v1276
    %v1798 = vpack.c.bf16 %v1797, %v1797
    %v1800 = vlaneseq
    %v1801 = vshrl.u32 %v1800, 7
    %v1802 = vsub.s32 0, %v1801
    %v1803 = vrot.slane %v310, %v1802
    %v1821 = vunpack.c.l.b16 %v294
    %v1822 = vunpack.c.l.b16 %v295
    %v1823 = vunpack.c.l.b16 %v296
    %v1824 = vunpack.c.l.b16 %v297
    %v1825 = vunpack.c.l.b16 %v298
    %v1826 = vunpack.c.l.b16 %v299
    %v1827 = vunpack.c.l.b16 %v300
    %v1828 = vunpack.c.l.b16 %v301
    %v1829 = vunpack.c.l.b16 %v302
    %v1830 = vunpack.c.l.b16 %v303
    %v1831 = vunpack.c.l.b16 %v304
    %v1832 = vunpack.c.l.b16 %v305
    %v1833 = vunpack.c.l.b16 %v306
    %v1834 = vunpack.c.l.b16 %v307
    %v1835 = vunpack.c.l.b16 %v308
    %v1836 = vunpack.c.l.b16 %v309
    %v1837 = vpack.c.b16 %v1822, %v1821
    %v1838 = vpack.c.b16 %v1824, %v1823
    %v1839 = vpack.c.b16 %v1826, %v1825
    %v1840 = vpack.c.b16 %v1828, %v1827
    %v1841 = vpack.c.b16 %v1830, %v1829
    %v1842 = vpack.c.b16 %v1832, %v1831
    %v1843 = vpack.c.b16 %v1834, %v1833
    %v1844 = vpack.c.b16 %v1836, %v1835
    %1853 = vmatprep.subr.bf16.mxu0 0
    %1854 = vmatpush1.bf16.msra.mxu0 %v1837
    %1855 = vmatprep.subr.bf16.mxu0 0
    %1856 = vmatpush1.bf16.msra.mxu0 %v1838
    %1857 = vmatprep.subr.bf16.mxu0 0
    %1858 = vmatpush1.bf16.msra.mxu0 %v1839
    %1859 = vmatprep.subr.bf16.mxu0 0
    %1860 = vmatpush1.bf16.msra.mxu0 %v1840
    %1861 = vmatprep.subr.bf16.mxu0 0
    %1862 = vmatpush1.bf16.msra.mxu0 %v1841
    %1863 = vmatprep.subr.bf16.mxu0 0
    %1864 = vmatpush1.bf16.msra.mxu0 %v1842
    %1865 = vmatprep.subr.bf16.mxu0 0
    %1866 = vmatpush1.bf16.msra.mxu0 %v1843
    %1867 = vmatprep.subr.bf16.mxu0 0
    %1868 = vmatpush1.bf16.msra.mxu0 %v1844
    %1869 = vmatprep.subr.bf16.mxu0 0
    %1870 = vmatpush1.bf16.msra.mxu0 0
    %1871 = vmatprep.subr.bf16.mxu0 0
    %1872 = vmatpush1.bf16.msra.mxu0 0
    %1873 = vmatprep.subr.bf16.mxu0 0
    %1874 = vmatpush1.bf16.msra.mxu0 0
    %1875 = vmatprep.subr.bf16.mxu0 0
    %1876 = vmatpush1.bf16.msra.mxu0 0
    %1877 = vmatprep.subr.bf16.mxu0 0
    %1878 = vmatpush1.bf16.msra.mxu0 0
    %1879 = vmatprep.subr.bf16.mxu0 0
    %1880 = vmatpush1.bf16.msra.mxu0 0
    %1881 = vmatprep.subr.bf16.mxu0 0
    %1882 = vmatpush1.bf16.msra.mxu0 0
    %1883 = vmatprep.subr.bf16.mxu0 0
    %1884 = vmatpush1.bf16.msra.mxu0 0
    %1885 = vmatprep.mubr.bf16.mxu0 0
    %1886 = vmatmul.mubr.bf16.gmra.mrb[0].mxu0 %v1798
    %v1887 = vpop.f32.mrb[0].mxu0
    %v1888 = vadd.f32 %v1803, %v1887
    %v1889 = vpop.f32.mrb[0].mxu0
    %v1890 = vpop.f32.mrb[0].mxu0
    %v1891 = vpop.f32.mrb[0].mxu0
    %1892 = vdwg.mxu0
    %v1894 = vcombine.high %v1888, %v1888
    %v1896 = vunpack.c.l.s4 1966171168
    %v1897 = vunpack.c.0.s8 %v1896
    %v1898 = vlaneseq
    %v1899 = vshrl.u32 %v1898, 7
    %v1900 = vsub.s32 %v1897, %v1899
    %v1901 = vrot.slane %v1888, %v1900
    %v1903 = vunpack.c.l.s4 1966171168
    %v1904 = vunpack.c.0.s8 %v1903
    %v1905 = vlaneseq
    %v1906 = vshrl.u32 %v1905, 7
    %v1907 = vsub.s32 %v1904, %v1906
    %v1908 = vrot.slane %v1894, %v1907
    %v1909 = vcombine.high %v1901, %v1901
    %v1910 = vcombine.high %v1908, %v1908
    %v1912 = vunpack.c.l.s4 1966171168
    %v1913 = vunpack.c.0.s8 %v1912
    %v1914 = vlaneseq
    %v1915 = vshrl.u32 %v1914, 7
    %v1916 = vsub.s32 %v1913, %v1915
    %v1917 = vrot.slane %v1901, %v1916
    %v1919 = vunpack.c.l.s4 1966171168
    %v1920 = vunpack.c.0.s8 %v1919
    %v1921 = vlaneseq
    %v1922 = vshrl.u32 %v1921, 7
    %v1923 = vsub.s32 %v1920, %v1922
    %v1924 = vrot.slane %v1908, %v1923
    %v1926 = vunpack.c.l.s4 1966171168
    %v1927 = vunpack.c.0.s8 %v1926
    %v1928 = vlaneseq
    %v1929 = vshrl.u32 %v1928, 7
    %v1930 = vsub.s32 %v1927, %v1929
    %v1931 = vrot.slane %v1909, %v1930
    %v1933 = vunpack.c.l.s4 1966171168
    %v1934 = vunpack.c.0.s8 %v1933
    %v1935 = vlaneseq
    %v1936 = vshrl.u32 %v1935, 7
    %v1937 = vsub.s32 %v1934, %v1936
    %v1938 = vrot.slane %v1910, %v1937
    %v1939 = vcombine.high %v1917, %v1917
    %v1940 = vcombine.high %v1924, %v1924
    %v1941 = vcombine.high %v1931, %v1931
    %v1942 = vcombine.high %v1938, %v1938
    %1951 = vst [vmem:[#allocation19] sm:$0x1] %v1917
    %1952 = vst [vmem:[#allocation19 + $0x8] sm:$0x1] %v1931
    %1953 = vst [vmem:[#allocation19 + $0x10] sm:$0x1] %v1939
    %1954 = vst [vmem:[#allocation19 + $0x18] sm:$0x1] %v1941
    %1955 = vst [vmem:[#allocation19 + $0x20] sm:$0x1] %v1924
    %1956 = vst [vmem:[#allocation19 + $0x28] sm:$0x1] %v1938
    %1957 = vst [vmem:[#allocation19 + $0x30] sm:$0x1] %v1940
    %1958 = vst [vmem:[#allocation19 + $0x38] sm:$0x1] %v1942
    %v1959 = vpack.c.bf16 %v1796, %v1796
    %1960 = vmatprep.subr.bf16.mxu0 0
    %1961 = vmatpush1.bf16.msra.mxu0 %v380
    %1962 = vmatprep.subr.bf16.mxu0 0
    %1963 = vmatpush1.bf16.msra.mxu0 %v381
    %1964 = vmatprep.subr.bf16.mxu0 0
    %1965 = vmatpush1.bf16.msra.mxu0 %v382
    %1966 = vmatprep.subr.bf16.mxu0 0
    %1967 = vmatpush1.bf16.msra.mxu0 %v383
    %1968 = vmatprep.subr.bf16.mxu0 0
    %1969 = vmatpush1.bf16.msra.mxu0 %v384
    %1970 = vmatprep.subr.bf16.mxu0 0
    %1971 = vmatpush1.bf16.msra.mxu0 %v385
    %1972 = vmatprep.subr.bf16.mxu0 0
    %1973 = vmatpush1.bf16.msra.mxu0 %v386
    %1974 = vmatprep.subr.bf16.mxu0 0
    %1975 = vmatpush1.bf16.msra.mxu0 %v387
    %1976 = vmatprep.subr.bf16.mxu0 0
    %1977 = vmatpush1.bf16.msra.mxu0 0
    %1978 = vmatprep.subr.bf16.mxu0 0
    %1979 = vmatpush1.bf16.msra.mxu0 0
    %1980 = vmatprep.subr.bf16.mxu0 0
    %1981 = vmatpush1.bf16.msra.mxu0 0
    %1982 = vmatprep.subr.bf16.mxu0 0
    %1983 = vmatpush1.bf16.msra.mxu0 0
    %1984 = vmatprep.subr.bf16.mxu0 0
    %1985 = vmatpush1.bf16.msra.mxu0 0
    %1986 = vmatprep.subr.bf16.mxu0 0
    %1987 = vmatpush1.bf16.msra.mxu0 0
    %1988 = vmatprep.subr.bf16.mxu0 0
    %1989 = vmatpush1.bf16.msra.mxu0 0
    %1990 = vmatprep.subr.bf16.mxu0 0
    %1991 = vmatpush1.bf16.msra.mxu0 0
    %1992 = vmatprep.mubr.bf16.mxu0 0
    %1993 = vmatmul.mubr.bf16.gmra.mrb[0].mxu0 %v1959
    %v1994 = vpop.f32.mrb[0].mxu0
    %v1995 = vadd.f32 0.0, %v1994
    %v1996 = vpop.f32.mrb[0].mxu0
    %v1997 = vpop.f32.mrb[0].mxu0
    %v1998 = vpop.f32.mrb[0].mxu0
    %1999 = vdwg.mxu0
    %v2001 = vcombine.high %v1995, %v1995
    %v2003 = vunpack.c.l.s4 1966171168
    %v2004 = vunpack.c.0.s8 %v2003
    %v2005 = vlaneseq
    %v2006 = vshrl.u32 %v2005, 7
    %v2007 = vsub.s32 %v2004, %v2006
    %v2008 = vrot.slane %v1995, %v2007
    %v2010 = vunpack.c.l.s4 1966171168
    %v2011 = vunpack.c.0.s8 %v2010
    %v2012 = vlaneseq
    %v2013 = vshrl.u32 %v2012, 7
    %v2014 = vsub.s32 %v2011, %v2013
    %v2015 = vrot.slane %v2001, %v2014
    %v2016 = vcombine.high %v2008, %v2008
    %v2017 = vcombine.high %v2015, %v2015
    %v2019 = vunpack.c.l.s4 1966171168
    %v2020 = vunpack.c.0.s8 %v2019
    %v2021 = vlaneseq
    %v2022 = vshrl.u32 %v2021, 7
    %v2023 = vsub.s32 %v2020, %v2022
    %v2024 = vrot.slane %v2008, %v2023
    %v2026 = vunpack.c.l.s4 1966171168
    %v2027 = vunpack.c.0.s8 %v2026
    %v2028 = vlaneseq
    %v2029 = vshrl.u32 %v2028, 7
    %v2030 = vsub.s32 %v2027, %v2029
    %v2031 = vrot.slane %v2015, %v2030
    %v2033 = vunpack.c.l.s4 1966171168
    %v2034 = vunpack.c.0.s8 %v2033
    %v2035 = vlaneseq
    %v2036 = vshrl.u32 %v2035, 7
    %v2037 = vsub.s32 %v2034, %v2036
    %v2038 = vrot.slane %v2016, %v2037
    %v2040 = vunpack.c.l.s4 1966171168
    %v2041 = vunpack.c.0.s8 %v2040
    %v2042 = vlaneseq
    %v2043 = vshrl.u32 %v2042, 7
    %v2044 = vsub.s32 %v2041, %v2043
    %v2045 = vrot.slane %v2017, %v2044
    %v2046 = vcombine.high %v2024, %v2024
    %v2047 = vcombine.high %v2031, %v2031
    %v2048 = vcombine.high %v2038, %v2038
    %v2049 = vcombine.high %v2045, %v2045
    %v2050 = vlaneseq
    %v2051 = vshrl.u32 %v2050, 7
    %v2052 = vsub.s32 0, %v2051
    %v2053 = vrot.slane %v2024, %v2052
    %v2054 = vlaneseq
    %v2055 = vshrl.u32 %v2054, 7
    %v2056 = vsub.s32 0, %v2055
    %v2057 = vrot.slane %v2038, %v2056
    %v2058 = vlaneseq
    %v2059 = vshrl.u32 %v2058, 7
    %v2060 = vsub.s32 0, %v2059
    %v2061 = vrot.slane %v2046, %v2060
    %v2062 = vlaneseq
    %v2063 = vshrl.u32 %v2062, 7
    %v2064 = vsub.s32 0, %v2063
    %v2065 = vrot.slane %v2048, %v2064
    %v2066 = vlaneseq
    %v2067 = vshrl.u32 %v2066, 7
    %v2068 = vsub.s32 0, %v2067
    %v2069 = vrot.slane %v2031, %v2068
    %v2070 = vlaneseq
    %v2071 = vshrl.u32 %v2070, 7
    %v2072 = vsub.s32 0, %v2071
    %v2073 = vrot.slane %v2045, %v2072
    %v2074 = vlaneseq
    %v2075 = vshrl.u32 %v2074, 7
    %v2076 = vsub.s32 0, %v2075
    %v2077 = vrot.slane %v2047, %v2076
    %v2078 = vlaneseq
    %v2079 = vshrl.u32 %v2078, 7
    %v2080 = vsub.s32 0, %v2079
    %v2081 = vrot.slane %v2049, %v2080
    %v2090 = vadd.f32 %v193, %v2053
    %v2091 = vadd.f32 %v194, %v2053
    %v2092 = vadd.f32 %v195, %v2057
    %v2093 = vadd.f32 %v196, %v2057
    %v2094 = vadd.f32 %v197, %v2061
    %v2095 = vadd.f32 %v198, %v2061
    %v2096 = vadd.f32 %v199, %v2065
    %v2097 = vadd.f32 %v200, %v2065
    %v2098 = vadd.f32 %v201, %v2069
    %v2099 = vadd.f32 %v202, %v2069
    %v2100 = vadd.f32 %v203, %v2073
    %v2101 = vadd.f32 %v204, %v2073
    %v2102 = vadd.f32 %v205, %v2077
    %v2103 = vadd.f32 %v206, %v2077
    %v2104 = vadd.f32 %v207, %v2081
    %v2105 = vadd.f32 %v208, %v2081
    %v2106 = vtanh.pop %v2090
    %v2107 = vtanh.pop %v2091
    %v2108 = vtanh.pop %v2092
    %v2109 = vtanh.pop %v2093
    %v2110 = vtanh.pop %v2094
    %v2111 = vtanh.pop %v2095
    %v2112 = vtanh.pop %v2096
    %v2113 = vtanh.pop %v2097
    %v2114 = vtanh.pop %v2098
    %v2115 = vtanh.pop %v2099
    %v2116 = vtanh.pop %v2100
    %v2117 = vtanh.pop %v2101
    %v2118 = vtanh.pop %v2102
    %v2119 = vtanh.pop %v2103
    %v2120 = vtanh.pop %v2104
    %v2121 = vtanh.pop %v2105
    %v2122 = vmul.f32 %v2106, %v562
    %v2123 = vmul.f32 %v2107, %v562
    %v2124 = vmul.f32 %v2108, %v562
    %v2125 = vmul.f32 %v2109, %v562
    %v2126 = vmul.f32 %v2110, %v562
    %v2127 = vmul.f32 %v2111, %v562
    %v2128 = vmul.f32 %v2112, %v562
    %v2129 = vmul.f32 %v2113, %v562
    %v2130 = vmul.f32 %v2114, %v562
    %v2131 = vmul.f32 %v2115, %v562
    %v2132 = vmul.f32 %v2116, %v562
    %v2133 = vmul.f32 %v2117, %v562
    %v2134 = vmul.f32 %v2118, %v562
    %v2135 = vmul.f32 %v2119, %v562
    %v2136 = vmul.f32 %v2120, %v562
    %v2137 = vmul.f32 %v2121, %v562
    %2138 = vadd.xlane.f32.xlu0 %v2122
    %v2139 = vpop.xlane.xlu0 %2138
    %2140 = vadd.xlane.f32.xlu0 %v2123
    %v2141 = vpop.xlane.xlu0 %2140
    %2142 = vadd.xlane.f32.xlu0 %v2124
    %v2143 = vpop.xlane.xlu0 %2142
    %2144 = vadd.xlane.f32.xlu0 %v2125
    %v2145 = vpop.xlane.xlu0 %2144
    %2146 = vadd.xlane.f32.xlu0 %v2126
    %v2147 = vpop.xlane.xlu0 %2146
    %2148 = vadd.xlane.f32.xlu0 %v2127
    %v2149 = vpop.xlane.xlu0 %2148
    %2150 = vadd.xlane.f32.xlu0 %v2128
    %v2151 = vpop.xlane.xlu0 %2150
    %2152 = vadd.xlane.f32.xlu0 %v2129
    %v2153 = vpop.xlane.xlu0 %2152
    %2154 = vadd.xlane.f32.xlu0 %v2130
    %v2155 = vpop.xlane.xlu0 %2154
    %2156 = vadd.xlane.f32.xlu0 %v2131
    %v2157 = vpop.xlane.xlu0 %2156
    %2158 = vadd.xlane.f32.xlu0 %v2132
    %v2159 = vpop.xlane.xlu0 %2158
    %2160 = vadd.xlane.f32.xlu0 %v2133
    %v2161 = vpop.xlane.xlu0 %2160
    %2162 = vadd.xlane.f32.xlu0 %v2134
    %v2163 = vpop.xlane.xlu0 %2162
    %2164 = vadd.xlane.f32.xlu0 %v2135
    %v2165 = vpop.xlane.xlu0 %2164
    %2166 = vadd.xlane.f32.xlu0 %v2136
    %v2167 = vpop.xlane.xlu0 %2166
    %2168 = vadd.xlane.f32.xlu0 %v2137
    %v2169 = vpop.xlane.xlu0 %2168
    %v2186 = vlaneseq
    %v2187 = vshrl.u32 %v2186, 7
    %v2188 = vsub.s32 %v629, %v2187
    %v2189 = vrot.slane %v2139, %v2188
    %v2190 = vlaneseq
    %v2191 = vshrl.u32 %v2190, 7
    %v2192 = vsub.s32 %v634, %v2191
    %v2193 = vrot.slane %v2141, %v2192
    %v2194 = vsel %vm639, %v2193, %v2189
    %v2195 = vlaneseq
    %v2196 = vshrl.u32 %v2195, 7
    %v2197 = vsub.s32 %v629, %v2196
    %v2198 = vrot.slane %v2143, %v2197
    %v2199 = vlaneseq
    %v2200 = vshrl.u32 %v2199, 7
    %v2201 = vsub.s32 %v634, %v2200
    %v2202 = vrot.slane %v2145, %v2201
    %v2203 = vsel %vm639, %v2202, %v2198
    %v2204 = vlaneseq
    %v2205 = vshrl.u32 %v2204, 7
    %v2206 = vsub.s32 %v629, %v2205
    %v2207 = vrot.slane %v2147, %v2206
    %v2208 = vlaneseq
    %v2209 = vshrl.u32 %v2208, 7
    %v2210 = vsub.s32 %v634, %v2209
    %v2211 = vrot.slane %v2149, %v2210
    %v2212 = vsel %vm639, %v2211, %v2207
    %v2213 = vlaneseq
    %v2214 = vshrl.u32 %v2213, 7
    %v2215 = vsub.s32 %v629, %v2214
    %v2216 = vrot.slane %v2151, %v2215
    %v2217 = vlaneseq
    %v2218 = vshrl.u32 %v2217, 7
    %v2219 = vsub.s32 %v634, %v2218
    %v2220 = vrot.slane %v2153, %v2219
    %v2221 = vsel %vm639, %v2220, %v2216
    %v2222 = vlaneseq
    %v2223 = vshrl.u32 %v2222, 7
    %v2224 = vsub.s32 %v629, %v2223
    %v2225 = vrot.slane %v2155, %v2224
    %v2226 = vlaneseq
    %v2227 = vshrl.u32 %v2226, 7
    %v2228 = vsub.s32 %v634, %v2227
    %v2229 = vrot.slane %v2157, %v2228
    %v2230 = vsel %vm639, %v2229, %v2225
    %v2231 = vlaneseq
    %v2232 = vshrl.u32 %v2231, 7
    %v2233 = vsub.s32 %v629, %v2232
    %v2234 = vrot.slane %v2159, %v2233
    %v2235 = vlaneseq
    %v2236 = vshrl.u32 %v2235, 7
    %v2237 = vsub.s32 %v634, %v2236
    %v2238 = vrot.slane %v2161, %v2237
    %v2239 = vsel %vm639, %v2238, %v2234
    %v2240 = vlaneseq
    %v2241 = vshrl.u32 %v2240, 7
    %v2242 = vsub.s32 %v629, %v2241
    %v2243 = vrot.slane %v2163, %v2242
    %v2244 = vlaneseq
    %v2245 = vshrl.u32 %v2244, 7
    %v2246 = vsub.s32 %v634, %v2245
    %v2247 = vrot.slane %v2165, %v2246
    %v2248 = vsel %vm639, %v2247, %v2243
    %v2249 = vlaneseq
    %v2250 = vshrl.u32 %v2249, 7
    %v2251 = vsub.s32 %v629, %v2250
    %v2252 = vrot.slane %v2167, %v2251
    %v2253 = vlaneseq
    %v2254 = vshrl.u32 %v2253, 7
    %v2255 = vsub.s32 %v634, %v2254
    %v2256 = vrot.slane %v2169, %v2255
    %v2257 = vsel %vm639, %v2256, %v2252
    %v2258 = vsel %vm704, %v2203, %v2194
    %v2259 = vsel %vm706, %v2212, %v2258
    %v2260 = vsel %vm708, %v2221, %v2259
    %v2261 = vsel %vm710, %v2230, %v2260
    %v2262 = vsel %vm712, %v2239, %v2261
    %v2263 = vsel %vm714, %v2248, %v2262
    %v2264 = vsel %vm716, %v2257, %v2263
    %v2266 = vsel %vm719, %v2264, -inf
    %2267 = vmax.xlane.f32.xlu0 %v2266
    %v2268 = vpop.xlane.xlu0 %2267
    %v2270 = vlaneseq
    %v2271 = vshrl.u32 %v2270, 7
    %v2272 = vsub.s32 0, %v2271
    %v2273 = vrot.slane %v2268, %v2272
    %v2274 = vlaneseq
    %v2275 = vshrl.u32 %v2274, 7
    %v2276 = vsub.s32 1, %v2275
    %v2277 = vrot.slane %v2268, %v2276
    %v2278 = vlaneseq
    %v2279 = vshrl.u32 %v2278, 7
    %v2280 = vsub.s32 2, %v2279
    %v2281 = vrot.slane %v2268, %v2280
    %v2282 = vlaneseq
    %v2283 = vshrl.u32 %v2282, 7
    %v2284 = vsub.s32 3, %v2283
    %v2285 = vrot.slane %v2268, %v2284
    %v2286 = vlaneseq
    %v2287 = vshrl.u32 %v2286, 7
    %v2288 = vsub.s32 4, %v2287
    %v2289 = vrot.slane %v2268, %v2288
    %v2290 = vlaneseq
    %v2291 = vshrl.u32 %v2290, 7
    %v2292 = vsub.s32 5, %v2291
    %v2293 = vrot.slane %v2268, %v2292
    %v2294 = vlaneseq
    %v2295 = vshrl.u32 %v2294, 7
    %v2296 = vsub.s32 6, %v2295
    %v2297 = vrot.slane %v2268, %v2296
    %v2298 = vlaneseq
    %v2299 = vshrl.u32 %v2298, 7
    %v2300 = vsub.s32 7, %v2299
    %v2301 = vrot.slane %v2268, %v2300
    %v2310 = vsub.f32 %v2139, %v2273
    %v2311 = vsub.f32 %v2141, %v2273
    %v2312 = vsub.f32 %v2143, %v2277
    %v2313 = vsub.f32 %v2145, %v2277
    %v2314 = vsub.f32 %v2147, %v2281
    %v2315 = vsub.f32 %v2149, %v2281
    %v2316 = vsub.f32 %v2151, %v2285
    %v2317 = vsub.f32 %v2153, %v2285
    %v2318 = vsub.f32 %v2155, %v2289
    %v2319 = vsub.f32 %v2157, %v2289
    %v2320 = vsub.f32 %v2159, %v2293
    %v2321 = vsub.f32 %v2161, %v2293
    %v2322 = vsub.f32 %v2163, %v2297
    %v2323 = vsub.f32 %v2165, %v2297
    %v2324 = vsub.f32 %v2167, %v2301
    %v2325 = vsub.f32 %v2169, %v2301
    %v2326 = vmul.f32 %v2310, 1.442695
    %v2327 = vpow.pop %v2326
    %v2328 = vmul.f32 %v2311, 1.442695
    %v2329 = vpow.pop %v2328
    %v2330 = vmul.f32 %v2312, 1.442695
    %v2331 = vpow.pop %v2330
    %v2332 = vmul.f32 %v2313, 1.442695
    %v2333 = vpow.pop %v2332
    %v2334 = vmul.f32 %v2314, 1.442695
    %v2335 = vpow.pop %v2334
    %v2336 = vmul.f32 %v2315, 1.442695
    %v2337 = vpow.pop %v2336
    %v2338 = vmul.f32 %v2316, 1.442695
    %v2339 = vpow.pop %v2338
    %v2340 = vmul.f32 %v2317, 1.442695
    %v2341 = vpow.pop %v2340
    %v2342 = vmul.f32 %v2318, 1.442695
    %v2343 = vpow.pop %v2342
    %v2344 = vmul.f32 %v2319, 1.442695
    %v2345 = vpow.pop %v2344
    %v2346 = vmul.f32 %v2320, 1.442695
    %v2347 = vpow.pop %v2346
    %v2348 = vmul.f32 %v2321, 1.442695
    %v2349 = vpow.pop %v2348
    %v2350 = vmul.f32 %v2322, 1.442695
    %v2351 = vpow.pop %v2350
    %v2352 = vmul.f32 %v2323, 1.442695
    %v2353 = vpow.pop %v2352
    %v2354 = vmul.f32 %v2324, 1.442695
    %v2355 = vpow.pop %v2354
    %v2356 = vmul.f32 %v2325, 1.442695
    %v2357 = vpow.pop %v2356
    %2374 = vset.pattern.permute.xlu0 0
    %2375 = vperm.xlu0 %2374, %v2327
    %v2376 = vpop.permute.xlu0 %2375
    %2377 = vset.pattern.permute.xlu0 0
    %2378 = vperm.xlu0 %2377, %v2329
    %v2379 = vpop.permute.xlu0 %2378
    %2380 = vset.pattern.permute.xlu0 0
    %2381 = vperm.xlu0 %2380, %v2331
    %v2382 = vpop.permute.xlu0 %2381
    %2383 = vset.pattern.permute.xlu0 0
    %2384 = vperm.xlu0 %2383, %v2333
    %v2385 = vpop.permute.xlu0 %2384
    %2386 = vset.pattern.permute.xlu0 0
    %2387 = vperm.xlu0 %2386, %v2335
    %v2388 = vpop.permute.xlu0 %2387
    %2389 = vset.pattern.permute.xlu0 0
    %2390 = vperm.xlu0 %2389, %v2337
    %v2391 = vpop.permute.xlu0 %2390
    %2392 = vset.pattern.permute.xlu0 0
    %2393 = vperm.xlu0 %2392, %v2339
    %v2394 = vpop.permute.xlu0 %2393
    %2395 = vset.pattern.permute.xlu0 0
    %2396 = vperm.xlu0 %2395, %v2341
    %v2397 = vpop.permute.xlu0 %2396
    %2398 = vset.pattern.permute.xlu0 0
    %2399 = vperm.xlu0 %2398, %v2343
    %v2400 = vpop.permute.xlu0 %2399
    %2401 = vset.pattern.permute.xlu0 0
    %2402 = vperm.xlu0 %2401, %v2345
    %v2403 = vpop.permute.xlu0 %2402
    %2404 = vset.pattern.permute.xlu0 0
    %2405 = vperm.xlu0 %2404, %v2347
    %v2406 = vpop.permute.xlu0 %2405
    %2407 = vset.pattern.permute.xlu0 0
    %2408 = vperm.xlu0 %2407, %v2349
    %v2409 = vpop.permute.xlu0 %2408
    %2410 = vset.pattern.permute.xlu0 0
    %2411 = vperm.xlu0 %2410, %v2351
    %v2412 = vpop.permute.xlu0 %2411
    %2413 = vset.pattern.permute.xlu0 0
    %2414 = vperm.xlu0 %2413, %v2353
    %v2415 = vpop.permute.xlu0 %2414
    %2416 = vset.pattern.permute.xlu0 0
    %2417 = vperm.xlu0 %2416, %v2355
    %v2418 = vpop.permute.xlu0 %2417
    %2419 = vset.pattern.permute.xlu0 0
    %2420 = vperm.xlu0 %2419, %v2357
    %v2421 = vpop.permute.xlu0 %2420
    %v2422 = vlaneseq
    %v2423 = vshrl.u32 %v2422, 7
    %v2424 = vsub.s32 %v629, %v2423
    %v2425 = vrot.slane %v2376, %v2424
    %v2426 = vlaneseq
    %v2427 = vshrl.u32 %v2426, 7
    %v2428 = vsub.s32 %v634, %v2427
    %v2429 = vrot.slane %v2379, %v2428
    %v2430 = vsel %vm639, %v2429, %v2425
    %v2431 = vlaneseq
    %v2432 = vshrl.u32 %v2431, 7
    %v2433 = vsub.s32 %v629, %v2432
    %v2434 = vrot.slane %v2382, %v2433
    %v2435 = vlaneseq
    %v2436 = vshrl.u32 %v2435, 7
    %v2437 = vsub.s32 %v634, %v2436
    %v2438 = vrot.slane %v2385, %v2437
    %v2439 = vsel %vm639, %v2438, %v2434
    %v2440 = vlaneseq
    %v2441 = vshrl.u32 %v2440, 7
    %v2442 = vsub.s32 %v629, %v2441
    %v2443 = vrot.slane %v2388, %v2442
    %v2444 = vlaneseq
    %v2445 = vshrl.u32 %v2444, 7
    %v2446 = vsub.s32 %v634, %v2445
    %v2447 = vrot.slane %v2391, %v2446
    %v2448 = vsel %vm639, %v2447, %v2443
    %v2449 = vlaneseq
    %v2450 = vshrl.u32 %v2449, 7
    %v2451 = vsub.s32 %v629, %v2450
    %v2452 = vrot.slane %v2394, %v2451
    %v2453 = vlaneseq
    %v2454 = vshrl.u32 %v2453, 7
    %v2455 = vsub.s32 %v634, %v2454
    %v2456 = vrot.slane %v2397, %v2455
    %v2457 = vsel %vm639, %v2456, %v2452
    %v2458 = vlaneseq
    %v2459 = vshrl.u32 %v2458, 7
    %v2460 = vsub.s32 %v629, %v2459
    %v2461 = vrot.slane %v2400, %v2460
    %v2462 = vlaneseq
    %v2463 = vshrl.u32 %v2462, 7
    %v2464 = vsub.s32 %v634, %v2463
    %v2465 = vrot.slane %v2403, %v2464
    %v2466 = vsel %vm639, %v2465, %v2461
    %v2467 = vlaneseq
    %v2468 = vshrl.u32 %v2467, 7
    %v2469 = vsub.s32 %v629, %v2468
    %v2470 = vrot.slane %v2406, %v2469
    %v2471 = vlaneseq
    %v2472 = vshrl.u32 %v2471, 7
    %v2473 = vsub.s32 %v634, %v2472
    %v2474 = vrot.slane %v2409, %v2473
    %v2475 = vsel %vm639, %v2474, %v2470
    %v2476 = vlaneseq
    %v2477 = vshrl.u32 %v2476, 7
    %v2478 = vsub.s32 %v629, %v2477
    %v2479 = vrot.slane %v2412, %v2478
    %v2480 = vlaneseq
    %v2481 = vshrl.u32 %v2480, 7
    %v2482 = vsub.s32 %v634, %v2481
    %v2483 = vrot.slane %v2415, %v2482
    %v2484 = vsel %vm639, %v2483, %v2479
    %v2485 = vlaneseq
    %v2486 = vshrl.u32 %v2485, 7
    %v2487 = vsub.s32 %v629, %v2486
    %v2488 = vrot.slane %v2418, %v2487
    %v2489 = vlaneseq
    %v2490 = vshrl.u32 %v2489, 7
    %v2491 = vsub.s32 %v634, %v2490
    %v2492 = vrot.slane %v2421, %v2491
    %v2493 = vsel %vm639, %v2492, %v2488
    %v2494 = vsel %vm704, %v2439, %v2430
    %v2495 = vsel %vm706, %v2448, %v2494
    %v2496 = vsel %vm708, %v2457, %v2495
    %v2497 = vsel %vm710, %v2466, %v2496
    %v2498 = vsel %vm712, %v2475, %v2497
    %v2499 = vsel %vm714, %v2484, %v2498
    %v2500 = vsel %vm716, %v2493, %v2499
    %v2502 = vsel %vm719, %v2500, 0.0
    %2503 = vadd.xlane.f32.xlu0 %v2502
    %v2504 = vpop.xlane.xlu0 %2503
    %v2505 = vrcp.pop %v2504
    %v2507 = vlaneseq
    %v2508 = vshrl.u32 %v2507, 7
    %v2509 = vsub.s32 0, %v2508
    %v2510 = vrot.slane %v2505, %v2509
    %v2511 = vlaneseq
    %v2512 = vshrl.u32 %v2511, 7
    %v2513 = vsub.s32 1, %v2512
    %v2514 = vrot.slane %v2505, %v2513
    %v2515 = vlaneseq
    %v2516 = vshrl.u32 %v2515, 7
    %v2517 = vsub.s32 2, %v2516
    %v2518 = vrot.slane %v2505, %v2517
    %v2519 = vlaneseq
    %v2520 = vshrl.u32 %v2519, 7
    %v2521 = vsub.s32 3, %v2520
    %v2522 = vrot.slane %v2505, %v2521
    %v2523 = vlaneseq
    %v2524 = vshrl.u32 %v2523, 7
    %v2525 = vsub.s32 4, %v2524
    %v2526 = vrot.slane %v2505, %v2525
    %v2527 = vlaneseq
    %v2528 = vshrl.u32 %v2527, 7
    %v2529 = vsub.s32 5, %v2528
    %v2530 = vrot.slane %v2505, %v2529
    %v2531 = vlaneseq
    %v2532 = vshrl.u32 %v2531, 7
    %v2533 = vsub.s32 6, %v2532
    %v2534 = vrot.slane %v2505, %v2533
    %v2535 = vlaneseq
    %v2536 = vshrl.u32 %v2535, 7
    %v2537 = vsub.s32 7, %v2536
    %v2538 = vrot.slane %v2505, %v2537
    %v2547 = vmul.f32 %v2327, %v2510
    %v2548 = vmul.f32 %v2329, %v2510
    %v2549 = vmul.f32 %v2331, %v2514
    %v2550 = vmul.f32 %v2333, %v2514
    %v2551 = vmul.f32 %v2335, %v2518
    %v2552 = vmul.f32 %v2337, %v2518
    %v2553 = vmul.f32 %v2339, %v2522
    %v2554 = vmul.f32 %v2341, %v2522
    %v2555 = vmul.f32 %v2343, %v2526
    %v2556 = vmul.f32 %v2345, %v2526
    %v2557 = vmul.f32 %v2347, %v2530
    %v2558 = vmul.f32 %v2349, %v2530
    %v2559 = vmul.f32 %v2351, %v2534
    %v2560 = vmul.f32 %v2353, %v2534
    %v2561 = vmul.f32 %v2355, %v2538
    %v2562 = vmul.f32 %v2357, %v2538
    %2564 = vset.pattern.permute.xlu0 0
    %2565 = vperm.xlu0 %2564, %v2547
    %v2566 = vpop.permute.xlu0 %2565
    %2569 = vset.pattern.permute.xlu0 0
    %2570 = vperm.xlu0 %2569, %v2548
    %v2571 = vpop.permute.xlu0 %2570
    %2574 = vset.pattern.permute.xlu0 0
    %2575 = vperm.xlu0 %2574, %v2549
    %v2576 = vpop.permute.xlu0 %2575
    %2579 = vset.pattern.permute.xlu0 0
    %2580 = vperm.xlu0 %2579, %v2550
    %v2581 = vpop.permute.xlu0 %2580
    %2584 = vset.pattern.permute.xlu0 0
    %2585 = vperm.xlu0 %2584, %v2551
    %v2586 = vpop.permute.xlu0 %2585
    %2589 = vset.pattern.permute.xlu0 0
    %2590 = vperm.xlu0 %2589, %v2552
    %v2591 = vpop.permute.xlu0 %2590
    %2594 = vset.pattern.permute.xlu0 0
    %2595 = vperm.xlu0 %2594, %v2553
    %v2596 = vpop.permute.xlu0 %2595
    %2599 = vset.pattern.permute.xlu0 0
    %2600 = vperm.xlu0 %2599, %v2554
    %v2601 = vpop.permute.xlu0 %2600
    %2604 = vset.pattern.permute.xlu0 0
    %2605 = vperm.xlu0 %2604, %v2555
    %v2606 = vpop.permute.xlu0 %2605
    %2609 = vset.pattern.permute.xlu0 0
    %2610 = vperm.xlu0 %2609, %v2556
    %v2611 = vpop.permute.xlu0 %2610
    %2614 = vset.pattern.permute.xlu0 0
    %2615 = vperm.xlu0 %2614, %v2557
    %v2616 = vpop.permute.xlu0 %2615
    %2619 = vset.pattern.permute.xlu0 0
    %2620 = vperm.xlu0 %2619, %v2558
    %v2621 = vpop.permute.xlu0 %2620
    %2624 = vset.pattern.permute.xlu0 0
    %2625 = vperm.xlu0 %2624, %v2559
    %v2626 = vpop.permute.xlu0 %2625
    %2629 = vset.pattern.permute.xlu0 0
    %2630 = vperm.xlu0 %2629, %v2560
    %v2631 = vpop.permute.xlu0 %2630
    %2634 = vset.pattern.permute.xlu0 0
    %2635 = vperm.xlu0 %2634, %v2561
    %v2636 = vpop.permute.xlu0 %2635
    %2639 = vset.pattern.permute.xlu0 0
    %2640 = vperm.xlu0 %2639, %v2562
    %v2641 = vpop.permute.xlu0 %2640
    %v2643 = vmul.f32 %v177, %v2566
    %v2644 = vmul.f32 %v178, %v2571
    %v2645 = vmul.f32 %v179, %v2576
    %v2646 = vmul.f32 %v180, %v2581
    %v2647 = vmul.f32 %v181, %v2586
    %v2648 = vmul.f32 %v182, %v2591
    %v2649 = vmul.f32 %v183, %v2596
    %v2650 = vmul.f32 %v184, %v2601
    %v2651 = vmul.f32 %v185, %v2606
    %v2652 = vmul.f32 %v186, %v2611
    %v2653 = vmul.f32 %v187, %v2616
    %v2654 = vmul.f32 %v188, %v2621
    %v2655 = vmul.f32 %v189, %v2626
    %v2656 = vmul.f32 %v190, %v2631
    %v2657 = vmul.f32 %v191, %v2636
    %v2658 = vmul.f32 %v192, %v2641
    %v2659 = vsel %vm1113, %v2643, 0.0
    %v2660 = vsel %vm1113, %v2644, 0.0
    %v2661 = vadd.f32 %v2659, %v2660
    %v2662 = vrot.slane %v2661, 4
    %v2663 = vadd.f32 %v2661, %v2662
    %v2664 = vrot.slane %v2663, 2
    %v2665 = vadd.f32 %v2663, %v2664
    %v2666 = vrot.slane %v2665, 1
    %v2667 = vadd.f32 %v2665, %v2666
    %v2668 = vsel %vm1113, %v2645, 0.0
    %v2669 = vsel %vm1113, %v2646, 0.0
    %v2670 = vadd.f32 %v2668, %v2669
    %v2671 = vrot.slane %v2670, 4
    %v2672 = vadd.f32 %v2670, %v2671
    %v2673 = vrot.slane %v2672, 2
    %v2674 = vadd.f32 %v2672, %v2673
    %v2675 = vrot.slane %v2674, 1
    %v2676 = vadd.f32 %v2674, %v2675
    %v2677 = vsel %vm1113, %v2647, 0.0
    %v2678 = vsel %vm1113, %v2648, 0.0
    %v2679 = vadd.f32 %v2677, %v2678
    %v2680 = vrot.slane %v2679, 4
    %v2681 = vadd.f32 %v2679, %v2680
    %v2682 = vrot.slane %v2681, 2
    %v2683 = vadd.f32 %v2681, %v2682
    %v2684 = vrot.slane %v2683, 1
    %v2685 = vadd.f32 %v2683, %v2684
    %v2686 = vsel %vm1113, %v2649, 0.0
    %v2687 = vsel %vm1113, %v2650, 0.0
    %v2688 = vadd.f32 %v2686, %v2687
    %v2689 = vrot.slane %v2688, 4
    %v2690 = vadd.f32 %v2688, %v2689
    %v2691 = vrot.slane %v2690, 2
    %v2692 = vadd.f32 %v2690, %v2691
    %v2693 = vrot.slane %v2692, 1
    %v2694 = vadd.f32 %v2692, %v2693
    %v2695 = vsel %vm1113, %v2651, 0.0
    %v2696 = vsel %vm1113, %v2652, 0.0
    %v2697 = vadd.f32 %v2695, %v2696
    %v2698 = vrot.slane %v2697, 4
    %v2699 = vadd.f32 %v2697, %v2698
    %v2700 = vrot.slane %v2699, 2
    %v2701 = vadd.f32 %v2699, %v2700
    %v2702 = vrot.slane %v2701, 1
    %v2703 = vadd.f32 %v2701, %v2702
    %v2704 = vsel %vm1113, %v2653, 0.0
    %v2705 = vsel %vm1113, %v2654, 0.0
    %v2706 = vadd.f32 %v2704, %v2705
    %v2707 = vrot.slane %v2706, 4
    %v2708 = vadd.f32 %v2706, %v2707
    %v2709 = vrot.slane %v2708, 2
    %v2710 = vadd.f32 %v2708, %v2709
    %v2711 = vrot.slane %v2710, 1
    %v2712 = vadd.f32 %v2710, %v2711
    %v2713 = vsel %vm1113, %v2655, 0.0
    %v2714 = vsel %vm1113, %v2656, 0.0
    %v2715 = vadd.f32 %v2713, %v2714
    %v2716 = vrot.slane %v2715, 4
    %v2717 = vadd.f32 %v2715, %v2716
    %v2718 = vrot.slane %v2717, 2
    %v2719 = vadd.f32 %v2717, %v2718
    %v2720 = vrot.slane %v2719, 1
    %v2721 = vadd.f32 %v2719, %v2720
    %v2722 = vsel %vm1113, %v2657, 0.0
    %v2723 = vsel %vm1113, %v2658, 0.0
    %v2724 = vadd.f32 %v2722, %v2723
    %v2725 = vrot.slane %v2724, 4
    %v2726 = vadd.f32 %v2724, %v2725
    %v2727 = vrot.slane %v2726, 2
    %v2728 = vadd.f32 %v2726, %v2727
    %v2729 = vrot.slane %v2728, 1
    %v2730 = vadd.f32 %v2728, %v2729
    %v2731 = vpack.c.bf16 %v2667, %v2667
    %v2732 = vpack.c.bf16 %v2676, %v2676
    %v2733 = vpack.c.bf16 %v2685, %v2685
    %v2734 = vpack.c.bf16 %v2694, %v2694
    %v2735 = vpack.c.bf16 %v2703, %v2703
    %v2736 = vpack.c.bf16 %v2712, %v2712
    %v2737 = vpack.c.bf16 %v2721, %v2721
    %v2738 = vpack.c.bf16 %v2730, %v2730
    %v2747 = vunpack.c.l.b16 %v2731
    %v2748 = vunpack.c.l.b16 %v2732
    %v2749 = vunpack.c.l.b16 %v2733
    %v2750 = vunpack.c.l.b16 %v2734
    %v2751 = vunpack.c.l.b16 %v2735
    %v2752 = vunpack.c.l.b16 %v2736
    %v2753 = vunpack.c.l.b16 %v2737
    %v2754 = vunpack.c.l.b16 %v2738
    %v2755 = vsel %vm704, %v2748, %v2747
    %v2756 = vsel %vm706, %v2749, %v2755
    %v2757 = vsel %vm708, %v2750, %v2756
    %v2758 = vsel %vm710, %v2751, %v2757
    %v2759 = vsel %vm712, %v2752, %v2758
    %v2760 = vsel %vm714, %v2753, %v2759
    %v2761 = vsel %vm716, %v2754, %v2760
    %v2762 = vpack.c.b16 %v2761, %v2761
    %v2764 = vsel %vm1113, %v2762, 0
    %2766 = vmatprep.subr.bf16.mxu0 %v1231
    %2767 = vmatpush1.bf16.msra.mxu0 %v1230
    %2768 = vmatprep.subr.bf16.mxu0 %v1233
    %2769 = vmatpush1.bf16.msra.mxu0 %v1232
    %2770 = vmatprep.subr.bf16.mxu0 0
    %2771 = vmatpush1.bf16.msra.mxu0 0
    %2772 = vmatprep.subr.bf16.mxu0 0
    %2773 = vmatpush1.bf16.msra.mxu0 0
    %2774 = vmatprep.subr.bf16.mxu0 0
    %2775 = vmatpush1.bf16.msra.mxu0 0
    %2776 = vmatprep.subr.bf16.mxu0 0
    %2777 = vmatpush1.bf16.msra.mxu0 0
    %2778 = vmatprep.subr.bf16.mxu0 0
    %2779 = vmatpush1.bf16.msra.mxu0 0
    %2780 = vmatprep.subr.bf16.mxu0 0
    %2781 = vmatpush1.bf16.msra.mxu0 0
    %2782 = vmatprep.subr.bf16.mxu0 0
    %2783 = vmatpush1.bf16.msra.mxu0 0
    %2784 = vmatprep.subr.bf16.mxu0 0
    %2785 = vmatpush1.bf16.msra.mxu0 0
    %2786 = vmatprep.subr.bf16.mxu0 0
    %2787 = vmatpush1.bf16.msra.mxu0 0
    %2788 = vmatprep.subr.bf16.mxu0 0
    %2789 = vmatpush1.bf16.msra.mxu0 0
    %2790 = vmatprep.subr.bf16.mxu0 0
    %2791 = vmatpush1.bf16.msra.mxu0 0
    %2792 = vmatprep.subr.bf16.mxu0 0
    %2793 = vmatpush1.bf16.msra.mxu0 0
    %2794 = vmatprep.subr.bf16.mxu0 0
    %2795 = vmatpush1.bf16.msra.mxu0 0
    %2796 = vmatprep.subr.bf16.mxu0 0
    %2797 = vmatpush1.bf16.msra.mxu0 0
    %2798 = vmatprep.mubr.bf16.mxu0 0
    %2799 = vmatmul.mubr.bf16.gmra.mrb[0].mxu0 %v2764
    %v2800 = vpop.f32.mrb[0].mxu0
    %v2801 = vadd.f32 %v316, %v2800
    %v2802 = vpop.f32.mrb[0].mxu0
    %v2803 = vadd.f32 %v320, %v2802
    %v2804 = vpop.f32.mrb[0].mxu0
    %v2805 = vpop.f32.mrb[0].mxu0
    %2806 = vdwg.mxu0
    %s2807 = scalar_lea.vmem [#allocation9], 8
    %v2808 = vld [vmem:[%s2807] sm:$0xff]
    %v2809 = vadd.f32 %v2808, %v2803
    %v2810 = vpack.c.bf16 %v2809, %v2809
    %2811 = vmatprep.subr.bf16.mxu0 %v1382
    %2812 = vmatpush1.bf16.msra.mxu0 %v1381
    %2813 = vmatprep.subr.bf16.mxu0 %v1386
    %2814 = vmatpush1.bf16.msra.mxu0 %v1385
    %2815 = vmatprep.subr.bf16.mxu0 %v1390
    %2816 = vmatpush1.bf16.msra.mxu0 %v1389
    %2817 = vmatprep.subr.bf16.mxu0 %v1394
    %2818 = vmatpush1.bf16.msra.mxu0 %v1393
    %2819 = vmatprep.subr.bf16.mxu0 %v1398
    %2820 = vmatpush1.bf16.msra.mxu0 %v1397
    %2821 = vmatprep.subr.bf16.mxu0 %v1402
    %2822 = vmatpush1.bf16.msra.mxu0 %v1401
    %2823 = vmatprep.subr.bf16.mxu0 %v1406
    %2824 = vmatpush1.bf16.msra.mxu0 %v1405
    %2825 = vmatprep.subr.bf16.mxu0 %v1410
    %2826 = vmatpush1.bf16.msra.mxu0 %v1409
    %2827 = vmatprep.subr.bf16.mxu0 0
    %2828 = vmatpush1.bf16.msra.mxu0 0
    %2829 = vmatprep.subr.bf16.mxu0 0
    %2830 = vmatpush1.bf16.msra.mxu0 0
    %2831 = vmatprep.subr.bf16.mxu0 0
    %2832 = vmatpush1.bf16.msra.mxu0 0
    %2833 = vmatprep.subr.bf16.mxu0 0
    %2834 = vmatpush1.bf16.msra.mxu0 0
    %2835 = vmatprep.subr.bf16.mxu0 0
    %2836 = vmatpush1.bf16.msra.mxu0 0
    %2837 = vmatprep.subr.bf16.mxu0 0
    %2838 = vmatpush1.bf16.msra.mxu0 0
    %2839 = vmatprep.subr.bf16.mxu0 0
    %2840 = vmatpush1.bf16.msra.mxu0 0
    %2841 = vmatprep.subr.bf16.mxu0 0
    %2842 = vmatpush1.bf16.msra.mxu0 0
    %2843 = vmatprep.mubr.bf16.mxu0 0
    %2844 = vmatmul.mubr.bf16.gmra.mrb[0].mxu0 %v1959
    %v2845 = vpop.f32.mrb[0].mxu0
    %v2846 = vadd.f32 0.0, %v2845
    %v2847 = vpop.f32.mrb[0].mxu0
    %v2848 = vadd.f32 0.0, %v2847
    %v2849 = vpop.f32.mrb[0].mxu0
    %v2850 = vpop.f32.mrb[0].mxu0
    %2851 = vdwg.mxu0
    %2852 = vmatprep.subr.bf16.mxu0 %v1384
    %2853 = vmatpush1.bf16.msra.mxu0 %v1383
    %2854 = vmatprep.subr.bf16.mxu0 %v1388
    %2855 = vmatpush1.bf16.msra.mxu0 %v1387
    %2856 = vmatprep.subr.bf16.mxu0 %v1392
    %2857 = vmatpush1.bf16.msra.mxu0 %v1391
    %2858 = vmatprep.subr.bf16.mxu0 %v1396
    %2859 = vmatpush1.bf16.msra.mxu0 %v1395
    %2860 = vmatprep.subr.bf16.mxu0 %v1400
    %2861 = vmatpush1.bf16.msra.mxu0 %v1399
    %2862 = vmatprep.subr.bf16.mxu0 %v1404
    %2863 = vmatpush1.bf16.msra.mxu0 %v1403
    %2864 = vmatprep.subr.bf16.mxu0 %v1408
    %2865 = vmatpush1.bf16.msra.mxu0 %v1407
    %2866 = vmatprep.subr.bf16.mxu0 %v1412
    %2867 = vmatpush1.bf16.msra.mxu0 %v1411
    %2868 = vmatprep.subr.bf16.mxu0 0
    %2869 = vmatpush1.bf16.msra.mxu0 0
    %2870 = vmatprep.subr.bf16.mxu0 0
    %2871 = vmatpush1.bf16.msra.mxu0 0
    %2872 = vmatprep.subr.bf16.mxu0 0
    %2873 = vmatpush1.bf16.msra.mxu0 0
    %2874 = vmatprep.subr.bf16.mxu0 0
    %2875 = vmatpush1.bf16.msra.mxu0 0
    %2876 = vmatprep.subr.bf16.mxu0 0
    %2877 = vmatpush1.bf16.msra.mxu0 0
    %2878 = vmatprep.subr.bf16.mxu0 0
    %2879 = vmatpush1.bf16.msra.mxu0 0
    %2880 = vmatprep.subr.bf16.mxu0 0
    %2881 = vmatpush1.bf16.msra.mxu0 0
    %2882 = vmatprep.subr.bf16.mxu0 0
    %2883 = vmatpush1.bf16.msra.mxu0 0
    %2884 = vmatprep.mubr.bf16.mxu0 0
    %2885 = vmatmul.mubr.bf16.gmra.mrb[0].mxu0 %v1959
    %v2886 = vpop.f32.mrb[0].mxu0
    %v2887 = vadd.f32 0.0, %v2886
    %v2888 = vpop.f32.mrb[0].mxu0
    %v2889 = vadd.f32 0.0, %v2888
    %v2890 = vpop.f32.mrb[0].mxu0
    %v2891 = vpop.f32.mrb[0].mxu0
    %2892 = vdwg.mxu0
    %2893 = vmatprep.subr.bf16.mxu0 %v1624
    %2894 = vmatpush1.bf16.msra.mxu0 %v1623
    %2895 = vmatprep.subr.bf16.mxu0 %v1628
    %2896 = vmatpush1.bf16.msra.mxu0 %v1627
    %2897 = vmatprep.subr.bf16.mxu0 %v1632
    %2898 = vmatpush1.bf16.msra.mxu0 %v1631
    %2899 = vmatprep.subr.bf16.mxu0 %v1636
    %2900 = vmatpush1.bf16.msra.mxu0 %v1635
    %2901 = vmatprep.subr.bf16.mxu0 %v1640
    %2902 = vmatpush1.bf16.msra.mxu0 %v1639
    %2903 = vmatprep.subr.bf16.mxu0 %v1644
    %2904 = vmatpush1.bf16.msra.mxu0 %v1643
    %2905 = vmatprep.subr.bf16.mxu0 %v1648
    %2906 = vmatpush1.bf16.msra.mxu0 %v1647
    %2907 = vmatprep.subr.bf16.mxu0 %v1652
    %2908 = vmatpush1.bf16.msra.mxu0 %v1651
    %2909 = vmatprep.subr.bf16.mxu0 0
    %2910 = vmatpush1.bf16.msra.mxu0 0
    %2911 = vmatprep.subr.bf16.mxu0 0
    %2912 = vmatpush1.bf16.msra.mxu0 0
    %2913 = vmatprep.subr.bf16.mxu0 0
    %2914 = vmatpush1.bf16.msra.mxu0 0
    %2915 = vmatprep.subr.bf16.mxu0 0
    %2916 = vmatpush1.bf16.msra.mxu0 0
    %2917 = vmatprep.subr.bf16.mxu0 0
    %2918 = vmatpush1.bf16.msra.mxu0 0
    %2919 = vmatprep.subr.bf16.mxu0 0
    %2920 = vmatpush1.bf16.msra.mxu0 0
    %2921 = vmatprep.subr.bf16.mxu0 0
    %2922 = vmatpush1.bf16.msra.mxu0 0
    %2923 = vmatprep.subr.bf16.mxu0 0
    %2924 = vmatpush1.bf16.msra.mxu0 0
    %2925 = vmatprep.mubr.bf16.mxu0 0
    %2926 = vmatmul.mubr.bf16.gmra.mrb[0].mxu0 %v2810
    %v2927 = vpop.f32.mrb[0].mxu0
    %v2928 = vadd.f32 %v2846, %v2927
    %v2929 = vpop.f32.mrb[0].mxu0
    %v2930 = vadd.f32 %v2848, %v2929
    %v2931 = vpop.f32.mrb[0].mxu0
    %v2932 = vpop.f32.mrb[0].mxu0
    %2933 = vdwg.mxu0
    %2934 = vmatprep.subr.bf16.mxu0 %v1626
    %2935 = vmatpush1.bf16.msra.mxu0 %v1625
    %2936 = vmatprep.subr.bf16.mxu0 %v1630
    %2937 = vmatpush1.bf16.msra.mxu0 %v1629
    %2938 = vmatprep.subr.bf16.mxu0 %v1634
    %2939 = vmatpush1.bf16.msra.mxu0 %v1633
    %2940 = vmatprep.subr.bf16.mxu0 %v1638
    %2941 = vmatpush1.bf16.msra.mxu0 %v1637
    %2942 = vmatprep.subr.bf16.mxu0 %v1642
    %2943 = vmatpush1.bf16.msra.mxu0 %v1641
    %2944 = vmatprep.subr.bf16.mxu0 %v1646
    %2945 = vmatpush1.bf16.msra.mxu0 %v1645
    %2946 = vmatprep.subr.bf16.mxu0 %v1650
    %2947 = vmatpush1.bf16.msra.mxu0 %v1649
    %2948 = vmatprep.subr.bf16.mxu0 %v1654
    %2949 = vmatpush1.bf16.msra.mxu0 %v1653
    %2950 = vmatprep.subr.bf16.mxu0 0
    %2951 = vmatpush1.bf16.msra.mxu0 0
    %2952 = vmatprep.subr.bf16.mxu0 0
    %2953 = vmatpush1.bf16.msra.mxu0 0
    %2954 = vmatprep.subr.bf16.mxu0 0
    %2955 = vmatpush1.bf16.msra.mxu0 0
    %2956 = vmatprep.subr.bf16.mxu0 0
    %2957 = vmatpush1.bf16.msra.mxu0 0
    %2958 = vmatprep.subr.bf16.mxu0 0
    %2959 = vmatpush1.bf16.msra.mxu0 0
    %2960 = vmatprep.subr.bf16.mxu0 0
    %2961 = vmatpush1.bf16.msra.mxu0 0
    %2962 = vmatprep.subr.bf16.mxu0 0
    %2963 = vmatpush1.bf16.msra.mxu0 0
    %2964 = vmatprep.subr.bf16.mxu0 0
    %2965 = vmatpush1.bf16.msra.mxu0 0
    %2966 = vmatprep.mubr.bf16.mxu0 0
    %2967 = vmatmul.mubr.bf16.gmra.mrb[0].mxu0 %v2810
    %v2968 = vpop.f32.mrb[0].mxu0
    %v2969 = vadd.f32 %v2887, %v2968
    %v2970 = vpop.f32.mrb[0].mxu0
    %v2971 = vadd.f32 %v2889, %v2970
    %v2972 = vpop.f32.mrb[0].mxu0
    %v2973 = vpop.f32.mrb[0].mxu0
    %2974 = vdwg.mxu0
    %v2975 = vadd.f32 %v2928, %v328
    %v2976 = vadd.f32 %v2930, %v332
    %v2977 = vadd.f32 %v2969, %v336
    %v2978 = vadd.f32 %v2971, %v340
    %v2979 = vxor.u32 %v2975, 2147483648
    %v2980 = vmul.f32 %v2979, 1.442695
    %v2981 = vpow.pop %v2980
    %v2982 = vadd.f32 %v2981, 1.0
    %v2983 = vrcp.pop %v2982
    %v2984 = vmul.f32 1.0, %v2983
    %v2985 = vxor.u32 %v2976, 2147483648
    %v2986 = vmul.f32 %v2985, 1.442695
    %v2987 = vpow.pop %v2986
    %v2988 = vadd.f32 %v2987, 1.0
    %v2989 = vrcp.pop %v2988
    %v2990 = vmul.f32 1.0, %v2989
    %v2991 = vtanh.pop %v2977
    %v2992 = vxor.u32 %v2978, 2147483648
    %v2993 = vmul.f32 %v2992, 1.442695
    %v2994 = vpow.pop %v2993
    %v2995 = vadd.f32 %v2994, 1.0
    %v2996 = vrcp.pop %v2995
    %v2997 = vmul.f32 1.0, %v2996
    %v2998 = vmul.f32 %v2990, %v1794
    %v2999 = vmul.f32 %v2984, %v2991
    %v3000 = vadd.f32 %v2998, %v2999
    %v3001 = vtanh.pop %v3000
    %v3002 = vmul.f32 %v2997, %v3001
    %v3003 = vadd.f32 %v3002, %v2801
    %v3004 = vpack.c.bf16 %v3003, %v3003
    %3005 = vmatprep.subr.bf16.mxu0 0
    %3006 = vmatpush1.bf16.msra.mxu0 %v1837
    %3007 = vmatprep.subr.bf16.mxu0 0
    %3008 = vmatpush1.bf16.msra.mxu0 %v1838
    %3009 = vmatprep.subr.bf16.mxu0 0
    %3010 = vmatpush1.bf16.msra.mxu0 %v1839
    %3011 = vmatprep.subr.bf16.mxu0 0
    %3012 = vmatpush1.bf16.msra.mxu0 %v1840
    %3013 = vmatprep.subr.bf16.mxu0 0
    %3014 = vmatpush1.bf16.msra.mxu0 %v1841
    %3015 = vmatprep.subr.bf16.mxu0 0
    %3016 = vmatpush1.bf16.msra.mxu0 %v1842
    %3017 = vmatprep.subr.bf16.mxu0 0
    %3018 = vmatpush1.bf16.msra.mxu0 %v1843
    %3019 = vmatprep.subr.bf16.mxu0 0
    %3020 = vmatpush1.bf16.msra.mxu0 %v1844
    %3021 = vmatprep.subr.bf16.mxu0 0
    %3022 = vmatpush1.bf16.msra.mxu0 0
    %3023 = vmatprep.subr.bf16.mxu0 0
    %3024 = vmatpush1.bf16.msra.mxu0 0
    %3025 = vmatprep.subr.bf16.mxu0 0
    %3026 = vmatpush1.bf16.msra.mxu0 0
    %3027 = vmatprep.subr.bf16.mxu0 0
    %3028 = vmatpush1.bf16.msra.mxu0 0
    %3029 = vmatprep.subr.bf16.mxu0 0
    %3030 = vmatpush1.bf16.msra.mxu0 0
    %3031 = vmatprep.subr.bf16.mxu0 0
    %3032 = vmatpush1.bf16.msra.mxu0 0
    %3033 = vmatprep.subr.bf16.mxu0 0
    %3034 = vmatpush1.bf16.msra.mxu0 0
    %3035 = vmatprep.subr.bf16.mxu0 0
    %3036 = vmatpush1.bf16.msra.mxu0 0
    %3037 = vmatprep.mubr.bf16.mxu0 0
    %3038 = vmatmul.mubr.bf16.gmra.mrb[0].mxu0 %v3004
    %v3039 = vpop.f32.mrb[0].mxu0
    %v3040 = vadd.f32 %v1803, %v3039
    %v3041 = vpop.f32.mrb[0].mxu0
    %v3042 = vpop.f32.mrb[0].mxu0
    %v3043 = vpop.f32.mrb[0].mxu0
    %3044 = vdwg.mxu0
    %v3046 = vcombine.high %v3040, %v3040
    %v3048 = vunpack.c.l.s4 1966171168
    %v3049 = vunpack.c.0.s8 %v3048
    %v3050 = vlaneseq
    %v3051 = vshrl.u32 %v3050, 7
    %v3052 = vsub.s32 %v3049, %v3051
    %v3053 = vrot.slane %v3040, %v3052
    %v3055 = vunpack.c.l.s4 1966171168
    %v3056 = vunpack.c.0.s8 %v3055
    %v3057 = vlaneseq
    %v3058 = vshrl.u32 %v3057, 7
    %v3059 = vsub.s32 %v3056, %v3058
    %v3060 = vrot.slane %v3046, %v3059
    %v3061 = vcombine.high %v3053, %v3053
    %v3062 = vcombine.high %v3060, %v3060
    %v3064 = vunpack.c.l.s4 1966171168
    %v3065 = vunpack.c.0.s8 %v3064
    %v3066 = vlaneseq
    %v3067 = vshrl.u32 %v3066, 7
    %v3068 = vsub.s32 %v3065, %v3067
    %v3069 = vrot.slane %v3053, %v3068
    %v3071 = vunpack.c.l.s4 1966171168
    %v3072 = vunpack.c.0.s8 %v3071
    %v3073 = vlaneseq
    %v3074 = vshrl.u32 %v3073, 7
    %v3075 = vsub.s32 %v3072, %v3074
    %v3076 = vrot.slane %v3060, %v3075
    %v3078 = vunpack.c.l.s4 1966171168
    %v3079 = vunpack.c.0.s8 %v3078
    %v3080 = vlaneseq
    %v3081 = vshrl.u32 %v3080, 7
    %v3082 = vsub.s32 %v3079, %v3081
    %v3083 = vrot.slane %v3061, %v3082
    %v3085 = vunpack.c.l.s4 1966171168
    %v3086 = vunpack.c.0.s8 %v3085
    %v3087 = vlaneseq
    %v3088 = vshrl.u32 %v3087, 7
    %v3089 = vsub.s32 %v3086, %v3088
    %v3090 = vrot.slane %v3062, %v3089
    %v3091 = vcombine.high %v3069, %v3069
    %v3092 = vcombine.high %v3076, %v3076
    %v3093 = vcombine.high %v3083, %v3083
    %v3094 = vcombine.high %v3090, %v3090
    %3103 = vst [vmem:[#allocation19 + $0x1] sm:$0x1] %v3069
    %3104 = vst [vmem:[#allocation19 + $0x9] sm:$0x1] %v3083
    %3105 = vst [vmem:[#allocation19 + $0x11] sm:$0x1] %v3091
    %3106 = vst [vmem:[#allocation19 + $0x19] sm:$0x1] %v3093
    %3107 = vst [vmem:[#allocation19 + $0x21] sm:$0x1] %v3076
    %3108 = vst [vmem:[#allocation19 + $0x29] sm:$0x1] %v3090
    %3109 = vst [vmem:[#allocation19 + $0x31] sm:$0x1] %v3092
    %3110 = vst [vmem:[#allocation19 + $0x39] sm:$0x1] %v3094
    %v3111 = vpack.c.bf16 %v3002, %v3002
    %3112 = vmatprep.subr.bf16.mxu0 0
    %3113 = vmatpush1.bf16.msra.mxu0 %v380
    %3114 = vmatprep.subr.bf16.mxu0 0
    %3115 = vmatpush1.bf16.msra.mxu0 %v381
    %3116 = vmatprep.subr.bf16.mxu0 0
    %3117 = vmatpush1.bf16.msra.mxu0 %v382
    %3118 = vmatprep.subr.bf16.mxu0 0
    %3119 = vmatpush1.bf16.msra.mxu0 %v383
    %3120 = vmatprep.subr.bf16.mxu0 0
    %3121 = vmatpush1.bf16.msra.mxu0 %v384
    %3122 = vmatprep.subr.bf16.mxu0 0
    %3123 = vmatpush1.bf16.msra.mxu0 %v385
    %3124 = vmatprep.subr.bf16.mxu0 0
    %3125 = vmatpush1.bf16.msra.mxu0 %v386
    %3126 = vmatprep.subr.bf16.mxu0 0
    %3127 = vmatpush1.bf16.msra.mxu0 %v387
    %3128 = vmatprep.subr.bf16.mxu0 0
    %3129 = vmatpush1.bf16.msra.mxu0 0
    %3130 = vmatprep.subr.bf16.mxu0 0
    %3131 = vmatpush1.bf16.msra.mxu0 0
    %3132 = vmatprep.subr.bf16.mxu0 0
    %3133 = vmatpush1.bf16.msra.mxu0 0
    %3134 = vmatprep.subr.bf16.mxu0 0
    %3135 = vmatpush1.bf16.msra.mxu0 0
    %3136 = vmatprep.subr.bf16.mxu0 0
    %3137 = vmatpush1.bf16.msra.mxu0 0
    %3138 = vmatprep.subr.bf16.mxu0 0
    %3139 = vmatpush1.bf16.msra.mxu0 0
    %3140 = vmatprep.subr.bf16.mxu0 0
    %3141 = vmatpush1.bf16.msra.mxu0 0
    %3142 = vmatprep.subr.bf16.mxu0 0
    %3143 = vmatpush1.bf16.msra.mxu0 0
    %3144 = vmatprep.mubr.bf16.mxu0 0
    %3145 = vmatmul.mubr.bf16.gmra.mrb[0].mxu0 %v3111
    %v3146 = vpop.f32.mrb[0].mxu0
    %v3147 = vadd.f32 0.0, %v3146
    %v3148 = vpop.f32.mrb[0].mxu0
    %v3149 = vpop.f32.mrb[0].mxu0
    %v3150 = vpop.f32.mrb[0].mxu0
    %3151 = vdwg.mxu0
    %v3153 = vcombine.high %v3147, %v3147
    %v3155 = vunpack.c.l.s4 1966171168
    %v3156 = vunpack.c.0.s8 %v3155
    %v3157 = vlaneseq
    %v3158 = vshrl.u32 %v3157, 7
    %v3159 = vsub.s32 %v3156, %v3158
    %v3160 = vrot.slane %v3147, %v3159
    %v3162 = vunpack.c.l.s4 1966171168
    %v3163 = vunpack.c.0.s8 %v3162
    %v3164 = vlaneseq
    %v3165 = vshrl.u32 %v3164, 7
    %v3166 = vsub.s32 %v3163, %v3165
    %v3167 = vrot.slane %v3153, %v3166
    %v3168 = vcombine.high %v3160, %v3160
    %v3169 = vcombine.high %v3167, %v3167
    %v3171 = vunpack.c.l.s4 1966171168
    %v3172 = vunpack.c.0.s8 %v3171
    %v3173 = vlaneseq
    %v3174 = vshrl.u32 %v3173, 7
    %v3175 = vsub.s32 %v3172, %v3174
    %v3176 = vrot.slane %v3160, %v3175
    %v3178 = vunpack.c.l.s4 1966171168
    %v3179 = vunpack.c.0.s8 %v3178
    %v3180 = vlaneseq
    %v3181 = vshrl.u32 %v3180, 7
    %v3182 = vsub.s32 %v3179, %v3181
    %v3183 = vrot.slane %v3167, %v3182
    %v3185 = vunpack.c.l.s4 1966171168
    %v3186 = vunpack.c.0.s8 %v3185
    %v3187 = vlaneseq
    %v3188 = vshrl.u32 %v3187, 7
    %v3189 = vsub.s32 %v3186, %v3188
    %v3190 = vrot.slane %v3168, %v3189
    %v3192 = vunpack.c.l.s4 1966171168
    %v3193 = vunpack.c.0.s8 %v3192
    %v3194 = vlaneseq
    %v3195 = vshrl.u32 %v3194, 7
    %v3196 = vsub.s32 %v3193, %v3195
    %v3197 = vrot.slane %v3169, %v3196
    %v3198 = vcombine.high %v3176, %v3176
    %v3199 = vcombine.high %v3183, %v3183
    %v3200 = vcombine.high %v3190, %v3190
    %v3201 = vcombine.high %v3197, %v3197
    %v3202 = vlaneseq
    %v3203 = vshrl.u32 %v3202, 7
    %v3204 = vsub.s32 0, %v3203
    %v3205 = vrot.slane %v3176, %v3204
    %v3206 = vlaneseq
    %v3207 = vshrl.u32 %v3206, 7
    %v3208 = vsub.s32 0, %v3207
    %v3209 = vrot.slane %v3190, %v3208
    %v3210 = vlaneseq
    %v3211 = vshrl.u32 %v3210, 7
    %v3212 = vsub.s32 0, %v3211
    %v3213 = vrot.slane %v3198, %v3212
    %v3214 = vlaneseq
    %v3215 = vshrl.u32 %v3214, 7
    %v3216 = vsub.s32 0, %v3215
    %v3217 = vrot.slane %v3200, %v3216
    %v3218 = vlaneseq
    %v3219 = vshrl.u32 %v3218, 7
    %v3220 = vsub.s32 0, %v3219
    %v3221 = vrot.slane %v3183, %v3220
    %v3222 = vlaneseq
    %v3223 = vshrl.u32 %v3222, 7
    %v3224 = vsub.s32 0, %v3223
    %v3225 = vrot.slane %v3197, %v3224
    %v3226 = vlaneseq
    %v3227 = vshrl.u32 %v3226, 7
    %v3228 = vsub.s32 0, %v3227
    %v3229 = vrot.slane %v3199, %v3228
    %v3230 = vlaneseq
    %v3231 = vshrl.u32 %v3230, 7
    %v3232 = vsub.s32 0, %v3231
    %v3233 = vrot.slane %v3201, %v3232
    %v3242 = vadd.f32 %v193, %v3205
    %v3243 = vadd.f32 %v194, %v3205
    %v3244 = vadd.f32 %v195, %v3209
    %v3245 = vadd.f32 %v196, %v3209
    %v3246 = vadd.f32 %v197, %v3213
    %v3247 = vadd.f32 %v198, %v3213
    %v3248 = vadd.f32 %v199, %v3217
    %v3249 = vadd.f32 %v200, %v3217
    %v3250 = vadd.f32 %v201, %v3221
    %v3251 = vadd.f32 %v202, %v3221
    %v3252 = vadd.f32 %v203, %v3225
    %v3253 = vadd.f32 %v204, %v3225
    %v3254 = vadd.f32 %v205, %v3229
    %v3255 = vadd.f32 %v206, %v3229
    %v3256 = vadd.f32 %v207, %v3233
    %v3257 = vadd.f32 %v208, %v3233
    %v3258 = vtanh.pop %v3242
    %v3259 = vtanh.pop %v3243
    %v3260 = vtanh.pop %v3244
    %v3261 = vtanh.pop %v3245
    %v3262 = vtanh.pop %v3246
    %v3263 = vtanh.pop %v3247
    %v3264 = vtanh.pop %v3248
    %v3265 = vtanh.pop %v3249
    %v3266 = vtanh.pop %v3250
    %v3267 = vtanh.pop %v3251
    %v3268 = vtanh.pop %v3252
    %v3269 = vtanh.pop %v3253
    %v3270 = vtanh.pop %v3254
    %v3271 = vtanh.pop %v3255
    %v3272 = vtanh.pop %v3256
    %v3273 = vtanh.pop %v3257
    %v3274 = vmul.f32 %v3258, %v562
    %v3275 = vmul.f32 %v3259, %v562
    %v3276 = vmul.f32 %v3260, %v562
    %v3277 = vmul.f32 %v3261, %v562
    %v3278 = vmul.f32 %v3262, %v562
    %v3279 = vmul.f32 %v3263, %v562
    %v3280 = vmul.f32 %v3264, %v562
    %v3281 = vmul.f32 %v3265, %v562
    %v3282 = vmul.f32 %v3266, %v562
    %v3283 = vmul.f32 %v3267, %v562
    %v3284 = vmul.f32 %v3268, %v562
    %v3285 = vmul.f32 %v3269, %v562
    %v3286 = vmul.f32 %v3270, %v562
    %v3287 = vmul.f32 %v3271, %v562
    %v3288 = vmul.f32 %v3272, %v562
    %v3289 = vmul.f32 %v3273, %v562
    %3290 = vadd.xlane.f32.xlu0 %v3274
    %v3291 = vpop.xlane.xlu0 %3290
    %3292 = vadd.xlane.f32.xlu0 %v3275
    %v3293 = vpop.xlane.xlu0 %3292
    %3294 = vadd.xlane.f32.xlu0 %v3276
    %v3295 = vpop.xlane.xlu0 %3294
    %3296 = vadd.xlane.f32.xlu0 %v3277
    %v3297 = vpop.xlane.xlu0 %3296
    %3298 = vadd.xlane.f32.xlu0 %v3278
    %v3299 = vpop.xlane.xlu0 %3298
    %3300 = vadd.xlane.f32.xlu0 %v3279
    %v3301 = vpop.xlane.xlu0 %3300
    %3302 = vadd.xlane.f32.xlu0 %v3280
    %v3303 = vpop.xlane.xlu0 %3302
    %3304 = vadd.xlane.f32.xlu0 %v3281
    %v3305 = vpop.xlane.xlu0 %3304
    %3306 = vadd.xlane.f32.xlu0 %v3282
    %v3307 = vpop.xlane.xlu0 %3306
    %3308 = vadd.xlane.f32.xlu0 %v3283
    %v3309 = vpop.xlane.xlu0 %3308
    %3310 = vadd.xlane.f32.xlu0 %v3284
    %v3311 = vpop.xlane.xlu0 %3310
    %3312 = vadd.xlane.f32.xlu0 %v3285
    %v3313 = vpop.xlane.xlu0 %3312
    %3314 = vadd.xlane.f32.xlu0 %v3286
    %v3315 = vpop.xlane.xlu0 %3314
    %3316 = vadd.xlane.f32.xlu0 %v3287
    %v3317 = vpop.xlane.xlu0 %3316
    %3318 = vadd.xlane.f32.xlu0 %v3288
    %v3319 = vpop.xlane.xlu0 %3318
    %3320 = vadd.xlane.f32.xlu0 %v3289
    %v3321 = vpop.xlane.xlu0 %3320
    %v3338 = vlaneseq
    %v3339 = vshrl.u32 %v3338, 7
    %v3340 = vsub.s32 %v629, %v3339
    %v3341 = vrot.slane %v3291, %v3340
    %v3342 = vlaneseq
    %v3343 = vshrl.u32 %v3342, 7
    %v3344 = vsub.s32 %v634, %v3343
    %v3345 = vrot.slane %v3293, %v3344
    %v3346 = vsel %vm639, %v3345, %v3341
    %v3347 = vlaneseq
    %v3348 = vshrl.u32 %v3347, 7
    %v3349 = vsub.s32 %v629, %v3348
    %v3350 = vrot.slane %v3295, %v3349
    %v3351 = vlaneseq
    %v3352 = vshrl.u32 %v3351, 7
    %v3353 = vsub.s32 %v634, %v3352
    %v3354 = vrot.slane %v3297, %v3353
    %v3355 = vsel %vm639, %v3354, %v3350
    %v3356 = vlaneseq
    %v3357 = vshrl.u32 %v3356, 7
    %v3358 = vsub.s32 %v629, %v3357
    %v3359 = vrot.slane %v3299, %v3358
    %v3360 = vlaneseq
    %v3361 = vshrl.u32 %v3360, 7
    %v3362 = vsub.s32 %v634, %v3361
    %v3363 = vrot.slane %v3301, %v3362
    %v3364 = vsel %vm639, %v3363, %v3359
    %v3365 = vlaneseq
    %v3366 = vshrl.u32 %v3365, 7
    %v3367 = vsub.s32 %v629, %v3366
    %v3368 = vrot.slane %v3303, %v3367
    %v3369 = vlaneseq
    %v3370 = vshrl.u32 %v3369, 7
    %v3371 = vsub.s32 %v634, %v3370
    %v3372 = vrot.slane %v3305, %v3371
    %v3373 = vsel %vm639, %v3372, %v3368
    %v3374 = vlaneseq
    %v3375 = vshrl.u32 %v3374, 7
    %v3376 = vsub.s32 %v629, %v3375
    %v3377 = vrot.slane %v3307, %v3376
    %v3378 = vlaneseq
    %v3379 = vshrl.u32 %v3378, 7
    %v3380 = vsub.s32 %v634, %v3379
    %v3381 = vrot.slane %v3309, %v3380
    %v3382 = vsel %vm639, %v3381, %v3377
    %v3383 = vlaneseq
    %v3384 = vshrl.u32 %v3383, 7
    %v3385 = vsub.s32 %v629, %v3384
    %v3386 = vrot.slane %v3311, %v3385
    %v3387 = vlaneseq
    %v3388 = vshrl.u32 %v3387, 7
    %v3389 = vsub.s32 %v634, %v3388
    %v3390 = vrot.slane %v3313, %v3389
    %v3391 = vsel %vm639, %v3390, %v3386
    %v3392 = vlaneseq
    %v3393 = vshrl.u32 %v3392, 7
    %v3394 = vsub.s32 %v629, %v3393
    %v3395 = vrot.slane %v3315, %v3394
    %v3396 = vlaneseq
    %v3397 = vshrl.u32 %v3396, 7
    %v3398 = vsub.s32 %v634, %v3397
    %v3399 = vrot.slane %v3317, %v3398
    %v3400 = vsel %vm639, %v3399, %v3395
    %v3401 = vlaneseq
    %v3402 = vshrl.u32 %v3401, 7
    %v3403 = vsub.s32 %v629, %v3402
    %v3404 = vrot.slane %v3319, %v3403
    %v3405 = vlaneseq
    %v3406 = vshrl.u32 %v3405, 7
    %v3407 = vsub.s32 %v634, %v3406
    %v3408 = vrot.slane %v3321, %v3407
    %v3409 = vsel %vm639, %v3408, %v3404
    %v3410 = vsel %vm704, %v3355, %v3346
    %v3411 = vsel %vm706, %v3364, %v3410
    %v3412 = vsel %vm708, %v3373, %v3411
    %v3413 = vsel %vm710, %v3382, %v3412
    %v3414 = vsel %vm712, %v3391, %v3413
    %v3415 = vsel %vm714, %v3400, %v3414
    %v3416 = vsel %vm716, %v3409, %v3415
    %v3418 = vsel %vm719, %v3416, -inf
    %3419 = vmax.xlane.f32.xlu0 %v3418
    %v3420 = vpop.xlane.xlu0 %3419
    %v3422 = vlaneseq
    %v3423 = vshrl.u32 %v3422, 7
    %v3424 = vsub.s32 0, %v3423
    %v3425 = vrot.slane %v3420, %v3424
    %v3426 = vlaneseq
    %v3427 = vshrl.u32 %v3426, 7
    %v3428 = vsub.s32 1, %v3427
    %v3429 = vrot.slane %v3420, %v3428
    %v3430 = vlaneseq
    %v3431 = vshrl.u32 %v3430, 7
    %v3432 = vsub.s32 2, %v3431
    %v3433 = vrot.slane %v3420, %v3432
    %v3434 = vlaneseq
    %v3435 = vshrl.u32 %v3434, 7
    %v3436 = vsub.s32 3, %v3435
    %v3437 = vrot.slane %v3420, %v3436
    %v3438 = vlaneseq
    %v3439 = vshrl.u32 %v3438, 7
    %v3440 = vsub.s32 4, %v3439
    %v3441 = vrot.slane %v3420, %v3440
    %v3442 = vlaneseq
    %v3443 = vshrl.u32 %v3442, 7
    %v3444 = vsub.s32 5, %v3443
    %v3445 = vrot.slane %v3420, %v3444
    %v3446 = vlaneseq
    %v3447 = vshrl.u32 %v3446, 7
    %v3448 = vsub.s32 6, %v3447
    %v3449 = vrot.slane %v3420, %v3448
    %v3450 = vlaneseq
    %v3451 = vshrl.u32 %v3450, 7
    %v3452 = vsub.s32 7, %v3451
    %v3453 = vrot.slane %v3420, %v3452
    %v3462 = vsub.f32 %v3291, %v3425
    %v3463 = vsub.f32 %v3293, %v3425
    %v3464 = vsub.f32 %v3295, %v3429
    %v3465 = vsub.f32 %v3297, %v3429
    %v3466 = vsub.f32 %v3299, %v3433
    %v3467 = vsub.f32 %v3301, %v3433
    %v3468 = vsub.f32 %v3303, %v3437
    %v3469 = vsub.f32 %v3305, %v3437
    %v3470 = vsub.f32 %v3307, %v3441
    %v3471 = vsub.f32 %v3309, %v3441
    %v3472 = vsub.f32 %v3311, %v3445
    %v3473 = vsub.f32 %v3313, %v3445
    %v3474 = vsub.f32 %v3315, %v3449
    %v3475 = vsub.f32 %v3317, %v3449
    %v3476 = vsub.f32 %v3319, %v3453
    %v3477 = vsub.f32 %v3321, %v3453
    %v3478 = vmul.f32 %v3462, 1.442695
    %v3479 = vpow.pop %v3478
    %v3480 = vmul.f32 %v3463, 1.442695
    %v3481 = vpow.pop %v3480
    %v3482 = vmul.f32 %v3464, 1.442695
    %v3483 = vpow.pop %v3482
    %v3484 = vmul.f32 %v3465, 1.442695
    %v3485 = vpow.pop %v3484
    %v3486 = vmul.f32 %v3466, 1.442695
    %v3487 = vpow.pop %v3486
    %v3488 = vmul.f32 %v3467, 1.442695
    %v3489 = vpow.pop %v3488
    %v3490 = vmul.f32 %v3468, 1.442695
    %v3491 = vpow.pop %v3490
    %v3492 = vmul.f32 %v3469, 1.442695
    %v3493 = vpow.pop %v3492
    %v3494 = vmul.f32 %v3470, 1.442695
    %v3495 = vpow.pop %v3494
    %v3496 = vmul.f32 %v3471, 1.442695
    %v3497 = vpow.pop %v3496
    %v3498 = vmul.f32 %v3472, 1.442695
    %v3499 = vpow.pop %v3498
    %v3500 = vmul.f32 %v3473, 1.442695
    %v3501 = vpow.pop %v3500
    %v3502 = vmul.f32 %v3474, 1.442695
    %v3503 = vpow.pop %v3502
    %v3504 = vmul.f32 %v3475, 1.442695
    %v3505 = vpow.pop %v3504
    %v3506 = vmul.f32 %v3476, 1.442695
    %v3507 = vpow.pop %v3506
    %v3508 = vmul.f32 %v3477, 1.442695
    %v3509 = vpow.pop %v3508
    %3526 = vset.pattern.permute.xlu0 0
    %3527 = vperm.xlu0 %3526, %v3479
    %v3528 = vpop.permute.xlu0 %3527
    %3529 = vset.pattern.permute.xlu0 0
    %3530 = vperm.xlu0 %3529, %v3481
    %v3531 = vpop.permute.xlu0 %3530
    %3532 = vset.pattern.permute.xlu0 0
    %3533 = vperm.xlu0 %3532, %v3483
    %v3534 = vpop.permute.xlu0 %3533
    %3535 = vset.pattern.permute.xlu0 0
    %3536 = vperm.xlu0 %3535, %v3485
    %v3537 = vpop.permute.xlu0 %3536
    %3538 = vset.pattern.permute.xlu0 0
    %3539 = vperm.xlu0 %3538, %v3487
    %v3540 = vpop.permute.xlu0 %3539
    %3541 = vset.pattern.permute.xlu0 0
    %3542 = vperm.xlu0 %3541, %v3489
    %v3543 = vpop.permute.xlu0 %3542
    %3544 = vset.pattern.permute.xlu0 0
    %3545 = vperm.xlu0 %3544, %v3491
    %v3546 = vpop.permute.xlu0 %3545
    %3547 = vset.pattern.permute.xlu0 0
    %3548 = vperm.xlu0 %3547, %v3493
    %v3549 = vpop.permute.xlu0 %3548
    %3550 = vset.pattern.permute.xlu0 0
    %3551 = vperm.xlu0 %3550, %v3495
    %v3552 = vpop.permute.xlu0 %3551
    %3553 = vset.pattern.permute.xlu0 0
    %3554 = vperm.xlu0 %3553, %v3497
    %v3555 = vpop.permute.xlu0 %3554
    %3556 = vset.pattern.permute.xlu0 0
    %3557 = vperm.xlu0 %3556, %v3499
    %v3558 = vpop.permute.xlu0 %3557
    %3559 = vset.pattern.permute.xlu0 0
    %3560 = vperm.xlu0 %3559, %v3501
    %v3561 = vpop.permute.xlu0 %3560
    %3562 = vset.pattern.permute.xlu0 0
    %3563 = vperm.xlu0 %3562, %v3503
    %v3564 = vpop.permute.xlu0 %3563
    %3565 = vset.pattern.permute.xlu0 0
    %3566 = vperm.xlu0 %3565, %v3505
    %v3567 = vpop.permute.xlu0 %3566
    %3568 = vset.pattern.permute.xlu0 0
    %3569 = vperm.xlu0 %3568, %v3507
    %v3570 = vpop.permute.xlu0 %3569
    %3571 = vset.pattern.permute.xlu0 0
    %3572 = vperm.xlu0 %3571, %v3509
    %v3573 = vpop.permute.xlu0 %3572
    %v3574 = vlaneseq
    %v3575 = vshrl.u32 %v3574, 7
    %v3576 = vsub.s32 %v629, %v3575
    %v3577 = vrot.slane %v3528, %v3576
    %v3578 = vlaneseq
    %v3579 = vshrl.u32 %v3578, 7
    %v3580 = vsub.s32 %v634, %v3579
    %v3581 = vrot.slane %v3531, %v3580
    %v3582 = vsel %vm639, %v3581, %v3577
    %v3583 = vlaneseq
    %v3584 = vshrl.u32 %v3583, 7
    %v3585 = vsub.s32 %v629, %v3584
    %v3586 = vrot.slane %v3534, %v3585
    %v3587 = vlaneseq
    %v3588 = vshrl.u32 %v3587, 7
    %v3589 = vsub.s32 %v634, %v3588
    %v3590 = vrot.slane %v3537, %v3589
    %v3591 = vsel %vm639, %v3590, %v3586
    %v3592 = vlaneseq
    %v3593 = vshrl.u32 %v3592, 7
    %v3594 = vsub.s32 %v629, %v3593
    %v3595 = vrot.slane %v3540, %v3594
    %v3596 = vlaneseq
    %v3597 = vshrl.u32 %v3596, 7
    %v3598 = vsub.s32 %v634, %v3597
    %v3599 = vrot.slane %v3543, %v3598
    %v3600 = vsel %vm639, %v3599, %v3595
    %v3601 = vlaneseq
    %v3602 = vshrl.u32 %v3601, 7
    %v3603 = vsub.s32 %v629, %v3602
    %v3604 = vrot.slane %v3546, %v3603
    %v3605 = vlaneseq
    %v3606 = vshrl.u32 %v3605, 7
    %v3607 = vsub.s32 %v634, %v3606
    %v3608 = vrot.slane %v3549, %v3607
    %v3609 = vsel %vm639, %v3608, %v3604
    %v3610 = vlaneseq
    %v3611 = vshrl.u32 %v3610, 7
    %v3612 = vsub.s32 %v629, %v3611
    %v3613 = vrot.slane %v3552, %v3612
    %v3614 = vlaneseq
    %v3615 = vshrl.u32 %v3614, 7
    %v3616 = vsub.s32 %v634, %v3615
    %v3617 = vrot.slane %v3555, %v3616
    %v3618 = vsel %vm639, %v3617, %v3613
    %v3619 = vlaneseq
    %v3620 = vshrl.u32 %v3619, 7
    %v3621 = vsub.s32 %v629, %v3620
    %v3622 = vrot.slane %v3558, %v3621
    %v3623 = vlaneseq
    %v3624 = vshrl.u32 %v3623, 7
    %v3625 = vsub.s32 %v634, %v3624
    %v3626 = vrot.slane %v3561, %v3625
    %v3627 = vsel %vm639, %v3626, %v3622
    %v3628 = vlaneseq
    %v3629 = vshrl.u32 %v3628, 7
    %v3630 = vsub.s32 %v629, %v3629
    %v3631 = vrot.slane %v3564, %v3630
    %v3632 = vlaneseq
    %v3633 = vshrl.u32 %v3632, 7
    %v3634 = vsub.s32 %v634, %v3633
    %v3635 = vrot.slane %v3567, %v3634
    %v3636 = vsel %vm639, %v3635, %v3631
    %v3637 = vlaneseq
    %v3638 = vshrl.u32 %v3637, 7
    %v3639 = vsub.s32 %v629, %v3638
    %v3640 = vrot.slane %v3570, %v3639
    %v3641 = vlaneseq
    %v3642 = vshrl.u32 %v3641, 7
    %v3643 = vsub.s32 %v634, %v3642
    %v3644 = vrot.slane %v3573, %v3643
    %v3645 = vsel %vm639, %v3644, %v3640
    %v3646 = vsel %vm704, %v3591, %v3582
    %v3647 = vsel %vm706, %v3600, %v3646
    %v3648 = vsel %vm708, %v3609, %v3647
    %v3649 = vsel %vm710, %v3618, %v3648
    %v3650 = vsel %vm712, %v3627, %v3649
    %v3651 = vsel %vm714, %v3636, %v3650
    %v3652 = vsel %vm716, %v3645, %v3651
    %v3654 = vsel %vm719, %v3652, 0.0
    %3655 = vadd.xlane.f32.xlu0 %v3654
    %v3656 = vpop.xlane.xlu0 %3655
    %v3657 = vrcp.pop %v3656
    %v3659 = vlaneseq
    %v3660 = vshrl.u32 %v3659, 7
    %v3661 = vsub.s32 0, %v3660
    %v3662 = vrot.slane %v3657, %v3661
    %v3663 = vlaneseq
    %v3664 = vshrl.u32 %v3663, 7
    %v3665 = vsub.s32 1, %v3664
    %v3666 = vrot.slane %v3657, %v3665
    %v3667 = vlaneseq
    %v3668 = vshrl.u32 %v3667, 7
    %v3669 = vsub.s32 2, %v3668
    %v3670 = vrot.slane %v3657, %v3669
    %v3671 = vlaneseq
    %v3672 = vshrl.u32 %v3671, 7
    %v3673 = vsub.s32 3, %v3672
    %v3674 = vrot.slane %v3657, %v3673
    %v3675 = vlaneseq
    %v3676 = vshrl.u32 %v3675, 7
    %v3677 = vsub.s32 4, %v3676
    %v3678 = vrot.slane %v3657, %v3677
    %v3679 = vlaneseq
    %v3680 = vshrl.u32 %v3679, 7
    %v3681 = vsub.s32 5, %v3680
    %v3682 = vrot.slane %v3657, %v3681
    %v3683 = vlaneseq
    %v3684 = vshrl.u32 %v3683, 7
    %v3685 = vsub.s32 6, %v3684
    %v3686 = vrot.slane %v3657, %v3685
    %v3687 = vlaneseq
    %v3688 = vshrl.u32 %v3687, 7
    %v3689 = vsub.s32 7, %v3688
    %v3690 = vrot.slane %v3657, %v3689
    %v3699 = vmul.f32 %v3479, %v3662
    %v3700 = vmul.f32 %v3481, %v3662
    %v3701 = vmul.f32 %v3483, %v3666
    %v3702 = vmul.f32 %v3485, %v3666
    %v3703 = vmul.f32 %v3487, %v3670
    %v3704 = vmul.f32 %v3489, %v3670
    %v3705 = vmul.f32 %v3491, %v3674
    %v3706 = vmul.f32 %v3493, %v3674
    %v3707 = vmul.f32 %v3495, %v3678
    %v3708 = vmul.f32 %v3497, %v3678
    %v3709 = vmul.f32 %v3499, %v3682
    %v3710 = vmul.f32 %v3501, %v3682
    %v3711 = vmul.f32 %v3503, %v3686
    %v3712 = vmul.f32 %v3505, %v3686
    %v3713 = vmul.f32 %v3507, %v3690
    %v3714 = vmul.f32 %v3509, %v3690
    %3716 = vset.pattern.permute.xlu0 0
    %3717 = vperm.xlu0 %3716, %v3699
    %v3718 = vpop.permute.xlu0 %3717
    %3721 = vset.pattern.permute.xlu0 0
    %3722 = vperm.xlu0 %3721, %v3700
    %v3723 = vpop.permute.xlu0 %3722
    %3726 = vset.pattern.permute.xlu0 0
    %3727 = vperm.xlu0 %3726, %v3701
    %v3728 = vpop.permute.xlu0 %3727
    %3731 = vset.pattern.permute.xlu0 0
    %3732 = vperm.xlu0 %3731, %v3702
    %v3733 = vpop.permute.xlu0 %3732
    %3736 = vset.pattern.permute.xlu0 0
    %3737 = vperm.xlu0 %3736, %v3703
    %v3738 = vpop.permute.xlu0 %3737
    %3741 = vset.pattern.permute.xlu0 0
    %3742 = vperm.xlu0 %3741, %v3704
    %v3743 = vpop.permute.xlu0 %3742
    %3746 = vset.pattern.permute.xlu0 0
    %3747 = vperm.xlu0 %3746, %v3705
    %v3748 = vpop.permute.xlu0 %3747
    %3751 = vset.pattern.permute.xlu0 0
    %3752 = vperm.xlu0 %3751, %v3706
    %v3753 = vpop.permute.xlu0 %3752
    %3756 = vset.pattern.permute.xlu0 0
    %3757 = vperm.xlu0 %3756, %v3707
    %v3758 = vpop.permute.xlu0 %3757
    %3761 = vset.pattern.permute.xlu0 0
    %3762 = vperm.xlu0 %3761, %v3708
    %v3763 = vpop.permute.xlu0 %3762
    %3766 = vset.pattern.permute.xlu0 0
    %3767 = vperm.xlu0 %3766, %v3709
    %v3768 = vpop.permute.xlu0 %3767
    %3771 = vset.pattern.permute.xlu0 0
    %3772 = vperm.xlu0 %3771, %v3710
    %v3773 = vpop.permute.xlu0 %3772
    %3776 = vset.pattern.permute.xlu0 0
    %3777 = vperm.xlu0 %3776, %v3711
    %v3778 = vpop.permute.xlu0 %3777
    %3781 = vset.pattern.permute.xlu0 0
    %3782 = vperm.xlu0 %3781, %v3712
    %v3783 = vpop.permute.xlu0 %3782
    %3786 = vset.pattern.permute.xlu0 0
    %3787 = vperm.xlu0 %3786, %v3713
    %v3788 = vpop.permute.xlu0 %3787
    %3791 = vset.pattern.permute.xlu0 0
    %3792 = vperm.xlu0 %3791, %v3714
    %v3793 = vpop.permute.xlu0 %3792
    %v3795 = vmul.f32 %v177, %v3718
    %v3796 = vmul.f32 %v178, %v3723
    %v3797 = vmul.f32 %v179, %v3728
    %v3798 = vmul.f32 %v180, %v3733
    %v3799 = vmul.f32 %v181, %v3738
    %v3800 = vmul.f32 %v182, %v3743
    %v3801 = vmul.f32 %v183, %v3748
    %v3802 = vmul.f32 %v184, %v3753
    %v3803 = vmul.f32 %v185, %v3758
    %v3804 = vmul.f32 %v186, %v3763
    %v3805 = vmul.f32 %v187, %v3768
    %v3806 = vmul.f32 %v188, %v3773
    %v3807 = vmul.f32 %v189, %v3778
    %v3808 = vmul.f32 %v190, %v3783
    %v3809 = vmul.f32 %v191, %v3788
    %v3810 = vmul.f32 %v192, %v3793
    %v3811 = vsel %vm1113, %v3795, 0.0
    %v3812 = vsel %vm1113, %v3796, 0.0
    %v3813 = vadd.f32 %v3811, %v3812
    %v3814 = vrot.slane %v3813, 4
    %v3815 = vadd.f32 %v3813, %v3814
    %v3816 = vrot.slane %v3815, 2
    %v3817 = vadd.f32 %v3815, %v3816
    %v3818 = vrot.slane %v3817, 1
    %v3819 = vadd.f32 %v3817, %v3818
    %v3820 = vsel %vm1113, %v3797, 0.0
    %v3821 = vsel %vm1113, %v3798, 0.0
    %v3822 = vadd.f32 %v3820, %v3821
    %v3823 = vrot.slane %v3822, 4
    %v3824 = vadd.f32 %v3822, %v3823
    %v3825 = vrot.slane %v3824, 2
    %v3826 = vadd.f32 %v3824, %v3825
    %v3827 = vrot.slane %v3826, 1
    %v3828 = vadd.f32 %v3826, %v3827
    %v3829 = vsel %vm1113, %v3799, 0.0
    %v3830 = vsel %vm1113, %v3800, 0.0
    %v3831 = vadd.f32 %v3829, %v3830
    %v3832 = vrot.slane %v3831, 4
    %v3833 = vadd.f32 %v3831, %v3832
    %v3834 = vrot.slane %v3833, 2
    %v3835 = vadd.f32 %v3833, %v3834
    %v3836 = vrot.slane %v3835, 1
    %v3837 = vadd.f32 %v3835, %v3836
    %v3838 = vsel %vm1113, %v3801, 0.0
    %v3839 = vsel %vm1113, %v3802, 0.0
    %v3840 = vadd.f32 %v3838, %v3839
    %v3841 = vrot.slane %v3840, 4
    %v3842 = vadd.f32 %v3840, %v3841
    %v3843 = vrot.slane %v3842, 2
    %v3844 = vadd.f32 %v3842, %v3843
    %v3845 = vrot.slane %v3844, 1
    %v3846 = vadd.f32 %v3844, %v3845
    %v3847 = vsel %vm1113, %v3803, 0.0
    %v3848 = vsel %vm1113, %v3804, 0.0
    %v3849 = vadd.f32 %v3847, %v3848
    %v3850 = vrot.slane %v3849, 4
    %v3851 = vadd.f32 %v3849, %v3850
    %v3852 = vrot.slane %v3851, 2
    %v3853 = vadd.f32 %v3851, %v3852
    %v3854 = vrot.slane %v3853, 1
    %v3855 = vadd.f32 %v3853, %v3854
    %v3856 = vsel %vm1113, %v3805, 0.0
    %v3857 = vsel %vm1113, %v3806, 0.0
    %v3858 = vadd.f32 %v3856, %v3857
    %v3859 = vrot.slane %v3858, 4
    %v3860 = vadd.f32 %v3858, %v3859
    %v3861 = vrot.slane %v3860, 2
    %v3862 = vadd.f32 %v3860, %v3861
    %v3863 = vrot.slane %v3862, 1
    %v3864 = vadd.f32 %v3862, %v3863
    %v3865 = vsel %vm1113, %v3807, 0.0
    %v3866 = vsel %vm1113, %v3808, 0.0
    %v3867 = vadd.f32 %v3865, %v3866
    %v3868 = vrot.slane %v3867, 4
    %v3869 = vadd.f32 %v3867, %v3868
    %v3870 = vrot.slane %v3869, 2
    %v3871 = vadd.f32 %v3869, %v3870
    %v3872 = vrot.slane %v3871, 1
    %v3873 = vadd.f32 %v3871, %v3872
    %v3874 = vsel %vm1113, %v3809, 0.0
    %v3875 = vsel %vm1113, %v3810, 0.0
    %v3876 = vadd.f32 %v3874, %v3875
    %v3877 = vrot.slane %v3876, 4
    %v3878 = vadd.f32 %v3876, %v3877
    %v3879 = vrot.slane %v3878, 2
    %v3880 = vadd.f32 %v3878, %v3879
    %v3881 = vrot.slane %v3880, 1
    %v3882 = vadd.f32 %v3880, %v3881
    %v3883 = vpack.c.bf16 %v3819, %v3819
    %v3884 = vpack.c.bf16 %v3828, %v3828
    %v3885 = vpack.c.bf16 %v3837, %v3837
    %v3886 = vpack.c.bf16 %v3846, %v3846
    %v3887 = vpack.c.bf16 %v3855, %v3855
    %v3888 = vpack.c.bf16 %v3864, %v3864
    %v3889 = vpack.c.bf16 %v3873, %v3873
    %v3890 = vpack.c.bf16 %v3882, %v3882
    %v3899 = vunpack.c.l.b16 %v3883
    %v3900 = vunpack.c.l.b16 %v3884
    %v3901 = vunpack.c.l.b16 %v3885
    %v3902 = vunpack.c.l.b16 %v3886
    %v3903 = vunpack.c.l.b16 %v3887
    %v3904 = vunpack.c.l.b16 %v3888
    %v3905 = vunpack.c.l.b16 %v3889
    %v3906 = vunpack.c.l.b16 %v3890
    %v3907 = vsel %vm704, %v3900, %v3899
    %v3908 = vsel %vm706, %v3901, %v3907
    %v3909 = vsel %vm708, %v3902, %v3908
    %v3910 = vsel %vm710, %v3903, %v3909
    %v3911 = vsel %vm712, %v3904, %v3910
    %v3912 = vsel %vm714, %v3905, %v3911
    %v3913 = vsel %vm716, %v3906, %v3912
    %v3914 = vpack.c.b16 %v3913, %v3913
    %v3916 = vsel %vm1113, %v3914, 0
    %3918 = vmatprep.subr.bf16.mxu0 %v1231
    %3919 = vmatpush1.bf16.msra.mxu0 %v1230
    %3920 = vmatprep.subr.bf16.mxu0 %v1233
    %3921 = vmatpush1.bf16.msra.mxu0 %v1232
    %3922 = vmatprep.subr.bf16.mxu0 0
    %3923 = vmatpush1.bf16.msra.mxu0 0
    %3924 = vmatprep.subr.bf16.mxu0 0
    %3925 = vmatpush1.bf16.msra.mxu0 0
    %3926 = vmatprep.subr.bf16.mxu0 0
    %3927 = vmatpush1.bf16.msra.mxu0 0
    %3928 = vmatprep.subr.bf16.mxu0 0
    %3929 = vmatpush1.bf16.msra.mxu0 0
    %3930 = vmatprep.subr.bf16.mxu0 0
    %3931 = vmatpush1.bf16.msra.mxu0 0
    %3932 = vmatprep.subr.bf16.mxu0 0
    %3933 = vmatpush1.bf16.msra.mxu0 0
    %3934 = vmatprep.subr.bf16.mxu0 0
    %3935 = vmatpush1.bf16.msra.mxu0 0
    %3936 = vmatprep.subr.bf16.mxu0 0
    %3937 = vmatpush1.bf16.msra.mxu0 0
    %3938 = vmatprep.subr.bf16.mxu0 0
    %3939 = vmatpush1.bf16.msra.mxu0 0
    %3940 = vmatprep.subr.bf16.mxu0 0
    %3941 = vmatpush1.bf16.msra.mxu0 0
    %3942 = vmatprep.subr.bf16.mxu0 0
    %3943 = vmatpush1.bf16.msra.mxu0 0
    %3944 = vmatprep.subr.bf16.mxu0 0
    %3945 = vmatpush1.bf16.msra.mxu0 0
    %3946 = vmatprep.subr.bf16.mxu0 0
    %3947 = vmatpush1.bf16.msra.mxu0 0
    %3948 = vmatprep.subr.bf16.mxu0 0
    %3949 = vmatpush1.bf16.msra.mxu0 0
    %3950 = vmatprep.mubr.bf16.mxu0 0
    %3951 = vmatmul.mubr.bf16.gmra.mrb[0].mxu0 %v3916
    %v3952 = vpop.f32.mrb[0].mxu0
    %v3953 = vadd.f32 %v316, %v3952
    %v3954 = vpop.f32.mrb[0].mxu0
    %v3955 = vadd.f32 %v320, %v3954
    %v3956 = vpop.f32.mrb[0].mxu0
    %v3957 = vpop.f32.mrb[0].mxu0
    %3958 = vdwg.mxu0
    %s3959 = scalar_lea.vmem [#allocation9], 16
    %v3960 = vld [vmem:[%s3959] sm:$0xff]
    %v3961 = vadd.f32 %v3960, %v3955
    %v3962 = vpack.c.bf16 %v3961, %v3961
    %3963 = vmatprep.subr.bf16.mxu0 %v1382
    %3964 = vmatpush1.bf16.msra.mxu0 %v1381
    %3965 = vmatprep.subr.bf16.mxu0 %v1386
    %3966 = vmatpush1.bf16.msra.mxu0 %v1385
    %3967 = vmatprep.subr.bf16.mxu0 %v1390
    %3968 = vmatpush1.bf16.msra.mxu0 %v1389
    %3969 = vmatprep.subr.bf16.mxu0 %v1394
    %3970 = vmatpush1.bf16.msra.mxu0 %v1393
    %3971 = vmatprep.subr.bf16.mxu0 %v1398
    %3972 = vmatpush1.bf16.msra.mxu0 %v1397
    %3973 = vmatprep.subr.bf16.mxu0 %v1402
    %3974 = vmatpush1.bf16.msra.mxu0 %v1401
    %3975 = vmatprep.subr.bf16.mxu0 %v1406
    %3976 = vmatpush1.bf16.msra.mxu0 %v1405
    %3977 = vmatprep.subr.bf16.mxu0 %v1410
    %3978 = vmatpush1.bf16.msra.mxu0 %v1409
    %3979 = vmatprep.subr.bf16.mxu0 0
    %3980 = vmatpush1.bf16.msra.mxu0 0
    %3981 = vmatprep.subr.bf16.mxu0 0
    %3982 = vmatpush1.bf16.msra.mxu0 0
    %3983 = vmatprep.subr.bf16.mxu0 0
    %3984 = vmatpush1.bf16.msra.mxu0 0
    %3985 = vmatprep.subr.bf16.mxu0 0
    %3986 = vmatpush1.bf16.msra.mxu0 0
    %3987 = vmatprep.subr.bf16.mxu0 0
    %3988 = vmatpush1.bf16.msra.mxu0 0
    %3989 = vmatprep.subr.bf16.mxu0 0
    %3990 = vmatpush1.bf16.msra.mxu0 0
    %3991 = vmatprep.subr.bf16.mxu0 0
    %3992 = vmatpush1.bf16.msra.mxu0 0
    %3993 = vmatprep.subr.bf16.mxu0 0
    %3994 = vmatpush1.bf16.msra.mxu0 0
    %3995 = vmatprep.mubr.bf16.mxu0 0
    %3996 = vmatmul.mubr.bf16.gmra.mrb[0].mxu0 %v3111
    %v3997 = vpop.f32.mrb[0].mxu0
    %v3998 = vadd.f32 0.0, %v3997
    %v3999 = vpop.f32.mrb[0].mxu0
    %v4000 = vadd.f32 0.0, %v3999
    %v4001 = vpop.f32.mrb[0].mxu0
    %v4002 = vpop.f32.mrb[0].mxu0
    %4003 = vdwg.mxu0
    %4004 = vmatprep.subr.bf16.mxu0 %v1384
    %4005 = vmatpush1.bf16.msra.mxu0 %v1383
    %4006 = vmatprep.subr.bf16.mxu0 %v1388
    %4007 = vmatpush1.bf16.msra.mxu0 %v1387
    %4008 = vmatprep.subr.bf16.mxu0 %v1392
    %4009 = vmatpush1.bf16.msra.mxu0 %v1391
    %4010 = vmatprep.subr.bf16.mxu0 %v1396
    %4011 = vmatpush1.bf16.msra.mxu0 %v1395
    %4012 = vmatprep.subr.bf16.mxu0 %v1400
    %4013 = vmatpush1.bf16.msra.mxu0 %v1399
    %4014 = vmatprep.subr.bf16.mxu0 %v1404
    %4015 = vmatpush1.bf16.msra.mxu0 %v1403
    %4016 = vmatprep.subr.bf16.mxu0 %v1408
    %4017 = vmatpush1.bf16.msra.mxu0 %v1407
    %4018 = vmatprep.subr.bf16.mxu0 %v1412
    %4019 = vmatpush1.bf16.msra.mxu0 %v1411
    %4020 = vmatprep.subr.bf16.mxu0 0
    %4021 = vmatpush1.bf16.msra.mxu0 0
    %4022 = vmatprep.subr.bf16.mxu0 0
    %4023 = vmatpush1.bf16.msra.mxu0 0
    %4024 = vmatprep.subr.bf16.mxu0 0
    %4025 = vmatpush1.bf16.msra.mxu0 0
    %4026 = vmatprep.subr.bf16.mxu0 0
    %4027 = vmatpush1.bf16.msra.mxu0 0
    %4028 = vmatprep.subr.bf16.mxu0 0
    %4029 = vmatpush1.bf16.msra.mxu0 0
    %4030 = vmatprep.subr.bf16.mxu0 0
    %4031 = vmatpush1.bf16.msra.mxu0 0
    %4032 = vmatprep.subr.bf16.mxu0 0
    %4033 = vmatpush1.bf16.msra.mxu0 0
    %4034 = vmatprep.subr.bf16.mxu0 0
    %4035 = vmatpush1.bf16.msra.mxu0 0
    %4036 = vmatprep.mubr.bf16.mxu0 0
    %4037 = vmatmul.mubr.bf16.gmra.mrb[0].mxu0 %v3111
    %v4038 = vpop.f32.mrb[0].mxu0
    %v4039 = vadd.f32 0.0, %v4038
    %v4040 = vpop.f32.mrb[0].mxu0
    %v4041 = vadd.f32 0.0, %v4040
    %v4042 = vpop.f32.mrb[0].mxu0
    %v4043 = vpop.f32.mrb[0].mxu0
    %4044 = vdwg.mxu0
    %4045 = vmatprep.subr.bf16.mxu0 %v1624
    %4046 = vmatpush1.bf16.msra.mxu0 %v1623
    %4047 = vmatprep.subr.bf16.mxu0 %v1628
    %4048 = vmatpush1.bf16.msra.mxu0 %v1627
    %4049 = vmatprep.subr.bf16.mxu0 %v1632
    %4050 = vmatpush1.bf16.msra.mxu0 %v1631
    %4051 = vmatprep.subr.bf16.mxu0 %v1636
    %4052 = vmatpush1.bf16.msra.mxu0 %v1635
    %4053 = vmatprep.subr.bf16.mxu0 %v1640
    %4054 = vmatpush1.bf16.msra.mxu0 %v1639
    %4055 = vmatprep.subr.bf16.mxu0 %v1644
    %4056 = vmatpush1.bf16.msra.mxu0 %v1643
    %4057 = vmatprep.subr.bf16.mxu0 %v1648
    %4058 = vmatpush1.bf16.msra.mxu0 %v1647
    %4059 = vmatprep.subr.bf16.mxu0 %v1652
    %4060 = vmatpush1.bf16.msra.mxu0 %v1651
    %4061 = vmatprep.subr.bf16.mxu0 0
    %4062 = vmatpush1.bf16.msra.mxu0 0
    %4063 = vmatprep.subr.bf16.mxu0 0
    %4064 = vmatpush1.bf16.msra.mxu0 0
    %4065 = vmatprep.subr.bf16.mxu0 0
    %4066 = vmatpush1.bf16.msra.mxu0 0
    %4067 = vmatprep.subr.bf16.mxu0 0
    %4068 = vmatpush1.bf16.msra.mxu0 0
    %4069 = vmatprep.subr.bf16.mxu0 0
    %4070 = vmatpush1.bf16.msra.mxu0 0
    %4071 = vmatprep.subr.bf16.mxu0 0
    %4072 = vmatpush1.bf16.msra.mxu0 0
    %4073 = vmatprep.subr.bf16.mxu0 0
    %4074 = vmatpush1.bf16.msra.mxu0 0
    %4075 = vmatprep.subr.bf16.mxu0 0
    %4076 = vmatpush1.bf16.msra.mxu0 0
    %4077 = vmatprep.mubr.bf16.mxu0 0
    %4078 = vmatmul.mubr.bf16.gmra.mrb[0].mxu0 %v3962
    %v4079 = vpop.f32.mrb[0].mxu0
    %v4080 = vadd.f32 %v3998, %v4079
    %v4081 = vpop.f32.mrb[0].mxu0
    %v4082 = vadd.f32 %v4000, %v4081
    %v4083 = vpop.f32.mrb[0].mxu0
    %v4084 = vpop.f32.mrb[0].mxu0
    %4085 = vdwg.mxu0
    %4086 = vmatprep.subr.bf16.mxu0 %v1626
    %4087 = vmatpush1.bf16.msra.mxu0 %v1625
    %4088 = vmatprep.subr.bf16.mxu0 %v1630
    %4089 = vmatpush1.bf16.msra.mxu0 %v1629
    %4090 = vmatprep.subr.bf16.mxu0 %v1634
    %4091 = vmatpush1.bf16.msra.mxu0 %v1633
    %4092 = vmatprep.subr.bf16.mxu0 %v1638
    %4093 = vmatpush1.bf16.msra.mxu0 %v1637
    %4094 = vmatprep.subr.bf16.mxu0 %v1642
    %4095 = vmatpush1.bf16.msra.mxu0 %v1641
    %4096 = vmatprep.subr.bf16.mxu0 %v1646
    %4097 = vmatpush1.bf16.msra.mxu0 %v1645
    %4098 = vmatprep.subr.bf16.mxu0 %v1650
    %4099 = vmatpush1.bf16.msra.mxu0 %v1649
    %4100 = vmatprep.subr.bf16.mxu0 %v1654
    %4101 = vmatpush1.bf16.msra.mxu0 %v1653
    %4102 = vmatprep.subr.bf16.mxu0 0
    %4103 = vmatpush1.bf16.msra.mxu0 0
    %4104 = vmatprep.subr.bf16.mxu0 0
    %4105 = vmatpush1.bf16.msra.mxu0 0
    %4106 = vmatprep.subr.bf16.mxu0 0
    %4107 = vmatpush1.bf16.msra.mxu0 0
    %4108 = vmatprep.subr.bf16.mxu0 0
    %4109 = vmatpush1.bf16.msra.mxu0 0
    %4110 = vmatprep.subr.bf16.mxu0 0
    %4111 = vmatpush1.bf16.msra.mxu0 0
    %4112 = vmatprep.subr.bf16.mxu0 0
    %4113 = vmatpush1.bf16.msra.mxu0 0
    %4114 = vmatprep.subr.bf16.mxu0 0
    %4115 = vmatpush1.bf16.msra.mxu0 0
    %4116 = vmatprep.subr.bf16.mxu0 0
    %4117 = vmatpush1.bf16.msra.mxu0 0
    %4118 = vmatprep.mubr.bf16.mxu0 0
    %4119 = vmatmul.mubr.bf16.gmra.mrb[0].mxu0 %v3962
    %v4120 = vpop.f32.mrb[0].mxu0
    %v4121 = vadd.f32 %v4039, %v4120
    %v4122 = vpop.f32.mrb[0].mxu0
    %v4123 = vadd.f32 %v4041, %v4122
    %v4124 = vpop.f32.mrb[0].mxu0
    %v4125 = vpop.f32.mrb[0].mxu0
    %4126 = vdwg.mxu0
    %v4127 = vadd.f32 %v4080, %v328
    %v4128 = vadd.f32 %v4082, %v332
    %v4129 = vadd.f32 %v4121, %v336
    %v4130 = vadd.f32 %v4123, %v340
    %v4131 = vxor.u32 %v4127, 2147483648
    %v4132 = vmul.f32 %v4131, 1.442695
    %v4133 = vpow.pop %v4132
    %v4134 = vadd.f32 %v4133, 1.0
    %v4135 = vrcp.pop %v4134
    %v4136 = vmul.f32 1.0, %v4135
    %v4137 = vxor.u32 %v4128, 2147483648
    %v4138 = vmul.f32 %v4137, 1.442695
    %v4139 = vpow.pop %v4138
    %v4140 = vadd.f32 %v4139, 1.0
    %v4141 = vrcp.pop %v4140
    %v4142 = vmul.f32 1.0, %v4141
    %v4143 = vtanh.pop %v4129
    %v4144 = vxor.u32 %v4130, 2147483648
    %v4145 = vmul.f32 %v4144, 1.442695
    %v4146 = vpow.pop %v4145
    %v4147 = vadd.f32 %v4146, 1.0
    %v4148 = vrcp.pop %v4147
    %v4149 = vmul.f32 1.0, %v4148
    %v4150 = vmul.f32 %v4142, %v3000
    %v4151 = vmul.f32 %v4136, %v4143
    %v4152 = vadd.f32 %v4150, %v4151
    %v4153 = vtanh.pop %v4152
    %v4154 = vmul.f32 %v4149, %v4153
    %v4155 = vadd.f32 %v4154, %v3953
    %v4156 = vpack.c.bf16 %v4155, %v4155
    %4157 = vmatprep.subr.bf16.mxu0 0
    %4158 = vmatpush1.bf16.msra.mxu0 %v1837
    %4159 = vmatprep.subr.bf16.mxu0 0
    %4160 = vmatpush1.bf16.msra.mxu0 %v1838
    %4161 = vmatprep.subr.bf16.mxu0 0
    %4162 = vmatpush1.bf16.msra.mxu0 %v1839
    %4163 = vmatprep.subr.bf16.mxu0 0
    %4164 = vmatpush1.bf16.msra.mxu0 %v1840
    %4165 = vmatprep.subr.bf16.mxu0 0
    %4166 = vmatpush1.bf16.msra.mxu0 %v1841
    %4167 = vmatprep.subr.bf16.mxu0 0
    %4168 = vmatpush1.bf16.msra.mxu0 %v1842
    %4169 = vmatprep.subr.bf16.mxu0 0
    %4170 = vmatpush1.bf16.msra.mxu0 %v1843
    %4171 = vmatprep.subr.bf16.mxu0 0
    %4172 = vmatpush1.bf16.msra.mxu0 %v1844
    %4173 = vmatprep.subr.bf16.mxu0 0
    %4174 = vmatpush1.bf16.msra.mxu0 0
    %4175 = vmatprep.subr.bf16.mxu0 0
    %4176 = vmatpush1.bf16.msra.mxu0 0
    %4177 = vmatprep.subr.bf16.mxu0 0
    %4178 = vmatpush1.bf16.msra.mxu0 0
    %4179 = vmatprep.subr.bf16.mxu0 0
    %4180 = vmatpush1.bf16.msra.mxu0 0
    %4181 = vmatprep.subr.bf16.mxu0 0
    %4182 = vmatpush1.bf16.msra.mxu0 0
    %4183 = vmatprep.subr.bf16.mxu0 0
    %4184 = vmatpush1.bf16.msra.mxu0 0
    %4185 = vmatprep.subr.bf16.mxu0 0
    %4186 = vmatpush1.bf16.msra.mxu0 0
    %4187 = vmatprep.subr.bf16.mxu0 0
    %4188 = vmatpush1.bf16.msra.mxu0 0
    %4189 = vmatprep.mubr.bf16.mxu0 0
    %4190 = vmatmul.mubr.bf16.gmra.mrb[0].mxu0 %v4156
    %v4191 = vpop.f32.mrb[0].mxu0
    %v4192 = vadd.f32 %v1803, %v4191
    %v4193 = vpop.f32.mrb[0].mxu0
    %v4194 = vpop.f32.mrb[0].mxu0
    %v4195 = vpop.f32.mrb[0].mxu0
    %4196 = vdwg.mxu0
    %v4198 = vcombine.high %v4192, %v4192
    %v4200 = vunpack.c.l.s4 1966171168
    %v4201 = vunpack.c.0.s8 %v4200
    %v4202 = vlaneseq
    %v4203 = vshrl.u32 %v4202, 7
    %v4204 = vsub.s32 %v4201, %v4203
    %v4205 = vrot.slane %v4192, %v4204
    %v4207 = vunpack.c.l.s4 1966171168
    %v4208 = vunpack.c.0.s8 %v4207
    %v4209 = vlaneseq
    %v4210 = vshrl.u32 %v4209, 7
    %v4211 = vsub.s32 %v4208, %v4210
    %v4212 = vrot.slane %v4198, %v4211
    %v4213 = vcombine.high %v4205, %v4205
    %v4214 = vcombine.high %v4212, %v4212
    %v4216 = vunpack.c.l.s4 1966171168
    %v4217 = vunpack.c.0.s8 %v4216
    %v4218 = vlaneseq
    %v4219 = vshrl.u32 %v4218, 7
    %v4220 = vsub.s32 %v4217, %v4219
    %v4221 = vrot.slane %v4205, %v4220
    %v4223 = vunpack.c.l.s4 1966171168
    %v4224 = vunpack.c.0.s8 %v4223
    %v4225 = vlaneseq
    %v4226 = vshrl.u32 %v4225, 7
    %v4227 = vsub.s32 %v4224, %v4226
    %v4228 = vrot.slane %v4212, %v4227
    %v4230 = vunpack.c.l.s4 1966171168
    %v4231 = vunpack.c.0.s8 %v4230
    %v4232 = vlaneseq
    %v4233 = vshrl.u32 %v4232, 7
    %v4234 = vsub.s32 %v4231, %v4233
    %v4235 = vrot.slane %v4213, %v4234
    %v4237 = vunpack.c.l.s4 1966171168
    %v4238 = vunpack.c.0.s8 %v4237
    %v4239 = vlaneseq
    %v4240 = vshrl.u32 %v4239, 7
    %v4241 = vsub.s32 %v4238, %v4240
    %v4242 = vrot.slane %v4214, %v4241
    %v4243 = vcombine.high %v4221, %v4221
    %v4244 = vcombine.high %v4228, %v4228
    %v4245 = vcombine.high %v4235, %v4235
    %v4246 = vcombine.high %v4242, %v4242
    %4255 = vst [vmem:[#allocation19 + $0x2] sm:$0x1] %v4221
    %4256 = vst [vmem:[#allocation19 + $0xa] sm:$0x1] %v4235
    %4257 = vst [vmem:[#allocation19 + $0x12] sm:$0x1] %v4243
    %4258 = vst [vmem:[#allocation19 + $0x1a] sm:$0x1] %v4245
    %4259 = vst [vmem:[#allocation19 + $0x22] sm:$0x1] %v4228
    %4260 = vst [vmem:[#allocation19 + $0x2a] sm:$0x1] %v4242
    %4261 = vst [vmem:[#allocation19 + $0x32] sm:$0x1] %v4244
    %4262 = vst [vmem:[#allocation19 + $0x3a] sm:$0x1] %v4246
    %v4263 = vpack.c.bf16 %v4154, %v4154
    %4264 = vmatprep.subr.bf16.mxu0 0
    %4265 = vmatpush1.bf16.msra.mxu0 %v380
    %4266 = vmatprep.subr.bf16.mxu0 0
    %4267 = vmatpush1.bf16.msra.mxu0 %v381
    %4268 = vmatprep.subr.bf16.mxu0 0
    %4269 = vmatpush1.bf16.msra.mxu0 %v382
    %4270 = vmatprep.subr.bf16.mxu0 0
    %4271 = vmatpush1.bf16.msra.mxu0 %v383
    %4272 = vmatprep.subr.bf16.mxu0 0
    %4273 = vmatpush1.bf16.msra.mxu0 %v384
    %4274 = vmatprep.subr.bf16.mxu0 0
    %4275 = vmatpush1.bf16.msra.mxu0 %v385
    %4276 = vmatprep.subr.bf16.mxu0 0
    %4277 = vmatpush1.bf16.msra.mxu0 %v386
    %4278 = vmatprep.subr.bf16.mxu0 0
    %4279 = vmatpush1.bf16.msra.mxu0 %v387
    %4280 = vmatprep.subr.bf16.mxu0 0
    %4281 = vmatpush1.bf16.msra.mxu0 0
    %4282 = vmatprep.subr.bf16.mxu0 0
    %4283 = vmatpush1.bf16.msra.mxu0 0
    %4284 = vmatprep.subr.bf16.mxu0 0
    %4285 = vmatpush1.bf16.msra.mxu0 0
    %4286 = vmatprep.subr.bf16.mxu0 0
    %4287 = vmatpush1.bf16.msra.mxu0 0
    %4288 = vmatprep.subr.bf16.mxu0 0
    %4289 = vmatpush1.bf16.msra.mxu0 0
    %4290 = vmatprep.subr.bf16.mxu0 0
    %4291 = vmatpush1.bf16.msra.mxu0 0
    %4292 = vmatprep.subr.bf16.mxu0 0
    %4293 = vmatpush1.bf16.msra.mxu0 0
    %4294 = vmatprep.subr.bf16.mxu0 0
    %4295 = vmatpush1.bf16.msra.mxu0 0
    %4296 = vmatprep.mubr.bf16.mxu0 0
    %4297 = vmatmul.mubr.bf16.gmra.mrb[0].mxu0 %v4263
    %v4298 = vpop.f32.mrb[0].mxu0
    %v4299 = vadd.f32 0.0, %v4298
    %v4300 = vpop.f32.mrb[0].mxu0
    %v4301 = vpop.f32.mrb[0].mxu0
    %v4302 = vpop.f32.mrb[0].mxu0
    %4303 = vdwg.mxu0
    %v4305 = vcombine.high %v4299, %v4299
    %v4307 = vunpack.c.l.s4 1966171168
    %v4308 = vunpack.c.0.s8 %v4307
    %v4309 = vlaneseq
    %v4310 = vshrl.u32 %v4309, 7
    %v4311 = vsub.s32 %v4308, %v4310
    %v4312 = vrot.slane %v4299, %v4311
    %v4314 = vunpack.c.l.s4 1966171168
    %v4315 = vunpack.c.0.s8 %v4314
    %v4316 = vlaneseq
    %v4317 = vshrl.u32 %v4316, 7
    %v4318 = vsub.s32 %v4315, %v4317
    %v4319 = vrot.slane %v4305, %v4318
    %v4320 = vcombine.high %v4312, %v4312
    %v4321 = vcombine.high %v4319, %v4319
    %v4323 = vunpack.c.l.s4 1966171168
    %v4324 = vunpack.c.0.s8 %v4323
    %v4325 = vlaneseq
    %v4326 = vshrl.u32 %v4325, 7
    %v4327 = vsub.s32 %v4324, %v4326
    %v4328 = vrot.slane %v4312, %v4327
    %v4330 = vunpack.c.l.s4 1966171168
    %v4331 = vunpack.c.0.s8 %v4330
    %v4332 = vlaneseq
    %v4333 = vshrl.u32 %v4332, 7
    %v4334 = vsub.s32 %v4331, %v4333
    %v4335 = vrot.slane %v4319, %v4334
    %v4337 = vunpack.c.l.s4 1966171168
    %v4338 = vunpack.c.0.s8 %v4337
    %v4339 = vlaneseq
    %v4340 = vshrl.u32 %v4339, 7
    %v4341 = vsub.s32 %v4338, %v4340
    %v4342 = vrot.slane %v4320, %v4341
    %v4344 = vunpack.c.l.s4 1966171168
    %v4345 = vunpack.c.0.s8 %v4344
    %v4346 = vlaneseq
    %v4347 = vshrl.u32 %v4346, 7
    %v4348 = vsub.s32 %v4345, %v4347
    %v4349 = vrot.slane %v4321, %v4348
    %v4350 = vcombine.high %v4328, %v4328
    %v4351 = vcombine.high %v4335, %v4335
    %v4352 = vcombine.high %v4342, %v4342
    %v4353 = vcombine.high %v4349, %v4349
    %v4354 = vlaneseq
    %v4355 = vshrl.u32 %v4354, 7
    %v4356 = vsub.s32 0, %v4355
    %v4357 = vrot.slane %v4328, %v4356
    %v4358 = vlaneseq
    %v4359 = vshrl.u32 %v4358, 7
    %v4360 = vsub.s32 0, %v4359
    %v4361 = vrot.slane %v4342, %v4360
    %v4362 = vlaneseq
    %v4363 = vshrl.u32 %v4362, 7
    %v4364 = vsub.s32 0, %v4363
    %v4365 = vrot.slane %v4350, %v4364
    %v4366 = vlaneseq
    %v4367 = vshrl.u32 %v4366, 7
    %v4368 = vsub.s32 0, %v4367
    %v4369 = vrot.slane %v4352, %v4368
    %v4370 = vlaneseq
    %v4371 = vshrl.u32 %v4370, 7
    %v4372 = vsub.s32 0, %v4371
    %v4373 = vrot.slane %v4335, %v4372
    %v4374 = vlaneseq
    %v4375 = vshrl.u32 %v4374, 7
    %v4376 = vsub.s32 0, %v4375
    %v4377 = vrot.slane %v4349, %v4376
    %v4378 = vlaneseq
    %v4379 = vshrl.u32 %v4378, 7
    %v4380 = vsub.s32 0, %v4379
    %v4381 = vrot.slane %v4351, %v4380
    %v4382 = vlaneseq
    %v4383 = vshrl.u32 %v4382, 7
    %v4384 = vsub.s32 0, %v4383
    %v4385 = vrot.slane %v4353, %v4384
    %v4394 = vadd.f32 %v193, %v4357
    %v4395 = vadd.f32 %v194, %v4357
    %v4396 = vadd.f32 %v195, %v4361
    %v4397 = vadd.f32 %v196, %v4361
    %v4398 = vadd.f32 %v197, %v4365
    %v4399 = vadd.f32 %v198, %v4365
    %v4400 = vadd.f32 %v199, %v4369
    %v4401 = vadd.f32 %v200, %v4369
    %v4402 = vadd.f32 %v201, %v4373
    %v4403 = vadd.f32 %v202, %v4373
    %v4404 = vadd.f32 %v203, %v4377
    %v4405 = vadd.f32 %v204, %v4377
    %v4406 = vadd.f32 %v205, %v4381
    %v4407 = vadd.f32 %v206, %v4381
    %v4408 = vadd.f32 %v207, %v4385
    %v4409 = vadd.f32 %v208, %v4385
    %v4410 = vtanh.pop %v4394
    %v4411 = vtanh.pop %v4395
    %v4412 = vtanh.pop %v4396
    %v4413 = vtanh.pop %v4397
    %v4414 = vtanh.pop %v4398
    %v4415 = vtanh.pop %v4399
    %v4416 = vtanh.pop %v4400
    %v4417 = vtanh.pop %v4401
    %v4418 = vtanh.pop %v4402
    %v4419 = vtanh.pop %v4403
    %v4420 = vtanh.pop %v4404
    %v4421 = vtanh.pop %v4405
    %v4422 = vtanh.pop %v4406
    %v4423 = vtanh.pop %v4407
    %v4424 = vtanh.pop %v4408
    %v4425 = vtanh.pop %v4409
    %v4426 = vmul.f32 %v4410, %v562
    %v4427 = vmul.f32 %v4411, %v562
    %v4428 = vmul.f32 %v4412, %v562
    %v4429 = vmul.f32 %v4413, %v562
    %v4430 = vmul.f32 %v4414, %v562
    %v4431 = vmul.f32 %v4415, %v562
    %v4432 = vmul.f32 %v4416, %v562
    %v4433 = vmul.f32 %v4417, %v562
    %v4434 = vmul.f32 %v4418, %v562
    %v4435 = vmul.f32 %v4419, %v562
    %v4436 = vmul.f32 %v4420, %v562
    %v4437 = vmul.f32 %v4421, %v562
    %v4438 = vmul.f32 %v4422, %v562
    %v4439 = vmul.f32 %v4423, %v562
    %v4440 = vmul.f32 %v4424, %v562
    %v4441 = vmul.f32 %v4425, %v562
    %4442 = vadd.xlane.f32.xlu0 %v4426
    %v4443 = vpop.xlane.xlu0 %4442
    %4444 = vadd.xlane.f32.xlu0 %v4427
    %v4445 = vpop.xlane.xlu0 %4444
    %4446 = vadd.xlane.f32.xlu0 %v4428
    %v4447 = vpop.xlane.xlu0 %4446
    %4448 = vadd.xlane.f32.xlu0 %v4429
    %v4449 = vpop.xlane.xlu0 %4448
    %4450 = vadd.xlane.f32.xlu0 %v4430
    %v4451 = vpop.xlane.xlu0 %4450
    %4452 = vadd.xlane.f32.xlu0 %v4431
    %v4453 = vpop.xlane.xlu0 %4452
    %4454 = vadd.xlane.f32.xlu0 %v4432
    %v4455 = vpop.xlane.xlu0 %4454
    %4456 = vadd.xlane.f32.xlu0 %v4433
    %v4457 = vpop.xlane.xlu0 %4456
    %4458 = vadd.xlane.f32.xlu0 %v4434
    %v4459 = vpop.xlane.xlu0 %4458
    %4460 = vadd.xlane.f32.xlu0 %v4435
    %v4461 = vpop.xlane.xlu0 %4460
    %4462 = vadd.xlane.f32.xlu0 %v4436
    %v4463 = vpop.xlane.xlu0 %4462
    %4464 = vadd.xlane.f32.xlu0 %v4437
    %v4465 = vpop.xlane.xlu0 %4464
    %4466 = vadd.xlane.f32.xlu0 %v4438
    %v4467 = vpop.xlane.xlu0 %4466
    %4468 = vadd.xlane.f32.xlu0 %v4439
    %v4469 = vpop.xlane.xlu0 %4468
    %4470 = vadd.xlane.f32.xlu0 %v4440
    %v4471 = vpop.xlane.xlu0 %4470
    %4472 = vadd.xlane.f32.xlu0 %v4441
    %v4473 = vpop.xlane.xlu0 %4472
    %v4490 = vlaneseq
    %v4491 = vshrl.u32 %v4490, 7
    %v4492 = vsub.s32 %v629, %v4491
    %v4493 = vrot.slane %v4443, %v4492
    %v4494 = vlaneseq
    %v4495 = vshrl.u32 %v4494, 7
    %v4496 = vsub.s32 %v634, %v4495
    %v4497 = vrot.slane %v4445, %v4496
    %v4498 = vsel %vm639, %v4497, %v4493
    %v4499 = vlaneseq
    %v4500 = vshrl.u32 %v4499, 7
    %v4501 = vsub.s32 %v629, %v4500
    %v4502 = vrot.slane %v4447, %v4501
    %v4503 = vlaneseq
    %v4504 = vshrl.u32 %v4503, 7
    %v4505 = vsub.s32 %v634, %v4504
    %v4506 = vrot.slane %v4449, %v4505
    %v4507 = vsel %vm639, %v4506, %v4502
    %v4508 = vlaneseq
    %v4509 = vshrl.u32 %v4508, 7
    %v4510 = vsub.s32 %v629, %v4509
    %v4511 = vrot.slane %v4451, %v4510
    %v4512 = vlaneseq
    %v4513 = vshrl.u32 %v4512, 7
    %v4514 = vsub.s32 %v634, %v4513
    %v4515 = vrot.slane %v4453, %v4514
    %v4516 = vsel %vm639, %v4515, %v4511
    %v4517 = vlaneseq
    %v4518 = vshrl.u32 %v4517, 7
    %v4519 = vsub.s32 %v629, %v4518
    %v4520 = vrot.slane %v4455, %v4519
    %v4521 = vlaneseq
    %v4522 = vshrl.u32 %v4521, 7
    %v4523 = vsub.s32 %v634, %v4522
    %v4524 = vrot.slane %v4457, %v4523
    %v4525 = vsel %vm639, %v4524, %v4520
    %v4526 = vlaneseq
    %v4527 = vshrl.u32 %v4526, 7
    %v4528 = vsub.s32 %v629, %v4527
    %v4529 = vrot.slane %v4459, %v4528
    %v4530 = vlaneseq
    %v4531 = vshrl.u32 %v4530, 7
    %v4532 = vsub.s32 %v634, %v4531
    %v4533 = vrot.slane %v4461, %v4532
    %v4534 = vsel %vm639, %v4533, %v4529
    %v4535 = vlaneseq
    %v4536 = vshrl.u32 %v4535, 7
    %v4537 = vsub.s32 %v629, %v4536
    %v4538 = vrot.slane %v4463, %v4537
    %v4539 = vlaneseq
    %v4540 = vshrl.u32 %v4539, 7
    %v4541 = vsub.s32 %v634, %v4540
    %v4542 = vrot.slane %v4465, %v4541
    %v4543 = vsel %vm639, %v4542, %v4538
    %v4544 = vlaneseq
    %v4545 = vshrl.u32 %v4544, 7
    %v4546 = vsub.s32 %v629, %v4545
    %v4547 = vrot.slane %v4467, %v4546
    %v4548 = vlaneseq
    %v4549 = vshrl.u32 %v4548, 7
    %v4550 = vsub.s32 %v634, %v4549
    %v4551 = vrot.slane %v4469, %v4550
    %v4552 = vsel %vm639, %v4551, %v4547
    %v4553 = vlaneseq
    %v4554 = vshrl.u32 %v4553, 7
    %v4555 = vsub.s32 %v629, %v4554
    %v4556 = vrot.slane %v4471, %v4555
    %v4557 = vlaneseq
    %v4558 = vshrl.u32 %v4557, 7
    %v4559 = vsub.s32 %v634, %v4558
    %v4560 = vrot.slane %v4473, %v4559
    %v4561 = vsel %vm639, %v4560, %v4556
    %v4562 = vsel %vm704, %v4507, %v4498
    %v4563 = vsel %vm706, %v4516, %v4562
    %v4564 = vsel %vm708, %v4525, %v4563
    %v4565 = vsel %vm710, %v4534, %v4564
    %v4566 = vsel %vm712, %v4543, %v4565
    %v4567 = vsel %vm714, %v4552, %v4566
    %v4568 = vsel %vm716, %v4561, %v4567
    %v4570 = vsel %vm719, %v4568, -inf
    %4571 = vmax.xlane.f32.xlu0 %v4570
    %v4572 = vpop.xlane.xlu0 %4571
    %v4574 = vlaneseq
    %v4575 = vshrl.u32 %v4574, 7
    %v4576 = vsub.s32 0, %v4575
    %v4577 = vrot.slane %v4572, %v4576
    %v4578 = vlaneseq
    %v4579 = vshrl.u32 %v4578, 7
    %v4580 = vsub.s32 1, %v4579
    %v4581 = vrot.slane %v4572, %v4580
    %v4582 = vlaneseq
    %v4583 = vshrl.u32 %v4582, 7
    %v4584 = vsub.s32 2, %v4583
    %v4585 = vrot.slane %v4572, %v4584
    %v4586 = vlaneseq
    %v4587 = vshrl.u32 %v4586, 7
    %v4588 = vsub.s32 3, %v4587
    %v4589 = vrot.slane %v4572, %v4588
    %v4590 = vlaneseq
    %v4591 = vshrl.u32 %v4590, 7
    %v4592 = vsub.s32 4, %v4591
    %v4593 = vrot.slane %v4572, %v4592
    %v4594 = vlaneseq
    %v4595 = vshrl.u32 %v4594, 7
    %v4596 = vsub.s32 5, %v4595
    %v4597 = vrot.slane %v4572, %v4596
    %v4598 = vlaneseq
    %v4599 = vshrl.u32 %v4598, 7
    %v4600 = vsub.s32 6, %v4599
    %v4601 = vrot.slane %v4572, %v4600
    %v4602 = vlaneseq
    %v4603 = vshrl.u32 %v4602, 7
    %v4604 = vsub.s32 7, %v4603
    %v4605 = vrot.slane %v4572, %v4604
    %v4614 = vsub.f32 %v4443, %v4577
    %v4615 = vsub.f32 %v4445, %v4577
    %v4616 = vsub.f32 %v4447, %v4581
    %v4617 = vsub.f32 %v4449, %v4581
    %v4618 = vsub.f32 %v4451, %v4585
    %v4619 = vsub.f32 %v4453, %v4585
    %v4620 = vsub.f32 %v4455, %v4589
    %v4621 = vsub.f32 %v4457, %v4589
    %v4622 = vsub.f32 %v4459, %v4593
    %v4623 = vsub.f32 %v4461, %v4593
    %v4624 = vsub.f32 %v4463, %v4597
    %v4625 = vsub.f32 %v4465, %v4597
    %v4626 = vsub.f32 %v4467, %v4601
    %v4627 = vsub.f32 %v4469, %v4601
    %v4628 = vsub.f32 %v4471, %v4605
    %v4629 = vsub.f32 %v4473, %v4605
    %v4630 = vmul.f32 %v4614, 1.442695
    %v4631 = vpow.pop %v4630
    %v4632 = vmul.f32 %v4615, 1.442695
    %v4633 = vpow.pop %v4632
    %v4634 = vmul.f32 %v4616, 1.442695
    %v4635 = vpow.pop %v4634
    %v4636 = vmul.f32 %v4617, 1.442695
    %v4637 = vpow.pop %v4636
    %v4638 = vmul.f32 %v4618, 1.442695
    %v4639 = vpow.pop %v4638
    %v4640 = vmul.f32 %v4619, 1.442695
    %v4641 = vpow.pop %v4640
    %v4642 = vmul.f32 %v4620, 1.442695
    %v4643 = vpow.pop %v4642
    %v4644 = vmul.f32 %v4621, 1.442695
    %v4645 = vpow.pop %v4644
    %v4646 = vmul.f32 %v4622, 1.442695
    %v4647 = vpow.pop %v4646
    %v4648 = vmul.f32 %v4623, 1.442695
    %v4649 = vpow.pop %v4648
    %v4650 = vmul.f32 %v4624, 1.442695
    %v4651 = vpow.pop %v4650
    %v4652 = vmul.f32 %v4625, 1.442695
    %v4653 = vpow.pop %v4652
    %v4654 = vmul.f32 %v4626, 1.442695
    %v4655 = vpow.pop %v4654
    %v4656 = vmul.f32 %v4627, 1.442695
    %v4657 = vpow.pop %v4656
    %v4658 = vmul.f32 %v4628, 1.442695
    %v4659 = vpow.pop %v4658
    %v4660 = vmul.f32 %v4629, 1.442695
    %v4661 = vpow.pop %v4660
    %4678 = vset.pattern.permute.xlu0 0
    %4679 = vperm.xlu0 %4678, %v4631
    %v4680 = vpop.permute.xlu0 %4679
    %4681 = vset.pattern.permute.xlu0 0
    %4682 = vperm.xlu0 %4681, %v4633
    %v4683 = vpop.permute.xlu0 %4682
    %4684 = vset.pattern.permute.xlu0 0
    %4685 = vperm.xlu0 %4684, %v4635
    %v4686 = vpop.permute.xlu0 %4685
    %4687 = vset.pattern.permute.xlu0 0
    %4688 = vperm.xlu0 %4687, %v4637
    %v4689 = vpop.permute.xlu0 %4688
    %4690 = vset.pattern.permute.xlu0 0
    %4691 = vperm.xlu0 %4690, %v4639
    %v4692 = vpop.permute.xlu0 %4691
    %4693 = vset.pattern.permute.xlu0 0
    %4694 = vperm.xlu0 %4693, %v4641
    %v4695 = vpop.permute.xlu0 %4694
    %4696 = vset.pattern.permute.xlu0 0
    %4697 = vperm.xlu0 %4696, %v4643
    %v4698 = vpop.permute.xlu0 %4697
    %4699 = vset.pattern.permute.xlu0 0
    %4700 = vperm.xlu0 %4699, %v4645
    %v4701 = vpop.permute.xlu0 %4700
    %4702 = vset.pattern.permute.xlu0 0
    %4703 = vperm.xlu0 %4702, %v4647
    %v4704 = vpop.permute.xlu0 %4703
    %4705 = vset.pattern.permute.xlu0 0
    %4706 = vperm.xlu0 %4705, %v4649
    %v4707 = vpop.permute.xlu0 %4706
    %4708 = vset.pattern.permute.xlu0 0
    %4709 = vperm.xlu0 %4708, %v4651
    %v4710 = vpop.permute.xlu0 %4709
    %4711 = vset.pattern.permute.xlu0 0
    %4712 = vperm.xlu0 %4711, %v4653
    %v4713 = vpop.permute.xlu0 %4712
    %4714 = vset.pattern.permute.xlu0 0
    %4715 = vperm.xlu0 %4714, %v4655
    %v4716 = vpop.permute.xlu0 %4715
    %4717 = vset.pattern.permute.xlu0 0
    %4718 = vperm.xlu0 %4717, %v4657
    %v4719 = vpop.permute.xlu0 %4718
    %4720 = vset.pattern.permute.xlu0 0
    %4721 = vperm.xlu0 %4720, %v4659
    %v4722 = vpop.permute.xlu0 %4721
    %4723 = vset.pattern.permute.xlu0 0
    %4724 = vperm.xlu0 %4723, %v4661
    %v4725 = vpop.permute.xlu0 %4724
    %v4726 = vlaneseq
    %v4727 = vshrl.u32 %v4726, 7
    %v4728 = vsub.s32 %v629, %v4727
    %v4729 = vrot.slane %v4680, %v4728
    %v4730 = vlaneseq
    %v4731 = vshrl.u32 %v4730, 7
    %v4732 = vsub.s32 %v634, %v4731
    %v4733 = vrot.slane %v4683, %v4732
    %v4734 = vsel %vm639, %v4733, %v4729
    %v4735 = vlaneseq
    %v4736 = vshrl.u32 %v4735, 7
    %v4737 = vsub.s32 %v629, %v4736
    %v4738 = vrot.slane %v4686, %v4737
    %v4739 = vlaneseq
    %v4740 = vshrl.u32 %v4739, 7
    %v4741 = vsub.s32 %v634, %v4740
    %v4742 = vrot.slane %v4689, %v4741
    %v4743 = vsel %vm639, %v4742, %v4738
    %v4744 = vlaneseq
    %v4745 = vshrl.u32 %v4744, 7
    %v4746 = vsub.s32 %v629, %v4745
    %v4747 = vrot.slane %v4692, %v4746
    %v4748 = vlaneseq
    %v4749 = vshrl.u32 %v4748, 7
    %v4750 = vsub.s32 %v634, %v4749
    %v4751 = vrot.slane %v4695, %v4750
    %v4752 = vsel %vm639, %v4751, %v4747
    %v4753 = vlaneseq
    %v4754 = vshrl.u32 %v4753, 7
    %v4755 = vsub.s32 %v629, %v4754
    %v4756 = vrot.slane %v4698, %v4755
    %v4757 = vlaneseq
    %v4758 = vshrl.u32 %v4757, 7
    %v4759 = vsub.s32 %v634, %v4758
    %v4760 = vrot.slane %v4701, %v4759
    %v4761 = vsel %vm639, %v4760, %v4756
    %v4762 = vlaneseq
    %v4763 = vshrl.u32 %v4762, 7
    %v4764 = vsub.s32 %v629, %v4763
    %v4765 = vrot.slane %v4704, %v4764
    %v4766 = vlaneseq
    %v4767 = vshrl.u32 %v4766, 7
    %v4768 = vsub.s32 %v634, %v4767
    %v4769 = vrot.slane %v4707, %v4768
    %v4770 = vsel %vm639, %v4769, %v4765
    %v4771 = vlaneseq
    %v4772 = vshrl.u32 %v4771, 7
    %v4773 = vsub.s32 %v629, %v4772
    %v4774 = vrot.slane %v4710, %v4773
    %v4775 = vlaneseq
    %v4776 = vshrl.u32 %v4775, 7
    %v4777 = vsub.s32 %v634, %v4776
    %v4778 = vrot.slane %v4713, %v4777
    %v4779 = vsel %vm639, %v4778, %v4774
    %v4780 = vlaneseq
    %v4781 = vshrl.u32 %v4780, 7
    %v4782 = vsub.s32 %v629, %v4781
    %v4783 = vrot.slane %v4716, %v4782
    %v4784 = vlaneseq
    %v4785 = vshrl.u32 %v4784, 7
    %v4786 = vsub.s32 %v634, %v4785
    %v4787 = vrot.slane %v4719, %v4786
    %v4788 = vsel %vm639, %v4787, %v4783
    %v4789 = vlaneseq
    %v4790 = vshrl.u32 %v4789, 7
    %v4791 = vsub.s32 %v629, %v4790
    %v4792 = vrot.slane %v4722, %v4791
    %v4793 = vlaneseq
    %v4794 = vshrl.u32 %v4793, 7
    %v4795 = vsub.s32 %v634, %v4794
    %v4796 = vrot.slane %v4725, %v4795
    %v4797 = vsel %vm639, %v4796, %v4792
    %v4798 = vsel %vm704, %v4743, %v4734
    %v4799 = vsel %vm706, %v4752, %v4798
    %v4800 = vsel %vm708, %v4761, %v4799
    %v4801 = vsel %vm710, %v4770, %v4800
    %v4802 = vsel %vm712, %v4779, %v4801
    %v4803 = vsel %vm714, %v4788, %v4802
    %v4804 = vsel %vm716, %v4797, %v4803
    %v4806 = vsel %vm719, %v4804, 0.0
    %4807 = vadd.xlane.f32.xlu0 %v4806
    %v4808 = vpop.xlane.xlu0 %4807
    %v4809 = vrcp.pop %v4808
    %v4811 = vlaneseq
    %v4812 = vshrl.u32 %v4811, 7
    %v4813 = vsub.s32 0, %v4812
    %v4814 = vrot.slane %v4809, %v4813
    %v4815 = vlaneseq
    %v4816 = vshrl.u32 %v4815, 7
    %v4817 = vsub.s32 1, %v4816
    %v4818 = vrot.slane %v4809, %v4817
    %v4819 = vlaneseq
    %v4820 = vshrl.u32 %v4819, 7
    %v4821 = vsub.s32 2, %v4820
    %v4822 = vrot.slane %v4809, %v4821
    %v4823 = vlaneseq
    %v4824 = vshrl.u32 %v4823, 7
    %v4825 = vsub.s32 3, %v4824
    %v4826 = vrot.slane %v4809, %v4825
    %v4827 = vlaneseq
    %v4828 = vshrl.u32 %v4827, 7
    %v4829 = vsub.s32 4, %v4828
    %v4830 = vrot.slane %v4809, %v4829
    %v4831 = vlaneseq
    %v4832 = vshrl.u32 %v4831, 7
    %v4833 = vsub.s32 5, %v4832
    %v4834 = vrot.slane %v4809, %v4833
    %v4835 = vlaneseq
    %v4836 = vshrl.u32 %v4835, 7
    %v4837 = vsub.s32 6, %v4836
    %v4838 = vrot.slane %v4809, %v4837
    %v4839 = vlaneseq
    %v4840 = vshrl.u32 %v4839, 7
    %v4841 = vsub.s32 7, %v4840
    %v4842 = vrot.slane %v4809, %v4841
    %v4851 = vmul.f32 %v4631, %v4814
    %v4852 = vmul.f32 %v4633, %v4814
    %v4853 = vmul.f32 %v4635, %v4818
    %v4854 = vmul.f32 %v4637, %v4818
    %v4855 = vmul.f32 %v4639, %v4822
    %v4856 = vmul.f32 %v4641, %v4822
    %v4857 = vmul.f32 %v4643, %v4826
    %v4858 = vmul.f32 %v4645, %v4826
    %v4859 = vmul.f32 %v4647, %v4830
    %v4860 = vmul.f32 %v4649, %v4830
    %v4861 = vmul.f32 %v4651, %v4834
    %v4862 = vmul.f32 %v4653, %v4834
    %v4863 = vmul.f32 %v4655, %v4838
    %v4864 = vmul.f32 %v4657, %v4838
    %v4865 = vmul.f32 %v4659, %v4842
    %v4866 = vmul.f32 %v4661, %v4842
    %4868 = vset.pattern.permute.xlu0 0
    %4869 = vperm.xlu0 %4868, %v4851
    %v4870 = vpop.permute.xlu0 %4869
    %4873 = vset.pattern.permute.xlu0 0
    %4874 = vperm.xlu0 %4873, %v4852
    %v4875 = vpop.permute.xlu0 %4874
    %4878 = vset.pattern.permute.xlu0 0
    %4879 = vperm.xlu0 %4878, %v4853
    %v4880 = vpop.permute.xlu0 %4879
    %4883 = vset.pattern.permute.xlu0 0
    %4884 = vperm.xlu0 %4883, %v4854
    %v4885 = vpop.permute.xlu0 %4884
    %4888 = vset.pattern.permute.xlu0 0
    %4889 = vperm.xlu0 %4888, %v4855
    %v4890 = vpop.permute.xlu0 %4889
    %4893 = vset.pattern.permute.xlu0 0
    %4894 = vperm.xlu0 %4893, %v4856
    %v4895 = vpop.permute.xlu0 %4894
    %4898 = vset.pattern.permute.xlu0 0
    %4899 = vperm.xlu0 %4898, %v4857
    %v4900 = vpop.permute.xlu0 %4899
    %4903 = vset.pattern.permute.xlu0 0
    %4904 = vperm.xlu0 %4903, %v4858
    %v4905 = vpop.permute.xlu0 %4904
    %4908 = vset.pattern.permute.xlu0 0
    %4909 = vperm.xlu0 %4908, %v4859
    %v4910 = vpop.permute.xlu0 %4909
    %4913 = vset.pattern.permute.xlu0 0
    %4914 = vperm.xlu0 %4913, %v4860
    %v4915 = vpop.permute.xlu0 %4914
    %4918 = vset.pattern.permute.xlu0 0
    %4919 = vperm.xlu0 %4918, %v4861
    %v4920 = vpop.permute.xlu0 %4919
    %4923 = vset.pattern.permute.xlu0 0
    %4924 = vperm.xlu0 %4923, %v4862
    %v4925 = vpop.permute.xlu0 %4924
    %4928 = vset.pattern.permute.xlu0 0
    %4929 = vperm.xlu0 %4928, %v4863
    %v4930 = vpop.permute.xlu0 %4929
    %4933 = vset.pattern.permute.xlu0 0
    %4934 = vperm.xlu0 %4933, %v4864
    %v4935 = vpop.permute.xlu0 %4934
    %4938 = vset.pattern.permute.xlu0 0
    %4939 = vperm.xlu0 %4938, %v4865
    %v4940 = vpop.permute.xlu0 %4939
    %4943 = vset.pattern.permute.xlu0 0
    %4944 = vperm.xlu0 %4943, %v4866
    %v4945 = vpop.permute.xlu0 %4944
    %v4947 = vmul.f32 %v177, %v4870
    %v4948 = vmul.f32 %v178, %v4875
    %v4949 = vmul.f32 %v179, %v4880
    %v4950 = vmul.f32 %v180, %v4885
    %v4951 = vmul.f32 %v181, %v4890
    %v4952 = vmul.f32 %v182, %v4895
    %v4953 = vmul.f32 %v183, %v4900
    %v4954 = vmul.f32 %v184, %v4905
    %v4955 = vmul.f32 %v185, %v4910
    %v4956 = vmul.f32 %v186, %v4915
    %v4957 = vmul.f32 %v187, %v4920
    %v4958 = vmul.f32 %v188, %v4925
    %v4959 = vmul.f32 %v189, %v4930
    %v4960 = vmul.f32 %v190, %v4935
    %v4961 = vmul.f32 %v191, %v4940
    %v4962 = vmul.f32 %v192, %v4945
    %v4963 = vsel %vm1113, %v4947, 0.0
    %v4964 = vsel %vm1113, %v4948, 0.0
    %v4965 = vadd.f32 %v4963, %v4964
    %v4966 = vrot.slane %v4965, 4
    %v4967 = vadd.f32 %v4965, %v4966
    %v4968 = vrot.slane %v4967, 2
    %v4969 = vadd.f32 %v4967, %v4968
    %v4970 = vrot.slane %v4969, 1
    %v4971 = vadd.f32 %v4969, %v4970
    %v4972 = vsel %vm1113, %v4949, 0.0
    %v4973 = vsel %vm1113, %v4950, 0.0
    %v4974 = vadd.f32 %v4972, %v4973
    %v4975 = vrot.slane %v4974, 4
    %v4976 = vadd.f32 %v4974, %v4975
    %v4977 = vrot.slane %v4976, 2
    %v4978 = vadd.f32 %v4976, %v4977
    %v4979 = vrot.slane %v4978, 1
    %v4980 = vadd.f32 %v4978, %v4979
    %v4981 = vsel %vm1113, %v4951, 0.0
    %v4982 = vsel %vm1113, %v4952, 0.0
    %v4983 = vadd.f32 %v4981, %v4982
    %v4984 = vrot.slane %v4983, 4
    %v4985 = vadd.f32 %v4983, %v4984
    %v4986 = vrot.slane %v4985, 2
    %v4987 = vadd.f32 %v4985, %v4986
    %v4988 = vrot.slane %v4987, 1
    %v4989 = vadd.f32 %v4987, %v4988
    %v4990 = vsel %vm1113, %v4953, 0.0
    %v4991 = vsel %vm1113, %v4954, 0.0
    %v4992 = vadd.f32 %v4990, %v4991
    %v4993 = vrot.slane %v4992, 4
    %v4994 = vadd.f32 %v4992, %v4993
    %v4995 = vrot.slane %v4994, 2
    %v4996 = vadd.f32 %v4994, %v4995
    %v4997 = vrot.slane %v4996, 1
    %v4998 = vadd.f32 %v4996, %v4997
    %v4999 = vsel %vm1113, %v4955, 0.0
    %v5000 = vsel %vm1113, %v4956, 0.0
    %v5001 = vadd.f32 %v4999, %v5000
    %v5002 = vrot.slane %v5001, 4
    %v5003 = vadd.f32 %v5001, %v5002
    %v5004 = vrot.slane %v5003, 2
    %v5005 = vadd.f32 %v5003, %v5004
    %v5006 = vrot.slane %v5005, 1
    %v5007 = vadd.f32 %v5005, %v5006
    %v5008 = vsel %vm1113, %v4957, 0.0
    %v5009 = vsel %vm1113, %v4958, 0.0
    %v5010 = vadd.f32 %v5008, %v5009
    %v5011 = vrot.slane %v5010, 4
    %v5012 = vadd.f32 %v5010, %v5011
    %v5013 = vrot.slane %v5012, 2
    %v5014 = vadd.f32 %v5012, %v5013
    %v5015 = vrot.slane %v5014, 1
    %v5016 = vadd.f32 %v5014, %v5015
    %v5017 = vsel %vm1113, %v4959, 0.0
    %v5018 = vsel %vm1113, %v4960, 0.0
    %v5019 = vadd.f32 %v5017, %v5018
    %v5020 = vrot.slane %v5019, 4
    %v5021 = vadd.f32 %v5019, %v5020
    %v5022 = vrot.slane %v5021, 2
    %v5023 = vadd.f32 %v5021, %v5022
    %v5024 = vrot.slane %v5023, 1
    %v5025 = vadd.f32 %v5023, %v5024
    %v5026 = vsel %vm1113, %v4961, 0.0
    %v5027 = vsel %vm1113, %v4962, 0.0
    %v5028 = vadd.f32 %v5026, %v5027
    %v5029 = vrot.slane %v5028, 4
    %v5030 = vadd.f32 %v5028, %v5029
    %v5031 = vrot.slane %v5030, 2
    %v5032 = vadd.f32 %v5030, %v5031
    %v5033 = vrot.slane %v5032, 1
    %v5034 = vadd.f32 %v5032, %v5033
    %v5035 = vpack.c.bf16 %v4971, %v4971
    %v5036 = vpack.c.bf16 %v4980, %v4980
    %v5037 = vpack.c.bf16 %v4989, %v4989
    %v5038 = vpack.c.bf16 %v4998, %v4998
    %v5039 = vpack.c.bf16 %v5007, %v5007
    %v5040 = vpack.c.bf16 %v5016, %v5016
    %v5041 = vpack.c.bf16 %v5025, %v5025
    %v5042 = vpack.c.bf16 %v5034, %v5034
    %v5051 = vunpack.c.l.b16 %v5035
    %v5052 = vunpack.c.l.b16 %v5036
    %v5053 = vunpack.c.l.b16 %v5037
    %v5054 = vunpack.c.l.b16 %v5038
    %v5055 = vunpack.c.l.b16 %v5039
    %v5056 = vunpack.c.l.b16 %v5040
    %v5057 = vunpack.c.l.b16 %v5041
    %v5058 = vunpack.c.l.b16 %v5042
    %v5059 = vsel %vm704, %v5052, %v5051
    %v5060 = vsel %vm706, %v5053, %v5059
    %v5061 = vsel %vm708, %v5054, %v5060
    %v5062 = vsel %vm710, %v5055, %v5061
    %v5063 = vsel %vm712, %v5056, %v5062
    %v5064 = vsel %vm714, %v5057, %v5063
    %v5065 = vsel %vm716, %v5058, %v5064
    %v5066 = vpack.c.b16 %v5065, %v5065
    %v5068 = vsel %vm1113, %v5066, 0
    %5070 = vmatprep.subr.bf16.mxu0 %v1231
    %5071 = vmatpush1.bf16.msra.mxu0 %v1230
    %5072 = vmatprep.subr.bf16.mxu0 %v1233
    %5073 = vmatpush1.bf16.msra.mxu0 %v1232
    %5074 = vmatprep.subr.bf16.mxu0 0
    %5075 = vmatpush1.bf16.msra.mxu0 0
    %5076 = vmatprep.subr.bf16.mxu0 0
    %5077 = vmatpush1.bf16.msra.mxu0 0
    %5078 = vmatprep.subr.bf16.mxu0 0
    %5079 = vmatpush1.bf16.msra.mxu0 0
    %5080 = vmatprep.subr.bf16.mxu0 0
    %5081 = vmatpush1.bf16.msra.mxu0 0
    %5082 = vmatprep.subr.bf16.mxu0 0
    %5083 = vmatpush1.bf16.msra.mxu0 0
    %5084 = vmatprep.subr.bf16.mxu0 0
    %5085 = vmatpush1.bf16.msra.mxu0 0
    %5086 = vmatprep.subr.bf16.mxu0 0
    %5087 = vmatpush1.bf16.msra.mxu0 0
    %5088 = vmatprep.subr.bf16.mxu0 0
    %5089 = vmatpush1.bf16.msra.mxu0 0
    %5090 = vmatprep.subr.bf16.mxu0 0
    %5091 = vmatpush1.bf16.msra.mxu0 0
    %5092 = vmatprep.subr.bf16.mxu0 0
    %5093 = vmatpush1.bf16.msra.mxu0 0
    %5094 = vmatprep.subr.bf16.mxu0 0
    %5095 = vmatpush1.bf16.msra.mxu0 0
    %5096 = vmatprep.subr.bf16.mxu0 0
    %5097 = vmatpush1.bf16.msra.mxu0 0
    %5098 = vmatprep.subr.bf16.mxu0 0
    %5099 = vmatpush1.bf16.msra.mxu0 0
    %5100 = vmatprep.subr.bf16.mxu0 0
    %5101 = vmatpush1.bf16.msra.mxu0 0
    %5102 = vmatprep.mubr.bf16.mxu0 0
    %5103 = vmatmul.mubr.bf16.gmra.mrb[0].mxu0 %v5068
    %v5104 = vpop.f32.mrb[0].mxu0
    %v5105 = vadd.f32 %v316, %v5104
    %v5106 = vpop.f32.mrb[0].mxu0
    %v5107 = vadd.f32 %v320, %v5106
    %v5108 = vpop.f32.mrb[0].mxu0
    %v5109 = vpop.f32.mrb[0].mxu0
    %5110 = vdwg.mxu0
    %s5111 = scalar_lea.vmem [#allocation9], 24
    %v5112 = vld [vmem:[%s5111] sm:$0xff]
    %v5113 = vadd.f32 %v5112, %v5107
    %v5114 = vpack.c.bf16 %v5113, %v5113
    %5115 = vmatprep.subr.bf16.mxu0 %v1382
    %5116 = vmatpush1.bf16.msra.mxu0 %v1381
    %5117 = vmatprep.subr.bf16.mxu0 %v1386
    %5118 = vmatpush1.bf16.msra.mxu0 %v1385
    %5119 = vmatprep.subr.bf16.mxu0 %v1390
    %5120 = vmatpush1.bf16.msra.mxu0 %v1389
    %5121 = vmatprep.subr.bf16.mxu0 %v1394
    %5122 = vmatpush1.bf16.msra.mxu0 %v1393
    %5123 = vmatprep.subr.bf16.mxu0 %v1398
    %5124 = vmatpush1.bf16.msra.mxu0 %v1397
    %5125 = vmatprep.subr.bf16.mxu0 %v1402
    %5126 = vmatpush1.bf16.msra.mxu0 %v1401
    %5127 = vmatprep.subr.bf16.mxu0 %v1406
    %5128 = vmatpush1.bf16.msra.mxu0 %v1405
    %5129 = vmatprep.subr.bf16.mxu0 %v1410
    %5130 = vmatpush1.bf16.msra.mxu0 %v1409
    %5131 = vmatprep.subr.bf16.mxu0 0
    %5132 = vmatpush1.bf16.msra.mxu0 0
    %5133 = vmatprep.subr.bf16.mxu0 0
    %5134 = vmatpush1.bf16.msra.mxu0 0
    %5135 = vmatprep.subr.bf16.mxu0 0
    %5136 = vmatpush1.bf16.msra.mxu0 0
    %5137 = vmatprep.subr.bf16.mxu0 0
    %5138 = vmatpush1.bf16.msra.mxu0 0
    %5139 = vmatprep.subr.bf16.mxu0 0
    %5140 = vmatpush1.bf16.msra.mxu0 0
    %5141 = vmatprep.subr.bf16.mxu0 0
    %5142 = vmatpush1.bf16.msra.mxu0 0
    %5143 = vmatprep.subr.bf16.mxu0 0
    %5144 = vmatpush1.bf16.msra.mxu0 0
    %5145 = vmatprep.subr.bf16.mxu0 0
    %5146 = vmatpush1.bf16.msra.mxu0 0
    %5147 = vmatprep.mubr.bf16.mxu0 0
    %5148 = vmatmul.mubr.bf16.gmra.mrb[0].mxu0 %v4263
    %v5149 = vpop.f32.mrb[0].mxu0
    %v5150 = vadd.f32 0.0, %v5149
    %v5151 = vpop.f32.mrb[0].mxu0
    %v5152 = vadd.f32 0.0, %v5151
    %v5153 = vpop.f32.mrb[0].mxu0
    %v5154 = vpop.f32.mrb[0].mxu0
    %5155 = vdwg.mxu0
    %5156 = vmatprep.subr.bf16.mxu0 %v1384
    %5157 = vmatpush1.bf16.msra.mxu0 %v1383
    %5158 = vmatprep.subr.bf16.mxu0 %v1388
    %5159 = vmatpush1.bf16.msra.mxu0 %v1387
    %5160 = vmatprep.subr.bf16.mxu0 %v1392
    %5161 = vmatpush1.bf16.msra.mxu0 %v1391
    %5162 = vmatprep.subr.bf16.mxu0 %v1396
    %5163 = vmatpush1.bf16.msra.mxu0 %v1395
    %5164 = vmatprep.subr.bf16.mxu0 %v1400
    %5165 = vmatpush1.bf16.msra.mxu0 %v1399
    %5166 = vmatprep.subr.bf16.mxu0 %v1404
    %5167 = vmatpush1.bf16.msra.mxu0 %v1403
    %5168 = vmatprep.subr.bf16.mxu0 %v1408
    %5169 = vmatpush1.bf16.msra.mxu0 %v1407
    %5170 = vmatprep.subr.bf16.mxu0 %v1412
    %5171 = vmatpush1.bf16.msra.mxu0 %v1411
    %5172 = vmatprep.subr.bf16.mxu0 0
    %5173 = vmatpush1.bf16.msra.mxu0 0
    %5174 = vmatprep.subr.bf16.mxu0 0
    %5175 = vmatpush1.bf16.msra.mxu0 0
    %5176 = vmatprep.subr.bf16.mxu0 0
    %5177 = vmatpush1.bf16.msra.mxu0 0
    %5178 = vmatprep.subr.bf16.mxu0 0
    %5179 = vmatpush1.bf16.msra.mxu0 0
    %5180 = vmatprep.subr.bf16.mxu0 0
    %5181 = vmatpush1.bf16.msra.mxu0 0
    %5182 = vmatprep.subr.bf16.mxu0 0
    %5183 = vmatpush1.bf16.msra.mxu0 0
    %5184 = vmatprep.subr.bf16.mxu0 0
    %5185 = vmatpush1.bf16.msra.mxu0 0
    %5186 = vmatprep.subr.bf16.mxu0 0
    %5187 = vmatpush1.bf16.msra.mxu0 0
    %5188 = vmatprep.mubr.bf16.mxu0 0
    %5189 = vmatmul.mubr.bf16.gmra.mrb[0].mxu0 %v4263
    %v5190 = vpop.f32.mrb[0].mxu0
    %v5191 = vadd.f32 0.0, %v5190
    %v5192 = vpop.f32.mrb[0].mxu0
    %v5193 = vadd.f32 0.0, %v5192
    %v5194 = vpop.f32.mrb[0].mxu0
    %v5195 = vpop.f32.mrb[0].mxu0
    %5196 = vdwg.mxu0
    %5197 = vmatprep.subr.bf16.mxu0 %v1624
    %5198 = vmatpush1.bf16.msra.mxu0 %v1623
    %5199 = vmatprep.subr.bf16.mxu0 %v1628
    %5200 = vmatpush1.bf16.msra.mxu0 %v1627
    %5201 = vmatprep.subr.bf16.mxu0 %v1632
    %5202 = vmatpush1.bf16.msra.mxu0 %v1631
    %5203 = vmatprep.subr.bf16.mxu0 %v1636
    %5204 = vmatpush1.bf16.msra.mxu0 %v1635
    %5205 = vmatprep.subr.bf16.mxu0 %v1640
    %5206 = vmatpush1.bf16.msra.mxu0 %v1639
    %5207 = vmatprep.subr.bf16.mxu0 %v1644
    %5208 = vmatpush1.bf16.msra.mxu0 %v1643
    %5209 = vmatprep.subr.bf16.mxu0 %v1648
    %5210 = vmatpush1.bf16.msra.mxu0 %v1647
    %5211 = vmatprep.subr.bf16.mxu0 %v1652
    %5212 = vmatpush1.bf16.msra.mxu0 %v1651
    %5213 = vmatprep.subr.bf16.mxu0 0
    %5214 = vmatpush1.bf16.msra.mxu0 0
    %5215 = vmatprep.subr.bf16.mxu0 0
    %5216 = vmatpush1.bf16.msra.mxu0 0
    %5217 = vmatprep.subr.bf16.mxu0 0
    %5218 = vmatpush1.bf16.msra.mxu0 0
    %5219 = vmatprep.subr.bf16.mxu0 0
    %5220 = vmatpush1.bf16.msra.mxu0 0
    %5221 = vmatprep.subr.bf16.mxu0 0
    %5222 = vmatpush1.bf16.msra.mxu0 0
    %5223 = vmatprep.subr.bf16.mxu0 0
    %5224 = vmatpush1.bf16.msra.mxu0 0
    %5225 = vmatprep.subr.bf16.mxu0 0
    %5226 = vmatpush1.bf16.msra.mxu0 0
    %5227 = vmatprep.subr.bf16.mxu0 0
    %5228 = vmatpush1.bf16.msra.mxu0 0
    %5229 = vmatprep.mubr.bf16.mxu0 0
    %5230 = vmatmul.mubr.bf16.gmra.mrb[0].mxu0 %v5114
    %v5231 = vpop.f32.mrb[0].mxu0
    %v5232 = vadd.f32 %v5150, %v5231
    %v5233 = vpop.f32.mrb[0].mxu0
    %v5234 = vadd.f32 %v5152, %v5233
    %v5235 = vpop.f32.mrb[0].mxu0
    %v5236 = vpop.f32.mrb[0].mxu0
    %5237 = vdwg.mxu0
    %5238 = vmatprep.subr.bf16.mxu0 %v1626
    %5239 = vmatpush1.bf16.msra.mxu0 %v1625
    %5240 = vmatprep.subr.bf16.mxu0 %v1630
    %5241 = vmatpush1.bf16.msra.mxu0 %v1629
    %5242 = vmatprep.subr.bf16.mxu0 %v1634
    %5243 = vmatpush1.bf16.msra.mxu0 %v1633
    %5244 = vmatprep.subr.bf16.mxu0 %v1638
    %5245 = vmatpush1.bf16.msra.mxu0 %v1637
    %5246 = vmatprep.subr.bf16.mxu0 %v1642
    %5247 = vmatpush1.bf16.msra.mxu0 %v1641
    %5248 = vmatprep.subr.bf16.mxu0 %v1646
    %5249 = vmatpush1.bf16.msra.mxu0 %v1645
    %5250 = vmatprep.subr.bf16.mxu0 %v1650
    %5251 = vmatpush1.bf16.msra.mxu0 %v1649
    %5252 = vmatprep.subr.bf16.mxu0 %v1654
    %5253 = vmatpush1.bf16.msra.mxu0 %v1653
    %5254 = vmatprep.subr.bf16.mxu0 0
    %5255 = vmatpush1.bf16.msra.mxu0 0
    %5256 = vmatprep.subr.bf16.mxu0 0
    %5257 = vmatpush1.bf16.msra.mxu0 0
    %5258 = vmatprep.subr.bf16.mxu0 0
    %5259 = vmatpush1.bf16.msra.mxu0 0
    %5260 = vmatprep.subr.bf16.mxu0 0
    %5261 = vmatpush1.bf16.msra.mxu0 0
    %5262 = vmatprep.subr.bf16.mxu0 0
    %5263 = vmatpush1.bf16.msra.mxu0 0
    %5264 = vmatprep.subr.bf16.mxu0 0
    %5265 = vmatpush1.bf16.msra.mxu0 0
    %5266 = vmatprep.subr.bf16.mxu0 0
    %5267 = vmatpush1.bf16.msra.mxu0 0
    %5268 = vmatprep.subr.bf16.mxu0 0
    %5269 = vmatpush1.bf16.msra.mxu0 0
    %5270 = vmatprep.mubr.bf16.mxu0 0
    %5271 = vmatmul.mubr.bf16.gmra.mrb[0].mxu0 %v5114
    %v5272 = vpop.f32.mrb[0].mxu0
    %v5273 = vadd.f32 %v5191, %v5272
    %v5274 = vpop.f32.mrb[0].mxu0
    %v5275 = vadd.f32 %v5193, %v5274
    %v5276 = vpop.f32.mrb[0].mxu0
    %v5277 = vpop.f32.mrb[0].mxu0
    %5278 = vdwg.mxu0
    %v5279 = vadd.f32 %v5232, %v328
    %v5280 = vadd.f32 %v5234, %v332
    %v5281 = vadd.f32 %v5273, %v336
    %v5282 = vadd.f32 %v5275, %v340
    %v5283 = vxor.u32 %v5279, 2147483648
    %v5284 = vmul.f32 %v5283, 1.442695
    %v5285 = vpow.pop %v5284
    %v5286 = vadd.f32 %v5285, 1.0
    %v5287 = vrcp.pop %v5286
    %v5288 = vmul.f32 1.0, %v5287
    %v5289 = vxor.u32 %v5280, 2147483648
    %v5290 = vmul.f32 %v5289, 1.442695
    %v5291 = vpow.pop %v5290
    %v5292 = vadd.f32 %v5291, 1.0
    %v5293 = vrcp.pop %v5292
    %v5294 = vmul.f32 1.0, %v5293
    %v5295 = vtanh.pop %v5281
    %v5296 = vxor.u32 %v5282, 2147483648
    %v5297 = vmul.f32 %v5296, 1.442695
    %v5298 = vpow.pop %v5297
    %v5299 = vadd.f32 %v5298, 1.0
    %v5300 = vrcp.pop %v5299
    %v5301 = vmul.f32 1.0, %v5300
    %v5302 = vmul.f32 %v5294, %v4152
    %v5303 = vmul.f32 %v5288, %v5295
    %v5304 = vadd.f32 %v5302, %v5303
    %v5305 = vtanh.pop %v5304
    %v5306 = vmul.f32 %v5301, %v5305
    %v5307 = vadd.f32 %v5306, %v5105
    %v5308 = vpack.c.bf16 %v5307, %v5307
    %5309 = vmatprep.subr.bf16.mxu0 0
    %5310 = vmatpush1.bf16.msra.mxu0 %v1837
    %5311 = vmatprep.subr.bf16.mxu0 0
    %5312 = vmatpush1.bf16.msra.mxu0 %v1838
    %5313 = vmatprep.subr.bf16.mxu0 0
    %5314 = vmatpush1.bf16.msra.mxu0 %v1839
    %5315 = vmatprep.subr.bf16.mxu0 0
    %5316 = vmatpush1.bf16.msra.mxu0 %v1840
    %5317 = vmatprep.subr.bf16.mxu0 0
    %5318 = vmatpush1.bf16.msra.mxu0 %v1841
    %5319 = vmatprep.subr.bf16.mxu0 0
    %5320 = vmatpush1.bf16.msra.mxu0 %v1842
    %5321 = vmatprep.subr.bf16.mxu0 0
    %5322 = vmatpush1.bf16.msra.mxu0 %v1843
    %5323 = vmatprep.subr.bf16.mxu0 0
    %5324 = vmatpush1.bf16.msra.mxu0 %v1844
    %5325 = vmatprep.subr.bf16.mxu0 0
    %5326 = vmatpush1.bf16.msra.mxu0 0
    %5327 = vmatprep.subr.bf16.mxu0 0
    %5328 = vmatpush1.bf16.msra.mxu0 0
    %5329 = vmatprep.subr.bf16.mxu0 0
    %5330 = vmatpush1.bf16.msra.mxu0 0
    %5331 = vmatprep.subr.bf16.mxu0 0
    %5332 = vmatpush1.bf16.msra.mxu0 0
    %5333 = vmatprep.subr.bf16.mxu0 0
    %5334 = vmatpush1.bf16.msra.mxu0 0
    %5335 = vmatprep.subr.bf16.mxu0 0
    %5336 = vmatpush1.bf16.msra.mxu0 0
    %5337 = vmatprep.subr.bf16.mxu0 0
    %5338 = vmatpush1.bf16.msra.mxu0 0
    %5339 = vmatprep.subr.bf16.mxu0 0
    %5340 = vmatpush1.bf16.msra.mxu0 0
    %5341 = vmatprep.mubr.bf16.mxu0 0
    %5342 = vmatmul.mubr.bf16.gmra.mrb[0].mxu0 %v5308
    %v5343 = vpop.f32.mrb[0].mxu0
    %v5344 = vadd.f32 %v1803, %v5343
    %v5345 = vpop.f32.mrb[0].mxu0
    %v5346 = vpop.f32.mrb[0].mxu0
    %v5347 = vpop.f32.mrb[0].mxu0
    %5348 = vdwg.mxu0
    %v5350 = vcombine.high %v5344, %v5344
    %v5352 = vunpack.c.l.s4 1966171168
    %v5353 = vunpack.c.0.s8 %v5352
    %v5354 = vlaneseq
    %v5355 = vshrl.u32 %v5354, 7
    %v5356 = vsub.s32 %v5353, %v5355
    %v5357 = vrot.slane %v5344, %v5356
    %v5359 = vunpack.c.l.s4 1966171168
    %v5360 = vunpack.c.0.s8 %v5359
    %v5361 = vlaneseq
    %v5362 = vshrl.u32 %v5361, 7
    %v5363 = vsub.s32 %v5360, %v5362
    %v5364 = vrot.slane %v5350, %v5363
    %v5365 = vcombine.high %v5357, %v5357
    %v5366 = vcombine.high %v5364, %v5364
    %v5368 = vunpack.c.l.s4 1966171168
    %v5369 = vunpack.c.0.s8 %v5368
    %v5370 = vlaneseq
    %v5371 = vshrl.u32 %v5370, 7
    %v5372 = vsub.s32 %v5369, %v5371
    %v5373 = vrot.slane %v5357, %v5372
    %v5375 = vunpack.c.l.s4 1966171168
    %v5376 = vunpack.c.0.s8 %v5375
    %v5377 = vlaneseq
    %v5378 = vshrl.u32 %v5377, 7
    %v5379 = vsub.s32 %v5376, %v5378
    %v5380 = vrot.slane %v5364, %v5379
    %v5382 = vunpack.c.l.s4 1966171168
    %v5383 = vunpack.c.0.s8 %v5382
    %v5384 = vlaneseq
    %v5385 = vshrl.u32 %v5384, 7
    %v5386 = vsub.s32 %v5383, %v5385
    %v5387 = vrot.slane %v5365, %v5386
    %v5389 = vunpack.c.l.s4 1966171168
    %v5390 = vunpack.c.0.s8 %v5389
    %v5391 = vlaneseq
    %v5392 = vshrl.u32 %v5391, 7
    %v5393 = vsub.s32 %v5390, %v5392
    %v5394 = vrot.slane %v5366, %v5393
    %v5395 = vcombine.high %v5373, %v5373
    %v5396 = vcombine.high %v5380, %v5380
    %v5397 = vcombine.high %v5387, %v5387
    %v5398 = vcombine.high %v5394, %v5394
    %5407 = vst [vmem:[#allocation19 + $0x3] sm:$0x1] %v5373
    %5408 = vst [vmem:[#allocation19 + $0xb] sm:$0x1] %v5387
    %5409 = vst [vmem:[#allocation19 + $0x13] sm:$0x1] %v5395
    %5410 = vst [vmem:[#allocation19 + $0x1b] sm:$0x1] %v5397
    %5411 = vst [vmem:[#allocation19 + $0x23] sm:$0x1] %v5380
    %5412 = vst [vmem:[#allocation19 + $0x2b] sm:$0x1] %v5394
    %5413 = vst [vmem:[#allocation19 + $0x33] sm:$0x1] %v5396
    %5414 = vst [vmem:[#allocation19 + $0x3b] sm:$0x1] %v5398
    %v5415 = vpack.c.bf16 %v5306, %v5306
    %5416 = vmatprep.subr.bf16.mxu0 0
    %5417 = vmatpush1.bf16.msra.mxu0 %v380
    %5418 = vmatprep.subr.bf16.mxu0 0
    %5419 = vmatpush1.bf16.msra.mxu0 %v381
    %5420 = vmatprep.subr.bf16.mxu0 0
    %5421 = vmatpush1.bf16.msra.mxu0 %v382
    %5422 = vmatprep.subr.bf16.mxu0 0
    %5423 = vmatpush1.bf16.msra.mxu0 %v383
    %5424 = vmatprep.subr.bf16.mxu0 0
    %5425 = vmatpush1.bf16.msra.mxu0 %v384
    %5426 = vmatprep.subr.bf16.mxu0 0
    %5427 = vmatpush1.bf16.msra.mxu0 %v385
    %5428 = vmatprep.subr.bf16.mxu0 0
    %5429 = vmatpush1.bf16.msra.mxu0 %v386
    %5430 = vmatprep.subr.bf16.mxu0 0
    %5431 = vmatpush1.bf16.msra.mxu0 %v387
    %5432 = vmatprep.subr.bf16.mxu0 0
    %5433 = vmatpush1.bf16.msra.mxu0 0
    %5434 = vmatprep.subr.bf16.mxu0 0
    %5435 = vmatpush1.bf16.msra.mxu0 0
    %5436 = vmatprep.subr.bf16.mxu0 0
    %5437 = vmatpush1.bf16.msra.mxu0 0
    %5438 = vmatprep.subr.bf16.mxu0 0
    %5439 = vmatpush1.bf16.msra.mxu0 0
    %5440 = vmatprep.subr.bf16.mxu0 0
    %5441 = vmatpush1.bf16.msra.mxu0 0
    %5442 = vmatprep.subr.bf16.mxu0 0
    %5443 = vmatpush1.bf16.msra.mxu0 0
    %5444 = vmatprep.subr.bf16.mxu0 0
    %5445 = vmatpush1.bf16.msra.mxu0 0
    %5446 = vmatprep.subr.bf16.mxu0 0
    %5447 = vmatpush1.bf16.msra.mxu0 0
    %5448 = vmatprep.mubr.bf16.mxu0 0
    %5449 = vmatmul.mubr.bf16.gmra.mrb[0].mxu0 %v5415
    %v5450 = vpop.f32.mrb[0].mxu0
    %v5451 = vadd.f32 0.0, %v5450
    %v5452 = vpop.f32.mrb[0].mxu0
    %v5453 = vpop.f32.mrb[0].mxu0
    %v5454 = vpop.f32.mrb[0].mxu0
    %5455 = vdwg.mxu0
    %v5457 = vcombine.high %v5451, %v5451
    %v5459 = vunpack.c.l.s4 1966171168
    %v5460 = vunpack.c.0.s8 %v5459
    %v5461 = vlaneseq
    %v5462 = vshrl.u32 %v5461, 7
    %v5463 = vsub.s32 %v5460, %v5462
    %v5464 = vrot.slane %v5451, %v5463
    %v5466 = vunpack.c.l.s4 1966171168
    %v5467 = vunpack.c.0.s8 %v5466
    %v5468 = vlaneseq
    %v5469 = vshrl.u32 %v5468, 7
    %v5470 = vsub.s32 %v5467, %v5469
    %v5471 = vrot.slane %v5457, %v5470
    %v5472 = vcombine.high %v5464, %v5464
    %v5473 = vcombine.high %v5471, %v5471
    %v5475 = vunpack.c.l.s4 1966171168
    %v5476 = vunpack.c.0.s8 %v5475
    %v5477 = vlaneseq
    %v5478 = vshrl.u32 %v5477, 7
    %v5479 = vsub.s32 %v5476, %v5478
    %v5480 = vrot.slane %v5464, %v5479
    %v5482 = vunpack.c.l.s4 1966171168
    %v5483 = vunpack.c.0.s8 %v5482
    %v5484 = vlaneseq
    %v5485 = vshrl.u32 %v5484, 7
    %v5486 = vsub.s32 %v5483, %v5485
    %v5487 = vrot.slane %v5471, %v5486
    %v5489 = vunpack.c.l.s4 1966171168
    %v5490 = vunpack.c.0.s8 %v5489
    %v5491 = vlaneseq
    %v5492 = vshrl.u32 %v5491, 7
    %v5493 = vsub.s32 %v5490, %v5492
    %v5494 = vrot.slane %v5472, %v5493
    %v5496 = vunpack.c.l.s4 1966171168
    %v5497 = vunpack.c.0.s8 %v5496
    %v5498 = vlaneseq
    %v5499 = vshrl.u32 %v5498, 7
    %v5500 = vsub.s32 %v5497, %v5499
    %v5501 = vrot.slane %v5473, %v5500
    %v5502 = vcombine.high %v5480, %v5480
    %v5503 = vcombine.high %v5487, %v5487
    %v5504 = vcombine.high %v5494, %v5494
    %v5505 = vcombine.high %v5501, %v5501
    %v5506 = vlaneseq
    %v5507 = vshrl.u32 %v5506, 7
    %v5508 = vsub.s32 0, %v5507
    %v5509 = vrot.slane %v5480, %v5508
    %v5510 = vlaneseq
    %v5511 = vshrl.u32 %v5510, 7
    %v5512 = vsub.s32 0, %v5511
    %v5513 = vrot.slane %v5494, %v5512
    %v5514 = vlaneseq
    %v5515 = vshrl.u32 %v5514, 7
    %v5516 = vsub.s32 0, %v5515
    %v5517 = vrot.slane %v5502, %v5516
    %v5518 = vlaneseq
    %v5519 = vshrl.u32 %v5518, 7
    %v5520 = vsub.s32 0, %v5519
    %v5521 = vrot.slane %v5504, %v5520
    %v5522 = vlaneseq
    %v5523 = vshrl.u32 %v5522, 7
    %v5524 = vsub.s32 0, %v5523
    %v5525 = vrot.slane %v5487, %v5524
    %v5526 = vlaneseq
    %v5527 = vshrl.u32 %v5526, 7
    %v5528 = vsub.s32 0, %v5527
    %v5529 = vrot.slane %v5501, %v5528
    %v5530 = vlaneseq
    %v5531 = vshrl.u32 %v5530, 7
    %v5532 = vsub.s32 0, %v5531
    %v5533 = vrot.slane %v5503, %v5532
    %v5534 = vlaneseq
    %v5535 = vshrl.u32 %v5534, 7
    %v5536 = vsub.s32 0, %v5535
    %v5537 = vrot.slane %v5505, %v5536
    %v5546 = vadd.f32 %v193, %v5509
    %v5547 = vadd.f32 %v194, %v5509
    %v5548 = vadd.f32 %v195, %v5513
    %v5549 = vadd.f32 %v196, %v5513
    %v5550 = vadd.f32 %v197, %v5517
    %v5551 = vadd.f32 %v198, %v5517
    %v5552 = vadd.f32 %v199, %v5521
    %v5553 = vadd.f32 %v200, %v5521
    %v5554 = vadd.f32 %v201, %v5525
    %v5555 = vadd.f32 %v202, %v5525
    %v5556 = vadd.f32 %v203, %v5529
    %v5557 = vadd.f32 %v204, %v5529
    %v5558 = vadd.f32 %v205, %v5533
    %v5559 = vadd.f32 %v206, %v5533
    %v5560 = vadd.f32 %v207, %v5537
    %v5561 = vadd.f32 %v208, %v5537
    %v5562 = vtanh.pop %v5546
    %v5563 = vtanh.pop %v5547
    %v5564 = vtanh.pop %v5548
    %v5565 = vtanh.pop %v5549
    %v5566 = vtanh.pop %v5550
    %v5567 = vtanh.pop %v5551
    %v5568 = vtanh.pop %v5552
    %v5569 = vtanh.pop %v5553
    %v5570 = vtanh.pop %v5554
    %v5571 = vtanh.pop %v5555
    %v5572 = vtanh.pop %v5556
    %v5573 = vtanh.pop %v5557
    %v5574 = vtanh.pop %v5558
    %v5575 = vtanh.pop %v5559
    %v5576 = vtanh.pop %v5560
    %v5577 = vtanh.pop %v5561
    %v5578 = vmul.f32 %v5562, %v562
    %v5579 = vmul.f32 %v5563, %v562
    %v5580 = vmul.f32 %v5564, %v562
    %v5581 = vmul.f32 %v5565, %v562
    %v5582 = vmul.f32 %v5566, %v562
    %v5583 = vmul.f32 %v5567, %v562
    %v5584 = vmul.f32 %v5568, %v562
    %v5585 = vmul.f32 %v5569, %v562
    %v5586 = vmul.f32 %v5570, %v562
    %v5587 = vmul.f32 %v5571, %v562
    %v5588 = vmul.f32 %v5572, %v562
    %v5589 = vmul.f32 %v5573, %v562
    %v5590 = vmul.f32 %v5574, %v562
    %v5591 = vmul.f32 %v5575, %v562
    %v5592 = vmul.f32 %v5576, %v562
    %v5593 = vmul.f32 %v5577, %v562
    %5594 = vadd.xlane.f32.xlu0 %v5578
    %v5595 = vpop.xlane.xlu0 %5594
    %5596 = vadd.xlane.f32.xlu0 %v5579
    %v5597 = vpop.xlane.xlu0 %5596
    %5598 = vadd.xlane.f32.xlu0 %v5580
    %v5599 = vpop.xlane.xlu0 %5598
    %5600 = vadd.xlane.f32.xlu0 %v5581
    %v5601 = vpop.xlane.xlu0 %5600
    %5602 = vadd.xlane.f32.xlu0 %v5582
    %v5603 = vpop.xlane.xlu0 %5602
    %5604 = vadd.xlane.f32.xlu0 %v5583
    %v5605 = vpop.xlane.xlu0 %5604
    %5606 = vadd.xlane.f32.xlu0 %v5584
    %v5607 = vpop.xlane.xlu0 %5606
    %5608 = vadd.xlane.f32.xlu0 %v5585
    %v5609 = vpop.xlane.xlu0 %5608
    %5610 = vadd.xlane.f32.xlu0 %v5586
    %v5611 = vpop.xlane.xlu0 %5610
    %5612 = vadd.xlane.f32.xlu0 %v5587
    %v5613 = vpop.xlane.xlu0 %5612
    %5614 = vadd.xlane.f32.xlu0 %v5588
    %v5615 = vpop.xlane.xlu0 %5614
    %5616 = vadd.xlane.f32.xlu0 %v5589
    %v5617 = vpop.xlane.xlu0 %5616
    %5618 = vadd.xlane.f32.xlu0 %v5590
    %v5619 = vpop.xlane.xlu0 %5618
    %5620 = vadd.xlane.f32.xlu0 %v5591
    %v5621 = vpop.xlane.xlu0 %5620
    %5622 = vadd.xlane.f32.xlu0 %v5592
    %v5623 = vpop.xlane.xlu0 %5622
    %5624 = vadd.xlane.f32.xlu0 %v5593
    %v5625 = vpop.xlane.xlu0 %5624
    %v5642 = vlaneseq
    %v5643 = vshrl.u32 %v5642, 7
    %v5644 = vsub.s32 %v629, %v5643
    %v5645 = vrot.slane %v5595, %v5644
    %v5646 = vlaneseq
    %v5647 = vshrl.u32 %v5646, 7
    %v5648 = vsub.s32 %v634, %v5647
    %v5649 = vrot.slane %v5597, %v5648
    %v5650 = vsel %vm639, %v5649, %v5645
    %v5651 = vlaneseq
    %v5652 = vshrl.u32 %v5651, 7
    %v5653 = vsub.s32 %v629, %v5652
    %v5654 = vrot.slane %v5599, %v5653
    %v5655 = vlaneseq
    %v5656 = vshrl.u32 %v5655, 7
    %v5657 = vsub.s32 %v634, %v5656
    %v5658 = vrot.slane %v5601, %v5657
    %v5659 = vsel %vm639, %v5658, %v5654
    %v5660 = vlaneseq
    %v5661 = vshrl.u32 %v5660, 7
    %v5662 = vsub.s32 %v629, %v5661
    %v5663 = vrot.slane %v5603, %v5662
    %v5664 = vlaneseq
    %v5665 = vshrl.u32 %v5664, 7
    %v5666 = vsub.s32 %v634, %v5665
    %v5667 = vrot.slane %v5605, %v5666
    %v5668 = vsel %vm639, %v5667, %v5663
    %v5669 = vlaneseq
    %v5670 = vshrl.u32 %v5669, 7
    %v5671 = vsub.s32 %v629, %v5670
    %v5672 = vrot.slane %v5607, %v5671
    %v5673 = vlaneseq
    %v5674 = vshrl.u32 %v5673, 7
    %v5675 = vsub.s32 %v634, %v5674
    %v5676 = vrot.slane %v5609, %v5675
    %v5677 = vsel %vm639, %v5676, %v5672
    %v5678 = vlaneseq
    %v5679 = vshrl.u32 %v5678, 7
    %v5680 = vsub.s32 %v629, %v5679
    %v5681 = vrot.slane %v5611, %v5680
    %v5682 = vlaneseq
    %v5683 = vshrl.u32 %v5682, 7
    %v5684 = vsub.s32 %v634, %v5683
    %v5685 = vrot.slane %v5613, %v5684
    %v5686 = vsel %vm639, %v5685, %v5681
    %v5687 = vlaneseq
    %v5688 = vshrl.u32 %v5687, 7
    %v5689 = vsub.s32 %v629, %v5688
    %v5690 = vrot.slane %v5615, %v5689
    %v5691 = vlaneseq
    %v5692 = vshrl.u32 %v5691, 7
    %v5693 = vsub.s32 %v634, %v5692
    %v5694 = vrot.slane %v5617, %v5693
    %v5695 = vsel %vm639, %v5694, %v5690
    %v5696 = vlaneseq
    %v5697 = vshrl.u32 %v5696, 7
    %v5698 = vsub.s32 %v629, %v5697
    %v5699 = vrot.slane %v5619, %v5698
    %v5700 = vlaneseq
    %v5701 = vshrl.u32 %v5700, 7
    %v5702 = vsub.s32 %v634, %v5701
    %v5703 = vrot.slane %v5621, %v5702
    %v5704 = vsel %vm639, %v5703, %v5699
    %v5705 = vlaneseq
    %v5706 = vshrl.u32 %v5705, 7
    %v5707 = vsub.s32 %v629, %v5706
    %v5708 = vrot.slane %v5623, %v5707
    %v5709 = vlaneseq
    %v5710 = vshrl.u32 %v5709, 7
    %v5711 = vsub.s32 %v634, %v5710
    %v5712 = vrot.slane %v5625, %v5711
    %v5713 = vsel %vm639, %v5712, %v5708
    %v5714 = vsel %vm704, %v5659, %v5650
    %v5715 = vsel %vm706, %v5668, %v5714
    %v5716 = vsel %vm708, %v5677, %v5715
    %v5717 = vsel %vm710, %v5686, %v5716
    %v5718 = vsel %vm712, %v5695, %v5717
    %v5719 = vsel %vm714, %v5704, %v5718
    %v5720 = vsel %vm716, %v5713, %v5719
    %v5722 = vsel %vm719, %v5720, -inf
    %5723 = vmax.xlane.f32.xlu0 %v5722
    %v5724 = vpop.xlane.xlu0 %5723
    %v5726 = vlaneseq
    %v5727 = vshrl.u32 %v5726, 7
    %v5728 = vsub.s32 0, %v5727
    %v5729 = vrot.slane %v5724, %v5728
    %v5730 = vlaneseq
    %v5731 = vshrl.u32 %v5730, 7
    %v5732 = vsub.s32 1, %v5731
    %v5733 = vrot.slane %v5724, %v5732
    %v5734 = vlaneseq
    %v5735 = vshrl.u32 %v5734, 7
    %v5736 = vsub.s32 2, %v5735
    %v5737 = vrot.slane %v5724, %v5736
    %v5738 = vlaneseq
    %v5739 = vshrl.u32 %v5738, 7
    %v5740 = vsub.s32 3, %v5739
    %v5741 = vrot.slane %v5724, %v5740
    %v5742 = vlaneseq
    %v5743 = vshrl.u32 %v5742, 7
    %v5744 = vsub.s32 4, %v5743
    %v5745 = vrot.slane %v5724, %v5744
    %v5746 = vlaneseq
    %v5747 = vshrl.u32 %v5746, 7
    %v5748 = vsub.s32 5, %v5747
    %v5749 = vrot.slane %v5724, %v5748
    %v5750 = vlaneseq
    %v5751 = vshrl.u32 %v5750, 7
    %v5752 = vsub.s32 6, %v5751
    %v5753 = vrot.slane %v5724, %v5752
    %v5754 = vlaneseq
    %v5755 = vshrl.u32 %v5754, 7
    %v5756 = vsub.s32 7, %v5755
    %v5757 = vrot.slane %v5724, %v5756
    %v5766 = vsub.f32 %v5595, %v5729
    %v5767 = vsub.f32 %v5597, %v5729
    %v5768 = vsub.f32 %v5599, %v5733
    %v5769 = vsub.f32 %v5601, %v5733
    %v5770 = vsub.f32 %v5603, %v5737
    %v5771 = vsub.f32 %v5605, %v5737
    %v5772 = vsub.f32 %v5607, %v5741
    %v5773 = vsub.f32 %v5609, %v5741
    %v5774 = vsub.f32 %v5611, %v5745
    %v5775 = vsub.f32 %v5613, %v5745
    %v5776 = vsub.f32 %v5615, %v5749
    %v5777 = vsub.f32 %v5617, %v5749
    %v5778 = vsub.f32 %v5619, %v5753
    %v5779 = vsub.f32 %v5621, %v5753
    %v5780 = vsub.f32 %v5623, %v5757
    %v5781 = vsub.f32 %v5625, %v5757
    %v5782 = vmul.f32 %v5766, 1.442695
    %v5783 = vpow.pop %v5782
    %v5784 = vmul.f32 %v5767, 1.442695
    %v5785 = vpow.pop %v5784
    %v5786 = vmul.f32 %v5768, 1.442695
    %v5787 = vpow.pop %v5786
    %v5788 = vmul.f32 %v5769, 1.442695
    %v5789 = vpow.pop %v5788
    %v5790 = vmul.f32 %v5770, 1.442695
    %v5791 = vpow.pop %v5790
    %v5792 = vmul.f32 %v5771, 1.442695
    %v5793 = vpow.pop %v5792
    %v5794 = vmul.f32 %v5772, 1.442695
    %v5795 = vpow.pop %v5794
    %v5796 = vmul.f32 %v5773, 1.442695
    %v5797 = vpow.pop %v5796
    %v5798 = vmul.f32 %v5774, 1.442695
    %v5799 = vpow.pop %v5798
    %v5800 = vmul.f32 %v5775, 1.442695
    %v5801 = vpow.pop %v5800
    %v5802 = vmul.f32 %v5776, 1.442695
    %v5803 = vpow.pop %v5802
    %v5804 = vmul.f32 %v5777, 1.442695
    %v5805 = vpow.pop %v5804
    %v5806 = vmul.f32 %v5778, 1.442695
    %v5807 = vpow.pop %v5806
    %v5808 = vmul.f32 %v5779, 1.442695
    %v5809 = vpow.pop %v5808
    %v5810 = vmul.f32 %v5780, 1.442695
    %v5811 = vpow.pop %v5810
    %v5812 = vmul.f32 %v5781, 1.442695
    %v5813 = vpow.pop %v5812
    %5830 = vset.pattern.permute.xlu0 0
    %5831 = vperm.xlu0 %5830, %v5783
    %v5832 = vpop.permute.xlu0 %5831
    %5833 = vset.pattern.permute.xlu0 0
    %5834 = vperm.xlu0 %5833, %v5785
    %v5835 = vpop.permute.xlu0 %5834
    %5836 = vset.pattern.permute.xlu0 0
    %5837 = vperm.xlu0 %5836, %v5787
    %v5838 = vpop.permute.xlu0 %5837
    %5839 = vset.pattern.permute.xlu0 0
    %5840 = vperm.xlu0 %5839, %v5789
    %v5841 = vpop.permute.xlu0 %5840
    %5842 = vset.pattern.permute.xlu0 0
    %5843 = vperm.xlu0 %5842, %v5791
    %v5844 = vpop.permute.xlu0 %5843
    %5845 = vset.pattern.permute.xlu0 0
    %5846 = vperm.xlu0 %5845, %v5793
    %v5847 = vpop.permute.xlu0 %5846
    %5848 = vset.pattern.permute.xlu0 0
    %5849 = vperm.xlu0 %5848, %v5795
    %v5850 = vpop.permute.xlu0 %5849
    %5851 = vset.pattern.permute.xlu0 0
    %5852 = vperm.xlu0 %5851, %v5797
    %v5853 = vpop.permute.xlu0 %5852
    %5854 = vset.pattern.permute.xlu0 0
    %5855 = vperm.xlu0 %5854, %v5799
    %v5856 = vpop.permute.xlu0 %5855
    %5857 = vset.pattern.permute.xlu0 0
    %5858 = vperm.xlu0 %5857, %v5801
    %v5859 = vpop.permute.xlu0 %5858
    %5860 = vset.pattern.permute.xlu0 0
    %5861 = vperm.xlu0 %5860, %v5803
    %v5862 = vpop.permute.xlu0 %5861
    %5863 = vset.pattern.permute.xlu0 0
    %5864 = vperm.xlu0 %5863, %v5805
    %v5865 = vpop.permute.xlu0 %5864
    %5866 = vset.pattern.permute.xlu0 0
    %5867 = vperm.xlu0 %5866, %v5807
    %v5868 = vpop.permute.xlu0 %5867
    %5869 = vset.pattern.permute.xlu0 0
    %5870 = vperm.xlu0 %5869, %v5809
    %v5871 = vpop.permute.xlu0 %5870
    %5872 = vset.pattern.permute.xlu0 0
    %5873 = vperm.xlu0 %5872, %v5811
    %v5874 = vpop.permute.xlu0 %5873
    %5875 = vset.pattern.permute.xlu0 0
    %5876 = vperm.xlu0 %5875, %v5813
    %v5877 = vpop.permute.xlu0 %5876
    %v5878 = vlaneseq
    %v5879 = vshrl.u32 %v5878, 7
    %v5880 = vsub.s32 %v629, %v5879
    %v5881 = vrot.slane %v5832, %v5880
    %v5882 = vlaneseq
    %v5883 = vshrl.u32 %v5882, 7
    %v5884 = vsub.s32 %v634, %v5883
    %v5885 = vrot.slane %v5835, %v5884
    %v5886 = vsel %vm639, %v5885, %v5881
    %v5887 = vlaneseq
    %v5888 = vshrl.u32 %v5887, 7
    %v5889 = vsub.s32 %v629, %v5888
    %v5890 = vrot.slane %v5838, %v5889
    %v5891 = vlaneseq
    %v5892 = vshrl.u32 %v5891, 7
    %v5893 = vsub.s32 %v634, %v5892
    %v5894 = vrot.slane %v5841, %v5893
    %v5895 = vsel %vm639, %v5894, %v5890
    %v5896 = vlaneseq
    %v5897 = vshrl.u32 %v5896, 7
    %v5898 = vsub.s32 %v629, %v5897
    %v5899 = vrot.slane %v5844, %v5898
    %v5900 = vlaneseq
    %v5901 = vshrl.u32 %v5900, 7
    %v5902 = vsub.s32 %v634, %v5901
    %v5903 = vrot.slane %v5847, %v5902
    %v5904 = vsel %vm639, %v5903, %v5899
    %v5905 = vlaneseq
    %v5906 = vshrl.u32 %v5905, 7
    %v5907 = vsub.s32 %v629, %v5906
    %v5908 = vrot.slane %v5850, %v5907
    %v5909 = vlaneseq
    %v5910 = vshrl.u32 %v5909, 7
    %v5911 = vsub.s32 %v634, %v5910
    %v5912 = vrot.slane %v5853, %v5911
    %v5913 = vsel %vm639, %v5912, %v5908
    %v5914 = vlaneseq
    %v5915 = vshrl.u32 %v5914, 7
    %v5916 = vsub.s32 %v629, %v5915
    %v5917 = vrot.slane %v5856, %v5916
    %v5918 = vlaneseq
    %v5919 = vshrl.u32 %v5918, 7
    %v5920 = vsub.s32 %v634, %v5919
    %v5921 = vrot.slane %v5859, %v5920
    %v5922 = vsel %vm639, %v5921, %v5917
    %v5923 = vlaneseq
    %v5924 = vshrl.u32 %v5923, 7
    %v5925 = vsub.s32 %v629, %v5924
    %v5926 = vrot.slane %v5862, %v5925
    %v5927 = vlaneseq
    %v5928 = vshrl.u32 %v5927, 7
    %v5929 = vsub.s32 %v634, %v5928
    %v5930 = vrot.slane %v5865, %v5929
    %v5931 = vsel %vm639, %v5930, %v5926
    %v5932 = vlaneseq
    %v5933 = vshrl.u32 %v5932, 7
    %v5934 = vsub.s32 %v629, %v5933
    %v5935 = vrot.slane %v5868, %v5934
    %v5936 = vlaneseq
    %v5937 = vshrl.u32 %v5936, 7
    %v5938 = vsub.s32 %v634, %v5937
    %v5939 = vrot.slane %v5871, %v5938
    %v5940 = vsel %vm639, %v5939, %v5935
    %v5941 = vlaneseq
    %v5942 = vshrl.u32 %v5941, 7
    %v5943 = vsub.s32 %v629, %v5942
    %v5944 = vrot.slane %v5874, %v5943
    %v5945 = vlaneseq
    %v5946 = vshrl.u32 %v5945, 7
    %v5947 = vsub.s32 %v634, %v5946
    %v5948 = vrot.slane %v5877, %v5947
    %v5949 = vsel %vm639, %v5948, %v5944
    %v5950 = vsel %vm704, %v5895, %v5886
    %v5951 = vsel %vm706, %v5904, %v5950
    %v5952 = vsel %vm708, %v5913, %v5951
    %v5953 = vsel %vm710, %v5922, %v5952
    %v5954 = vsel %vm712, %v5931, %v5953
    %v5955 = vsel %vm714, %v5940, %v5954
    %v5956 = vsel %vm716, %v5949, %v5955
    %v5958 = vsel %vm719, %v5956, 0.0
    %5959 = vadd.xlane.f32.xlu0 %v5958
    %v5960 = vpop.xlane.xlu0 %5959
    %v5961 = vrcp.pop %v5960
    %v5963 = vlaneseq
    %v5964 = vshrl.u32 %v5963, 7
    %v5965 = vsub.s32 0, %v5964
    %v5966 = vrot.slane %v5961, %v5965
    %v5967 = vlaneseq
    %v5968 = vshrl.u32 %v5967, 7
    %v5969 = vsub.s32 1, %v5968
    %v5970 = vrot.slane %v5961, %v5969
    %v5971 = vlaneseq
    %v5972 = vshrl.u32 %v5971, 7
    %v5973 = vsub.s32 2, %v5972
    %v5974 = vrot.slane %v5961, %v5973
    %v5975 = vlaneseq
    %v5976 = vshrl.u32 %v5975, 7
    %v5977 = vsub.s32 3, %v5976
    %v5978 = vrot.slane %v5961, %v5977
    %v5979 = vlaneseq
    %v5980 = vshrl.u32 %v5979, 7
    %v5981 = vsub.s32 4, %v5980
    %v5982 = vrot.slane %v5961, %v5981
    %v5983 = vlaneseq
    %v5984 = vshrl.u32 %v5983, 7
    %v5985 = vsub.s32 5, %v5984
    %v5986 = vrot.slane %v5961, %v5985
    %v5987 = vlaneseq
    %v5988 = vshrl.u32 %v5987, 7
    %v5989 = vsub.s32 6, %v5988
    %v5990 = vrot.slane %v5961, %v5989
    %v5991 = vlaneseq
    %v5992 = vshrl.u32 %v5991, 7
    %v5993 = vsub.s32 7, %v5992
    %v5994 = vrot.slane %v5961, %v5993
    %v6003 = vmul.f32 %v5783, %v5966
    %v6004 = vmul.f32 %v5785, %v5966
    %v6005 = vmul.f32 %v5787, %v5970
    %v6006 = vmul.f32 %v5789, %v5970
    %v6007 = vmul.f32 %v5791, %v5974
    %v6008 = vmul.f32 %v5793, %v5974
    %v6009 = vmul.f32 %v5795, %v5978
    %v6010 = vmul.f32 %v5797, %v5978
    %v6011 = vmul.f32 %v5799, %v5982
    %v6012 = vmul.f32 %v5801, %v5982
    %v6013 = vmul.f32 %v5803, %v5986
    %v6014 = vmul.f32 %v5805, %v5986
    %v6015 = vmul.f32 %v5807, %v5990
    %v6016 = vmul.f32 %v5809, %v5990
    %v6017 = vmul.f32 %v5811, %v5994
    %v6018 = vmul.f32 %v5813, %v5994
    %6020 = vset.pattern.permute.xlu0 0
    %6021 = vperm.xlu0 %6020, %v6003
    %v6022 = vpop.permute.xlu0 %6021
    %6025 = vset.pattern.permute.xlu0 0
    %6026 = vperm.xlu0 %6025, %v6004
    %v6027 = vpop.permute.xlu0 %6026
    %6030 = vset.pattern.permute.xlu0 0
    %6031 = vperm.xlu0 %6030, %v6005
    %v6032 = vpop.permute.xlu0 %6031
    %6035 = vset.pattern.permute.xlu0 0
    %6036 = vperm.xlu0 %6035, %v6006
    %v6037 = vpop.permute.xlu0 %6036
    %6040 = vset.pattern.permute.xlu0 0
    %6041 = vperm.xlu0 %6040, %v6007
    %v6042 = vpop.permute.xlu0 %6041
    %6045 = vset.pattern.permute.xlu0 0
    %6046 = vperm.xlu0 %6045, %v6008
    %v6047 = vpop.permute.xlu0 %6046
    %6050 = vset.pattern.permute.xlu0 0
    %6051 = vperm.xlu0 %6050, %v6009
    %v6052 = vpop.permute.xlu0 %6051
    %6055 = vset.pattern.permute.xlu0 0
    %6056 = vperm.xlu0 %6055, %v6010
    %v6057 = vpop.permute.xlu0 %6056
    %6060 = vset.pattern.permute.xlu0 0
    %6061 = vperm.xlu0 %6060, %v6011
    %v6062 = vpop.permute.xlu0 %6061
    %6065 = vset.pattern.permute.xlu0 0
    %6066 = vperm.xlu0 %6065, %v6012
    %v6067 = vpop.permute.xlu0 %6066
    %6070 = vset.pattern.permute.xlu0 0
    %6071 = vperm.xlu0 %6070, %v6013
    %v6072 = vpop.permute.xlu0 %6071
    %6075 = vset.pattern.permute.xlu0 0
    %6076 = vperm.xlu0 %6075, %v6014
    %v6077 = vpop.permute.xlu0 %6076
    %6080 = vset.pattern.permute.xlu0 0
    %6081 = vperm.xlu0 %6080, %v6015
    %v6082 = vpop.permute.xlu0 %6081
    %6085 = vset.pattern.permute.xlu0 0
    %6086 = vperm.xlu0 %6085, %v6016
    %v6087 = vpop.permute.xlu0 %6086
    %6090 = vset.pattern.permute.xlu0 0
    %6091 = vperm.xlu0 %6090, %v6017
    %v6092 = vpop.permute.xlu0 %6091
    %6095 = vset.pattern.permute.xlu0 0
    %6096 = vperm.xlu0 %6095, %v6018
    %v6097 = vpop.permute.xlu0 %6096
    %v6099 = vmul.f32 %v177, %v6022
    %v6100 = vmul.f32 %v178, %v6027
    %v6101 = vmul.f32 %v179, %v6032
    %v6102 = vmul.f32 %v180, %v6037
    %v6103 = vmul.f32 %v181, %v6042
    %v6104 = vmul.f32 %v182, %v6047
    %v6105 = vmul.f32 %v183, %v6052
    %v6106 = vmul.f32 %v184, %v6057
    %v6107 = vmul.f32 %v185, %v6062
    %v6108 = vmul.f32 %v186, %v6067
    %v6109 = vmul.f32 %v187, %v6072
    %v6110 = vmul.f32 %v188, %v6077
    %v6111 = vmul.f32 %v189, %v6082
    %v6112 = vmul.f32 %v190, %v6087
    %v6113 = vmul.f32 %v191, %v6092
    %v6114 = vmul.f32 %v192, %v6097
    %v6115 = vsel %vm1113, %v6099, 0.0
    %v6116 = vsel %vm1113, %v6100, 0.0
    %v6117 = vadd.f32 %v6115, %v6116
    %v6118 = vrot.slane %v6117, 4
    %v6119 = vadd.f32 %v6117, %v6118
    %v6120 = vrot.slane %v6119, 2
    %v6121 = vadd.f32 %v6119, %v6120
    %v6122 = vrot.slane %v6121, 1
    %v6123 = vadd.f32 %v6121, %v6122
    %v6124 = vsel %vm1113, %v6101, 0.0
    %v6125 = vsel %vm1113, %v6102, 0.0
    %v6126 = vadd.f32 %v6124, %v6125
    %v6127 = vrot.slane %v6126, 4
    %v6128 = vadd.f32 %v6126, %v6127
    %v6129 = vrot.slane %v6128, 2
    %v6130 = vadd.f32 %v6128, %v6129
    %v6131 = vrot.slane %v6130, 1
    %v6132 = vadd.f32 %v6130, %v6131
    %v6133 = vsel %vm1113, %v6103, 0.0
    %v6134 = vsel %vm1113, %v6104, 0.0
    %v6135 = vadd.f32 %v6133, %v6134
    %v6136 = vrot.slane %v6135, 4
    %v6137 = vadd.f32 %v6135, %v6136
    %v6138 = vrot.slane %v6137, 2
    %v6139 = vadd.f32 %v6137, %v6138
    %v6140 = vrot.slane %v6139, 1
    %v6141 = vadd.f32 %v6139, %v6140
    %v6142 = vsel %vm1113, %v6105, 0.0
    %v6143 = vsel %vm1113, %v6106, 0.0
    %v6144 = vadd.f32 %v6142, %v6143
    %v6145 = vrot.slane %v6144, 4
    %v6146 = vadd.f32 %v6144, %v6145
    %v6147 = vrot.slane %v6146, 2
    %v6148 = vadd.f32 %v6146, %v6147
    %v6149 = vrot.slane %v6148, 1
    %v6150 = vadd.f32 %v6148, %v6149
    %v6151 = vsel %vm1113, %v6107, 0.0
    %v6152 = vsel %vm1113, %v6108, 0.0
    %v6153 = vadd.f32 %v6151, %v6152
    %v6154 = vrot.slane %v6153, 4
    %v6155 = vadd.f32 %v6153, %v6154
    %v6156 = vrot.slane %v6155, 2
    %v6157 = vadd.f32 %v6155, %v6156
    %v6158 = vrot.slane %v6157, 1
    %v6159 = vadd.f32 %v6157, %v6158
    %v6160 = vsel %vm1113, %v6109, 0.0
    %v6161 = vsel %vm1113, %v6110, 0.0
    %v6162 = vadd.f32 %v6160, %v6161
    %v6163 = vrot.slane %v6162, 4
    %v6164 = vadd.f32 %v6162, %v6163
    %v6165 = vrot.slane %v6164, 2
    %v6166 = vadd.f32 %v6164, %v6165
    %v6167 = vrot.slane %v6166, 1
    %v6168 = vadd.f32 %v6166, %v6167
    %v6169 = vsel %vm1113, %v6111, 0.0
    %v6170 = vsel %vm1113, %v6112, 0.0
    %v6171 = vadd.f32 %v6169, %v6170
    %v6172 = vrot.slane %v6171, 4
    %v6173 = vadd.f32 %v6171, %v6172
    %v6174 = vrot.slane %v6173, 2
    %v6175 = vadd.f32 %v6173, %v6174
    %v6176 = vrot.slane %v6175, 1
    %v6177 = vadd.f32 %v6175, %v6176
    %v6178 = vsel %vm1113, %v6113, 0.0
    %v6179 = vsel %vm1113, %v6114, 0.0
    %v6180 = vadd.f32 %v6178, %v6179
    %v6181 = vrot.slane %v6180, 4
    %v6182 = vadd.f32 %v6180, %v6181
    %v6183 = vrot.slane %v6182, 2
    %v6184 = vadd.f32 %v6182, %v6183
    %v6185 = vrot.slane %v6184, 1
    %v6186 = vadd.f32 %v6184, %v6185
    %v6187 = vpack.c.bf16 %v6123, %v6123
    %v6188 = vpack.c.bf16 %v6132, %v6132
    %v6189 = vpack.c.bf16 %v6141, %v6141
    %v6190 = vpack.c.bf16 %v6150, %v6150
    %v6191 = vpack.c.bf16 %v6159, %v6159
    %v6192 = vpack.c.bf16 %v6168, %v6168
    %v6193 = vpack.c.bf16 %v6177, %v6177
    %v6194 = vpack.c.bf16 %v6186, %v6186
    %v6203 = vunpack.c.l.b16 %v6187
    %v6204 = vunpack.c.l.b16 %v6188
    %v6205 = vunpack.c.l.b16 %v6189
    %v6206 = vunpack.c.l.b16 %v6190
    %v6207 = vunpack.c.l.b16 %v6191
    %v6208 = vunpack.c.l.b16 %v6192
    %v6209 = vunpack.c.l.b16 %v6193
    %v6210 = vunpack.c.l.b16 %v6194
    %v6211 = vsel %vm704, %v6204, %v6203
    %v6212 = vsel %vm706, %v6205, %v6211
    %v6213 = vsel %vm708, %v6206, %v6212
    %v6214 = vsel %vm710, %v6207, %v6213
    %v6215 = vsel %vm712, %v6208, %v6214
    %v6216 = vsel %vm714, %v6209, %v6215
    %v6217 = vsel %vm716, %v6210, %v6216
    %v6218 = vpack.c.b16 %v6217, %v6217
    %v6220 = vsel %vm1113, %v6218, 0
    %6222 = vmatprep.subr.bf16.mxu0 %v1231
    %6223 = vmatpush1.bf16.msra.mxu0 %v1230
    %6224 = vmatprep.subr.bf16.mxu0 %v1233
    %6225 = vmatpush1.bf16.msra.mxu0 %v1232
    %6226 = vmatprep.subr.bf16.mxu0 0
    %6227 = vmatpush1.bf16.msra.mxu0 0
    %6228 = vmatprep.subr.bf16.mxu0 0
    %6229 = vmatpush1.bf16.msra.mxu0 0
    %6230 = vmatprep.subr.bf16.mxu0 0
    %6231 = vmatpush1.bf16.msra.mxu0 0
    %6232 = vmatprep.subr.bf16.mxu0 0
    %6233 = vmatpush1.bf16.msra.mxu0 0
    %6234 = vmatprep.subr.bf16.mxu0 0
    %6235 = vmatpush1.bf16.msra.mxu0 0
    %6236 = vmatprep.subr.bf16.mxu0 0
    %6237 = vmatpush1.bf16.msra.mxu0 0
    %6238 = vmatprep.subr.bf16.mxu0 0
    %6239 = vmatpush1.bf16.msra.mxu0 0
    %6240 = vmatprep.subr.bf16.mxu0 0
    %6241 = vmatpush1.bf16.msra.mxu0 0
    %6242 = vmatprep.subr.bf16.mxu0 0
    %6243 = vmatpush1.bf16.msra.mxu0 0
    %6244 = vmatprep.subr.bf16.mxu0 0
    %6245 = vmatpush1.bf16.msra.mxu0 0
    %6246 = vmatprep.subr.bf16.mxu0 0
    %6247 = vmatpush1.bf16.msra.mxu0 0
    %6248 = vmatprep.subr.bf16.mxu0 0
    %6249 = vmatpush1.bf16.msra.mxu0 0
    %6250 = vmatprep.subr.bf16.mxu0 0
    %6251 = vmatpush1.bf16.msra.mxu0 0
    %6252 = vmatprep.subr.bf16.mxu0 0
    %6253 = vmatpush1.bf16.msra.mxu0 0
    %6254 = vmatprep.mubr.bf16.mxu0 0
    %6255 = vmatmul.mubr.bf16.gmra.mrb[0].mxu0 %v6220
    %v6256 = vpop.f32.mrb[0].mxu0
    %v6257 = vadd.f32 %v316, %v6256
    %v6258 = vpop.f32.mrb[0].mxu0
    %v6259 = vadd.f32 %v320, %v6258
    %v6260 = vpop.f32.mrb[0].mxu0
    %v6261 = vpop.f32.mrb[0].mxu0
    %6262 = vdwg.mxu0
    %s6263 = scalar_lea.vmem [#allocation9], 32
    %v6264 = vld [vmem:[%s6263] sm:$0xff]
    %v6265 = vadd.f32 %v6264, %v6259
    %v6266 = vpack.c.bf16 %v6265, %v6265
    %6267 = vmatprep.subr.bf16.mxu0 %v1382
    %6268 = vmatpush1.bf16.msra.mxu0 %v1381
    %6269 = vmatprep.subr.bf16.mxu0 %v1386
    %6270 = vmatpush1.bf16.msra.mxu0 %v1385
    %6271 = vmatprep.subr.bf16.mxu0 %v1390
    %6272 = vmatpush1.bf16.msra.mxu0 %v1389
    %6273 = vmatprep.subr.bf16.mxu0 %v1394
    %6274 = vmatpush1.bf16.msra.mxu0 %v1393
    %6275 = vmatprep.subr.bf16.mxu0 %v1398
    %6276 = vmatpush1.bf16.msra.mxu0 %v1397
    %6277 = vmatprep.subr.bf16.mxu0 %v1402
    %6278 = vmatpush1.bf16.msra.mxu0 %v1401
    %6279 = vmatprep.subr.bf16.mxu0 %v1406
    %6280 = vmatpush1.bf16.msra.mxu0 %v1405
    %6281 = vmatprep.subr.bf16.mxu0 %v1410
    %6282 = vmatpush1.bf16.msra.mxu0 %v1409
    %6283 = vmatprep.subr.bf16.mxu0 0
    %6284 = vmatpush1.bf16.msra.mxu0 0
    %6285 = vmatprep.subr.bf16.mxu0 0
    %6286 = vmatpush1.bf16.msra.mxu0 0
    %6287 = vmatprep.subr.bf16.mxu0 0
    %6288 = vmatpush1.bf16.msra.mxu0 0
    %6289 = vmatprep.subr.bf16.mxu0 0
    %6290 = vmatpush1.bf16.msra.mxu0 0
    %6291 = vmatprep.subr.bf16.mxu0 0
    %6292 = vmatpush1.bf16.msra.mxu0 0
    %6293 = vmatprep.subr.bf16.mxu0 0
    %6294 = vmatpush1.bf16.msra.mxu0 0
    %6295 = vmatprep.subr.bf16.mxu0 0
    %6296 = vmatpush1.bf16.msra.mxu0 0
    %6297 = vmatprep.subr.bf16.mxu0 0
    %6298 = vmatpush1.bf16.msra.mxu0 0
    %6299 = vmatprep.mubr.bf16.mxu0 0
    %6300 = vmatmul.mubr.bf16.gmra.mrb[0].mxu0 %v5415
    %v6301 = vpop.f32.mrb[0].mxu0
    %v6302 = vadd.f32 0.0, %v6301
    %v6303 = vpop.f32.mrb[0].mxu0
    %v6304 = vadd.f32 0.0, %v6303
    %v6305 = vpop.f32.mrb[0].mxu0
    %v6306 = vpop.f32.mrb[0].mxu0
    %6307 = vdwg.mxu0
    %6308 = vmatprep.subr.bf16.mxu0 %v1384
    %6309 = vmatpush1.bf16.msra.mxu0 %v1383
    %6310 = vmatprep.subr.bf16.mxu0 %v1388
    %6311 = vmatpush1.bf16.msra.mxu0 %v1387
    %6312 = vmatprep.subr.bf16.mxu0 %v1392
    %6313 = vmatpush1.bf16.msra.mxu0 %v1391
    %6314 = vmatprep.subr.bf16.mxu0 %v1396
    %6315 = vmatpush1.bf16.msra.mxu0 %v1395
    %6316 = vmatprep.subr.bf16.mxu0 %v1400
    %6317 = vmatpush1.bf16.msra.mxu0 %v1399
    %6318 = vmatprep.subr.bf16.mxu0 %v1404
    %6319 = vmatpush1.bf16.msra.mxu0 %v1403
    %6320 = vmatprep.subr.bf16.mxu0 %v1408
    %6321 = vmatpush1.bf16.msra.mxu0 %v1407
    %6322 = vmatprep.subr.bf16.mxu0 %v1412
    %6323 = vmatpush1.bf16.msra.mxu0 %v1411
    %6324 = vmatprep.subr.bf16.mxu0 0
    %6325 = vmatpush1.bf16.msra.mxu0 0
    %6326 = vmatprep.subr.bf16.mxu0 0
    %6327 = vmatpush1.bf16.msra.mxu0 0
    %6328 = vmatprep.subr.bf16.mxu0 0
    %6329 = vmatpush1.bf16.msra.mxu0 0
    %6330 = vmatprep.subr.bf16.mxu0 0
    %6331 = vmatpush1.bf16.msra.mxu0 0
    %6332 = vmatprep.subr.bf16.mxu0 0
    %6333 = vmatpush1.bf16.msra.mxu0 0
    %6334 = vmatprep.subr.bf16.mxu0 0
    %6335 = vmatpush1.bf16.msra.mxu0 0
    %6336 = vmatprep.subr.bf16.mxu0 0
    %6337 = vmatpush1.bf16.msra.mxu0 0
    %6338 = vmatprep.subr.bf16.mxu0 0
    %6339 = vmatpush1.bf16.msra.mxu0 0
    %6340 = vmatprep.mubr.bf16.mxu0 0
    %6341 = vmatmul.mubr.bf16.gmra.mrb[0].mxu0 %v5415
    %v6342 = vpop.f32.mrb[0].mxu0
    %v6343 = vadd.f32 0.0, %v6342
    %v6344 = vpop.f32.mrb[0].mxu0
    %v6345 = vadd.f32 0.0, %v6344
    %v6346 = vpop.f32.mrb[0].mxu0
    %v6347 = vpop.f32.mrb[0].mxu0
    %6348 = vdwg.mxu0
    %6349 = vmatprep.subr.bf16.mxu0 %v1624
    %6350 = vmatpush1.bf16.msra.mxu0 %v1623
    %6351 = vmatprep.subr.bf16.mxu0 %v1628
    %6352 = vmatpush1.bf16.msra.mxu0 %v1627
    %6353 = vmatprep.subr.bf16.mxu0 %v1632
    %6354 = vmatpush1.bf16.msra.mxu0 %v1631
    %6355 = vmatprep.subr.bf16.mxu0 %v1636
    %6356 = vmatpush1.bf16.msra.mxu0 %v1635
    %6357 = vmatprep.subr.bf16.mxu0 %v1640
    %6358 = vmatpush1.bf16.msra.mxu0 %v1639
    %6359 = vmatprep.subr.bf16.mxu0 %v1644
    %6360 = vmatpush1.bf16.msra.mxu0 %v1643
    %6361 = vmatprep.subr.bf16.mxu0 %v1648
    %6362 = vmatpush1.bf16.msra.mxu0 %v1647
    %6363 = vmatprep.subr.bf16.mxu0 %v1652
    %6364 = vmatpush1.bf16.msra.mxu0 %v1651
    %6365 = vmatprep.subr.bf16.mxu0 0
    %6366 = vmatpush1.bf16.msra.mxu0 0
    %6367 = vmatprep.subr.bf16.mxu0 0
    %6368 = vmatpush1.bf16.msra.mxu0 0
    %6369 = vmatprep.subr.bf16.mxu0 0
    %6370 = vmatpush1.bf16.msra.mxu0 0
    %6371 = vmatprep.subr.bf16.mxu0 0
    %6372 = vmatpush1.bf16.msra.mxu0 0
    %6373 = vmatprep.subr.bf16.mxu0 0
    %6374 = vmatpush1.bf16.msra.mxu0 0
    %6375 = vmatprep.subr.bf16.mxu0 0
    %6376 = vmatpush1.bf16.msra.mxu0 0
    %6377 = vmatprep.subr.bf16.mxu0 0
    %6378 = vmatpush1.bf16.msra.mxu0 0
    %6379 = vmatprep.subr.bf16.mxu0 0
    %6380 = vmatpush1.bf16.msra.mxu0 0
    %6381 = vmatprep.mubr.bf16.mxu0 0
    %6382 = vmatmul.mubr.bf16.gmra.mrb[0].mxu0 %v6266
    %v6383 = vpop.f32.mrb[0].mxu0
    %v6384 = vadd.f32 %v6302, %v6383
    %v6385 = vpop.f32.mrb[0].mxu0
    %v6386 = vadd.f32 %v6304, %v6385
    %v6387 = vpop.f32.mrb[0].mxu0
    %v6388 = vpop.f32.mrb[0].mxu0
    %6389 = vdwg.mxu0
    %6390 = vmatprep.subr.bf16.mxu0 %v1626
    %6391 = vmatpush1.bf16.msra.mxu0 %v1625
    %6392 = vmatprep.subr.bf16.mxu0 %v1630
    %6393 = vmatpush1.bf16.msra.mxu0 %v1629
    %6394 = vmatprep.subr.bf16.mxu0 %v1634
    %6395 = vmatpush1.bf16.msra.mxu0 %v1633
    %6396 = vmatprep.subr.bf16.mxu0 %v1638
    %6397 = vmatpush1.bf16.msra.mxu0 %v1637
    %6398 = vmatprep.subr.bf16.mxu0 %v1642
    %6399 = vmatpush1.bf16.msra.mxu0 %v1641
    %6400 = vmatprep.subr.bf16.mxu0 %v1646
    %6401 = vmatpush1.bf16.msra.mxu0 %v1645
    %6402 = vmatprep.subr.bf16.mxu0 %v1650
    %6403 = vmatpush1.bf16.msra.mxu0 %v1649
    %6404 = vmatprep.subr.bf16.mxu0 %v1654
    %6405 = vmatpush1.bf16.msra.mxu0 %v1653
    %6406 = vmatprep.subr.bf16.mxu0 0
    %6407 = vmatpush1.bf16.msra.mxu0 0
    %6408 = vmatprep.subr.bf16.mxu0 0
    %6409 = vmatpush1.bf16.msra.mxu0 0
    %6410 = vmatprep.subr.bf16.mxu0 0
    %6411 = vmatpush1.bf16.msra.mxu0 0
    %6412 = vmatprep.subr.bf16.mxu0 0
    %6413 = vmatpush1.bf16.msra.mxu0 0
    %6414 = vmatprep.subr.bf16.mxu0 0
    %6415 = vmatpush1.bf16.msra.mxu0 0
    %6416 = vmatprep.subr.bf16.mxu0 0
    %6417 = vmatpush1.bf16.msra.mxu0 0
    %6418 = vmatprep.subr.bf16.mxu0 0
    %6419 = vmatpush1.bf16.msra.mxu0 0
    %6420 = vmatprep.subr.bf16.mxu0 0
    %6421 = vmatpush1.bf16.msra.mxu0 0
    %6422 = vmatprep.mubr.bf16.mxu0 0
    %6423 = vmatmul.mubr.bf16.gmra.mrb[0].mxu0 %v6266
    %v6424 = vpop.f32.mrb[0].mxu0
    %v6425 = vadd.f32 %v6343, %v6424
    %v6426 = vpop.f32.mrb[0].mxu0
    %v6427 = vadd.f32 %v6345, %v6426
    %v6428 = vpop.f32.mrb[0].mxu0
    %v6429 = vpop.f32.mrb[0].mxu0
    %6430 = vdwg.mxu0
    %v6431 = vadd.f32 %v6384, %v328
    %v6432 = vadd.f32 %v6386, %v332
    %v6433 = vadd.f32 %v6425, %v336
    %v6434 = vadd.f32 %v6427, %v340
    %v6435 = vxor.u32 %v6431, 2147483648
    %v6436 = vmul.f32 %v6435, 1.442695
    %v6437 = vpow.pop %v6436
    %v6438 = vadd.f32 %v6437, 1.0
    %v6439 = vrcp.pop %v6438
    %v6440 = vmul.f32 1.0, %v6439
    %v6441 = vxor.u32 %v6432, 2147483648
    %v6442 = vmul.f32 %v6441, 1.442695
    %v6443 = vpow.pop %v6442
    %v6444 = vadd.f32 %v6443, 1.0
    %v6445 = vrcp.pop %v6444
    %v6446 = vmul.f32 1.0, %v6445
    %v6447 = vtanh.pop %v6433
    %v6448 = vxor.u32 %v6434, 2147483648
    %v6449 = vmul.f32 %v6448, 1.442695
    %v6450 = vpow.pop %v6449
    %v6451 = vadd.f32 %v6450, 1.0
    %v6452 = vrcp.pop %v6451
    %v6453 = vmul.f32 1.0, %v6452
    %v6454 = vmul.f32 %v6446, %v5304
    %v6455 = vmul.f32 %v6440, %v6447
    %v6456 = vadd.f32 %v6454, %v6455
    %v6457 = vtanh.pop %v6456
    %v6458 = vmul.f32 %v6453, %v6457
    %v6459 = vadd.f32 %v6458, %v6257
    %v6460 = vpack.c.bf16 %v6459, %v6459
    %6461 = vmatprep.subr.bf16.mxu0 0
    %6462 = vmatpush1.bf16.msra.mxu0 %v1837
    %6463 = vmatprep.subr.bf16.mxu0 0
    %6464 = vmatpush1.bf16.msra.mxu0 %v1838
    %6465 = vmatprep.subr.bf16.mxu0 0
    %6466 = vmatpush1.bf16.msra.mxu0 %v1839
    %6467 = vmatprep.subr.bf16.mxu0 0
    %6468 = vmatpush1.bf16.msra.mxu0 %v1840
    %6469 = vmatprep.subr.bf16.mxu0 0
    %6470 = vmatpush1.bf16.msra.mxu0 %v1841
    %6471 = vmatprep.subr.bf16.mxu0 0
    %6472 = vmatpush1.bf16.msra.mxu0 %v1842
    %6473 = vmatprep.subr.bf16.mxu0 0
    %6474 = vmatpush1.bf16.msra.mxu0 %v1843
    %6475 = vmatprep.subr.bf16.mxu0 0
    %6476 = vmatpush1.bf16.msra.mxu0 %v1844
    %6477 = vmatprep.subr.bf16.mxu0 0
    %6478 = vmatpush1.bf16.msra.mxu0 0
    %6479 = vmatprep.subr.bf16.mxu0 0
    %6480 = vmatpush1.bf16.msra.mxu0 0
    %6481 = vmatprep.subr.bf16.mxu0 0
    %6482 = vmatpush1.bf16.msra.mxu0 0
    %6483 = vmatprep.subr.bf16.mxu0 0
    %6484 = vmatpush1.bf16.msra.mxu0 0
    %6485 = vmatprep.subr.bf16.mxu0 0
    %6486 = vmatpush1.bf16.msra.mxu0 0
    %6487 = vmatprep.subr.bf16.mxu0 0
    %6488 = vmatpush1.bf16.msra.mxu0 0
    %6489 = vmatprep.subr.bf16.mxu0 0
    %6490 = vmatpush1.bf16.msra.mxu0 0
    %6491 = vmatprep.subr.bf16.mxu0 0
    %6492 = vmatpush1.bf16.msra.mxu0 0
    %6493 = vmatprep.mubr.bf16.mxu0 0
    %6494 = vmatmul.mubr.bf16.gmra.mrb[0].mxu0 %v6460
    %v6495 = vpop.f32.mrb[0].mxu0
    %v6496 = vadd.f32 %v1803, %v6495
    %v6497 = vpop.f32.mrb[0].mxu0
    %v6498 = vpop.f32.mrb[0].mxu0
    %v6499 = vpop.f32.mrb[0].mxu0
    %6500 = vdwg.mxu0
    %v6502 = vcombine.high %v6496, %v6496
    %v6504 = vunpack.c.l.s4 1966171168
    %v6505 = vunpack.c.0.s8 %v6504
    %v6506 = vlaneseq
    %v6507 = vshrl.u32 %v6506, 7
    %v6508 = vsub.s32 %v6505, %v6507
    %v6509 = vrot.slane %v6496, %v6508
    %v6511 = vunpack.c.l.s4 1966171168
    %v6512 = vunpack.c.0.s8 %v6511
    %v6513 = vlaneseq
    %v6514 = vshrl.u32 %v6513, 7
    %v6515 = vsub.s32 %v6512, %v6514
    %v6516 = vrot.slane %v6502, %v6515
    %v6517 = vcombine.high %v6509, %v6509
    %v6518 = vcombine.high %v6516, %v6516
    %v6520 = vunpack.c.l.s4 1966171168
    %v6521 = vunpack.c.0.s8 %v6520
    %v6522 = vlaneseq
    %v6523 = vshrl.u32 %v6522, 7
    %v6524 = vsub.s32 %v6521, %v6523
    %v6525 = vrot.slane %v6509, %v6524
    %v6527 = vunpack.c.l.s4 1966171168
    %v6528 = vunpack.c.0.s8 %v6527
    %v6529 = vlaneseq
    %v6530 = vshrl.u32 %v6529, 7
    %v6531 = vsub.s32 %v6528, %v6530
    %v6532 = vrot.slane %v6516, %v6531
    %v6534 = vunpack.c.l.s4 1966171168
    %v6535 = vunpack.c.0.s8 %v6534
    %v6536 = vlaneseq
    %v6537 = vshrl.u32 %v6536, 7
    %v6538 = vsub.s32 %v6535, %v6537
    %v6539 = vrot.slane %v6517, %v6538
    %v6541 = vunpack.c.l.s4 1966171168
    %v6542 = vunpack.c.0.s8 %v6541
    %v6543 = vlaneseq
    %v6544 = vshrl.u32 %v6543, 7
    %v6545 = vsub.s32 %v6542, %v6544
    %v6546 = vrot.slane %v6518, %v6545
    %v6547 = vcombine.high %v6525, %v6525
    %v6548 = vcombine.high %v6532, %v6532
    %v6549 = vcombine.high %v6539, %v6539
    %v6550 = vcombine.high %v6546, %v6546
    %6559 = vst [vmem:[#allocation19 + $0x4] sm:$0x1] %v6525
    %6560 = vst [vmem:[#allocation19 + $0xc] sm:$0x1] %v6539
    %6561 = vst [vmem:[#allocation19 + $0x14] sm:$0x1] %v6547
    %6562 = vst [vmem:[#allocation19 + $0x1c] sm:$0x1] %v6549
    %6563 = vst [vmem:[#allocation19 + $0x24] sm:$0x1] %v6532
    %6564 = vst [vmem:[#allocation19 + $0x2c] sm:$0x1] %v6546
    %6565 = vst [vmem:[#allocation19 + $0x34] sm:$0x1] %v6548
    %6566 = vst [vmem:[#allocation19 + $0x3c] sm:$0x1] %v6550
    %v6567 = vpack.c.bf16 %v6458, %v6458
    %6568 = vmatprep.subr.bf16.mxu0 0
    %6569 = vmatpush1.bf16.msra.mxu0 %v380
    %6570 = vmatprep.subr.bf16.mxu0 0
    %6571 = vmatpush1.bf16.msra.mxu0 %v381
    %6572 = vmatprep.subr.bf16.mxu0 0
    %6573 = vmatpush1.bf16.msra.mxu0 %v382
    %6574 = vmatprep.subr.bf16.mxu0 0
    %6575 = vmatpush1.bf16.msra.mxu0 %v383
    %6576 = vmatprep.subr.bf16.mxu0 0
    %6577 = vmatpush1.bf16.msra.mxu0 %v384
    %6578 = vmatprep.subr.bf16.mxu0 0
    %6579 = vmatpush1.bf16.msra.mxu0 %v385
    %6580 = vmatprep.subr.bf16.mxu0 0
    %6581 = vmatpush1.bf16.msra.mxu0 %v386
    %6582 = vmatprep.subr.bf16.mxu0 0
    %6583 = vmatpush1.bf16.msra.mxu0 %v387
    %6584 = vmatprep.subr.bf16.mxu0 0
    %6585 = vmatpush1.bf16.msra.mxu0 0
    %6586 = vmatprep.subr.bf16.mxu0 0
    %6587 = vmatpush1.bf16.msra.mxu0 0
    %6588 = vmatprep.subr.bf16.mxu0 0
    %6589 = vmatpush1.bf16.msra.mxu0 0
    %6590 = vmatprep.subr.bf16.mxu0 0
    %6591 = vmatpush1.bf16.msra.mxu0 0
    %6592 = vmatprep.subr.bf16.mxu0 0
    %6593 = vmatpush1.bf16.msra.mxu0 0
    %6594 = vmatprep.subr.bf16.mxu0 0
    %6595 = vmatpush1.bf16.msra.mxu0 0
    %6596 = vmatprep.subr.bf16.mxu0 0
    %6597 = vmatpush1.bf16.msra.mxu0 0
    %6598 = vmatprep.subr.bf16.mxu0 0
    %6599 = vmatpush1.bf16.msra.mxu0 0
    %6600 = vmatprep.mubr.bf16.mxu0 0
    %6601 = vmatmul.mubr.bf16.gmra.mrb[0].mxu0 %v6567
    %v6602 = vpop.f32.mrb[0].mxu0
    %v6603 = vadd.f32 0.0, %v6602
    %v6604 = vpop.f32.mrb[0].mxu0
    %v6605 = vpop.f32.mrb[0].mxu0
    %v6606 = vpop.f32.mrb[0].mxu0
    %6607 = vdwg.mxu0
    %v6609 = vcombine.high %v6603, %v6603
    %v6611 = vunpack.c.l.s4 1966171168
    %v6612 = vunpack.c.0.s8 %v6611
    %v6613 = vlaneseq
    %v6614 = vshrl.u32 %v6613, 7
    %v6615 = vsub.s32 %v6612, %v6614
    %v6616 = vrot.slane %v6603, %v6615
    %v6618 = vunpack.c.l.s4 1966171168
    %v6619 = vunpack.c.0.s8 %v6618
    %v6620 = vlaneseq
    %v6621 = vshrl.u32 %v6620, 7
    %v6622 = vsub.s32 %v6619, %v6621
    %v6623 = vrot.slane %v6609, %v6622
    %v6624 = vcombine.high %v6616, %v6616
    %v6625 = vcombine.high %v6623, %v6623
    %v6627 = vunpack.c.l.s4 1966171168
    %v6628 = vunpack.c.0.s8 %v6627
    %v6629 = vlaneseq
    %v6630 = vshrl.u32 %v6629, 7
    %v6631 = vsub.s32 %v6628, %v6630
    %v6632 = vrot.slane %v6616, %v6631
    %v6634 = vunpack.c.l.s4 1966171168
    %v6635 = vunpack.c.0.s8 %v6634
    %v6636 = vlaneseq
    %v6637 = vshrl.u32 %v6636, 7
    %v6638 = vsub.s32 %v6635, %v6637
    %v6639 = vrot.slane %v6623, %v6638
    %v6641 = vunpack.c.l.s4 1966171168
    %v6642 = vunpack.c.0.s8 %v6641
    %v6643 = vlaneseq
    %v6644 = vshrl.u32 %v6643, 7
    %v6645 = vsub.s32 %v6642, %v6644
    %v6646 = vrot.slane %v6624, %v6645
    %v6648 = vunpack.c.l.s4 1966171168
    %v6649 = vunpack.c.0.s8 %v6648
    %v6650 = vlaneseq
    %v6651 = vshrl.u32 %v6650, 7
    %v6652 = vsub.s32 %v6649, %v6651
    %v6653 = vrot.slane %v6625, %v6652
    %v6654 = vcombine.high %v6632, %v6632
    %v6655 = vcombine.high %v6639, %v6639
    %v6656 = vcombine.high %v6646, %v6646
    %v6657 = vcombine.high %v6653, %v6653
    %v6658 = vlaneseq
    %v6659 = vshrl.u32 %v6658, 7
    %v6660 = vsub.s32 0, %v6659
    %v6661 = vrot.slane %v6632, %v6660
    %v6662 = vlaneseq
    %v6663 = vshrl.u32 %v6662, 7
    %v6664 = vsub.s32 0, %v6663
    %v6665 = vrot.slane %v6646, %v6664
    %v6666 = vlaneseq
    %v6667 = vshrl.u32 %v6666, 7
    %v6668 = vsub.s32 0, %v6667
    %v6669 = vrot.slane %v6654, %v6668
    %v6670 = vlaneseq
    %v6671 = vshrl.u32 %v6670, 7
    %v6672 = vsub.s32 0, %v6671
    %v6673 = vrot.slane %v6656, %v6672
    %v6674 = vlaneseq
    %v6675 = vshrl.u32 %v6674, 7
    %v6676 = vsub.s32 0, %v6675
    %v6677 = vrot.slane %v6639, %v6676
    %v6678 = vlaneseq
    %v6679 = vshrl.u32 %v6678, 7
    %v6680 = vsub.s32 0, %v6679
    %v6681 = vrot.slane %v6653, %v6680
    %v6682 = vlaneseq
    %v6683 = vshrl.u32 %v6682, 7
    %v6684 = vsub.s32 0, %v6683
    %v6685 = vrot.slane %v6655, %v6684
    %v6686 = vlaneseq
    %v6687 = vshrl.u32 %v6686, 7
    %v6688 = vsub.s32 0, %v6687
    %v6689 = vrot.slane %v6657, %v6688
    %v6698 = vadd.f32 %v193, %v6661
    %v6699 = vadd.f32 %v194, %v6661
    %v6700 = vadd.f32 %v195, %v6665
    %v6701 = vadd.f32 %v196, %v6665
    %v6702 = vadd.f32 %v197, %v6669
    %v6703 = vadd.f32 %v198, %v6669
    %v6704 = vadd.f32 %v199, %v6673
    %v6705 = vadd.f32 %v200, %v6673
    %v6706 = vadd.f32 %v201, %v6677
    %v6707 = vadd.f32 %v202, %v6677
    %v6708 = vadd.f32 %v203, %v6681
    %v6709 = vadd.f32 %v204, %v6681
    %v6710 = vadd.f32 %v205, %v6685
    %v6711 = vadd.f32 %v206, %v6685
    %v6712 = vadd.f32 %v207, %v6689
    %v6713 = vadd.f32 %v208, %v6689
    %v6714 = vtanh.pop %v6698
    %v6715 = vtanh.pop %v6699
    %v6716 = vtanh.pop %v6700
    %v6717 = vtanh.pop %v6701
    %v6718 = vtanh.pop %v6702
    %v6719 = vtanh.pop %v6703
    %v6720 = vtanh.pop %v6704
    %v6721 = vtanh.pop %v6705
    %v6722 = vtanh.pop %v6706
    %v6723 = vtanh.pop %v6707
    %v6724 = vtanh.pop %v6708
    %v6725 = vtanh.pop %v6709
    %v6726 = vtanh.pop %v6710
    %v6727 = vtanh.pop %v6711
    %v6728 = vtanh.pop %v6712
    %v6729 = vtanh.pop %v6713
    %v6730 = vmul.f32 %v6714, %v562
    %v6731 = vmul.f32 %v6715, %v562
    %v6732 = vmul.f32 %v6716, %v562
    %v6733 = vmul.f32 %v6717, %v562
    %v6734 = vmul.f32 %v6718, %v562
    %v6735 = vmul.f32 %v6719, %v562
    %v6736 = vmul.f32 %v6720, %v562
    %v6737 = vmul.f32 %v6721, %v562
    %v6738 = vmul.f32 %v6722, %v562
    %v6739 = vmul.f32 %v6723, %v562
    %v6740 = vmul.f32 %v6724, %v562
    %v6741 = vmul.f32 %v6725, %v562
    %v6742 = vmul.f32 %v6726, %v562
    %v6743 = vmul.f32 %v6727, %v562
    %v6744 = vmul.f32 %v6728, %v562
    %v6745 = vmul.f32 %v6729, %v562
    %6746 = vadd.xlane.f32.xlu0 %v6730
    %v6747 = vpop.xlane.xlu0 %6746
    %6748 = vadd.xlane.f32.xlu0 %v6731
    %v6749 = vpop.xlane.xlu0 %6748
    %6750 = vadd.xlane.f32.xlu0 %v6732
    %v6751 = vpop.xlane.xlu0 %6750
    %6752 = vadd.xlane.f32.xlu0 %v6733
    %v6753 = vpop.xlane.xlu0 %6752
    %6754 = vadd.xlane.f32.xlu0 %v6734
    %v6755 = vpop.xlane.xlu0 %6754
    %6756 = vadd.xlane.f32.xlu0 %v6735
    %v6757 = vpop.xlane.xlu0 %6756
    %6758 = vadd.xlane.f32.xlu0 %v6736
    %v6759 = vpop.xlane.xlu0 %6758
    %6760 = vadd.xlane.f32.xlu0 %v6737
    %v6761 = vpop.xlane.xlu0 %6760
    %6762 = vadd.xlane.f32.xlu0 %v6738
    %v6763 = vpop.xlane.xlu0 %6762
    %6764 = vadd.xlane.f32.xlu0 %v6739
    %v6765 = vpop.xlane.xlu0 %6764
    %6766 = vadd.xlane.f32.xlu0 %v6740
    %v6767 = vpop.xlane.xlu0 %6766
    %6768 = vadd.xlane.f32.xlu0 %v6741
    %v6769 = vpop.xlane.xlu0 %6768
    %6770 = vadd.xlane.f32.xlu0 %v6742
    %v6771 = vpop.xlane.xlu0 %6770
    %6772 = vadd.xlane.f32.xlu0 %v6743
    %v6773 = vpop.xlane.xlu0 %6772
    %6774 = vadd.xlane.f32.xlu0 %v6744
    %v6775 = vpop.xlane.xlu0 %6774
    %6776 = vadd.xlane.f32.xlu0 %v6745
    %v6777 = vpop.xlane.xlu0 %6776
    %v6794 = vlaneseq
    %v6795 = vshrl.u32 %v6794, 7
    %v6796 = vsub.s32 %v629, %v6795
    %v6797 = vrot.slane %v6747, %v6796
    %v6798 = vlaneseq
    %v6799 = vshrl.u32 %v6798, 7
    %v6800 = vsub.s32 %v634, %v6799
    %v6801 = vrot.slane %v6749, %v6800
    %v6802 = vsel %vm639, %v6801, %v6797
    %v6803 = vlaneseq
    %v6804 = vshrl.u32 %v6803, 7
    %v6805 = vsub.s32 %v629, %v6804
    %v6806 = vrot.slane %v6751, %v6805
    %v6807 = vlaneseq
    %v6808 = vshrl.u32 %v6807, 7
    %v6809 = vsub.s32 %v634, %v6808
    %v6810 = vrot.slane %v6753, %v6809
    %v6811 = vsel %vm639, %v6810, %v6806
    %v6812 = vlaneseq
    %v6813 = vshrl.u32 %v6812, 7
    %v6814 = vsub.s32 %v629, %v6813
    %v6815 = vrot.slane %v6755, %v6814
    %v6816 = vlaneseq
    %v6817 = vshrl.u32 %v6816, 7
    %v6818 = vsub.s32 %v634, %v6817
    %v6819 = vrot.slane %v6757, %v6818
    %v6820 = vsel %vm639, %v6819, %v6815
    %v6821 = vlaneseq
    %v6822 = vshrl.u32 %v6821, 7
    %v6823 = vsub.s32 %v629, %v6822
    %v6824 = vrot.slane %v6759, %v6823
    %v6825 = vlaneseq
    %v6826 = vshrl.u32 %v6825, 7
    %v6827 = vsub.s32 %v634, %v6826
    %v6828 = vrot.slane %v6761, %v6827
    %v6829 = vsel %vm639, %v6828, %v6824
    %v6830 = vlaneseq
    %v6831 = vshrl.u32 %v6830, 7
    %v6832 = vsub.s32 %v629, %v6831
    %v6833 = vrot.slane %v6763, %v6832
    %v6834 = vlaneseq
    %v6835 = vshrl.u32 %v6834, 7
    %v6836 = vsub.s32 %v634, %v6835
    %v6837 = vrot.slane %v6765, %v6836
    %v6838 = vsel %vm639, %v6837, %v6833
    %v6839 = vlaneseq
    %v6840 = vshrl.u32 %v6839, 7
    %v6841 = vsub.s32 %v629, %v6840
    %v6842 = vrot.slane %v6767, %v6841
    %v6843 = vlaneseq
    %v6844 = vshrl.u32 %v6843, 7
    %v6845 = vsub.s32 %v634, %v6844
    %v6846 = vrot.slane %v6769, %v6845
    %v6847 = vsel %vm639, %v6846, %v6842
    %v6848 = vlaneseq
    %v6849 = vshrl.u32 %v6848, 7
    %v6850 = vsub.s32 %v629, %v6849
    %v6851 = vrot.slane %v6771, %v6850
    %v6852 = vlaneseq
    %v6853 = vshrl.u32 %v6852, 7
    %v6854 = vsub.s32 %v634, %v6853
    %v6855 = vrot.slane %v6773, %v6854
    %v6856 = vsel %vm639, %v6855, %v6851
    %v6857 = vlaneseq
    %v6858 = vshrl.u32 %v6857, 7
    %v6859 = vsub.s32 %v629, %v6858
    %v6860 = vrot.slane %v6775, %v6859
    %v6861 = vlaneseq
    %v6862 = vshrl.u32 %v6861, 7
    %v6863 = vsub.s32 %v634, %v6862
    %v6864 = vrot.slane %v6777, %v6863
    %v6865 = vsel %vm639, %v6864, %v6860
    %v6866 = vsel %vm704, %v6811, %v6802
    %v6867 = vsel %vm706, %v6820, %v6866
    %v6868 = vsel %vm708, %v6829, %v6867
    %v6869 = vsel %vm710, %v6838, %v6868
    %v6870 = vsel %vm712, %v6847, %v6869
    %v6871 = vsel %vm714, %v6856, %v6870
    %v6872 = vsel %vm716, %v6865, %v6871
    %v6874 = vsel %vm719, %v6872, -inf
    %6875 = vmax.xlane.f32.xlu0 %v6874
    %v6876 = vpop.xlane.xlu0 %6875
    %v6878 = vlaneseq
    %v6879 = vshrl.u32 %v6878, 7
    %v6880 = vsub.s32 0, %v6879
    %v6881 = vrot.slane %v6876, %v6880
    %v6882 = vlaneseq
    %v6883 = vshrl.u32 %v6882, 7
    %v6884 = vsub.s32 1, %v6883
    %v6885 = vrot.slane %v6876, %v6884
    %v6886 = vlaneseq
    %v6887 = vshrl.u32 %v6886, 7
    %v6888 = vsub.s32 2, %v6887
    %v6889 = vrot.slane %v6876, %v6888
    %v6890 = vlaneseq
    %v6891 = vshrl.u32 %v6890, 7
    %v6892 = vsub.s32 3, %v6891
    %v6893 = vrot.slane %v6876, %v6892
    %v6894 = vlaneseq
    %v6895 = vshrl.u32 %v6894, 7
    %v6896 = vsub.s32 4, %v6895
    %v6897 = vrot.slane %v6876, %v6896
    %v6898 = vlaneseq
    %v6899 = vshrl.u32 %v6898, 7
    %v6900 = vsub.s32 5, %v6899
    %v6901 = vrot.slane %v6876, %v6900
    %v6902 = vlaneseq
    %v6903 = vshrl.u32 %v6902, 7
    %v6904 = vsub.s32 6, %v6903
    %v6905 = vrot.slane %v6876, %v6904
    %v6906 = vlaneseq
    %v6907 = vshrl.u32 %v6906, 7
    %v6908 = vsub.s32 7, %v6907
    %v6909 = vrot.slane %v6876, %v6908
    %v6918 = vsub.f32 %v6747, %v6881
    %v6919 = vsub.f32 %v6749, %v6881
    %v6920 = vsub.f32 %v6751, %v6885
    %v6921 = vsub.f32 %v6753, %v6885
    %v6922 = vsub.f32 %v6755, %v6889
    %v6923 = vsub.f32 %v6757, %v6889
    %v6924 = vsub.f32 %v6759, %v6893
    %v6925 = vsub.f32 %v6761, %v6893
    %v6926 = vsub.f32 %v6763, %v6897
    %v6927 = vsub.f32 %v6765, %v6897
    %v6928 = vsub.f32 %v6767, %v6901
    %v6929 = vsub.f32 %v6769, %v6901
    %v6930 = vsub.f32 %v6771, %v6905
    %v6931 = vsub.f32 %v6773, %v6905
    %v6932 = vsub.f32 %v6775, %v6909
    %v6933 = vsub.f32 %v6777, %v6909
    %v6934 = vmul.f32 %v6918, 1.442695
    %v6935 = vpow.pop %v6934
    %v6936 = vmul.f32 %v6919, 1.442695
    %v6937 = vpow.pop %v6936
    %v6938 = vmul.f32 %v6920, 1.442695
    %v6939 = vpow.pop %v6938
    %v6940 = vmul.f32 %v6921, 1.442695
    %v6941 = vpow.pop %v6940
    %v6942 = vmul.f32 %v6922, 1.442695
    %v6943 = vpow.pop %v6942
    %v6944 = vmul.f32 %v6923, 1.442695
    %v6945 = vpow.pop %v6944
    %v6946 = vmul.f32 %v6924, 1.442695
    %v6947 = vpow.pop %v6946
    %v6948 = vmul.f32 %v6925, 1.442695
    %v6949 = vpow.pop %v6948
    %v6950 = vmul.f32 %v6926, 1.442695
    %v6951 = vpow.pop %v6950
    %v6952 = vmul.f32 %v6927, 1.442695
    %v6953 = vpow.pop %v6952
    %v6954 = vmul.f32 %v6928, 1.442695
    %v6955 = vpow.pop %v6954
    %v6956 = vmul.f32 %v6929, 1.442695
    %v6957 = vpow.pop %v6956
    %v6958 = vmul.f32 %v6930, 1.442695
    %v6959 = vpow.pop %v6958
    %v6960 = vmul.f32 %v6931, 1.442695
    %v6961 = vpow.pop %v6960
    %v6962 = vmul.f32 %v6932, 1.442695
    %v6963 = vpow.pop %v6962
    %v6964 = vmul.f32 %v6933, 1.442695
    %v6965 = vpow.pop %v6964
    %6982 = vset.pattern.permute.xlu0 0
    %6983 = vperm.xlu0 %6982, %v6935
    %v6984 = vpop.permute.xlu0 %6983
    %6985 = vset.pattern.permute.xlu0 0
    %6986 = vperm.xlu0 %6985, %v6937
    %v6987 = vpop.permute.xlu0 %6986
    %6988 = vset.pattern.permute.xlu0 0
    %6989 = vperm.xlu0 %6988, %v6939
    %v6990 = vpop.permute.xlu0 %6989
    %6991 = vset.pattern.permute.xlu0 0
    %6992 = vperm.xlu0 %6991, %v6941
    %v6993 = vpop.permute.xlu0 %6992
    %6994 = vset.pattern.permute.xlu0 0
    %6995 = vperm.xlu0 %6994, %v6943
    %v6996 = vpop.permute.xlu0 %6995
    %6997 = vset.pattern.permute.xlu0 0
    %6998 = vperm.xlu0 %6997, %v6945
    %v6999 = vpop.permute.xlu0 %6998
    %7000 = vset.pattern.permute.xlu0 0
    %7001 = vperm.xlu0 %7000, %v6947
    %v7002 = vpop.permute.xlu0 %7001
    %7003 = vset.pattern.permute.xlu0 0
    %7004 = vperm.xlu0 %7003, %v6949
    %v7005 = vpop.permute.xlu0 %7004
    %7006 = vset.pattern.permute.xlu0 0
    %7007 = vperm.xlu0 %7006, %v6951
    %v7008 = vpop.permute.xlu0 %7007
    %7009 = vset.pattern.permute.xlu0 0
    %7010 = vperm.xlu0 %7009, %v6953
    %v7011 = vpop.permute.xlu0 %7010
    %7012 = vset.pattern.permute.xlu0 0
    %7013 = vperm.xlu0 %7012, %v6955
    %v7014 = vpop.permute.xlu0 %7013
    %7015 = vset.pattern.permute.xlu0 0
    %7016 = vperm.xlu0 %7015, %v6957
    %v7017 = vpop.permute.xlu0 %7016
    %7018 = vset.pattern.permute.xlu0 0
    %7019 = vperm.xlu0 %7018, %v6959
    %v7020 = vpop.permute.xlu0 %7019
    %7021 = vset.pattern.permute.xlu0 0
    %7022 = vperm.xlu0 %7021, %v6961
    %v7023 = vpop.permute.xlu0 %7022
    %7024 = vset.pattern.permute.xlu0 0
    %7025 = vperm.xlu0 %7024, %v6963
    %v7026 = vpop.permute.xlu0 %7025
    %7027 = vset.pattern.permute.xlu0 0
    %7028 = vperm.xlu0 %7027, %v6965
    %v7029 = vpop.permute.xlu0 %7028
    %v7030 = vlaneseq
    %v7031 = vshrl.u32 %v7030, 7
    %v7032 = vsub.s32 %v629, %v7031
    %v7033 = vrot.slane %v6984, %v7032
    %v7034 = vlaneseq
    %v7035 = vshrl.u32 %v7034, 7
    %v7036 = vsub.s32 %v634, %v7035
    %v7037 = vrot.slane %v6987, %v7036
    %v7038 = vsel %vm639, %v7037, %v7033
    %v7039 = vlaneseq
    %v7040 = vshrl.u32 %v7039, 7
    %v7041 = vsub.s32 %v629, %v7040
    %v7042 = vrot.slane %v6990, %v7041
    %v7043 = vlaneseq
    %v7044 = vshrl.u32 %v7043, 7
    %v7045 = vsub.s32 %v634, %v7044
    %v7046 = vrot.slane %v6993, %v7045
    %v7047 = vsel %vm639, %v7046, %v7042
    %v7048 = vlaneseq
    %v7049 = vshrl.u32 %v7048, 7
    %v7050 = vsub.s32 %v629, %v7049
    %v7051 = vrot.slane %v6996, %v7050
    %v7052 = vlaneseq
    %v7053 = vshrl.u32 %v7052, 7
    %v7054 = vsub.s32 %v634, %v7053
    %v7055 = vrot.slane %v6999, %v7054
    %v7056 = vsel %vm639, %v7055, %v7051
    %v7057 = vlaneseq
    %v7058 = vshrl.u32 %v7057, 7
    %v7059 = vsub.s32 %v629, %v7058
    %v7060 = vrot.slane %v7002, %v7059
    %v7061 = vlaneseq
    %v7062 = vshrl.u32 %v7061, 7
    %v7063 = vsub.s32 %v634, %v7062
    %v7064 = vrot.slane %v7005, %v7063
    %v7065 = vsel %vm639, %v7064, %v7060
    %v7066 = vlaneseq
    %v7067 = vshrl.u32 %v7066, 7
    %v7068 = vsub.s32 %v629, %v7067
    %v7069 = vrot.slane %v7008, %v7068
    %v7070 = vlaneseq
    %v7071 = vshrl.u32 %v7070, 7
    %v7072 = vsub.s32 %v634, %v7071
    %v7073 = vrot.slane %v7011, %v7072
    %v7074 = vsel %vm639, %v7073, %v7069
    %v7075 = vlaneseq
    %v7076 = vshrl.u32 %v7075, 7
    %v7077 = vsub.s32 %v629, %v7076
    %v7078 = vrot.slane %v7014, %v7077
    %v7079 = vlaneseq
    %v7080 = vshrl.u32 %v7079, 7
    %v7081 = vsub.s32 %v634, %v7080
    %v7082 = vrot.slane %v7017, %v7081
    %v7083 = vsel %vm639, %v7082, %v7078
    %v7084 = vlaneseq
    %v7085 = vshrl.u32 %v7084, 7
    %v7086 = vsub.s32 %v629, %v7085
    %v7087 = vrot.slane %v7020, %v7086
    %v7088 = vlaneseq
    %v7089 = vshrl.u32 %v7088, 7
    %v7090 = vsub.s32 %v634, %v7089
    %v7091 = vrot.slane %v7023, %v7090
    %v7092 = vsel %vm639, %v7091, %v7087
    %v7093 = vlaneseq
    %v7094 = vshrl.u32 %v7093, 7
    %v7095 = vsub.s32 %v629, %v7094
    %v7096 = vrot.slane %v7026, %v7095
    %v7097 = vlaneseq
    %v7098 = vshrl.u32 %v7097, 7
    %v7099 = vsub.s32 %v634, %v7098
    %v7100 = vrot.slane %v7029, %v7099
    %v7101 = vsel %vm639, %v7100, %v7096
    %v7102 = vsel %vm704, %v7047, %v7038
    %v7103 = vsel %vm706, %v7056, %v7102
    %v7104 = vsel %vm708, %v7065, %v7103
    %v7105 = vsel %vm710, %v7074, %v7104
    %v7106 = vsel %vm712, %v7083, %v7105
    %v7107 = vsel %vm714, %v7092, %v7106
    %v7108 = vsel %vm716, %v7101, %v7107
    %v7110 = vsel %vm719, %v7108, 0.0
    %7111 = vadd.xlane.f32.xlu0 %v7110
    %v7112 = vpop.xlane.xlu0 %7111
    %v7113 = vrcp.pop %v7112
    %v7115 = vlaneseq
    %v7116 = vshrl.u32 %v7115, 7
    %v7117 = vsub.s32 0, %v7116
    %v7118 = vrot.slane %v7113, %v7117
    %v7119 = vlaneseq
    %v7120 = vshrl.u32 %v7119, 7
    %v7121 = vsub.s32 1, %v7120
    %v7122 = vrot.slane %v7113, %v7121
    %v7123 = vlaneseq
    %v7124 = vshrl.u32 %v7123, 7
    %v7125 = vsub.s32 2, %v7124
    %v7126 = vrot.slane %v7113, %v7125
    %v7127 = vlaneseq
    %v7128 = vshrl.u32 %v7127, 7
    %v7129 = vsub.s32 3, %v7128
    %v7130 = vrot.slane %v7113, %v7129
    %v7131 = vlaneseq
    %v7132 = vshrl.u32 %v7131, 7
    %v7133 = vsub.s32 4, %v7132
    %v7134 = vrot.slane %v7113, %v7133
    %v7135 = vlaneseq
    %v7136 = vshrl.u32 %v7135, 7
    %v7137 = vsub.s32 5, %v7136
    %v7138 = vrot.slane %v7113, %v7137
    %v7139 = vlaneseq
    %v7140 = vshrl.u32 %v7139, 7
    %v7141 = vsub.s32 6, %v7140
    %v7142 = vrot.slane %v7113, %v7141
    %v7143 = vlaneseq
    %v7144 = vshrl.u32 %v7143, 7
    %v7145 = vsub.s32 7, %v7144
    %v7146 = vrot.slane %v7113, %v7145
    %v7155 = vmul.f32 %v6935, %v7118
    %v7156 = vmul.f32 %v6937, %v7118
    %v7157 = vmul.f32 %v6939, %v7122
    %v7158 = vmul.f32 %v6941, %v7122
    %v7159 = vmul.f32 %v6943, %v7126
    %v7160 = vmul.f32 %v6945, %v7126
    %v7161 = vmul.f32 %v6947, %v7130
    %v7162 = vmul.f32 %v6949, %v7130
    %v7163 = vmul.f32 %v6951, %v7134
    %v7164 = vmul.f32 %v6953, %v7134
    %v7165 = vmul.f32 %v6955, %v7138
    %v7166 = vmul.f32 %v6957, %v7138
    %v7167 = vmul.f32 %v6959, %v7142
    %v7168 = vmul.f32 %v6961, %v7142
    %v7169 = vmul.f32 %v6963, %v7146
    %v7170 = vmul.f32 %v6965, %v7146
    %7172 = vset.pattern.permute.xlu0 0
    %7173 = vperm.xlu0 %7172, %v7155
    %v7174 = vpop.permute.xlu0 %7173
    %7177 = vset.pattern.permute.xlu0 0
    %7178 = vperm.xlu0 %7177, %v7156
    %v7179 = vpop.permute.xlu0 %7178
    %7182 = vset.pattern.permute.xlu0 0
    %7183 = vperm.xlu0 %7182, %v7157
    %v7184 = vpop.permute.xlu0 %7183
    %7187 = vset.pattern.permute.xlu0 0
    %7188 = vperm.xlu0 %7187, %v7158
    %v7189 = vpop.permute.xlu0 %7188
    %7192 = vset.pattern.permute.xlu0 0
    %7193 = vperm.xlu0 %7192, %v7159
    %v7194 = vpop.permute.xlu0 %7193
    %7197 = vset.pattern.permute.xlu0 0
    %7198 = vperm.xlu0 %7197, %v7160
    %v7199 = vpop.permute.xlu0 %7198
    %7202 = vset.pattern.permute.xlu0 0
    %7203 = vperm.xlu0 %7202, %v7161
    %v7204 = vpop.permute.xlu0 %7203
    %7207 = vset.pattern.permute.xlu0 0
    %7208 = vperm.xlu0 %7207, %v7162
    %v7209 = vpop.permute.xlu0 %7208
    %7212 = vset.pattern.permute.xlu0 0
    %7213 = vperm.xlu0 %7212, %v7163
    %v7214 = vpop.permute.xlu0 %7213
    %7217 = vset.pattern.permute.xlu0 0
    %7218 = vperm.xlu0 %7217, %v7164
    %v7219 = vpop.permute.xlu0 %7218
    %7222 = vset.pattern.permute.xlu0 0
    %7223 = vperm.xlu0 %7222, %v7165
    %v7224 = vpop.permute.xlu0 %7223
    %7227 = vset.pattern.permute.xlu0 0
    %7228 = vperm.xlu0 %7227, %v7166
    %v7229 = vpop.permute.xlu0 %7228
    %7232 = vset.pattern.permute.xlu0 0
    %7233 = vperm.xlu0 %7232, %v7167
    %v7234 = vpop.permute.xlu0 %7233
    %7237 = vset.pattern.permute.xlu0 0
    %7238 = vperm.xlu0 %7237, %v7168
    %v7239 = vpop.permute.xlu0 %7238
    %7242 = vset.pattern.permute.xlu0 0
    %7243 = vperm.xlu0 %7242, %v7169
    %v7244 = vpop.permute.xlu0 %7243
    %7247 = vset.pattern.permute.xlu0 0
    %7248 = vperm.xlu0 %7247, %v7170
    %v7249 = vpop.permute.xlu0 %7248
    %v7251 = vmul.f32 %v177, %v7174
    %v7252 = vmul.f32 %v178, %v7179
    %v7253 = vmul.f32 %v179, %v7184
    %v7254 = vmul.f32 %v180, %v7189
    %v7255 = vmul.f32 %v181, %v7194
    %v7256 = vmul.f32 %v182, %v7199
    %v7257 = vmul.f32 %v183, %v7204
    %v7258 = vmul.f32 %v184, %v7209
    %v7259 = vmul.f32 %v185, %v7214
    %v7260 = vmul.f32 %v186, %v7219
    %v7261 = vmul.f32 %v187, %v7224
    %v7262 = vmul.f32 %v188, %v7229
    %v7263 = vmul.f32 %v189, %v7234
    %v7264 = vmul.f32 %v190, %v7239
    %v7265 = vmul.f32 %v191, %v7244
    %v7266 = vmul.f32 %v192, %v7249
    %v7267 = vsel %vm1113, %v7251, 0.0
    %v7268 = vsel %vm1113, %v7252, 0.0
    %v7269 = vadd.f32 %v7267, %v7268
    %v7270 = vrot.slane %v7269, 4
    %v7271 = vadd.f32 %v7269, %v7270
    %v7272 = vrot.slane %v7271, 2
    %v7273 = vadd.f32 %v7271, %v7272
    %v7274 = vrot.slane %v7273, 1
    %v7275 = vadd.f32 %v7273, %v7274
    %v7276 = vsel %vm1113, %v7253, 0.0
    %v7277 = vsel %vm1113, %v7254, 0.0
    %v7278 = vadd.f32 %v7276, %v7277
    %v7279 = vrot.slane %v7278, 4
    %v7280 = vadd.f32 %v7278, %v7279
    %v7281 = vrot.slane %v7280, 2
    %v7282 = vadd.f32 %v7280, %v7281
    %v7283 = vrot.slane %v7282, 1
    %v7284 = vadd.f32 %v7282, %v7283
    %v7285 = vsel %vm1113, %v7255, 0.0
    %v7286 = vsel %vm1113, %v7256, 0.0
    %v7287 = vadd.f32 %v7285, %v7286
    %v7288 = vrot.slane %v7287, 4
    %v7289 = vadd.f32 %v7287, %v7288
    %v7290 = vrot.slane %v7289, 2
    %v7291 = vadd.f32 %v7289, %v7290
    %v7292 = vrot.slane %v7291, 1
    %v7293 = vadd.f32 %v7291, %v7292
    %v7294 = vsel %vm1113, %v7257, 0.0
    %v7295 = vsel %vm1113, %v7258, 0.0
    %v7296 = vadd.f32 %v7294, %v7295
    %v7297 = vrot.slane %v7296, 4
    %v7298 = vadd.f32 %v7296, %v7297
    %v7299 = vrot.slane %v7298, 2
    %v7300 = vadd.f32 %v7298, %v7299
    %v7301 = vrot.slane %v7300, 1
    %v7302 = vadd.f32 %v7300, %v7301
    %v7303 = vsel %vm1113, %v7259, 0.0
    %v7304 = vsel %vm1113, %v7260, 0.0
    %v7305 = vadd.f32 %v7303, %v7304
    %v7306 = vrot.slane %v7305, 4
    %v7307 = vadd.f32 %v7305, %v7306
    %v7308 = vrot.slane %v7307, 2
    %v7309 = vadd.f32 %v7307, %v7308
    %v7310 = vrot.slane %v7309, 1
    %v7311 = vadd.f32 %v7309, %v7310
    %v7312 = vsel %vm1113, %v7261, 0.0
    %v7313 = vsel %vm1113, %v7262, 0.0
    %v7314 = vadd.f32 %v7312, %v7313
    %v7315 = vrot.slane %v7314, 4
    %v7316 = vadd.f32 %v7314, %v7315
    %v7317 = vrot.slane %v7316, 2
    %v7318 = vadd.f32 %v7316, %v7317
    %v7319 = vrot.slane %v7318, 1
    %v7320 = vadd.f32 %v7318, %v7319
    %v7321 = vsel %vm1113, %v7263, 0.0
    %v7322 = vsel %vm1113, %v7264, 0.0
    %v7323 = vadd.f32 %v7321, %v7322
    %v7324 = vrot.slane %v7323, 4
    %v7325 = vadd.f32 %v7323, %v7324
    %v7326 = vrot.slane %v7325, 2
    %v7327 = vadd.f32 %v7325, %v7326
    %v7328 = vrot.slane %v7327, 1
    %v7329 = vadd.f32 %v7327, %v7328
    %v7330 = vsel %vm1113, %v7265, 0.0
    %v7331 = vsel %vm1113, %v7266, 0.0
    %v7332 = vadd.f32 %v7330, %v7331
    %v7333 = vrot.slane %v7332, 4
    %v7334 = vadd.f32 %v7332, %v7333
    %v7335 = vrot.slane %v7334, 2
    %v7336 = vadd.f32 %v7334, %v7335
    %v7337 = vrot.slane %v7336, 1
    %v7338 = vadd.f32 %v7336, %v7337
    %v7339 = vpack.c.bf16 %v7275, %v7275
    %v7340 = vpack.c.bf16 %v7284, %v7284
    %v7341 = vpack.c.bf16 %v7293, %v7293
    %v7342 = vpack.c.bf16 %v7302, %v7302
    %v7343 = vpack.c.bf16 %v7311, %v7311
    %v7344 = vpack.c.bf16 %v7320, %v7320
    %v7345 = vpack.c.bf16 %v7329, %v7329
    %v7346 = vpack.c.bf16 %v7338, %v7338
    %v7355 = vunpack.c.l.b16 %v7339
    %v7356 = vunpack.c.l.b16 %v7340
    %v7357 = vunpack.c.l.b16 %v7341
    %v7358 = vunpack.c.l.b16 %v7342
    %v7359 = vunpack.c.l.b16 %v7343
    %v7360 = vunpack.c.l.b16 %v7344
    %v7361 = vunpack.c.l.b16 %v7345
    %v7362 = vunpack.c.l.b16 %v7346
    %v7363 = vsel %vm704, %v7356, %v7355
    %v7364 = vsel %vm706, %v7357, %v7363
    %v7365 = vsel %vm708, %v7358, %v7364
    %v7366 = vsel %vm710, %v7359, %v7365
    %v7367 = vsel %vm712, %v7360, %v7366
    %v7368 = vsel %vm714, %v7361, %v7367
    %v7369 = vsel %vm716, %v7362, %v7368
    %v7370 = vpack.c.b16 %v7369, %v7369
    %v7372 = vsel %vm1113, %v7370, 0
    %7374 = vmatprep.subr.bf16.mxu0 %v1231
    %7375 = vmatpush1.bf16.msra.mxu0 %v1230
    %7376 = vmatprep.subr.bf16.mxu0 %v1233
    %7377 = vmatpush1.bf16.msra.mxu0 %v1232
    %7378 = vmatprep.subr.bf16.mxu0 0
    %7379 = vmatpush1.bf16.msra.mxu0 0
    %7380 = vmatprep.subr.bf16.mxu0 0
    %7381 = vmatpush1.bf16.msra.mxu0 0
    %7382 = vmatprep.subr.bf16.mxu0 0
    %7383 = vmatpush1.bf16.msra.mxu0 0
    %7384 = vmatprep.subr.bf16.mxu0 0
    %7385 = vmatpush1.bf16.msra.mxu0 0
    %7386 = vmatprep.subr.bf16.mxu0 0
    %7387 = vmatpush1.bf16.msra.mxu0 0
    %7388 = vmatprep.subr.bf16.mxu0 0
    %7389 = vmatpush1.bf16.msra.mxu0 0
    %7390 = vmatprep.subr.bf16.mxu0 0
    %7391 = vmatpush1.bf16.msra.mxu0 0
    %7392 = vmatprep.subr.bf16.mxu0 0
    %7393 = vmatpush1.bf16.msra.mxu0 0
    %7394 = vmatprep.subr.bf16.mxu0 0
    %7395 = vmatpush1.bf16.msra.mxu0 0
    %7396 = vmatprep.subr.bf16.mxu0 0
    %7397 = vmatpush1.bf16.msra.mxu0 0
    %7398 = vmatprep.subr.bf16.mxu0 0
    %7399 = vmatpush1.bf16.msra.mxu0 0
    %7400 = vmatprep.subr.bf16.mxu0 0
    %7401 = vmatpush1.bf16.msra.mxu0 0
    %7402 = vmatprep.subr.bf16.mxu0 0
    %7403 = vmatpush1.bf16.msra.mxu0 0
    %7404 = vmatprep.subr.bf16.mxu0 0
    %7405 = vmatpush1.bf16.msra.mxu0 0
    %7406 = vmatprep.mubr.bf16.mxu0 0
    %7407 = vmatmul.mubr.bf16.gmra.mrb[0].mxu0 %v7372
    %v7408 = vpop.f32.mrb[0].mxu0
    %v7409 = vadd.f32 %v316, %v7408
    %v7410 = vpop.f32.mrb[0].mxu0
    %v7411 = vadd.f32 %v320, %v7410
    %v7412 = vpop.f32.mrb[0].mxu0
    %v7413 = vpop.f32.mrb[0].mxu0
    %7414 = vdwg.mxu0
    %s7415 = scalar_lea.vmem [#allocation9], 40
    %v7416 = vld [vmem:[%s7415] sm:$0xff]
    %v7417 = vadd.f32 %v7416, %v7411
    %v7418 = vpack.c.bf16 %v7417, %v7417
    %7419 = vmatprep.subr.bf16.mxu0 %v1382
    %7420 = vmatpush1.bf16.msra.mxu0 %v1381
    %7421 = vmatprep.subr.bf16.mxu0 %v1386
    %7422 = vmatpush1.bf16.msra.mxu0 %v1385
    %7423 = vmatprep.subr.bf16.mxu0 %v1390
    %7424 = vmatpush1.bf16.msra.mxu0 %v1389
    %7425 = vmatprep.subr.bf16.mxu0 %v1394
    %7426 = vmatpush1.bf16.msra.mxu0 %v1393
    %7427 = vmatprep.subr.bf16.mxu0 %v1398
    %7428 = vmatpush1.bf16.msra.mxu0 %v1397
    %7429 = vmatprep.subr.bf16.mxu0 %v1402
    %7430 = vmatpush1.bf16.msra.mxu0 %v1401
    %7431 = vmatprep.subr.bf16.mxu0 %v1406
    %7432 = vmatpush1.bf16.msra.mxu0 %v1405
    %7433 = vmatprep.subr.bf16.mxu0 %v1410
    %7434 = vmatpush1.bf16.msra.mxu0 %v1409
    %7435 = vmatprep.subr.bf16.mxu0 0
    %7436 = vmatpush1.bf16.msra.mxu0 0
    %7437 = vmatprep.subr.bf16.mxu0 0
    %7438 = vmatpush1.bf16.msra.mxu0 0
    %7439 = vmatprep.subr.bf16.mxu0 0
    %7440 = vmatpush1.bf16.msra.mxu0 0
    %7441 = vmatprep.subr.bf16.mxu0 0
    %7442 = vmatpush1.bf16.msra.mxu0 0
    %7443 = vmatprep.subr.bf16.mxu0 0
    %7444 = vmatpush1.bf16.msra.mxu0 0
    %7445 = vmatprep.subr.bf16.mxu0 0
    %7446 = vmatpush1.bf16.msra.mxu0 0
    %7447 = vmatprep.subr.bf16.mxu0 0
    %7448 = vmatpush1.bf16.msra.mxu0 0
    %7449 = vmatprep.subr.bf16.mxu0 0
    %7450 = vmatpush1.bf16.msra.mxu0 0
    %7451 = vmatprep.mubr.bf16.mxu0 0
    %7452 = vmatmul.mubr.bf16.gmra.mrb[0].mxu0 %v6567
    %v7453 = vpop.f32.mrb[0].mxu0
    %v7454 = vadd.f32 0.0, %v7453
    %v7455 = vpop.f32.mrb[0].mxu0
    %v7456 = vadd.f32 0.0, %v7455
    %v7457 = vpop.f32.mrb[0].mxu0
    %v7458 = vpop.f32.mrb[0].mxu0
    %7459 = vdwg.mxu0
    %7460 = vmatprep.subr.bf16.mxu0 %v1384
    %7461 = vmatpush1.bf16.msra.mxu0 %v1383
    %7462 = vmatprep.subr.bf16.mxu0 %v1388
    %7463 = vmatpush1.bf16.msra.mxu0 %v1387
    %7464 = vmatprep.subr.bf16.mxu0 %v1392
    %7465 = vmatpush1.bf16.msra.mxu0 %v1391
    %7466 = vmatprep.subr.bf16.mxu0 %v1396
    %7467 = vmatpush1.bf16.msra.mxu0 %v1395
    %7468 = vmatprep.subr.bf16.mxu0 %v1400
    %7469 = vmatpush1.bf16.msra.mxu0 %v1399
    %7470 = vmatprep.subr.bf16.mxu0 %v1404
    %7471 = vmatpush1.bf16.msra.mxu0 %v1403
    %7472 = vmatprep.subr.bf16.mxu0 %v1408
    %7473 = vmatpush1.bf16.msra.mxu0 %v1407
    %7474 = vmatprep.subr.bf16.mxu0 %v1412
    %7475 = vmatpush1.bf16.msra.mxu0 %v1411
    %7476 = vmatprep.subr.bf16.mxu0 0
    %7477 = vmatpush1.bf16.msra.mxu0 0
    %7478 = vmatprep.subr.bf16.mxu0 0
    %7479 = vmatpush1.bf16.msra.mxu0 0
    %7480 = vmatprep.subr.bf16.mxu0 0
    %7481 = vmatpush1.bf16.msra.mxu0 0
    %7482 = vmatprep.subr.bf16.mxu0 0
    %7483 = vmatpush1.bf16.msra.mxu0 0
    %7484 = vmatprep.subr.bf16.mxu0 0
    %7485 = vmatpush1.bf16.msra.mxu0 0
    %7486 = vmatprep.subr.bf16.mxu0 0
    %7487 = vmatpush1.bf16.msra.mxu0 0
    %7488 = vmatprep.subr.bf16.mxu0 0
    %7489 = vmatpush1.bf16.msra.mxu0 0
    %7490 = vmatprep.subr.bf16.mxu0 0
    %7491 = vmatpush1.bf16.msra.mxu0 0
    %7492 = vmatprep.mubr.bf16.mxu0 0
    %7493 = vmatmul.mubr.bf16.gmra.mrb[0].mxu0 %v6567
    %v7494 = vpop.f32.mrb[0].mxu0
    %v7495 = vadd.f32 0.0, %v7494
    %v7496 = vpop.f32.mrb[0].mxu0
    %v7497 = vadd.f32 0.0, %v7496
    %v7498 = vpop.f32.mrb[0].mxu0
    %v7499 = vpop.f32.mrb[0].mxu0
    %7500 = vdwg.mxu0
    %7501 = vmatprep.subr.bf16.mxu0 %v1624
    %7502 = vmatpush1.bf16.msra.mxu0 %v1623
    %7503 = vmatprep.subr.bf16.mxu0 %v1628
    %7504 = vmatpush1.bf16.msra.mxu0 %v1627
    %7505 = vmatprep.subr.bf16.mxu0 %v1632
    %7506 = vmatpush1.bf16.msra.mxu0 %v1631
    %7507 = vmatprep.subr.bf16.mxu0 %v1636
    %7508 = vmatpush1.bf16.msra.mxu0 %v1635
    %7509 = vmatprep.subr.bf16.mxu0 %v1640
    %7510 = vmatpush1.bf16.msra.mxu0 %v1639
    %7511 = vmatprep.subr.bf16.mxu0 %v1644
    %7512 = vmatpush1.bf16.msra.mxu0 %v1643
    %7513 = vmatprep.subr.bf16.mxu0 %v1648
    %7514 = vmatpush1.bf16.msra.mxu0 %v1647
    %7515 = vmatprep.subr.bf16.mxu0 %v1652
    %7516 = vmatpush1.bf16.msra.mxu0 %v1651
    %7517 = vmatprep.subr.bf16.mxu0 0
    %7518 = vmatpush1.bf16.msra.mxu0 0
    %7519 = vmatprep.subr.bf16.mxu0 0
    %7520 = vmatpush1.bf16.msra.mxu0 0
    %7521 = vmatprep.subr.bf16.mxu0 0
    %7522 = vmatpush1.bf16.msra.mxu0 0
    %7523 = vmatprep.subr.bf16.mxu0 0
    %7524 = vmatpush1.bf16.msra.mxu0 0
    %7525 = vmatprep.subr.bf16.mxu0 0
    %7526 = vmatpush1.bf16.msra.mxu0 0
    %7527 = vmatprep.subr.bf16.mxu0 0
    %7528 = vmatpush1.bf16.msra.mxu0 0
    %7529 = vmatprep.subr.bf16.mxu0 0
    %7530 = vmatpush1.bf16.msra.mxu0 0
    %7531 = vmatprep.subr.bf16.mxu0 0
    %7532 = vmatpush1.bf16.msra.mxu0 0
    %7533 = vmatprep.mubr.bf16.mxu0 0
    %7534 = vmatmul.mubr.bf16.gmra.mrb[0].mxu0 %v7418
    %v7535 = vpop.f32.mrb[0].mxu0
    %v7536 = vadd.f32 %v7454, %v7535
    %v7537 = vpop.f32.mrb[0].mxu0
    %v7538 = vadd.f32 %v7456, %v7537
    %v7539 = vpop.f32.mrb[0].mxu0
    %v7540 = vpop.f32.mrb[0].mxu0
    %7541 = vdwg.mxu0
    %7542 = vmatprep.subr.bf16.mxu0 %v1626
    %7543 = vmatpush1.bf16.msra.mxu0 %v1625
    %7544 = vmatprep.subr.bf16.mxu0 %v1630
    %7545 = vmatpush1.bf16.msra.mxu0 %v1629
    %7546 = vmatprep.subr.bf16.mxu0 %v1634
    %7547 = vmatpush1.bf16.msra.mxu0 %v1633
    %7548 = vmatprep.subr.bf16.mxu0 %v1638
    %7549 = vmatpush1.bf16.msra.mxu0 %v1637
    %7550 = vmatprep.subr.bf16.mxu0 %v1642
    %7551 = vmatpush1.bf16.msra.mxu0 %v1641
    %7552 = vmatprep.subr.bf16.mxu0 %v1646
    %7553 = vmatpush1.bf16.msra.mxu0 %v1645
    %7554 = vmatprep.subr.bf16.mxu0 %v1650
    %7555 = vmatpush1.bf16.msra.mxu0 %v1649
    %7556 = vmatprep.subr.bf16.mxu0 %v1654
    %7557 = vmatpush1.bf16.msra.mxu0 %v1653
    %7558 = vmatprep.subr.bf16.mxu0 0
    %7559 = vmatpush1.bf16.msra.mxu0 0
    %7560 = vmatprep.subr.bf16.mxu0 0
    %7561 = vmatpush1.bf16.msra.mxu0 0
    %7562 = vmatprep.subr.bf16.mxu0 0
    %7563 = vmatpush1.bf16.msra.mxu0 0
    %7564 = vmatprep.subr.bf16.mxu0 0
    %7565 = vmatpush1.bf16.msra.mxu0 0
    %7566 = vmatprep.subr.bf16.mxu0 0
    %7567 = vmatpush1.bf16.msra.mxu0 0
    %7568 = vmatprep.subr.bf16.mxu0 0
    %7569 = vmatpush1.bf16.msra.mxu0 0
    %7570 = vmatprep.subr.bf16.mxu0 0
    %7571 = vmatpush1.bf16.msra.mxu0 0
    %7572 = vmatprep.subr.bf16.mxu0 0
    %7573 = vmatpush1.bf16.msra.mxu0 0
    %7574 = vmatprep.mubr.bf16.mxu0 0
    %7575 = vmatmul.mubr.bf16.gmra.mrb[0].mxu0 %v7418
    %v7576 = vpop.f32.mrb[0].mxu0
    %v7577 = vadd.f32 %v7495, %v7576
    %v7578 = vpop.f32.mrb[0].mxu0
    %v7579 = vadd.f32 %v7497, %v7578
    %v7580 = vpop.f32.mrb[0].mxu0
    %v7581 = vpop.f32.mrb[0].mxu0
    %7582 = vdwg.mxu0
    %v7583 = vadd.f32 %v7536, %v328
    %v7584 = vadd.f32 %v7538, %v332
    %v7585 = vadd.f32 %v7577, %v336
    %v7586 = vadd.f32 %v7579, %v340
    %v7587 = vxor.u32 %v7583, 2147483648
    %v7588 = vmul.f32 %v7587, 1.442695
    %v7589 = vpow.pop %v7588
    %v7590 = vadd.f32 %v7589, 1.0
    %v7591 = vrcp.pop %v7590
    %v7592 = vmul.f32 1.0, %v7591
    %v7593 = vxor.u32 %v7584, 2147483648
    %v7594 = vmul.f32 %v7593, 1.442695
    %v7595 = vpow.pop %v7594
    %v7596 = vadd.f32 %v7595, 1.0
    %v7597 = vrcp.pop %v7596
    %v7598 = vmul.f32 1.0, %v7597
    %v7599 = vtanh.pop %v7585
    %v7600 = vxor.u32 %v7586, 2147483648
    %v7601 = vmul.f32 %v7600, 1.442695
    %v7602 = vpow.pop %v7601
    %v7603 = vadd.f32 %v7602, 1.0
    %v7604 = vrcp.pop %v7603
    %v7605 = vmul.f32 1.0, %v7604
    %v7606 = vmul.f32 %v7598, %v6456
    %v7607 = vmul.f32 %v7592, %v7599
    %v7608 = vadd.f32 %v7606, %v7607
    %v7609 = vtanh.pop %v7608
    %v7610 = vmul.f32 %v7605, %v7609
    %v7611 = vadd.f32 %v7610, %v7409
    %v7612 = vpack.c.bf16 %v7611, %v7611
    %7613 = vmatprep.subr.bf16.mxu0 0
    %7614 = vmatpush1.bf16.msra.mxu0 %v1837
    %7615 = vmatprep.subr.bf16.mxu0 0
    %7616 = vmatpush1.bf16.msra.mxu0 %v1838
    %7617 = vmatprep.subr.bf16.mxu0 0
    %7618 = vmatpush1.bf16.msra.mxu0 %v1839
    %7619 = vmatprep.subr.bf16.mxu0 0
    %7620 = vmatpush1.bf16.msra.mxu0 %v1840
    %7621 = vmatprep.subr.bf16.mxu0 0
    %7622 = vmatpush1.bf16.msra.mxu0 %v1841
    %7623 = vmatprep.subr.bf16.mxu0 0
    %7624 = vmatpush1.bf16.msra.mxu0 %v1842
    %7625 = vmatprep.subr.bf16.mxu0 0
    %7626 = vmatpush1.bf16.msra.mxu0 %v1843
    %7627 = vmatprep.subr.bf16.mxu0 0
    %7628 = vmatpush1.bf16.msra.mxu0 %v1844
    %7629 = vmatprep.subr.bf16.mxu0 0
    %7630 = vmatpush1.bf16.msra.mxu0 0
    %7631 = vmatprep.subr.bf16.mxu0 0
    %7632 = vmatpush1.bf16.msra.mxu0 0
    %7633 = vmatprep.subr.bf16.mxu0 0
    %7634 = vmatpush1.bf16.msra.mxu0 0
    %7635 = vmatprep.subr.bf16.mxu0 0
    %7636 = vmatpush1.bf16.msra.mxu0 0
    %7637 = vmatprep.subr.bf16.mxu0 0
    %7638 = vmatpush1.bf16.msra.mxu0 0
    %7639 = vmatprep.subr.bf16.mxu0 0
    %7640 = vmatpush1.bf16.msra.mxu0 0
    %7641 = vmatprep.subr.bf16.mxu0 0
    %7642 = vmatpush1.bf16.msra.mxu0 0
    %7643 = vmatprep.subr.bf16.mxu0 0
    %7644 = vmatpush1.bf16.msra.mxu0 0
    %7645 = vmatprep.mubr.bf16.mxu0 0
    %7646 = vmatmul.mubr.bf16.gmra.mrb[0].mxu0 %v7612
    %v7647 = vpop.f32.mrb[0].mxu0
    %v7648 = vadd.f32 %v1803, %v7647
    %v7649 = vpop.f32.mrb[0].mxu0
    %v7650 = vpop.f32.mrb[0].mxu0
    %v7651 = vpop.f32.mrb[0].mxu0
    %7652 = vdwg.mxu0
    %v7654 = vcombine.high %v7648, %v7648
    %v7656 = vunpack.c.l.s4 1966171168
    %v7657 = vunpack.c.0.s8 %v7656
    %v7658 = vlaneseq
    %v7659 = vshrl.u32 %v7658, 7
    %v7660 = vsub.s32 %v7657, %v7659
    %v7661 = vrot.slane %v7648, %v7660
    %v7663 = vunpack.c.l.s4 1966171168
    %v7664 = vunpack.c.0.s8 %v7663
    %v7665 = vlaneseq
    %v7666 = vshrl.u32 %v7665, 7
    %v7667 = vsub.s32 %v7664, %v7666
    %v7668 = vrot.slane %v7654, %v7667
    %v7669 = vcombine.high %v7661, %v7661
    %v7670 = vcombine.high %v7668, %v7668
    %v7672 = vunpack.c.l.s4 1966171168
    %v7673 = vunpack.c.0.s8 %v7672
    %v7674 = vlaneseq
    %v7675 = vshrl.u32 %v7674, 7
    %v7676 = vsub.s32 %v7673, %v7675
    %v7677 = vrot.slane %v7661, %v7676
    %v7679 = vunpack.c.l.s4 1966171168
    %v7680 = vunpack.c.0.s8 %v7679
    %v7681 = vlaneseq
    %v7682 = vshrl.u32 %v7681, 7
    %v7683 = vsub.s32 %v7680, %v7682
    %v7684 = vrot.slane %v7668, %v7683
    %v7686 = vunpack.c.l.s4 1966171168
    %v7687 = vunpack.c.0.s8 %v7686
    %v7688 = vlaneseq
    %v7689 = vshrl.u32 %v7688, 7
    %v7690 = vsub.s32 %v7687, %v7689
    %v7691 = vrot.slane %v7669, %v7690
    %v7693 = vunpack.c.l.s4 1966171168
    %v7694 = vunpack.c.0.s8 %v7693
    %v7695 = vlaneseq
    %v7696 = vshrl.u32 %v7695, 7
    %v7697 = vsub.s32 %v7694, %v7696
    %v7698 = vrot.slane %v7670, %v7697
    %v7699 = vcombine.high %v7677, %v7677
    %v7700 = vcombine.high %v7684, %v7684
    %v7701 = vcombine.high %v7691, %v7691
    %v7702 = vcombine.high %v7698, %v7698
    %7711 = vst [vmem:[#allocation19 + $0x5] sm:$0x1] %v7677
    %7712 = vst [vmem:[#allocation19 + $0xd] sm:$0x1] %v7691
    %7713 = vst [vmem:[#allocation19 + $0x15] sm:$0x1] %v7699
    %7714 = vst [vmem:[#allocation19 + $0x1d] sm:$0x1] %v7701
    %7715 = vst [vmem:[#allocation19 + $0x25] sm:$0x1] %v7684
    %7716 = vst [vmem:[#allocation19 + $0x2d] sm:$0x1] %v7698
    %7717 = vst [vmem:[#allocation19 + $0x35] sm:$0x1] %v7700
    %7718 = vst [vmem:[#allocation19 + $0x3d] sm:$0x1] %v7702
    %v7719 = vpack.c.bf16 %v7610, %v7610
    %7720 = vmatprep.subr.bf16.mxu0 0
    %7721 = vmatpush1.bf16.msra.mxu0 %v380
    %7722 = vmatprep.subr.bf16.mxu0 0
    %7723 = vmatpush1.bf16.msra.mxu0 %v381
    %7724 = vmatprep.subr.bf16.mxu0 0
    %7725 = vmatpush1.bf16.msra.mxu0 %v382
    %7726 = vmatprep.subr.bf16.mxu0 0
    %7727 = vmatpush1.bf16.msra.mxu0 %v383
    %7728 = vmatprep.subr.bf16.mxu0 0
    %7729 = vmatpush1.bf16.msra.mxu0 %v384
    %7730 = vmatprep.subr.bf16.mxu0 0
    %7731 = vmatpush1.bf16.msra.mxu0 %v385
    %7732 = vmatprep.subr.bf16.mxu0 0
    %7733 = vmatpush1.bf16.msra.mxu0 %v386
    %7734 = vmatprep.subr.bf16.mxu0 0
    %7735 = vmatpush1.bf16.msra.mxu0 %v387
    %7736 = vmatprep.subr.bf16.mxu0 0
    %7737 = vmatpush1.bf16.msra.mxu0 0
    %7738 = vmatprep.subr.bf16.mxu0 0
    %7739 = vmatpush1.bf16.msra.mxu0 0
    %7740 = vmatprep.subr.bf16.mxu0 0
    %7741 = vmatpush1.bf16.msra.mxu0 0
    %7742 = vmatprep.subr.bf16.mxu0 0
    %7743 = vmatpush1.bf16.msra.mxu0 0
    %7744 = vmatprep.subr.bf16.mxu0 0
    %7745 = vmatpush1.bf16.msra.mxu0 0
    %7746 = vmatprep.subr.bf16.mxu0 0
    %7747 = vmatpush1.bf16.msra.mxu0 0
    %7748 = vmatprep.subr.bf16.mxu0 0
    %7749 = vmatpush1.bf16.msra.mxu0 0
    %7750 = vmatprep.subr.bf16.mxu0 0
    %7751 = vmatpush1.bf16.msra.mxu0 0
    %7752 = vmatprep.mubr.bf16.mxu0 0
    %7753 = vmatmul.mubr.bf16.gmra.mrb[0].mxu0 %v7719
    %v7754 = vpop.f32.mrb[0].mxu0
    %v7755 = vadd.f32 0.0, %v7754
    %v7756 = vpop.f32.mrb[0].mxu0
    %v7757 = vpop.f32.mrb[0].mxu0
    %v7758 = vpop.f32.mrb[0].mxu0
    %7759 = vdwg.mxu0
    %v7761 = vcombine.high %v7755, %v7755
    %v7763 = vunpack.c.l.s4 1966171168
    %v7764 = vunpack.c.0.s8 %v7763
    %v7765 = vlaneseq
    %v7766 = vshrl.u32 %v7765, 7
    %v7767 = vsub.s32 %v7764, %v7766
    %v7768 = vrot.slane %v7755, %v7767
    %v7770 = vunpack.c.l.s4 1966171168
    %v7771 = vunpack.c.0.s8 %v7770
    %v7772 = vlaneseq
    %v7773 = vshrl.u32 %v7772, 7
    %v7774 = vsub.s32 %v7771, %v7773
    %v7775 = vrot.slane %v7761, %v7774
    %v7776 = vcombine.high %v7768, %v7768
    %v7777 = vcombine.high %v7775, %v7775
    %v7779 = vunpack.c.l.s4 1966171168
    %v7780 = vunpack.c.0.s8 %v7779
    %v7781 = vlaneseq
    %v7782 = vshrl.u32 %v7781, 7
    %v7783 = vsub.s32 %v7780, %v7782
    %v7784 = vrot.slane %v7768, %v7783
    %v7786 = vunpack.c.l.s4 1966171168
    %v7787 = vunpack.c.0.s8 %v7786
    %v7788 = vlaneseq
    %v7789 = vshrl.u32 %v7788, 7
    %v7790 = vsub.s32 %v7787, %v7789
    %v7791 = vrot.slane %v7775, %v7790
    %v7793 = vunpack.c.l.s4 1966171168
    %v7794 = vunpack.c.0.s8 %v7793
    %v7795 = vlaneseq
    %v7796 = vshrl.u32 %v7795, 7
    %v7797 = vsub.s32 %v7794, %v7796
    %v7798 = vrot.slane %v7776, %v7797
    %v7800 = vunpack.c.l.s4 1966171168
    %v7801 = vunpack.c.0.s8 %v7800
    %v7802 = vlaneseq
    %v7803 = vshrl.u32 %v7802, 7
    %v7804 = vsub.s32 %v7801, %v7803
    %v7805 = vrot.slane %v7777, %v7804
    %v7806 = vcombine.high %v7784, %v7784
    %v7807 = vcombine.high %v7791, %v7791
    %v7808 = vcombine.high %v7798, %v7798
    %v7809 = vcombine.high %v7805, %v7805
    %v7810 = vlaneseq
    %v7811 = vshrl.u32 %v7810, 7
    %v7812 = vsub.s32 0, %v7811
    %v7813 = vrot.slane %v7784, %v7812
    %v7814 = vlaneseq
    %v7815 = vshrl.u32 %v7814, 7
    %v7816 = vsub.s32 0, %v7815
    %v7817 = vrot.slane %v7798, %v7816
    %v7818 = vlaneseq
    %v7819 = vshrl.u32 %v7818, 7
    %v7820 = vsub.s32 0, %v7819
    %v7821 = vrot.slane %v7806, %v7820
    %v7822 = vlaneseq
    %v7823 = vshrl.u32 %v7822, 7
    %v7824 = vsub.s32 0, %v7823
    %v7825 = vrot.slane %v7808, %v7824
    %v7826 = vlaneseq
    %v7827 = vshrl.u32 %v7826, 7
    %v7828 = vsub.s32 0, %v7827
    %v7829 = vrot.slane %v7791, %v7828
    %v7830 = vlaneseq
    %v7831 = vshrl.u32 %v7830, 7
    %v7832 = vsub.s32 0, %v7831
    %v7833 = vrot.slane %v7805, %v7832
    %v7834 = vlaneseq
    %v7835 = vshrl.u32 %v7834, 7
    %v7836 = vsub.s32 0, %v7835
    %v7837 = vrot.slane %v7807, %v7836
    %v7838 = vlaneseq
    %v7839 = vshrl.u32 %v7838, 7
    %v7840 = vsub.s32 0, %v7839
    %v7841 = vrot.slane %v7809, %v7840
    %v7850 = vadd.f32 %v193, %v7813
    %v7851 = vadd.f32 %v194, %v7813
    %v7852 = vadd.f32 %v195, %v7817
    %v7853 = vadd.f32 %v196, %v7817
    %v7854 = vadd.f32 %v197, %v7821
    %v7855 = vadd.f32 %v198, %v7821
    %v7856 = vadd.f32 %v199, %v7825
    %v7857 = vadd.f32 %v200, %v7825
    %v7858 = vadd.f32 %v201, %v7829
    %v7859 = vadd.f32 %v202, %v7829
    %v7860 = vadd.f32 %v203, %v7833
    %v7861 = vadd.f32 %v204, %v7833
    %v7862 = vadd.f32 %v205, %v7837
    %v7863 = vadd.f32 %v206, %v7837
    %v7864 = vadd.f32 %v207, %v7841
    %v7865 = vadd.f32 %v208, %v7841
    %v7866 = vtanh.pop %v7850
    %v7867 = vtanh.pop %v7851
    %v7868 = vtanh.pop %v7852
    %v7869 = vtanh.pop %v7853
    %v7870 = vtanh.pop %v7854
    %v7871 = vtanh.pop %v7855
    %v7872 = vtanh.pop %v7856
    %v7873 = vtanh.pop %v7857
    %v7874 = vtanh.pop %v7858
    %v7875 = vtanh.pop %v7859
    %v7876 = vtanh.pop %v7860
    %v7877 = vtanh.pop %v7861
    %v7878 = vtanh.pop %v7862
    %v7879 = vtanh.pop %v7863
    %v7880 = vtanh.pop %v7864
    %v7881 = vtanh.pop %v7865
    %v7882 = vmul.f32 %v7866, %v562
    %v7883 = vmul.f32 %v7867, %v562
    %v7884 = vmul.f32 %v7868, %v562
    %v7885 = vmul.f32 %v7869, %v562
    %v7886 = vmul.f32 %v7870, %v562
    %v7887 = vmul.f32 %v7871, %v562
    %v7888 = vmul.f32 %v7872, %v562
    %v7889 = vmul.f32 %v7873, %v562
    %v7890 = vmul.f32 %v7874, %v562
    %v7891 = vmul.f32 %v7875, %v562
    %v7892 = vmul.f32 %v7876, %v562
    %v7893 = vmul.f32 %v7877, %v562
    %v7894 = vmul.f32 %v7878, %v562
    %v7895 = vmul.f32 %v7879, %v562
    %v7896 = vmul.f32 %v7880, %v562
    %v7897 = vmul.f32 %v7881, %v562
    %7898 = vadd.xlane.f32.xlu0 %v7882
    %v7899 = vpop.xlane.xlu0 %7898
    %7900 = vadd.xlane.f32.xlu0 %v7883
    %v7901 = vpop.xlane.xlu0 %7900
    %7902 = vadd.xlane.f32.xlu0 %v7884
    %v7903 = vpop.xlane.xlu0 %7902
    %7904 = vadd.xlane.f32.xlu0 %v7885
    %v7905 = vpop.xlane.xlu0 %7904
    %7906 = vadd.xlane.f32.xlu0 %v7886
    %v7907 = vpop.xlane.xlu0 %7906
    %7908 = vadd.xlane.f32.xlu0 %v7887
    %v7909 = vpop.xlane.xlu0 %7908
    %7910 = vadd.xlane.f32.xlu0 %v7888
    %v7911 = vpop.xlane.xlu0 %7910
    %7912 = vadd.xlane.f32.xlu0 %v7889
    %v7913 = vpop.xlane.xlu0 %7912
    %7914 = vadd.xlane.f32.xlu0 %v7890
    %v7915 = vpop.xlane.xlu0 %7914
    %7916 = vadd.xlane.f32.xlu0 %v7891
    %v7917 = vpop.xlane.xlu0 %7916
    %7918 = vadd.xlane.f32.xlu0 %v7892
    %v7919 = vpop.xlane.xlu0 %7918
    %7920 = vadd.xlane.f32.xlu0 %v7893
    %v7921 = vpop.xlane.xlu0 %7920
    %7922 = vadd.xlane.f32.xlu0 %v7894
    %v7923 = vpop.xlane.xlu0 %7922
    %7924 = vadd.xlane.f32.xlu0 %v7895
    %v7925 = vpop.xlane.xlu0 %7924
    %7926 = vadd.xlane.f32.xlu0 %v7896
    %v7927 = vpop.xlane.xlu0 %7926
    %7928 = vadd.xlane.f32.xlu0 %v7897
    %v7929 = vpop.xlane.xlu0 %7928
    %v7946 = vlaneseq
    %v7947 = vshrl.u32 %v7946, 7
    %v7948 = vsub.s32 %v629, %v7947
    %v7949 = vrot.slane %v7899, %v7948
    %v7950 = vlaneseq
    %v7951 = vshrl.u32 %v7950, 7
    %v7952 = vsub.s32 %v634, %v7951
    %v7953 = vrot.slane %v7901, %v7952
    %v7954 = vsel %vm639, %v7953, %v7949
    %v7955 = vlaneseq
    %v7956 = vshrl.u32 %v7955, 7
    %v7957 = vsub.s32 %v629, %v7956
    %v7958 = vrot.slane %v7903, %v7957
    %v7959 = vlaneseq
    %v7960 = vshrl.u32 %v7959, 7
    %v7961 = vsub.s32 %v634, %v7960
    %v7962 = vrot.slane %v7905, %v7961
    %v7963 = vsel %vm639, %v7962, %v7958
    %v7964 = vlaneseq
    %v7965 = vshrl.u32 %v7964, 7
    %v7966 = vsub.s32 %v629, %v7965
    %v7967 = vrot.slane %v7907, %v7966
    %v7968 = vlaneseq
    %v7969 = vshrl.u32 %v7968, 7
    %v7970 = vsub.s32 %v634, %v7969
    %v7971 = vrot.slane %v7909, %v7970
    %v7972 = vsel %vm639, %v7971, %v7967
    %v7973 = vlaneseq
    %v7974 = vshrl.u32 %v7973, 7
    %v7975 = vsub.s32 %v629, %v7974
    %v7976 = vrot.slane %v7911, %v7975
    %v7977 = vlaneseq
    %v7978 = vshrl.u32 %v7977, 7
    %v7979 = vsub.s32 %v634, %v7978
    %v7980 = vrot.slane %v7913, %v7979
    %v7981 = vsel %vm639, %v7980, %v7976
    %v7982 = vlaneseq
    %v7983 = vshrl.u32 %v7982, 7
    %v7984 = vsub.s32 %v629, %v7983
    %v7985 = vrot.slane %v7915, %v7984
    %v7986 = vlaneseq
    %v7987 = vshrl.u32 %v7986, 7
    %v7988 = vsub.s32 %v634, %v7987
    %v7989 = vrot.slane %v7917, %v7988
    %v7990 = vsel %vm639, %v7989, %v7985
    %v7991 = vlaneseq
    %v7992 = vshrl.u32 %v7991, 7
    %v7993 = vsub.s32 %v629, %v7992
    %v7994 = vrot.slane %v7919, %v7993
    %v7995 = vlaneseq
    %v7996 = vshrl.u32 %v7995, 7
    %v7997 = vsub.s32 %v634, %v7996
    %v7998 = vrot.slane %v7921, %v7997
    %v7999 = vsel %vm639, %v7998, %v7994
    %v8000 = vlaneseq
    %v8001 = vshrl.u32 %v8000, 7
    %v8002 = vsub.s32 %v629, %v8001
    %v8003 = vrot.slane %v7923, %v8002
    %v8004 = vlaneseq
    %v8005 = vshrl.u32 %v8004, 7
    %v8006 = vsub.s32 %v634, %v8005
    %v8007 = vrot.slane %v7925, %v8006
    %v8008 = vsel %vm639, %v8007, %v8003
    %v8009 = vlaneseq
    %v8010 = vshrl.u32 %v8009, 7
    %v8011 = vsub.s32 %v629, %v8010
    %v8012 = vrot.slane %v7927, %v8011
    %v8013 = vlaneseq
    %v8014 = vshrl.u32 %v8013, 7
    %v8015 = vsub.s32 %v634, %v8014
    %v8016 = vrot.slane %v7929, %v8015
    %v8017 = vsel %vm639, %v8016, %v8012
    %v8018 = vsel %vm704, %v7963, %v7954
    %v8019 = vsel %vm706, %v7972, %v8018
    %v8020 = vsel %vm708, %v7981, %v8019
    %v8021 = vsel %vm710, %v7990, %v8020
    %v8022 = vsel %vm712, %v7999, %v8021
    %v8023 = vsel %vm714, %v8008, %v8022
    %v8024 = vsel %vm716, %v8017, %v8023
    %v8026 = vsel %vm719, %v8024, -inf
    %8027 = vmax.xlane.f32.xlu0 %v8026
    %v8028 = vpop.xlane.xlu0 %8027
    %v8030 = vlaneseq
    %v8031 = vshrl.u32 %v8030, 7
    %v8032 = vsub.s32 0, %v8031
    %v8033 = vrot.slane %v8028, %v8032
    %v8034 = vlaneseq
    %v8035 = vshrl.u32 %v8034, 7
    %v8036 = vsub.s32 1, %v8035
    %v8037 = vrot.slane %v8028, %v8036
    %v8038 = vlaneseq
    %v8039 = vshrl.u32 %v8038, 7
    %v8040 = vsub.s32 2, %v8039
    %v8041 = vrot.slane %v8028, %v8040
    %v8042 = vlaneseq
    %v8043 = vshrl.u32 %v8042, 7
    %v8044 = vsub.s32 3, %v8043
    %v8045 = vrot.slane %v8028, %v8044
    %v8046 = vlaneseq
    %v8047 = vshrl.u32 %v8046, 7
    %v8048 = vsub.s32 4, %v8047
    %v8049 = vrot.slane %v8028, %v8048
    %v8050 = vlaneseq
    %v8051 = vshrl.u32 %v8050, 7
    %v8052 = vsub.s32 5, %v8051
    %v8053 = vrot.slane %v8028, %v8052
    %v8054 = vlaneseq
    %v8055 = vshrl.u32 %v8054, 7
    %v8056 = vsub.s32 6, %v8055
    %v8057 = vrot.slane %v8028, %v8056
    %v8058 = vlaneseq
    %v8059 = vshrl.u32 %v8058, 7
    %v8060 = vsub.s32 7, %v8059
    %v8061 = vrot.slane %v8028, %v8060
    %v8070 = vsub.f32 %v7899, %v8033
    %v8071 = vsub.f32 %v7901, %v8033
    %v8072 = vsub.f32 %v7903, %v8037
    %v8073 = vsub.f32 %v7905, %v8037
    %v8074 = vsub.f32 %v7907, %v8041
    %v8075 = vsub.f32 %v7909, %v8041
    %v8076 = vsub.f32 %v7911, %v8045
    %v8077 = vsub.f32 %v7913, %v8045
    %v8078 = vsub.f32 %v7915, %v8049
    %v8079 = vsub.f32 %v7917, %v8049
    %v8080 = vsub.f32 %v7919, %v8053
    %v8081 = vsub.f32 %v7921, %v8053
    %v8082 = vsub.f32 %v7923, %v8057
    %v8083 = vsub.f32 %v7925, %v8057
    %v8084 = vsub.f32 %v7927, %v8061
    %v8085 = vsub.f32 %v7929, %v8061
    %v8086 = vmul.f32 %v8070, 1.442695
    %v8087 = vpow.pop %v8086
    %v8088 = vmul.f32 %v8071, 1.442695
    %v8089 = vpow.pop %v8088
    %v8090 = vmul.f32 %v8072, 1.442695
    %v8091 = vpow.pop %v8090
    %v8092 = vmul.f32 %v8073, 1.442695
    %v8093 = vpow.pop %v8092
    %v8094 = vmul.f32 %v8074, 1.442695
    %v8095 = vpow.pop %v8094
    %v8096 = vmul.f32 %v8075, 1.442695
    %v8097 = vpow.pop %v8096
    %v8098 = vmul.f32 %v8076, 1.442695
    %v8099 = vpow.pop %v8098
    %v8100 = vmul.f32 %v8077, 1.442695
    %v8101 = vpow.pop %v8100
    %v8102 = vmul.f32 %v8078, 1.442695
    %v8103 = vpow.pop %v8102
    %v8104 = vmul.f32 %v8079, 1.442695
    %v8105 = vpow.pop %v8104
    %v8106 = vmul.f32 %v8080, 1.442695
    %v8107 = vpow.pop %v8106
    %v8108 = vmul.f32 %v8081, 1.442695
    %v8109 = vpow.pop %v8108
    %v8110 = vmul.f32 %v8082, 1.442695
    %v8111 = vpow.pop %v8110
    %v8112 = vmul.f32 %v8083, 1.442695
    %v8113 = vpow.pop %v8112
    %v8114 = vmul.f32 %v8084, 1.442695
    %v8115 = vpow.pop %v8114
    %v8116 = vmul.f32 %v8085, 1.442695
    %v8117 = vpow.pop %v8116
    %8134 = vset.pattern.permute.xlu0 0
    %8135 = vperm.xlu0 %8134, %v8087
    %v8136 = vpop.permute.xlu0 %8135
    %8137 = vset.pattern.permute.xlu0 0
    %8138 = vperm.xlu0 %8137, %v8089
    %v8139 = vpop.permute.xlu0 %8138
    %8140 = vset.pattern.permute.xlu0 0
    %8141 = vperm.xlu0 %8140, %v8091
    %v8142 = vpop.permute.xlu0 %8141
    %8143 = vset.pattern.permute.xlu0 0
    %8144 = vperm.xlu0 %8143, %v8093
    %v8145 = vpop.permute.xlu0 %8144
    %8146 = vset.pattern.permute.xlu0 0
    %8147 = vperm.xlu0 %8146, %v8095
    %v8148 = vpop.permute.xlu0 %8147
    %8149 = vset.pattern.permute.xlu0 0
    %8150 = vperm.xlu0 %8149, %v8097
    %v8151 = vpop.permute.xlu0 %8150
    %8152 = vset.pattern.permute.xlu0 0
    %8153 = vperm.xlu0 %8152, %v8099
    %v8154 = vpop.permute.xlu0 %8153
    %8155 = vset.pattern.permute.xlu0 0
    %8156 = vperm.xlu0 %8155, %v8101
    %v8157 = vpop.permute.xlu0 %8156
    %8158 = vset.pattern.permute.xlu0 0
    %8159 = vperm.xlu0 %8158, %v8103
    %v8160 = vpop.permute.xlu0 %8159
    %8161 = vset.pattern.permute.xlu0 0
    %8162 = vperm.xlu0 %8161, %v8105
    %v8163 = vpop.permute.xlu0 %8162
    %8164 = vset.pattern.permute.xlu0 0
    %8165 = vperm.xlu0 %8164, %v8107
    %v8166 = vpop.permute.xlu0 %8165
    %8167 = vset.pattern.permute.xlu0 0
    %8168 = vperm.xlu0 %8167, %v8109
    %v8169 = vpop.permute.xlu0 %8168
    %8170 = vset.pattern.permute.xlu0 0
    %8171 = vperm.xlu0 %8170, %v8111
    %v8172 = vpop.permute.xlu0 %8171
    %8173 = vset.pattern.permute.xlu0 0
    %8174 = vperm.xlu0 %8173, %v8113
    %v8175 = vpop.permute.xlu0 %8174
    %8176 = vset.pattern.permute.xlu0 0
    %8177 = vperm.xlu0 %8176, %v8115
    %v8178 = vpop.permute.xlu0 %8177
    %8179 = vset.pattern.permute.xlu0 0
    %8180 = vperm.xlu0 %8179, %v8117
    %v8181 = vpop.permute.xlu0 %8180
    %v8182 = vlaneseq
    %v8183 = vshrl.u32 %v8182, 7
    %v8184 = vsub.s32 %v629, %v8183
    %v8185 = vrot.slane %v8136, %v8184
    %v8186 = vlaneseq
    %v8187 = vshrl.u32 %v8186, 7
    %v8188 = vsub.s32 %v634, %v8187
    %v8189 = vrot.slane %v8139, %v8188
    %v8190 = vsel %vm639, %v8189, %v8185
    %v8191 = vlaneseq
    %v8192 = vshrl.u32 %v8191, 7
    %v8193 = vsub.s32 %v629, %v8192
    %v8194 = vrot.slane %v8142, %v8193
    %v8195 = vlaneseq
    %v8196 = vshrl.u32 %v8195, 7
    %v8197 = vsub.s32 %v634, %v8196
    %v8198 = vrot.slane %v8145, %v8197
    %v8199 = vsel %vm639, %v8198, %v8194
    %v8200 = vlaneseq
    %v8201 = vshrl.u32 %v8200, 7
    %v8202 = vsub.s32 %v629, %v8201
    %v8203 = vrot.slane %v8148, %v8202
    %v8204 = vlaneseq
    %v8205 = vshrl.u32 %v8204, 7
    %v8206 = vsub.s32 %v634, %v8205
    %v8207 = vrot.slane %v8151, %v8206
    %v8208 = vsel %vm639, %v8207, %v8203
    %v8209 = vlaneseq
    %v8210 = vshrl.u32 %v8209, 7
    %v8211 = vsub.s32 %v629, %v8210
    %v8212 = vrot.slane %v8154, %v8211
    %v8213 = vlaneseq
    %v8214 = vshrl.u32 %v8213, 7
    %v8215 = vsub.s32 %v634, %v8214
    %v8216 = vrot.slane %v8157, %v8215
    %v8217 = vsel %vm639, %v8216, %v8212
    %v8218 = vlaneseq
    %v8219 = vshrl.u32 %v8218, 7
    %v8220 = vsub.s32 %v629, %v8219
    %v8221 = vrot.slane %v8160, %v8220
    %v8222 = vlaneseq
    %v8223 = vshrl.u32 %v8222, 7
    %v8224 = vsub.s32 %v634, %v8223
    %v8225 = vrot.slane %v8163, %v8224
    %v8226 = vsel %vm639, %v8225, %v8221
    %v8227 = vlaneseq
    %v8228 = vshrl.u32 %v8227, 7
    %v8229 = vsub.s32 %v629, %v8228
    %v8230 = vrot.slane %v8166, %v8229
    %v8231 = vlaneseq
    %v8232 = vshrl.u32 %v8231, 7
    %v8233 = vsub.s32 %v634, %v8232
    %v8234 = vrot.slane %v8169, %v8233
    %v8235 = vsel %vm639, %v8234, %v8230
    %v8236 = vlaneseq
    %v8237 = vshrl.u32 %v8236, 7
    %v8238 = vsub.s32 %v629, %v8237
    %v8239 = vrot.slane %v8172, %v8238
    %v8240 = vlaneseq
    %v8241 = vshrl.u32 %v8240, 7
    %v8242 = vsub.s32 %v634, %v8241
    %v8243 = vrot.slane %v8175, %v8242
    %v8244 = vsel %vm639, %v8243, %v8239
    %v8245 = vlaneseq
    %v8246 = vshrl.u32 %v8245, 7
    %v8247 = vsub.s32 %v629, %v8246
    %v8248 = vrot.slane %v8178, %v8247
    %v8249 = vlaneseq
    %v8250 = vshrl.u32 %v8249, 7
    %v8251 = vsub.s32 %v634, %v8250
    %v8252 = vrot.slane %v8181, %v8251
    %v8253 = vsel %vm639, %v8252, %v8248
    %v8254 = vsel %vm704, %v8199, %v8190
    %v8255 = vsel %vm706, %v8208, %v8254
    %v8256 = vsel %vm708, %v8217, %v8255
    %v8257 = vsel %vm710, %v8226, %v8256
    %v8258 = vsel %vm712, %v8235, %v8257
    %v8259 = vsel %vm714, %v8244, %v8258
    %v8260 = vsel %vm716, %v8253, %v8259
    %v8262 = vsel %vm719, %v8260, 0.0
    %8263 = vadd.xlane.f32.xlu0 %v8262
    %v8264 = vpop.xlane.xlu0 %8263
    %v8265 = vrcp.pop %v8264
    %v8267 = vlaneseq
    %v8268 = vshrl.u32 %v8267, 7
    %v8269 = vsub.s32 0, %v8268
    %v8270 = vrot.slane %v8265, %v8269
    %v8271 = vlaneseq
    %v8272 = vshrl.u32 %v8271, 7
    %v8273 = vsub.s32 1, %v8272
    %v8274 = vrot.slane %v8265, %v8273
    %v8275 = vlaneseq
    %v8276 = vshrl.u32 %v8275, 7
    %v8277 = vsub.s32 2, %v8276
    %v8278 = vrot.slane %v8265, %v8277
    %v8279 = vlaneseq
    %v8280 = vshrl.u32 %v8279, 7
    %v8281 = vsub.s32 3, %v8280
    %v8282 = vrot.slane %v8265, %v8281
    %v8283 = vlaneseq
    %v8284 = vshrl.u32 %v8283, 7
    %v8285 = vsub.s32 4, %v8284
    %v8286 = vrot.slane %v8265, %v8285
    %v8287 = vlaneseq
    %v8288 = vshrl.u32 %v8287, 7
    %v8289 = vsub.s32 5, %v8288
    %v8290 = vrot.slane %v8265, %v8289
    %v8291 = vlaneseq
    %v8292 = vshrl.u32 %v8291, 7
    %v8293 = vsub.s32 6, %v8292
    %v8294 = vrot.slane %v8265, %v8293
    %v8295 = vlaneseq
    %v8296 = vshrl.u32 %v8295, 7
    %v8297 = vsub.s32 7, %v8296
    %v8298 = vrot.slane %v8265, %v8297
    %v8307 = vmul.f32 %v8087, %v8270
    %v8308 = vmul.f32 %v8089, %v8270
    %v8309 = vmul.f32 %v8091, %v8274
    %v8310 = vmul.f32 %v8093, %v8274
    %v8311 = vmul.f32 %v8095, %v8278
    %v8312 = vmul.f32 %v8097, %v8278
    %v8313 = vmul.f32 %v8099, %v8282
    %v8314 = vmul.f32 %v8101, %v8282
    %v8315 = vmul.f32 %v8103, %v8286
    %v8316 = vmul.f32 %v8105, %v8286
    %v8317 = vmul.f32 %v8107, %v8290
    %v8318 = vmul.f32 %v8109, %v8290
    %v8319 = vmul.f32 %v8111, %v8294
    %v8320 = vmul.f32 %v8113, %v8294
    %v8321 = vmul.f32 %v8115, %v8298
    %v8322 = vmul.f32 %v8117, %v8298
    %8324 = vset.pattern.permute.xlu0 0
    %8325 = vperm.xlu0 %8324, %v8307
    %v8326 = vpop.permute.xlu0 %8325
    %8329 = vset.pattern.permute.xlu0 0
    %8330 = vperm.xlu0 %8329, %v8308
    %v8331 = vpop.permute.xlu0 %8330
    %8334 = vset.pattern.permute.xlu0 0
    %8335 = vperm.xlu0 %8334, %v8309
    %v8336 = vpop.permute.xlu0 %8335
    %8339 = vset.pattern.permute.xlu0 0
    %8340 = vperm.xlu0 %8339, %v8310
    %v8341 = vpop.permute.xlu0 %8340
    %8344 = vset.pattern.permute.xlu0 0
    %8345 = vperm.xlu0 %8344, %v8311
    %v8346 = vpop.permute.xlu0 %8345
    %8349 = vset.pattern.permute.xlu0 0
    %8350 = vperm.xlu0 %8349, %v8312
    %v8351 = vpop.permute.xlu0 %8350
    %8354 = vset.pattern.permute.xlu0 0
    %8355 = vperm.xlu0 %8354, %v8313
    %v8356 = vpop.permute.xlu0 %8355
    %8359 = vset.pattern.permute.xlu0 0
    %8360 = vperm.xlu0 %8359, %v8314
    %v8361 = vpop.permute.xlu0 %8360
    %8364 = vset.pattern.permute.xlu0 0
    %8365 = vperm.xlu0 %8364, %v8315
    %v8366 = vpop.permute.xlu0 %8365
    %8369 = vset.pattern.permute.xlu0 0
    %8370 = vperm.xlu0 %8369, %v8316
    %v8371 = vpop.permute.xlu0 %8370
    %8374 = vset.pattern.permute.xlu0 0
    %8375 = vperm.xlu0 %8374, %v8317
    %v8376 = vpop.permute.xlu0 %8375
    %8379 = vset.pattern.permute.xlu0 0
    %8380 = vperm.xlu0 %8379, %v8318
    %v8381 = vpop.permute.xlu0 %8380
    %8384 = vset.pattern.permute.xlu0 0
    %8385 = vperm.xlu0 %8384, %v8319
    %v8386 = vpop.permute.xlu0 %8385
    %8389 = vset.pattern.permute.xlu0 0
    %8390 = vperm.xlu0 %8389, %v8320
    %v8391 = vpop.permute.xlu0 %8390
    %8394 = vset.pattern.permute.xlu0 0
    %8395 = vperm.xlu0 %8394, %v8321
    %v8396 = vpop.permute.xlu0 %8395
    %8399 = vset.pattern.permute.xlu0 0
    %8400 = vperm.xlu0 %8399, %v8322
    %v8401 = vpop.permute.xlu0 %8400
    %v8403 = vmul.f32 %v177, %v8326
    %v8404 = vmul.f32 %v178, %v8331
    %v8405 = vmul.f32 %v179, %v8336
    %v8406 = vmul.f32 %v180, %v8341
    %v8407 = vmul.f32 %v181, %v8346
    %v8408 = vmul.f32 %v182, %v8351
    %v8409 = vmul.f32 %v183, %v8356
    %v8410 = vmul.f32 %v184, %v8361
    %v8411 = vmul.f32 %v185, %v8366
    %v8412 = vmul.f32 %v186, %v8371
    %v8413 = vmul.f32 %v187, %v8376
    %v8414 = vmul.f32 %v188, %v8381
    %v8415 = vmul.f32 %v189, %v8386
    %v8416 = vmul.f32 %v190, %v8391
    %v8417 = vmul.f32 %v191, %v8396
    %v8418 = vmul.f32 %v192, %v8401
    %v8419 = vsel %vm1113, %v8403, 0.0
    %v8420 = vsel %vm1113, %v8404, 0.0
    %v8421 = vadd.f32 %v8419, %v8420
    %v8422 = vrot.slane %v8421, 4
    %v8423 = vadd.f32 %v8421, %v8422
    %v8424 = vrot.slane %v8423, 2
    %v8425 = vadd.f32 %v8423, %v8424
    %v8426 = vrot.slane %v8425, 1
    %v8427 = vadd.f32 %v8425, %v8426
    %v8428 = vsel %vm1113, %v8405, 0.0
    %v8429 = vsel %vm1113, %v8406, 0.0
    %v8430 = vadd.f32 %v8428, %v8429
    %v8431 = vrot.slane %v8430, 4
    %v8432 = vadd.f32 %v8430, %v8431
    %v8433 = vrot.slane %v8432, 2
    %v8434 = vadd.f32 %v8432, %v8433
    %v8435 = vrot.slane %v8434, 1
    %v8436 = vadd.f32 %v8434, %v8435
    %v8437 = vsel %vm1113, %v8407, 0.0
    %v8438 = vsel %vm1113, %v8408, 0.0
    %v8439 = vadd.f32 %v8437, %v8438
    %v8440 = vrot.slane %v8439, 4
    %v8441 = vadd.f32 %v8439, %v8440
    %v8442 = vrot.slane %v8441, 2
    %v8443 = vadd.f32 %v8441, %v8442
    %v8444 = vrot.slane %v8443, 1
    %v8445 = vadd.f32 %v8443, %v8444
    %v8446 = vsel %vm1113, %v8409, 0.0
    %v8447 = vsel %vm1113, %v8410, 0.0
    %v8448 = vadd.f32 %v8446, %v8447
    %v8449 = vrot.slane %v8448, 4
    %v8450 = vadd.f32 %v8448, %v8449
    %v8451 = vrot.slane %v8450, 2
    %v8452 = vadd.f32 %v8450, %v8451
    %v8453 = vrot.slane %v8452, 1
    %v8454 = vadd.f32 %v8452, %v8453
    %v8455 = vsel %vm1113, %v8411, 0.0
    %v8456 = vsel %vm1113, %v8412, 0.0
    %v8457 = vadd.f32 %v8455, %v8456
    %v8458 = vrot.slane %v8457, 4
    %v8459 = vadd.f32 %v8457, %v8458
    %v8460 = vrot.slane %v8459, 2
    %v8461 = vadd.f32 %v8459, %v8460
    %v8462 = vrot.slane %v8461, 1
    %v8463 = vadd.f32 %v8461, %v8462
    %v8464 = vsel %vm1113, %v8413, 0.0
    %v8465 = vsel %vm1113, %v8414, 0.0
    %v8466 = vadd.f32 %v8464, %v8465
    %v8467 = vrot.slane %v8466, 4
    %v8468 = vadd.f32 %v8466, %v8467
    %v8469 = vrot.slane %v8468, 2
    %v8470 = vadd.f32 %v8468, %v8469
    %v8471 = vrot.slane %v8470, 1
    %v8472 = vadd.f32 %v8470, %v8471
    %v8473 = vsel %vm1113, %v8415, 0.0
    %v8474 = vsel %vm1113, %v8416, 0.0
    %v8475 = vadd.f32 %v8473, %v8474
    %v8476 = vrot.slane %v8475, 4
    %v8477 = vadd.f32 %v8475, %v8476
    %v8478 = vrot.slane %v8477, 2
    %v8479 = vadd.f32 %v8477, %v8478
    %v8480 = vrot.slane %v8479, 1
    %v8481 = vadd.f32 %v8479, %v8480
    %v8482 = vsel %vm1113, %v8417, 0.0
    %v8483 = vsel %vm1113, %v8418, 0.0
    %v8484 = vadd.f32 %v8482, %v8483
    %v8485 = vrot.slane %v8484, 4
    %v8486 = vadd.f32 %v8484, %v8485
    %v8487 = vrot.slane %v8486, 2
    %v8488 = vadd.f32 %v8486, %v8487
    %v8489 = vrot.slane %v8488, 1
    %v8490 = vadd.f32 %v8488, %v8489
    %v8491 = vpack.c.bf16 %v8427, %v8427
    %v8492 = vpack.c.bf16 %v8436, %v8436
    %v8493 = vpack.c.bf16 %v8445, %v8445
    %v8494 = vpack.c.bf16 %v8454, %v8454
    %v8495 = vpack.c.bf16 %v8463, %v8463
    %v8496 = vpack.c.bf16 %v8472, %v8472
    %v8497 = vpack.c.bf16 %v8481, %v8481
    %v8498 = vpack.c.bf16 %v8490, %v8490
    %v8507 = vunpack.c.l.b16 %v8491
    %v8508 = vunpack.c.l.b16 %v8492
    %v8509 = vunpack.c.l.b16 %v8493
    %v8510 = vunpack.c.l.b16 %v8494
    %v8511 = vunpack.c.l.b16 %v8495
    %v8512 = vunpack.c.l.b16 %v8496
    %v8513 = vunpack.c.l.b16 %v8497
    %v8514 = vunpack.c.l.b16 %v8498
    %v8515 = vsel %vm704, %v8508, %v8507
    %v8516 = vsel %vm706, %v8509, %v8515
    %v8517 = vsel %vm708, %v8510, %v8516
    %v8518 = vsel %vm710, %v8511, %v8517
    %v8519 = vsel %vm712, %v8512, %v8518
    %v8520 = vsel %vm714, %v8513, %v8519
    %v8521 = vsel %vm716, %v8514, %v8520
    %v8522 = vpack.c.b16 %v8521, %v8521
    %v8524 = vsel %vm1113, %v8522, 0
    %8526 = vmatprep.subr.bf16.mxu0 %v1231
    %8527 = vmatpush1.bf16.msra.mxu0 %v1230
    %8528 = vmatprep.subr.bf16.mxu0 %v1233
    %8529 = vmatpush1.bf16.msra.mxu0 %v1232
    %8530 = vmatprep.subr.bf16.mxu0 0
    %8531 = vmatpush1.bf16.msra.mxu0 0
    %8532 = vmatprep.subr.bf16.mxu0 0
    %8533 = vmatpush1.bf16.msra.mxu0 0
    %8534 = vmatprep.subr.bf16.mxu0 0
    %8535 = vmatpush1.bf16.msra.mxu0 0
    %8536 = vmatprep.subr.bf16.mxu0 0
    %8537 = vmatpush1.bf16.msra.mxu0 0
    %8538 = vmatprep.subr.bf16.mxu0 0
    %8539 = vmatpush1.bf16.msra.mxu0 0
    %8540 = vmatprep.subr.bf16.mxu0 0
    %8541 = vmatpush1.bf16.msra.mxu0 0
    %8542 = vmatprep.subr.bf16.mxu0 0
    %8543 = vmatpush1.bf16.msra.mxu0 0
    %8544 = vmatprep.subr.bf16.mxu0 0
    %8545 = vmatpush1.bf16.msra.mxu0 0
    %8546 = vmatprep.subr.bf16.mxu0 0
    %8547 = vmatpush1.bf16.msra.mxu0 0
    %8548 = vmatprep.subr.bf16.mxu0 0
    %8549 = vmatpush1.bf16.msra.mxu0 0
    %8550 = vmatprep.subr.bf16.mxu0 0
    %8551 = vmatpush1.bf16.msra.mxu0 0
    %8552 = vmatprep.subr.bf16.mxu0 0
    %8553 = vmatpush1.bf16.msra.mxu0 0
    %8554 = vmatprep.subr.bf16.mxu0 0
    %8555 = vmatpush1.bf16.msra.mxu0 0
    %8556 = vmatprep.subr.bf16.mxu0 0
    %8557 = vmatpush1.bf16.msra.mxu0 0
    %8558 = vmatprep.mubr.bf16.mxu0 0
    %8559 = vmatmul.mubr.bf16.gmra.mrb[0].mxu0 %v8524
    %v8560 = vpop.f32.mrb[0].mxu0
    %v8561 = vadd.f32 %v316, %v8560
    %v8562 = vpop.f32.mrb[0].mxu0
    %v8563 = vadd.f32 %v320, %v8562
    %v8564 = vpop.f32.mrb[0].mxu0
    %v8565 = vpop.f32.mrb[0].mxu0
    %8566 = vdwg.mxu0
    %s8567 = scalar_lea.vmem [#allocation9], 48
    %v8568 = vld [vmem:[%s8567] sm:$0xff]
    %v8569 = vadd.f32 %v8568, %v8563
    %v8570 = vpack.c.bf16 %v8569, %v8569
    %8571 = vmatprep.subr.bf16.mxu0 %v1382
    %8572 = vmatpush1.bf16.msra.mxu0 %v1381
    %8573 = vmatprep.subr.bf16.mxu0 %v1386
    %8574 = vmatpush1.bf16.msra.mxu0 %v1385
    %8575 = vmatprep.subr.bf16.mxu0 %v1390
    %8576 = vmatpush1.bf16.msra.mxu0 %v1389
    %8577 = vmatprep.subr.bf16.mxu0 %v1394
    %8578 = vmatpush1.bf16.msra.mxu0 %v1393
    %8579 = vmatprep.subr.bf16.mxu0 %v1398
    %8580 = vmatpush1.bf16.msra.mxu0 %v1397
    %8581 = vmatprep.subr.bf16.mxu0 %v1402
    %8582 = vmatpush1.bf16.msra.mxu0 %v1401
    %8583 = vmatprep.subr.bf16.mxu0 %v1406
    %8584 = vmatpush1.bf16.msra.mxu0 %v1405
    %8585 = vmatprep.subr.bf16.mxu0 %v1410
    %8586 = vmatpush1.bf16.msra.mxu0 %v1409
    %8587 = vmatprep.subr.bf16.mxu0 0
    %8588 = vmatpush1.bf16.msra.mxu0 0
    %8589 = vmatprep.subr.bf16.mxu0 0
    %8590 = vmatpush1.bf16.msra.mxu0 0
    %8591 = vmatprep.subr.bf16.mxu0 0
    %8592 = vmatpush1.bf16.msra.mxu0 0
    %8593 = vmatprep.subr.bf16.mxu0 0
    %8594 = vmatpush1.bf16.msra.mxu0 0
    %8595 = vmatprep.subr.bf16.mxu0 0
    %8596 = vmatpush1.bf16.msra.mxu0 0
    %8597 = vmatprep.subr.bf16.mxu0 0
    %8598 = vmatpush1.bf16.msra.mxu0 0
    %8599 = vmatprep.subr.bf16.mxu0 0
    %8600 = vmatpush1.bf16.msra.mxu0 0
    %8601 = vmatprep.subr.bf16.mxu0 0
    %8602 = vmatpush1.bf16.msra.mxu0 0
    %8603 = vmatprep.mubr.bf16.mxu0 0
    %8604 = vmatmul.mubr.bf16.gmra.mrb[0].mxu0 %v7719
    %v8605 = vpop.f32.mrb[0].mxu0
    %v8606 = vadd.f32 0.0, %v8605
    %v8607 = vpop.f32.mrb[0].mxu0
    %v8608 = vadd.f32 0.0, %v8607
    %v8609 = vpop.f32.mrb[0].mxu0
    %v8610 = vpop.f32.mrb[0].mxu0
    %8611 = vdwg.mxu0
    %8612 = vmatprep.subr.bf16.mxu0 %v1384
    %8613 = vmatpush1.bf16.msra.mxu0 %v1383
    %8614 = vmatprep.subr.bf16.mxu0 %v1388
    %8615 = vmatpush1.bf16.msra.mxu0 %v1387
    %8616 = vmatprep.subr.bf16.mxu0 %v1392
    %8617 = vmatpush1.bf16.msra.mxu0 %v1391
    %8618 = vmatprep.subr.bf16.mxu0 %v1396
    %8619 = vmatpush1.bf16.msra.mxu0 %v1395
    %8620 = vmatprep.subr.bf16.mxu0 %v1400
    %8621 = vmatpush1.bf16.msra.mxu0 %v1399
    %8622 = vmatprep.subr.bf16.mxu0 %v1404
    %8623 = vmatpush1.bf16.msra.mxu0 %v1403
    %8624 = vmatprep.subr.bf16.mxu0 %v1408
    %8625 = vmatpush1.bf16.msra.mxu0 %v1407
    %8626 = vmatprep.subr.bf16.mxu0 %v1412
    %8627 = vmatpush1.bf16.msra.mxu0 %v1411
    %8628 = vmatprep.subr.bf16.mxu0 0
    %8629 = vmatpush1.bf16.msra.mxu0 0
    %8630 = vmatprep.subr.bf16.mxu0 0
    %8631 = vmatpush1.bf16.msra.mxu0 0
    %8632 = vmatprep.subr.bf16.mxu0 0
    %8633 = vmatpush1.bf16.msra.mxu0 0
    %8634 = vmatprep.subr.bf16.mxu0 0
    %8635 = vmatpush1.bf16.msra.mxu0 0
    %8636 = vmatprep.subr.bf16.mxu0 0
    %8637 = vmatpush1.bf16.msra.mxu0 0
    %8638 = vmatprep.subr.bf16.mxu0 0
    %8639 = vmatpush1.bf16.msra.mxu0 0
    %8640 = vmatprep.subr.bf16.mxu0 0
    %8641 = vmatpush1.bf16.msra.mxu0 0
    %8642 = vmatprep.subr.bf16.mxu0 0
    %8643 = vmatpush1.bf16.msra.mxu0 0
    %8644 = vmatprep.mubr.bf16.mxu0 0
    %8645 = vmatmul.mubr.bf16.gmra.mrb[0].mxu0 %v7719
    %v8646 = vpop.f32.mrb[0].mxu0
    %v8647 = vadd.f32 0.0, %v8646
    %v8648 = vpop.f32.mrb[0].mxu0
    %v8649 = vadd.f32 0.0, %v8648
    %v8650 = vpop.f32.mrb[0].mxu0
    %v8651 = vpop.f32.mrb[0].mxu0
    %8652 = vdwg.mxu0
    %8653 = vmatprep.subr.bf16.mxu0 %v1624
    %8654 = vmatpush1.bf16.msra.mxu0 %v1623
    %8655 = vmatprep.subr.bf16.mxu0 %v1628
    %8656 = vmatpush1.bf16.msra.mxu0 %v1627
    %8657 = vmatprep.subr.bf16.mxu0 %v1632
    %8658 = vmatpush1.bf16.msra.mxu0 %v1631
    %8659 = vmatprep.subr.bf16.mxu0 %v1636
    %8660 = vmatpush1.bf16.msra.mxu0 %v1635
    %8661 = vmatprep.subr.bf16.mxu0 %v1640
    %8662 = vmatpush1.bf16.msra.mxu0 %v1639
    %8663 = vmatprep.subr.bf16.mxu0 %v1644
    %8664 = vmatpush1.bf16.msra.mxu0 %v1643
    %8665 = vmatprep.subr.bf16.mxu0 %v1648
    %8666 = vmatpush1.bf16.msra.mxu0 %v1647
    %8667 = vmatprep.subr.bf16.mxu0 %v1652
    %8668 = vmatpush1.bf16.msra.mxu0 %v1651
    %8669 = vmatprep.subr.bf16.mxu0 0
    %8670 = vmatpush1.bf16.msra.mxu0 0
    %8671 = vmatprep.subr.bf16.mxu0 0
    %8672 = vmatpush1.bf16.msra.mxu0 0
    %8673 = vmatprep.subr.bf16.mxu0 0
    %8674 = vmatpush1.bf16.msra.mxu0 0
    %8675 = vmatprep.subr.bf16.mxu0 0
    %8676 = vmatpush1.bf16.msra.mxu0 0
    %8677 = vmatprep.subr.bf16.mxu0 0
    %8678 = vmatpush1.bf16.msra.mxu0 0
    %8679 = vmatprep.subr.bf16.mxu0 0
    %8680 = vmatpush1.bf16.msra.mxu0 0
    %8681 = vmatprep.subr.bf16.mxu0 0
    %8682 = vmatpush1.bf16.msra.mxu0 0
    %8683 = vmatprep.subr.bf16.mxu0 0
    %8684 = vmatpush1.bf16.msra.mxu0 0
    %8685 = vmatprep.mubr.bf16.mxu0 0
    %8686 = vmatmul.mubr.bf16.gmra.mrb[0].mxu0 %v8570
    %v8687 = vpop.f32.mrb[0].mxu0
    %v8688 = vadd.f32 %v8606, %v8687
    %v8689 = vpop.f32.mrb[0].mxu0
    %v8690 = vadd.f32 %v8608, %v8689
    %v8691 = vpop.f32.mrb[0].mxu0
    %v8692 = vpop.f32.mrb[0].mxu0
    %8693 = vdwg.mxu0
    %8694 = vmatprep.subr.bf16.mxu0 %v1626
    %8695 = vmatpush1.bf16.msra.mxu0 %v1625
    %8696 = vmatprep.subr.bf16.mxu0 %v1630
    %8697 = vmatpush1.bf16.msra.mxu0 %v1629
    %8698 = vmatprep.subr.bf16.mxu0 %v1634
    %8699 = vmatpush1.bf16.msra.mxu0 %v1633
    %8700 = vmatprep.subr.bf16.mxu0 %v1638
    %8701 = vmatpush1.bf16.msra.mxu0 %v1637
    %8702 = vmatprep.subr.bf16.mxu0 %v1642
    %8703 = vmatpush1.bf16.msra.mxu0 %v1641
    %8704 = vmatprep.subr.bf16.mxu0 %v1646
    %8705 = vmatpush1.bf16.msra.mxu0 %v1645
    %8706 = vmatprep.subr.bf16.mxu0 %v1650
    %8707 = vmatpush1.bf16.msra.mxu0 %v1649
    %8708 = vmatprep.subr.bf16.mxu0 %v1654
    %8709 = vmatpush1.bf16.msra.mxu0 %v1653
    %8710 = vmatprep.subr.bf16.mxu0 0
    %8711 = vmatpush1.bf16.msra.mxu0 0
    %8712 = vmatprep.subr.bf16.mxu0 0
    %8713 = vmatpush1.bf16.msra.mxu0 0
    %8714 = vmatprep.subr.bf16.mxu0 0
    %8715 = vmatpush1.bf16.msra.mxu0 0
    %8716 = vmatprep.subr.bf16.mxu0 0
    %8717 = vmatpush1.bf16.msra.mxu0 0
    %8718 = vmatprep.subr.bf16.mxu0 0
    %8719 = vmatpush1.bf16.msra.mxu0 0
    %8720 = vmatprep.subr.bf16.mxu0 0
    %8721 = vmatpush1.bf16.msra.mxu0 0
    %8722 = vmatprep.subr.bf16.mxu0 0
    %8723 = vmatpush1.bf16.msra.mxu0 0
    %8724 = vmatprep.subr.bf16.mxu0 0
    %8725 = vmatpush1.bf16.msra.mxu0 0
    %8726 = vmatprep.mubr.bf16.mxu0 0
    %8727 = vmatmul.mubr.bf16.gmra.mrb[0].mxu0 %v8570
    %v8728 = vpop.f32.mrb[0].mxu0
    %v8729 = vadd.f32 %v8647, %v8728
    %v8730 = vpop.f32.mrb[0].mxu0
    %v8731 = vadd.f32 %v8649, %v8730
    %v8732 = vpop.f32.mrb[0].mxu0
    %v8733 = vpop.f32.mrb[0].mxu0
    %8734 = vdwg.mxu0
    %v8735 = vadd.f32 %v8688, %v328
    %v8736 = vadd.f32 %v8690, %v332
    %v8737 = vadd.f32 %v8729, %v336
    %v8738 = vadd.f32 %v8731, %v340
    %v8739 = vxor.u32 %v8735, 2147483648
    %v8740 = vmul.f32 %v8739, 1.442695
    %v8741 = vpow.pop %v8740
    %v8742 = vadd.f32 %v8741, 1.0
    %v8743 = vrcp.pop %v8742
    %v8744 = vmul.f32 1.0, %v8743
    %v8745 = vxor.u32 %v8736, 2147483648
    %v8746 = vmul.f32 %v8745, 1.442695
    %v8747 = vpow.pop %v8746
    %v8748 = vadd.f32 %v8747, 1.0
    %v8749 = vrcp.pop %v8748
    %v8750 = vmul.f32 1.0, %v8749
    %v8751 = vtanh.pop %v8737
    %v8752 = vxor.u32 %v8738, 2147483648
    %v8753 = vmul.f32 %v8752, 1.442695
    %v8754 = vpow.pop %v8753
    %v8755 = vadd.f32 %v8754, 1.0
    %v8756 = vrcp.pop %v8755
    %v8757 = vmul.f32 1.0, %v8756
    %v8758 = vmul.f32 %v8750, %v7608
    %v8759 = vmul.f32 %v8744, %v8751
    %v8760 = vadd.f32 %v8758, %v8759
    %v8761 = vtanh.pop %v8760
    %v8762 = vmul.f32 %v8757, %v8761
    %v8763 = vadd.f32 %v8762, %v8561
    %v8764 = vpack.c.bf16 %v8763, %v8763
    %8765 = vmatprep.subr.bf16.mxu0 0
    %8766 = vmatpush1.bf16.msra.mxu0 %v1837
    %8767 = vmatprep.subr.bf16.mxu0 0
    %8768 = vmatpush1.bf16.msra.mxu0 %v1838
    %8769 = vmatprep.subr.bf16.mxu0 0
    %8770 = vmatpush1.bf16.msra.mxu0 %v1839
    %8771 = vmatprep.subr.bf16.mxu0 0
    %8772 = vmatpush1.bf16.msra.mxu0 %v1840
    %8773 = vmatprep.subr.bf16.mxu0 0
    %8774 = vmatpush1.bf16.msra.mxu0 %v1841
    %8775 = vmatprep.subr.bf16.mxu0 0
    %8776 = vmatpush1.bf16.msra.mxu0 %v1842
    %8777 = vmatprep.subr.bf16.mxu0 0
    %8778 = vmatpush1.bf16.msra.mxu0 %v1843
    %8779 = vmatprep.subr.bf16.mxu0 0
    %8780 = vmatpush1.bf16.msra.mxu0 %v1844
    %8781 = vmatprep.subr.bf16.mxu0 0
    %8782 = vmatpush1.bf16.msra.mxu0 0
    %8783 = vmatprep.subr.bf16.mxu0 0
    %8784 = vmatpush1.bf16.msra.mxu0 0
    %8785 = vmatprep.subr.bf16.mxu0 0
    %8786 = vmatpush1.bf16.msra.mxu0 0
    %8787 = vmatprep.subr.bf16.mxu0 0
    %8788 = vmatpush1.bf16.msra.mxu0 0
    %8789 = vmatprep.subr.bf16.mxu0 0
    %8790 = vmatpush1.bf16.msra.mxu0 0
    %8791 = vmatprep.subr.bf16.mxu0 0
    %8792 = vmatpush1.bf16.msra.mxu0 0
    %8793 = vmatprep.subr.bf16.mxu0 0
    %8794 = vmatpush1.bf16.msra.mxu0 0
    %8795 = vmatprep.subr.bf16.mxu0 0
    %8796 = vmatpush1.bf16.msra.mxu0 0
    %8797 = vmatprep.mubr.bf16.mxu0 0
    %8798 = vmatmul.mubr.bf16.gmra.mrb[0].mxu0 %v8764
    %v8799 = vpop.f32.mrb[0].mxu0
    %v8800 = vadd.f32 %v1803, %v8799
    %v8801 = vpop.f32.mrb[0].mxu0
    %v8802 = vpop.f32.mrb[0].mxu0
    %v8803 = vpop.f32.mrb[0].mxu0
    %8804 = vdwg.mxu0
    %v8806 = vcombine.high %v8800, %v8800
    %v8808 = vunpack.c.l.s4 1966171168
    %v8809 = vunpack.c.0.s8 %v8808
    %v8810 = vlaneseq
    %v8811 = vshrl.u32 %v8810, 7
    %v8812 = vsub.s32 %v8809, %v8811
    %v8813 = vrot.slane %v8800, %v8812
    %v8815 = vunpack.c.l.s4 1966171168
    %v8816 = vunpack.c.0.s8 %v8815
    %v8817 = vlaneseq
    %v8818 = vshrl.u32 %v8817, 7
    %v8819 = vsub.s32 %v8816, %v8818
    %v8820 = vrot.slane %v8806, %v8819
    %v8821 = vcombine.high %v8813, %v8813
    %v8822 = vcombine.high %v8820, %v8820
    %v8824 = vunpack.c.l.s4 1966171168
    %v8825 = vunpack.c.0.s8 %v8824
    %v8826 = vlaneseq
    %v8827 = vshrl.u32 %v8826, 7
    %v8828 = vsub.s32 %v8825, %v8827
    %v8829 = vrot.slane %v8813, %v8828
    %v8831 = vunpack.c.l.s4 1966171168
    %v8832 = vunpack.c.0.s8 %v8831
    %v8833 = vlaneseq
    %v8834 = vshrl.u32 %v8833, 7
    %v8835 = vsub.s32 %v8832, %v8834
    %v8836 = vrot.slane %v8820, %v8835
    %v8838 = vunpack.c.l.s4 1966171168
    %v8839 = vunpack.c.0.s8 %v8838
    %v8840 = vlaneseq
    %v8841 = vshrl.u32 %v8840, 7
    %v8842 = vsub.s32 %v8839, %v8841
    %v8843 = vrot.slane %v8821, %v8842
    %v8845 = vunpack.c.l.s4 1966171168
    %v8846 = vunpack.c.0.s8 %v8845
    %v8847 = vlaneseq
    %v8848 = vshrl.u32 %v8847, 7
    %v8849 = vsub.s32 %v8846, %v8848
    %v8850 = vrot.slane %v8822, %v8849
    %v8851 = vcombine.high %v8829, %v8829
    %v8852 = vcombine.high %v8836, %v8836
    %v8853 = vcombine.high %v8843, %v8843
    %v8854 = vcombine.high %v8850, %v8850
    %8863 = vst [vmem:[#allocation19 + $0x6] sm:$0x1] %v8829
    %8864 = vst [vmem:[#allocation19 + $0xe] sm:$0x1] %v8843
    %8865 = vst [vmem:[#allocation19 + $0x16] sm:$0x1] %v8851
    %8866 = vst [vmem:[#allocation19 + $0x1e] sm:$0x1] %v8853
    %8867 = vst [vmem:[#allocation19 + $0x26] sm:$0x1] %v8836
    %8868 = vst [vmem:[#allocation19 + $0x2e] sm:$0x1] %v8850
    %8869 = vst [vmem:[#allocation19 + $0x36] sm:$0x1] %v8852
    %8870 = vst [vmem:[#allocation19 + $0x3e] sm:$0x1] %v8854
    %v8871 = vpack.c.bf16 %v8762, %v8762
    %8872 = vmatprep.subr.bf16.mxu0 0
    %8873 = vmatpush1.bf16.msra.mxu0 %v380
    %8874 = vmatprep.subr.bf16.mxu0 0
    %8875 = vmatpush1.bf16.msra.mxu0 %v381
    %8876 = vmatprep.subr.bf16.mxu0 0
    %8877 = vmatpush1.bf16.msra.mxu0 %v382
    %8878 = vmatprep.subr.bf16.mxu0 0
    %8879 = vmatpush1.bf16.msra.mxu0 %v383
    %8880 = vmatprep.subr.bf16.mxu0 0
    %8881 = vmatpush1.bf16.msra.mxu0 %v384
    %8882 = vmatprep.subr.bf16.mxu0 0
    %8883 = vmatpush1.bf16.msra.mxu0 %v385
    %8884 = vmatprep.subr.bf16.mxu0 0
    %8885 = vmatpush1.bf16.msra.mxu0 %v386
    %8886 = vmatprep.subr.bf16.mxu0 0
    %8887 = vmatpush1.bf16.msra.mxu0 %v387
    %8888 = vmatprep.subr.bf16.mxu0 0
    %8889 = vmatpush1.bf16.msra.mxu0 0
    %8890 = vmatprep.subr.bf16.mxu0 0
    %8891 = vmatpush1.bf16.msra.mxu0 0
    %8892 = vmatprep.subr.bf16.mxu0 0
    %8893 = vmatpush1.bf16.msra.mxu0 0
    %8894 = vmatprep.subr.bf16.mxu0 0
    %8895 = vmatpush1.bf16.msra.mxu0 0
    %8896 = vmatprep.subr.bf16.mxu0 0
    %8897 = vmatpush1.bf16.msra.mxu0 0
    %8898 = vmatprep.subr.bf16.mxu0 0
    %8899 = vmatpush1.bf16.msra.mxu0 0
    %8900 = vmatprep.subr.bf16.mxu0 0
    %8901 = vmatpush1.bf16.msra.mxu0 0
    %8902 = vmatprep.subr.bf16.mxu0 0
    %8903 = vmatpush1.bf16.msra.mxu0 0
    %8904 = vmatprep.mubr.bf16.mxu0 0
    %8905 = vmatmul.mubr.bf16.gmra.mrb[0].mxu0 %v8871
    %v8906 = vpop.f32.mrb[0].mxu0
    %v8907 = vadd.f32 0.0, %v8906
    %v8908 = vpop.f32.mrb[0].mxu0
    %v8909 = vpop.f32.mrb[0].mxu0
    %v8910 = vpop.f32.mrb[0].mxu0
    %8911 = vdwg.mxu0
    %v8913 = vcombine.high %v8907, %v8907
    %v8915 = vunpack.c.l.s4 1966171168
    %v8916 = vunpack.c.0.s8 %v8915
    %v8917 = vlaneseq
    %v8918 = vshrl.u32 %v8917, 7
    %v8919 = vsub.s32 %v8916, %v8918
    %v8920 = vrot.slane %v8907, %v8919
    %v8922 = vunpack.c.l.s4 1966171168
    %v8923 = vunpack.c.0.s8 %v8922
    %v8924 = vlaneseq
    %v8925 = vshrl.u32 %v8924, 7
    %v8926 = vsub.s32 %v8923, %v8925
    %v8927 = vrot.slane %v8913, %v8926
    %v8928 = vcombine.high %v8920, %v8920
    %v8929 = vcombine.high %v8927, %v8927
    %v8931 = vunpack.c.l.s4 1966171168
    %v8932 = vunpack.c.0.s8 %v8931
    %v8933 = vlaneseq
    %v8934 = vshrl.u32 %v8933, 7
    %v8935 = vsub.s32 %v8932, %v8934
    %v8936 = vrot.slane %v8920, %v8935
    %v8938 = vunpack.c.l.s4 1966171168
    %v8939 = vunpack.c.0.s8 %v8938
    %v8940 = vlaneseq
    %v8941 = vshrl.u32 %v8940, 7
    %v8942 = vsub.s32 %v8939, %v8941
    %v8943 = vrot.slane %v8927, %v8942
    %v8945 = vunpack.c.l.s4 1966171168
    %v8946 = vunpack.c.0.s8 %v8945
    %v8947 = vlaneseq
    %v8948 = vshrl.u32 %v8947, 7
    %v8949 = vsub.s32 %v8946, %v8948
    %v8950 = vrot.slane %v8928, %v8949
    %v8952 = vunpack.c.l.s4 1966171168
    %v8953 = vunpack.c.0.s8 %v8952
    %v8954 = vlaneseq
    %v8955 = vshrl.u32 %v8954, 7
    %v8956 = vsub.s32 %v8953, %v8955
    %v8957 = vrot.slane %v8929, %v8956
    %v8958 = vcombine.high %v8936, %v8936
    %v8959 = vcombine.high %v8943, %v8943
    %v8960 = vcombine.high %v8950, %v8950
    %v8961 = vcombine.high %v8957, %v8957
    %v8962 = vlaneseq
    %v8963 = vshrl.u32 %v8962, 7
    %v8964 = vsub.s32 0, %v8963
    %v8965 = vrot.slane %v8936, %v8964
    %v8966 = vlaneseq
    %v8967 = vshrl.u32 %v8966, 7
    %v8968 = vsub.s32 0, %v8967
    %v8969 = vrot.slane %v8950, %v8968
    %v8970 = vlaneseq
    %v8971 = vshrl.u32 %v8970, 7
    %v8972 = vsub.s32 0, %v8971
    %v8973 = vrot.slane %v8958, %v8972
    %v8974 = vlaneseq
    %v8975 = vshrl.u32 %v8974, 7
    %v8976 = vsub.s32 0, %v8975
    %v8977 = vrot.slane %v8960, %v8976
    %v8978 = vlaneseq
    %v8979 = vshrl.u32 %v8978, 7
    %v8980 = vsub.s32 0, %v8979
    %v8981 = vrot.slane %v8943, %v8980
    %v8982 = vlaneseq
    %v8983 = vshrl.u32 %v8982, 7
    %v8984 = vsub.s32 0, %v8983
    %v8985 = vrot.slane %v8957, %v8984
    %v8986 = vlaneseq
    %v8987 = vshrl.u32 %v8986, 7
    %v8988 = vsub.s32 0, %v8987
    %v8989 = vrot.slane %v8959, %v8988
    %v8990 = vlaneseq
    %v8991 = vshrl.u32 %v8990, 7
    %v8992 = vsub.s32 0, %v8991
    %v8993 = vrot.slane %v8961, %v8992
    %v9002 = vadd.f32 %v193, %v8965
    %v9003 = vadd.f32 %v194, %v8965
    %v9004 = vadd.f32 %v195, %v8969
    %v9005 = vadd.f32 %v196, %v8969
    %v9006 = vadd.f32 %v197, %v8973
    %v9007 = vadd.f32 %v198, %v8973
    %v9008 = vadd.f32 %v199, %v8977
    %v9009 = vadd.f32 %v200, %v8977
    %v9010 = vadd.f32 %v201, %v8981
    %v9011 = vadd.f32 %v202, %v8981
    %v9012 = vadd.f32 %v203, %v8985
    %v9013 = vadd.f32 %v204, %v8985
    %v9014 = vadd.f32 %v205, %v8989
    %v9015 = vadd.f32 %v206, %v8989
    %v9016 = vadd.f32 %v207, %v8993
    %v9017 = vadd.f32 %v208, %v8993
    %v9018 = vtanh.pop %v9002
    %v9019 = vtanh.pop %v9003
    %v9020 = vtanh.pop %v9004
    %v9021 = vtanh.pop %v9005
    %v9022 = vtanh.pop %v9006
    %v9023 = vtanh.pop %v9007
    %v9024 = vtanh.pop %v9008
    %v9025 = vtanh.pop %v9009
    %v9026 = vtanh.pop %v9010
    %v9027 = vtanh.pop %v9011
    %v9028 = vtanh.pop %v9012
    %v9029 = vtanh.pop %v9013
    %v9030 = vtanh.pop %v9014
    %v9031 = vtanh.pop %v9015
    %v9032 = vtanh.pop %v9016
    %v9033 = vtanh.pop %v9017
    %v9034 = vmul.f32 %v9018, %v562
    %v9035 = vmul.f32 %v9019, %v562
    %v9036 = vmul.f32 %v9020, %v562
    %v9037 = vmul.f32 %v9021, %v562
    %v9038 = vmul.f32 %v9022, %v562
    %v9039 = vmul.f32 %v9023, %v562
    %v9040 = vmul.f32 %v9024, %v562
    %v9041 = vmul.f32 %v9025, %v562
    %v9042 = vmul.f32 %v9026, %v562
    %v9043 = vmul.f32 %v9027, %v562
    %v9044 = vmul.f32 %v9028, %v562
    %v9045 = vmul.f32 %v9029, %v562
    %v9046 = vmul.f32 %v9030, %v562
    %v9047 = vmul.f32 %v9031, %v562
    %v9048 = vmul.f32 %v9032, %v562
    %v9049 = vmul.f32 %v9033, %v562
    %9050 = vadd.xlane.f32.xlu0 %v9034
    %v9051 = vpop.xlane.xlu0 %9050
    %9052 = vadd.xlane.f32.xlu0 %v9035
    %v9053 = vpop.xlane.xlu0 %9052
    %9054 = vadd.xlane.f32.xlu0 %v9036
    %v9055 = vpop.xlane.xlu0 %9054
    %9056 = vadd.xlane.f32.xlu0 %v9037
    %v9057 = vpop.xlane.xlu0 %9056
    %9058 = vadd.xlane.f32.xlu0 %v9038
    %v9059 = vpop.xlane.xlu0 %9058
    %9060 = vadd.xlane.f32.xlu0 %v9039
    %v9061 = vpop.xlane.xlu0 %9060
    %9062 = vadd.xlane.f32.xlu0 %v9040
    %v9063 = vpop.xlane.xlu0 %9062
    %9064 = vadd.xlane.f32.xlu0 %v9041
    %v9065 = vpop.xlane.xlu0 %9064
    %9066 = vadd.xlane.f32.xlu0 %v9042
    %v9067 = vpop.xlane.xlu0 %9066
    %9068 = vadd.xlane.f32.xlu0 %v9043
    %v9069 = vpop.xlane.xlu0 %9068
    %9070 = vadd.xlane.f32.xlu0 %v9044
    %v9071 = vpop.xlane.xlu0 %9070
    %9072 = vadd.xlane.f32.xlu0 %v9045
    %v9073 = vpop.xlane.xlu0 %9072
    %9074 = vadd.xlane.f32.xlu0 %v9046
    %v9075 = vpop.xlane.xlu0 %9074
    %9076 = vadd.xlane.f32.xlu0 %v9047
    %v9077 = vpop.xlane.xlu0 %9076
    %9078 = vadd.xlane.f32.xlu0 %v9048
    %v9079 = vpop.xlane.xlu0 %9078
    %9080 = vadd.xlane.f32.xlu0 %v9049
    %v9081 = vpop.xlane.xlu0 %9080
    %v9098 = vlaneseq
    %v9099 = vshrl.u32 %v9098, 7
    %v9100 = vsub.s32 %v629, %v9099
    %v9101 = vrot.slane %v9051, %v9100
    %v9102 = vlaneseq
    %v9103 = vshrl.u32 %v9102, 7
    %v9104 = vsub.s32 %v634, %v9103
    %v9105 = vrot.slane %v9053, %v9104
    %v9106 = vsel %vm639, %v9105, %v9101
    %v9107 = vlaneseq
    %v9108 = vshrl.u32 %v9107, 7
    %v9109 = vsub.s32 %v629, %v9108
    %v9110 = vrot.slane %v9055, %v9109
    %v9111 = vlaneseq
    %v9112 = vshrl.u32 %v9111, 7
    %v9113 = vsub.s32 %v634, %v9112
    %v9114 = vrot.slane %v9057, %v9113
    %v9115 = vsel %vm639, %v9114, %v9110
    %v9116 = vlaneseq
    %v9117 = vshrl.u32 %v9116, 7
    %v9118 = vsub.s32 %v629, %v9117
    %v9119 = vrot.slane %v9059, %v9118
    %v9120 = vlaneseq
    %v9121 = vshrl.u32 %v9120, 7
    %v9122 = vsub.s32 %v634, %v9121
    %v9123 = vrot.slane %v9061, %v9122
    %v9124 = vsel %vm639, %v9123, %v9119
    %v9125 = vlaneseq
    %v9126 = vshrl.u32 %v9125, 7
    %v9127 = vsub.s32 %v629, %v9126
    %v9128 = vrot.slane %v9063, %v9127
    %v9129 = vlaneseq
    %v9130 = vshrl.u32 %v9129, 7
    %v9131 = vsub.s32 %v634, %v9130
    %v9132 = vrot.slane %v9065, %v9131
    %v9133 = vsel %vm639, %v9132, %v9128
    %v9134 = vlaneseq
    %v9135 = vshrl.u32 %v9134, 7
    %v9136 = vsub.s32 %v629, %v9135
    %v9137 = vrot.slane %v9067, %v9136
    %v9138 = vlaneseq
    %v9139 = vshrl.u32 %v9138, 7
    %v9140 = vsub.s32 %v634, %v9139
    %v9141 = vrot.slane %v9069, %v9140
    %v9142 = vsel %vm639, %v9141, %v9137
    %v9143 = vlaneseq
    %v9144 = vshrl.u32 %v9143, 7
    %v9145 = vsub.s32 %v629, %v9144
    %v9146 = vrot.slane %v9071, %v9145
    %v9147 = vlaneseq
    %v9148 = vshrl.u32 %v9147, 7
    %v9149 = vsub.s32 %v634, %v9148
    %v9150 = vrot.slane %v9073, %v9149
    %v9151 = vsel %vm639, %v9150, %v9146
    %v9152 = vlaneseq
    %v9153 = vshrl.u32 %v9152, 7
    %v9154 = vsub.s32 %v629, %v9153
    %v9155 = vrot.slane %v9075, %v9154
    %v9156 = vlaneseq
    %v9157 = vshrl.u32 %v9156, 7
    %v9158 = vsub.s32 %v634, %v9157
    %v9159 = vrot.slane %v9077, %v9158
    %v9160 = vsel %vm639, %v9159, %v9155
    %v9161 = vlaneseq
    %v9162 = vshrl.u32 %v9161, 7
    %v9163 = vsub.s32 %v629, %v9162
    %v9164 = vrot.slane %v9079, %v9163
    %v9165 = vlaneseq
    %v9166 = vshrl.u32 %v9165, 7
    %v9167 = vsub.s32 %v634, %v9166
    %v9168 = vrot.slane %v9081, %v9167
    %v9169 = vsel %vm639, %v9168, %v9164
    %v9170 = vsel %vm704, %v9115, %v9106
    %v9171 = vsel %vm706, %v9124, %v9170
    %v9172 = vsel %vm708, %v9133, %v9171
    %v9173 = vsel %vm710, %v9142, %v9172
    %v9174 = vsel %vm712, %v9151, %v9173
    %v9175 = vsel %vm714, %v9160, %v9174
    %v9176 = vsel %vm716, %v9169, %v9175
    %v9178 = vsel %vm719, %v9176, -inf
    %9179 = vmax.xlane.f32.xlu0 %v9178
    %v9180 = vpop.xlane.xlu0 %9179
    %v9182 = vlaneseq
    %v9183 = vshrl.u32 %v9182, 7
    %v9184 = vsub.s32 0, %v9183
    %v9185 = vrot.slane %v9180, %v9184
    %v9186 = vlaneseq
    %v9187 = vshrl.u32 %v9186, 7
    %v9188 = vsub.s32 1, %v9187
    %v9189 = vrot.slane %v9180, %v9188
    %v9190 = vlaneseq
    %v9191 = vshrl.u32 %v9190, 7
    %v9192 = vsub.s32 2, %v9191
    %v9193 = vrot.slane %v9180, %v9192
    %v9194 = vlaneseq
    %v9195 = vshrl.u32 %v9194, 7
    %v9196 = vsub.s32 3, %v9195
    %v9197 = vrot.slane %v9180, %v9196
    %v9198 = vlaneseq
    %v9199 = vshrl.u32 %v9198, 7
    %v9200 = vsub.s32 4, %v9199
    %v9201 = vrot.slane %v9180, %v9200
    %v9202 = vlaneseq
    %v9203 = vshrl.u32 %v9202, 7
    %v9204 = vsub.s32 5, %v9203
    %v9205 = vrot.slane %v9180, %v9204
    %v9206 = vlaneseq
    %v9207 = vshrl.u32 %v9206, 7
    %v9208 = vsub.s32 6, %v9207
    %v9209 = vrot.slane %v9180, %v9208
    %v9210 = vlaneseq
    %v9211 = vshrl.u32 %v9210, 7
    %v9212 = vsub.s32 7, %v9211
    %v9213 = vrot.slane %v9180, %v9212
    %v9222 = vsub.f32 %v9051, %v9185
    %v9223 = vsub.f32 %v9053, %v9185
    %v9224 = vsub.f32 %v9055, %v9189
    %v9225 = vsub.f32 %v9057, %v9189
    %v9226 = vsub.f32 %v9059, %v9193
    %v9227 = vsub.f32 %v9061, %v9193
    %v9228 = vsub.f32 %v9063, %v9197
    %v9229 = vsub.f32 %v9065, %v9197
    %v9230 = vsub.f32 %v9067, %v9201
    %v9231 = vsub.f32 %v9069, %v9201
    %v9232 = vsub.f32 %v9071, %v9205
    %v9233 = vsub.f32 %v9073, %v9205
    %v9234 = vsub.f32 %v9075, %v9209
    %v9235 = vsub.f32 %v9077, %v9209
    %v9236 = vsub.f32 %v9079, %v9213
    %v9237 = vsub.f32 %v9081, %v9213
    %v9238 = vmul.f32 %v9222, 1.442695
    %v9239 = vpow.pop %v9238
    %v9240 = vmul.f32 %v9223, 1.442695
    %v9241 = vpow.pop %v9240
    %v9242 = vmul.f32 %v9224, 1.442695
    %v9243 = vpow.pop %v9242
    %v9244 = vmul.f32 %v9225, 1.442695
    %v9245 = vpow.pop %v9244
    %v9246 = vmul.f32 %v9226, 1.442695
    %v9247 = vpow.pop %v9246
    %v9248 = vmul.f32 %v9227, 1.442695
    %v9249 = vpow.pop %v9248
    %v9250 = vmul.f32 %v9228, 1.442695
    %v9251 = vpow.pop %v9250
    %v9252 = vmul.f32 %v9229, 1.442695
    %v9253 = vpow.pop %v9252
    %v9254 = vmul.f32 %v9230, 1.442695
    %v9255 = vpow.pop %v9254
    %v9256 = vmul.f32 %v9231, 1.442695
    %v9257 = vpow.pop %v9256
    %v9258 = vmul.f32 %v9232, 1.442695
    %v9259 = vpow.pop %v9258
    %v9260 = vmul.f32 %v9233, 1.442695
    %v9261 = vpow.pop %v9260
    %v9262 = vmul.f32 %v9234, 1.442695
    %v9263 = vpow.pop %v9262
    %v9264 = vmul.f32 %v9235, 1.442695
    %v9265 = vpow.pop %v9264
    %v9266 = vmul.f32 %v9236, 1.442695
    %v9267 = vpow.pop %v9266
    %v9268 = vmul.f32 %v9237, 1.442695
    %v9269 = vpow.pop %v9268
    %9286 = vset.pattern.permute.xlu0 0
    %9287 = vperm.xlu0 %9286, %v9239
    %v9288 = vpop.permute.xlu0 %9287
    %9289 = vset.pattern.permute.xlu0 0
    %9290 = vperm.xlu0 %9289, %v9241
    %v9291 = vpop.permute.xlu0 %9290
    %9292 = vset.pattern.permute.xlu0 0
    %9293 = vperm.xlu0 %9292, %v9243
    %v9294 = vpop.permute.xlu0 %9293
    %9295 = vset.pattern.permute.xlu0 0
    %9296 = vperm.xlu0 %9295, %v9245
    %v9297 = vpop.permute.xlu0 %9296
    %9298 = vset.pattern.permute.xlu0 0
    %9299 = vperm.xlu0 %9298, %v9247
    %v9300 = vpop.permute.xlu0 %9299
    %9301 = vset.pattern.permute.xlu0 0
    %9302 = vperm.xlu0 %9301, %v9249
    %v9303 = vpop.permute.xlu0 %9302
    %9304 = vset.pattern.permute.xlu0 0
    %9305 = vperm.xlu0 %9304, %v9251
    %v9306 = vpop.permute.xlu0 %9305
    %9307 = vset.pattern.permute.xlu0 0
    %9308 = vperm.xlu0 %9307, %v9253
    %v9309 = vpop.permute.xlu0 %9308
    %9310 = vset.pattern.permute.xlu0 0
    %9311 = vperm.xlu0 %9310, %v9255
    %v9312 = vpop.permute.xlu0 %9311
    %9313 = vset.pattern.permute.xlu0 0
    %9314 = vperm.xlu0 %9313, %v9257
    %v9315 = vpop.permute.xlu0 %9314
    %9316 = vset.pattern.permute.xlu0 0
    %9317 = vperm.xlu0 %9316, %v9259
    %v9318 = vpop.permute.xlu0 %9317
    %9319 = vset.pattern.permute.xlu0 0
    %9320 = vperm.xlu0 %9319, %v9261
    %v9321 = vpop.permute.xlu0 %9320
    %9322 = vset.pattern.permute.xlu0 0
    %9323 = vperm.xlu0 %9322, %v9263
    %v9324 = vpop.permute.xlu0 %9323
    %9325 = vset.pattern.permute.xlu0 0
    %9326 = vperm.xlu0 %9325, %v9265
    %v9327 = vpop.permute.xlu0 %9326
    %9328 = vset.pattern.permute.xlu0 0
    %9329 = vperm.xlu0 %9328, %v9267
    %v9330 = vpop.permute.xlu0 %9329
    %9331 = vset.pattern.permute.xlu0 0
    %9332 = vperm.xlu0 %9331, %v9269
    %v9333 = vpop.permute.xlu0 %9332
    %v9334 = vlaneseq
    %v9335 = vshrl.u32 %v9334, 7
    %v9336 = vsub.s32 %v629, %v9335
    %v9337 = vrot.slane %v9288, %v9336
    %v9338 = vlaneseq
    %v9339 = vshrl.u32 %v9338, 7
    %v9340 = vsub.s32 %v634, %v9339
    %v9341 = vrot.slane %v9291, %v9340
    %v9342 = vsel %vm639, %v9341, %v9337
    %v9343 = vlaneseq
    %v9344 = vshrl.u32 %v9343, 7
    %v9345 = vsub.s32 %v629, %v9344
    %v9346 = vrot.slane %v9294, %v9345
    %v9347 = vlaneseq
    %v9348 = vshrl.u32 %v9347, 7
    %v9349 = vsub.s32 %v634, %v9348
    %v9350 = vrot.slane %v9297, %v9349
    %v9351 = vsel %vm639, %v9350, %v9346
    %v9352 = vlaneseq
    %v9353 = vshrl.u32 %v9352, 7
    %v9354 = vsub.s32 %v629, %v9353
    %v9355 = vrot.slane %v9300, %v9354
    %v9356 = vlaneseq
    %v9357 = vshrl.u32 %v9356, 7
    %v9358 = vsub.s32 %v634, %v9357
    %v9359 = vrot.slane %v9303, %v9358
    %v9360 = vsel %vm639, %v9359, %v9355
    %v9361 = vlaneseq
    %v9362 = vshrl.u32 %v9361, 7
    %v9363 = vsub.s32 %v629, %v9362
    %v9364 = vrot.slane %v9306, %v9363
    %v9365 = vlaneseq
    %v9366 = vshrl.u32 %v9365, 7
    %v9367 = vsub.s32 %v634, %v9366
    %v9368 = vrot.slane %v9309, %v9367
    %v9369 = vsel %vm639, %v9368, %v9364
    %v9370 = vlaneseq
    %v9371 = vshrl.u32 %v9370, 7
    %v9372 = vsub.s32 %v629, %v9371
    %v9373 = vrot.slane %v9312, %v9372
    %v9374 = vlaneseq
    %v9375 = vshrl.u32 %v9374, 7
    %v9376 = vsub.s32 %v634, %v9375
    %v9377 = vrot.slane %v9315, %v9376
    %v9378 = vsel %vm639, %v9377, %v9373
    %v9379 = vlaneseq
    %v9380 = vshrl.u32 %v9379, 7
    %v9381 = vsub.s32 %v629, %v9380
    %v9382 = vrot.slane %v9318, %v9381
    %v9383 = vlaneseq
    %v9384 = vshrl.u32 %v9383, 7
    %v9385 = vsub.s32 %v634, %v9384
    %v9386 = vrot.slane %v9321, %v9385
    %v9387 = vsel %vm639, %v9386, %v9382
    %v9388 = vlaneseq
    %v9389 = vshrl.u32 %v9388, 7
    %v9390 = vsub.s32 %v629, %v9389
    %v9391 = vrot.slane %v9324, %v9390
    %v9392 = vlaneseq
    %v9393 = vshrl.u32 %v9392, 7
    %v9394 = vsub.s32 %v634, %v9393
    %v9395 = vrot.slane %v9327, %v9394
    %v9396 = vsel %vm639, %v9395, %v9391
    %v9397 = vlaneseq
    %v9398 = vshrl.u32 %v9397, 7
    %v9399 = vsub.s32 %v629, %v9398
    %v9400 = vrot.slane %v9330, %v9399
    %v9401 = vlaneseq
    %v9402 = vshrl.u32 %v9401, 7
    %v9403 = vsub.s32 %v634, %v9402
    %v9404 = vrot.slane %v9333, %v9403
    %v9405 = vsel %vm639, %v9404, %v9400
    %v9406 = vsel %vm704, %v9351, %v9342
    %v9407 = vsel %vm706, %v9360, %v9406
    %v9408 = vsel %vm708, %v9369, %v9407
    %v9409 = vsel %vm710, %v9378, %v9408
    %v9410 = vsel %vm712, %v9387, %v9409
    %v9411 = vsel %vm714, %v9396, %v9410
    %v9412 = vsel %vm716, %v9405, %v9411
    %v9414 = vsel %vm719, %v9412, 0.0
    %9415 = vadd.xlane.f32.xlu0 %v9414
    %v9416 = vpop.xlane.xlu0 %9415
    %v9417 = vrcp.pop %v9416
    %v9419 = vlaneseq
    %v9420 = vshrl.u32 %v9419, 7
    %v9421 = vsub.s32 0, %v9420
    %v9422 = vrot.slane %v9417, %v9421
    %v9423 = vlaneseq
    %v9424 = vshrl.u32 %v9423, 7
    %v9425 = vsub.s32 1, %v9424
    %v9426 = vrot.slane %v9417, %v9425
    %v9427 = vlaneseq
    %v9428 = vshrl.u32 %v9427, 7
    %v9429 = vsub.s32 2, %v9428
    %v9430 = vrot.slane %v9417, %v9429
    %v9431 = vlaneseq
    %v9432 = vshrl.u32 %v9431, 7
    %v9433 = vsub.s32 3, %v9432
    %v9434 = vrot.slane %v9417, %v9433
    %v9435 = vlaneseq
    %v9436 = vshrl.u32 %v9435, 7
    %v9437 = vsub.s32 4, %v9436
    %v9438 = vrot.slane %v9417, %v9437
    %v9439 = vlaneseq
    %v9440 = vshrl.u32 %v9439, 7
    %v9441 = vsub.s32 5, %v9440
    %v9442 = vrot.slane %v9417, %v9441
    %v9443 = vlaneseq
    %v9444 = vshrl.u32 %v9443, 7
    %v9445 = vsub.s32 6, %v9444
    %v9446 = vrot.slane %v9417, %v9445
    %v9447 = vlaneseq
    %v9448 = vshrl.u32 %v9447, 7
    %v9449 = vsub.s32 7, %v9448
    %v9450 = vrot.slane %v9417, %v9449
    %v9459 = vmul.f32 %v9239, %v9422
    %v9460 = vmul.f32 %v9241, %v9422
    %v9461 = vmul.f32 %v9243, %v9426
    %v9462 = vmul.f32 %v9245, %v9426
    %v9463 = vmul.f32 %v9247, %v9430
    %v9464 = vmul.f32 %v9249, %v9430
    %v9465 = vmul.f32 %v9251, %v9434
    %v9466 = vmul.f32 %v9253, %v9434
    %v9467 = vmul.f32 %v9255, %v9438
    %v9468 = vmul.f32 %v9257, %v9438
    %v9469 = vmul.f32 %v9259, %v9442
    %v9470 = vmul.f32 %v9261, %v9442
    %v9471 = vmul.f32 %v9263, %v9446
    %v9472 = vmul.f32 %v9265, %v9446
    %v9473 = vmul.f32 %v9267, %v9450
    %v9474 = vmul.f32 %v9269, %v9450
    %9476 = vset.pattern.permute.xlu0 0
    %9477 = vperm.xlu0 %9476, %v9459
    %v9478 = vpop.permute.xlu0 %9477
    %9481 = vset.pattern.permute.xlu0 0
    %9482 = vperm.xlu0 %9481, %v9460
    %v9483 = vpop.permute.xlu0 %9482
    %9486 = vset.pattern.permute.xlu0 0
    %9487 = vperm.xlu0 %9486, %v9461
    %v9488 = vpop.permute.xlu0 %9487
    %9491 = vset.pattern.permute.xlu0 0
    %9492 = vperm.xlu0 %9491, %v9462
    %v9493 = vpop.permute.xlu0 %9492
    %9496 = vset.pattern.permute.xlu0 0
    %9497 = vperm.xlu0 %9496, %v9463
    %v9498 = vpop.permute.xlu0 %9497
    %9501 = vset.pattern.permute.xlu0 0
    %9502 = vperm.xlu0 %9501, %v9464
    %v9503 = vpop.permute.xlu0 %9502
    %9506 = vset.pattern.permute.xlu0 0
    %9507 = vperm.xlu0 %9506, %v9465
    %v9508 = vpop.permute.xlu0 %9507
    %9511 = vset.pattern.permute.xlu0 0
    %9512 = vperm.xlu0 %9511, %v9466
    %v9513 = vpop.permute.xlu0 %9512
    %9516 = vset.pattern.permute.xlu0 0
    %9517 = vperm.xlu0 %9516, %v9467
    %v9518 = vpop.permute.xlu0 %9517
    %9521 = vset.pattern.permute.xlu0 0
    %9522 = vperm.xlu0 %9521, %v9468
    %v9523 = vpop.permute.xlu0 %9522
    %9526 = vset.pattern.permute.xlu0 0
    %9527 = vperm.xlu0 %9526, %v9469
    %v9528 = vpop.permute.xlu0 %9527
    %9531 = vset.pattern.permute.xlu0 0
    %9532 = vperm.xlu0 %9531, %v9470
    %v9533 = vpop.permute.xlu0 %9532
    %9536 = vset.pattern.permute.xlu0 0
    %9537 = vperm.xlu0 %9536, %v9471
    %v9538 = vpop.permute.xlu0 %9537
    %9541 = vset.pattern.permute.xlu0 0
    %9542 = vperm.xlu0 %9541, %v9472
    %v9543 = vpop.permute.xlu0 %9542
    %9546 = vset.pattern.permute.xlu0 0
    %9547 = vperm.xlu0 %9546, %v9473
    %v9548 = vpop.permute.xlu0 %9547
    %9551 = vset.pattern.permute.xlu0 0
    %9552 = vperm.xlu0 %9551, %v9474
    %v9553 = vpop.permute.xlu0 %9552
    %v9555 = vmul.f32 %v177, %v9478
    %v9556 = vmul.f32 %v178, %v9483
    %v9557 = vmul.f32 %v179, %v9488
    %v9558 = vmul.f32 %v180, %v9493
    %v9559 = vmul.f32 %v181, %v9498
    %v9560 = vmul.f32 %v182, %v9503
    %v9561 = vmul.f32 %v183, %v9508
    %v9562 = vmul.f32 %v184, %v9513
    %v9563 = vmul.f32 %v185, %v9518
    %v9564 = vmul.f32 %v186, %v9523
    %v9565 = vmul.f32 %v187, %v9528
    %v9566 = vmul.f32 %v188, %v9533
    %v9567 = vmul.f32 %v189, %v9538
    %v9568 = vmul.f32 %v190, %v9543
    %v9569 = vmul.f32 %v191, %v9548
    %v9570 = vmul.f32 %v192, %v9553
    %v9571 = vsel %vm1113, %v9555, 0.0
    %v9572 = vsel %vm1113, %v9556, 0.0
    %v9573 = vadd.f32 %v9571, %v9572
    %v9574 = vrot.slane %v9573, 4
    %v9575 = vadd.f32 %v9573, %v9574
    %v9576 = vrot.slane %v9575, 2
    %v9577 = vadd.f32 %v9575, %v9576
    %v9578 = vrot.slane %v9577, 1
    %v9579 = vadd.f32 %v9577, %v9578
    %v9580 = vsel %vm1113, %v9557, 0.0
    %v9581 = vsel %vm1113, %v9558, 0.0
    %v9582 = vadd.f32 %v9580, %v9581
    %v9583 = vrot.slane %v9582, 4
    %v9584 = vadd.f32 %v9582, %v9583
    %v9585 = vrot.slane %v9584, 2
    %v9586 = vadd.f32 %v9584, %v9585
    %v9587 = vrot.slane %v9586, 1
    %v9588 = vadd.f32 %v9586, %v9587
    %v9589 = vsel %vm1113, %v9559, 0.0
    %v9590 = vsel %vm1113, %v9560, 0.0
    %v9591 = vadd.f32 %v9589, %v9590
    %v9592 = vrot.slane %v9591, 4
    %v9593 = vadd.f32 %v9591, %v9592
    %v9594 = vrot.slane %v9593, 2
    %v9595 = vadd.f32 %v9593, %v9594
    %v9596 = vrot.slane %v9595, 1
    %v9597 = vadd.f32 %v9595, %v9596
    %v9598 = vsel %vm1113, %v9561, 0.0
    %v9599 = vsel %vm1113, %v9562, 0.0
    %v9600 = vadd.f32 %v9598, %v9599
    %v9601 = vrot.slane %v9600, 4
    %v9602 = vadd.f32 %v9600, %v9601
    %v9603 = vrot.slane %v9602, 2
    %v9604 = vadd.f32 %v9602, %v9603
    %v9605 = vrot.slane %v9604, 1
    %v9606 = vadd.f32 %v9604, %v9605
    %v9607 = vsel %vm1113, %v9563, 0.0
    %v9608 = vsel %vm1113, %v9564, 0.0
    %v9609 = vadd.f32 %v9607, %v9608
    %v9610 = vrot.slane %v9609, 4
    %v9611 = vadd.f32 %v9609, %v9610
    %v9612 = vrot.slane %v9611, 2
    %v9613 = vadd.f32 %v9611, %v9612
    %v9614 = vrot.slane %v9613, 1
    %v9615 = vadd.f32 %v9613, %v9614
    %v9616 = vsel %vm1113, %v9565, 0.0
    %v9617 = vsel %vm1113, %v9566, 0.0
    %v9618 = vadd.f32 %v9616, %v9617
    %v9619 = vrot.slane %v9618, 4
    %v9620 = vadd.f32 %v9618, %v9619
    %v9621 = vrot.slane %v9620, 2
    %v9622 = vadd.f32 %v9620, %v9621
    %v9623 = vrot.slane %v9622, 1
    %v9624 = vadd.f32 %v9622, %v9623
    %v9625 = vsel %vm1113, %v9567, 0.0
    %v9626 = vsel %vm1113, %v9568, 0.0
    %v9627 = vadd.f32 %v9625, %v9626
    %v9628 = vrot.slane %v9627, 4
    %v9629 = vadd.f32 %v9627, %v9628
    %v9630 = vrot.slane %v9629, 2
    %v9631 = vadd.f32 %v9629, %v9630
    %v9632 = vrot.slane %v9631, 1
    %v9633 = vadd.f32 %v9631, %v9632
    %v9634 = vsel %vm1113, %v9569, 0.0
    %v9635 = vsel %vm1113, %v9570, 0.0
    %v9636 = vadd.f32 %v9634, %v9635
    %v9637 = vrot.slane %v9636, 4
    %v9638 = vadd.f32 %v9636, %v9637
    %v9639 = vrot.slane %v9638, 2
    %v9640 = vadd.f32 %v9638, %v9639
    %v9641 = vrot.slane %v9640, 1
    %v9642 = vadd.f32 %v9640, %v9641
    %v9643 = vpack.c.bf16 %v9579, %v9579
    %v9644 = vpack.c.bf16 %v9588, %v9588
    %v9645 = vpack.c.bf16 %v9597, %v9597
    %v9646 = vpack.c.bf16 %v9606, %v9606
    %v9647 = vpack.c.bf16 %v9615, %v9615
    %v9648 = vpack.c.bf16 %v9624, %v9624
    %v9649 = vpack.c.bf16 %v9633, %v9633
    %v9650 = vpack.c.bf16 %v9642, %v9642
    %v9659 = vunpack.c.l.b16 %v9643
    %v9660 = vunpack.c.l.b16 %v9644
    %v9661 = vunpack.c.l.b16 %v9645
    %v9662 = vunpack.c.l.b16 %v9646
    %v9663 = vunpack.c.l.b16 %v9647
    %v9664 = vunpack.c.l.b16 %v9648
    %v9665 = vunpack.c.l.b16 %v9649
    %v9666 = vunpack.c.l.b16 %v9650
    %v9667 = vsel %vm704, %v9660, %v9659
    %v9668 = vsel %vm706, %v9661, %v9667
    %v9669 = vsel %vm708, %v9662, %v9668
    %v9670 = vsel %vm710, %v9663, %v9669
    %v9671 = vsel %vm712, %v9664, %v9670
    %v9672 = vsel %vm714, %v9665, %v9671
    %v9673 = vsel %vm716, %v9666, %v9672
    %v9674 = vpack.c.b16 %v9673, %v9673
    %v9676 = vsel %vm1113, %v9674, 0
    %9678 = vmatprep.subr.bf16.mxu0 %v1231
    %9679 = vmatpush1.bf16.msra.mxu0 %v1230
    %9680 = vmatprep.subr.bf16.mxu0 %v1233
    %9681 = vmatpush1.bf16.msra.mxu0 %v1232
    %9682 = vmatprep.subr.bf16.mxu0 0
    %9683 = vmatpush1.bf16.msra.mxu0 0
    %9684 = vmatprep.subr.bf16.mxu0 0
    %9685 = vmatpush1.bf16.msra.mxu0 0
    %9686 = vmatprep.subr.bf16.mxu0 0
    %9687 = vmatpush1.bf16.msra.mxu0 0
    %9688 = vmatprep.subr.bf16.mxu0 0
    %9689 = vmatpush1.bf16.msra.mxu0 0
    %9690 = vmatprep.subr.bf16.mxu0 0
    %9691 = vmatpush1.bf16.msra.mxu0 0
    %9692 = vmatprep.subr.bf16.mxu0 0
    %9693 = vmatpush1.bf16.msra.mxu0 0
    %9694 = vmatprep.subr.bf16.mxu0 0
    %9695 = vmatpush1.bf16.msra.mxu0 0
    %9696 = vmatprep.subr.bf16.mxu0 0
    %9697 = vmatpush1.bf16.msra.mxu0 0
    %9698 = vmatprep.subr.bf16.mxu0 0
    %9699 = vmatpush1.bf16.msra.mxu0 0
    %9700 = vmatprep.subr.bf16.mxu0 0
    %9701 = vmatpush1.bf16.msra.mxu0 0
    %9702 = vmatprep.subr.bf16.mxu0 0
    %9703 = vmatpush1.bf16.msra.mxu0 0
    %9704 = vmatprep.subr.bf16.mxu0 0
    %9705 = vmatpush1.bf16.msra.mxu0 0
    %9706 = vmatprep.subr.bf16.mxu0 0
    %9707 = vmatpush1.bf16.msra.mxu0 0
    %9708 = vmatprep.subr.bf16.mxu0 0
    %9709 = vmatpush1.bf16.msra.mxu0 0
    %9710 = vmatprep.mubr.bf16.mxu0 0
    %9711 = vmatmul.mubr.bf16.gmra.mrb[0].mxu0 %v9676
    %v9712 = vpop.f32.mrb[0].mxu0
    %v9713 = vadd.f32 %v316, %v9712
    %v9714 = vpop.f32.mrb[0].mxu0
    %v9715 = vadd.f32 %v320, %v9714
    %v9716 = vpop.f32.mrb[0].mxu0
    %v9717 = vpop.f32.mrb[0].mxu0
    %9718 = vdwg.mxu0
    %s9719 = scalar_lea.vmem [#allocation9], 56
    %v9720 = vld [vmem:[%s9719] sm:$0xff]
    %v9721 = vadd.f32 %v9720, %v9715
    %v9722 = vpack.c.bf16 %v9721, %v9721
    %9723 = vmatprep.subr.bf16.mxu0 %v1382
    %9724 = vmatpush1.bf16.msra.mxu0 %v1381
    %9725 = vmatprep.subr.bf16.mxu0 %v1386
    %9726 = vmatpush1.bf16.msra.mxu0 %v1385
    %9727 = vmatprep.subr.bf16.mxu0 %v1390
    %9728 = vmatpush1.bf16.msra.mxu0 %v1389
    %9729 = vmatprep.subr.bf16.mxu0 %v1394
    %9730 = vmatpush1.bf16.msra.mxu0 %v1393
    %9731 = vmatprep.subr.bf16.mxu0 %v1398
    %9732 = vmatpush1.bf16.msra.mxu0 %v1397
    %9733 = vmatprep.subr.bf16.mxu0 %v1402
    %9734 = vmatpush1.bf16.msra.mxu0 %v1401
    %9735 = vmatprep.subr.bf16.mxu0 %v1406
    %9736 = vmatpush1.bf16.msra.mxu0 %v1405
    %9737 = vmatprep.subr.bf16.mxu0 %v1410
    %9738 = vmatpush1.bf16.msra.mxu0 %v1409
    %9739 = vmatprep.subr.bf16.mxu0 0
    %9740 = vmatpush1.bf16.msra.mxu0 0
    %9741 = vmatprep.subr.bf16.mxu0 0
    %9742 = vmatpush1.bf16.msra.mxu0 0
    %9743 = vmatprep.subr.bf16.mxu0 0
    %9744 = vmatpush1.bf16.msra.mxu0 0
    %9745 = vmatprep.subr.bf16.mxu0 0
    %9746 = vmatpush1.bf16.msra.mxu0 0
    %9747 = vmatprep.subr.bf16.mxu0 0
    %9748 = vmatpush1.bf16.msra.mxu0 0
    %9749 = vmatprep.subr.bf16.mxu0 0
    %9750 = vmatpush1.bf16.msra.mxu0 0
    %9751 = vmatprep.subr.bf16.mxu0 0
    %9752 = vmatpush1.bf16.msra.mxu0 0
    %9753 = vmatprep.subr.bf16.mxu0 0
    %9754 = vmatpush1.bf16.msra.mxu0 0
    %9755 = vmatprep.mubr.bf16.mxu0 0
    %9756 = vmatmul.mubr.bf16.gmra.mrb[0].mxu0 %v8871
    %v9757 = vpop.f32.mrb[0].mxu0
    %v9758 = vadd.f32 0.0, %v9757
    %v9759 = vpop.f32.mrb[0].mxu0
    %v9760 = vadd.f32 0.0, %v9759
    %v9761 = vpop.f32.mrb[0].mxu0
    %v9762 = vpop.f32.mrb[0].mxu0
    %9763 = vdwg.mxu0
    %9764 = vmatprep.subr.bf16.mxu0 %v1384
    %9765 = vmatpush1.bf16.msra.mxu0 %v1383
    %9766 = vmatprep.subr.bf16.mxu0 %v1388
    %9767 = vmatpush1.bf16.msra.mxu0 %v1387
    %9768 = vmatprep.subr.bf16.mxu0 %v1392
    %9769 = vmatpush1.bf16.msra.mxu0 %v1391
    %9770 = vmatprep.subr.bf16.mxu0 %v1396
    %9771 = vmatpush1.bf16.msra.mxu0 %v1395
    %9772 = vmatprep.subr.bf16.mxu0 %v1400
    %9773 = vmatpush1.bf16.msra.mxu0 %v1399
    %9774 = vmatprep.subr.bf16.mxu0 %v1404
    %9775 = vmatpush1.bf16.msra.mxu0 %v1403
    %9776 = vmatprep.subr.bf16.mxu0 %v1408
    %9777 = vmatpush1.bf16.msra.mxu0 %v1407
    %9778 = vmatprep.subr.bf16.mxu0 %v1412
    %9779 = vmatpush1.bf16.msra.mxu0 %v1411
    %9780 = vmatprep.subr.bf16.mxu0 0
    %9781 = vmatpush1.bf16.msra.mxu0 0
    %9782 = vmatprep.subr.bf16.mxu0 0
    %9783 = vmatpush1.bf16.msra.mxu0 0
    %9784 = vmatprep.subr.bf16.mxu0 0
    %9785 = vmatpush1.bf16.msra.mxu0 0
    %9786 = vmatprep.subr.bf16.mxu0 0
    %9787 = vmatpush1.bf16.msra.mxu0 0
    %9788 = vmatprep.subr.bf16.mxu0 0
    %9789 = vmatpush1.bf16.msra.mxu0 0
    %9790 = vmatprep.subr.bf16.mxu0 0
    %9791 = vmatpush1.bf16.msra.mxu0 0
    %9792 = vmatprep.subr.bf16.mxu0 0
    %9793 = vmatpush1.bf16.msra.mxu0 0
    %9794 = vmatprep.subr.bf16.mxu0 0
    %9795 = vmatpush1.bf16.msra.mxu0 0
    %9796 = vmatprep.mubr.bf16.mxu0 0
    %9797 = vmatmul.mubr.bf16.gmra.mrb[0].mxu0 %v8871
    %v9798 = vpop.f32.mrb[0].mxu0
    %v9799 = vadd.f32 0.0, %v9798
    %v9800 = vpop.f32.mrb[0].mxu0
    %v9801 = vadd.f32 0.0, %v9800
    %v9802 = vpop.f32.mrb[0].mxu0
    %v9803 = vpop.f32.mrb[0].mxu0
    %9804 = vdwg.mxu0
    %9805 = vmatprep.subr.bf16.mxu0 %v1624
    %9806 = vmatpush1.bf16.msra.mxu0 %v1623
    %9807 = vmatprep.subr.bf16.mxu0 %v1628
    %9808 = vmatpush1.bf16.msra.mxu0 %v1627
    %9809 = vmatprep.subr.bf16.mxu0 %v1632
    %9810 = vmatpush1.bf16.msra.mxu0 %v1631
    %9811 = vmatprep.subr.bf16.mxu0 %v1636
    %9812 = vmatpush1.bf16.msra.mxu0 %v1635
    %9813 = vmatprep.subr.bf16.mxu0 %v1640
    %9814 = vmatpush1.bf16.msra.mxu0 %v1639
    %9815 = vmatprep.subr.bf16.mxu0 %v1644
    %9816 = vmatpush1.bf16.msra.mxu0 %v1643
    %9817 = vmatprep.subr.bf16.mxu0 %v1648
    %9818 = vmatpush1.bf16.msra.mxu0 %v1647
    %9819 = vmatprep.subr.bf16.mxu0 %v1652
    %9820 = vmatpush1.bf16.msra.mxu0 %v1651
    %9821 = vmatprep.subr.bf16.mxu0 0
    %9822 = vmatpush1.bf16.msra.mxu0 0
    %9823 = vmatprep.subr.bf16.mxu0 0
    %9824 = vmatpush1.bf16.msra.mxu0 0
    %9825 = vmatprep.subr.bf16.mxu0 0
    %9826 = vmatpush1.bf16.msra.mxu0 0
    %9827 = vmatprep.subr.bf16.mxu0 0
    %9828 = vmatpush1.bf16.msra.mxu0 0
    %9829 = vmatprep.subr.bf16.mxu0 0
    %9830 = vmatpush1.bf16.msra.mxu0 0
    %9831 = vmatprep.subr.bf16.mxu0 0
    %9832 = vmatpush1.bf16.msra.mxu0 0
    %9833 = vmatprep.subr.bf16.mxu0 0
    %9834 = vmatpush1.bf16.msra.mxu0 0
    %9835 = vmatprep.subr.bf16.mxu0 0
    %9836 = vmatpush1.bf16.msra.mxu0 0
    %9837 = vmatprep.mubr.bf16.mxu0 0
    %9838 = vmatmul.mubr.bf16.gmra.mrb[0].mxu0 %v9722
    %v9839 = vpop.f32.mrb[0].mxu0
    %v9840 = vadd.f32 %v9758, %v9839
    %v9841 = vpop.f32.mrb[0].mxu0
    %v9842 = vadd.f32 %v9760, %v9841
    %v9843 = vpop.f32.mrb[0].mxu0
    %v9844 = vpop.f32.mrb[0].mxu0
    %9845 = vdwg.mxu0
    %9846 = vmatprep.subr.bf16.mxu0 %v1626
    %9847 = vmatpush1.bf16.msra.mxu0 %v1625
    %9848 = vmatprep.subr.bf16.mxu0 %v1630
    %9849 = vmatpush1.bf16.msra.mxu0 %v1629
    %9850 = vmatprep.subr.bf16.mxu0 %v1634
    %9851 = vmatpush1.bf16.msra.mxu0 %v1633
    %9852 = vmatprep.subr.bf16.mxu0 %v1638
    %9853 = vmatpush1.bf16.msra.mxu0 %v1637
    %9854 = vmatprep.subr.bf16.mxu0 %v1642
    %9855 = vmatpush1.bf16.msra.mxu0 %v1641
    %9856 = vmatprep.subr.bf16.mxu0 %v1646
    %9857 = vmatpush1.bf16.msra.mxu0 %v1645
    %9858 = vmatprep.subr.bf16.mxu0 %v1650
    %9859 = vmatpush1.bf16.msra.mxu0 %v1649
    %9860 = vmatprep.subr.bf16.mxu0 %v1654
    %9861 = vmatpush1.bf16.msra.mxu0 %v1653
    %9862 = vmatprep.subr.bf16.mxu0 0
    %9863 = vmatpush1.bf16.msra.mxu0 0
    %9864 = vmatprep.subr.bf16.mxu0 0
    %9865 = vmatpush1.bf16.msra.mxu0 0
    %9866 = vmatprep.subr.bf16.mxu0 0
    %9867 = vmatpush1.bf16.msra.mxu0 0
    %9868 = vmatprep.subr.bf16.mxu0 0
    %9869 = vmatpush1.bf16.msra.mxu0 0
    %9870 = vmatprep.subr.bf16.mxu0 0
    %9871 = vmatpush1.bf16.msra.mxu0 0
    %9872 = vmatprep.subr.bf16.mxu0 0
    %9873 = vmatpush1.bf16.msra.mxu0 0
    %9874 = vmatprep.subr.bf16.mxu0 0
    %9875 = vmatpush1.bf16.msra.mxu0 0
    %9876 = vmatprep.subr.bf16.mxu0 0
    %9877 = vmatpush1.bf16.msra.mxu0 0
    %9878 = vmatprep.mubr.bf16.mxu0 0
    %9879 = vmatmul.mubr.bf16.gmra.mrb[0].mxu0 %v9722
    %v9880 = vpop.f32.mrb[0].mxu0
    %v9881 = vadd.f32 %v9799, %v9880
    %v9882 = vpop.f32.mrb[0].mxu0
    %v9883 = vadd.f32 %v9801, %v9882
    %v9884 = vpop.f32.mrb[0].mxu0
    %v9885 = vpop.f32.mrb[0].mxu0
    %9886 = vdwg.mxu0
    %v9887 = vadd.f32 %v9840, %v328
    %v9888 = vadd.f32 %v9842, %v332
    %v9889 = vadd.f32 %v9881, %v336
    %v9890 = vadd.f32 %v9883, %v340
    %v9891 = vxor.u32 %v9887, 2147483648
    %v9892 = vmul.f32 %v9891, 1.442695
    %v9893 = vpow.pop %v9892
    %v9894 = vadd.f32 %v9893, 1.0
    %v9895 = vrcp.pop %v9894
    %v9896 = vmul.f32 1.0, %v9895
    %v9897 = vxor.u32 %v9888, 2147483648
    %v9898 = vmul.f32 %v9897, 1.442695
    %v9899 = vpow.pop %v9898
    %v9900 = vadd.f32 %v9899, 1.0
    %v9901 = vrcp.pop %v9900
    %v9902 = vmul.f32 1.0, %v9901
    %v9903 = vtanh.pop %v9889
    %v9904 = vxor.u32 %v9890, 2147483648
    %v9905 = vmul.f32 %v9904, 1.442695
    %v9906 = vpow.pop %v9905
    %v9907 = vadd.f32 %v9906, 1.0
    %v9908 = vrcp.pop %v9907
    %v9909 = vmul.f32 1.0, %v9908
    %v9910 = vmul.f32 %v9902, %v8760
    %v9911 = vmul.f32 %v9896, %v9903
    %v9912 = vadd.f32 %v9910, %v9911
    %v9913 = vtanh.pop %v9912
    %v9914 = vmul.f32 %v9909, %v9913
    %v9915 = vadd.f32 %v9914, %v9713
    %v9916 = vpack.c.bf16 %v9915, %v9915
    %9917 = vmatprep.subr.bf16.mxu0 0
    %9918 = vmatpush1.bf16.msra.mxu0 %v1837
    %9919 = vmatprep.subr.bf16.mxu0 0
    %9920 = vmatpush1.bf16.msra.mxu0 %v1838
    %9921 = vmatprep.subr.bf16.mxu0 0
    %9922 = vmatpush1.bf16.msra.mxu0 %v1839
    %9923 = vmatprep.subr.bf16.mxu0 0
    %9924 = vmatpush1.bf16.msra.mxu0 %v1840
    %9925 = vmatprep.subr.bf16.mxu0 0
    %9926 = vmatpush1.bf16.msra.mxu0 %v1841
    %9927 = vmatprep.subr.bf16.mxu0 0
    %9928 = vmatpush1.bf16.msra.mxu0 %v1842
    %9929 = vmatprep.subr.bf16.mxu0 0
    %9930 = vmatpush1.bf16.msra.mxu0 %v1843
    %9931 = vmatprep.subr.bf16.mxu0 0
    %9932 = vmatpush1.bf16.msra.mxu0 %v1844
    %9933 = vmatprep.subr.bf16.mxu0 0
    %9934 = vmatpush1.bf16.msra.mxu0 0
    %9935 = vmatprep.subr.bf16.mxu0 0
    %9936 = vmatpush1.bf16.msra.mxu0 0
    %9937 = vmatprep.subr.bf16.mxu0 0
    %9938 = vmatpush1.bf16.msra.mxu0 0
    %9939 = vmatprep.subr.bf16.mxu0 0
    %9940 = vmatpush1.bf16.msra.mxu0 0
    %9941 = vmatprep.subr.bf16.mxu0 0
    %9942 = vmatpush1.bf16.msra.mxu0 0
    %9943 = vmatprep.subr.bf16.mxu0 0
    %9944 = vmatpush1.bf16.msra.mxu0 0
    %9945 = vmatprep.subr.bf16.mxu0 0
    %9946 = vmatpush1.bf16.msra.mxu0 0
    %9947 = vmatprep.subr.bf16.mxu0 0
    %9948 = vmatpush1.bf16.msra.mxu0 0
    %9949 = vmatprep.mubr.bf16.mxu0 0
    %9950 = vmatmul.mubr.bf16.gmra.mrb[0].mxu0 %v9916
    %v9951 = vpop.f32.mrb[0].mxu0
    %v9952 = vadd.f32 %v1803, %v9951
    %v9953 = vpop.f32.mrb[0].mxu0
    %v9954 = vpop.f32.mrb[0].mxu0
    %v9955 = vpop.f32.mrb[0].mxu0
    %9956 = vdwg.mxu0
    %v9958 = vcombine.high %v9952, %v9952
    %v9960 = vunpack.c.l.s4 1966171168
    %v9961 = vunpack.c.0.s8 %v9960
    %v9962 = vlaneseq
    %v9963 = vshrl.u32 %v9962, 7
    %v9964 = vsub.s32 %v9961, %v9963
    %v9965 = vrot.slane %v9952, %v9964
    %v9967 = vunpack.c.l.s4 1966171168
    %v9968 = vunpack.c.0.s8 %v9967
    %v9969 = vlaneseq
    %v9970 = vshrl.u32 %v9969, 7
    %v9971 = vsub.s32 %v9968, %v9970
    %v9972 = vrot.slane %v9958, %v9971
    %v9973 = vcombine.high %v9965, %v9965
    %v9974 = vcombine.high %v9972, %v9972
    %v9976 = vunpack.c.l.s4 1966171168
    %v9977 = vunpack.c.0.s8 %v9976
    %v9978 = vlaneseq
    %v9979 = vshrl.u32 %v9978, 7
    %v9980 = vsub.s32 %v9977, %v9979
    %v9981 = vrot.slane %v9965, %v9980
    %v9983 = vunpack.c.l.s4 1966171168
    %v9984 = vunpack.c.0.s8 %v9983
    %v9985 = vlaneseq
    %v9986 = vshrl.u32 %v9985, 7
    %v9987 = vsub.s32 %v9984, %v9986
    %v9988 = vrot.slane %v9972, %v9987
    %v9990 = vunpack.c.l.s4 1966171168
    %v9991 = vunpack.c.0.s8 %v9990
    %v9992 = vlaneseq
    %v9993 = vshrl.u32 %v9992, 7
    %v9994 = vsub.s32 %v9991, %v9993
    %v9995 = vrot.slane %v9973, %v9994
    %v9997 = vunpack.c.l.s4 1966171168
    %v9998 = vunpack.c.0.s8 %v9997
    %v9999 = vlaneseq
    %v10000 = vshrl.u32 %v9999, 7
    %v10001 = vsub.s32 %v9998, %v10000
    %v10002 = vrot.slane %v9974, %v10001
    %v10003 = vcombine.high %v9981, %v9981
    %v10004 = vcombine.high %v9988, %v9988
    %v10005 = vcombine.high %v9995, %v9995
    %v10006 = vcombine.high %v10002, %v10002
    %10015 = vst [vmem:[#allocation19 + $0x7] sm:$0x1] %v9981
    %10016 = vst [vmem:[#allocation19 + $0xf] sm:$0x1] %v9995
    %10017 = vst [vmem:[#allocation19 + $0x17] sm:$0x1] %v10003
    %10018 = vst [vmem:[#allocation19 + $0x1f] sm:$0x1] %v10005
    %10019 = vst [vmem:[#allocation19 + $0x27] sm:$0x1] %v9988
    %10020 = vst [vmem:[#allocation19 + $0x2f] sm:$0x1] %v10002
    %10021 = vst [vmem:[#allocation19 + $0x37] sm:$0x1] %v10004
    %10022 = vst [vmem:[#allocation19 + $0x3f] sm:$0x1] %v10006
    %10023 = vst [vmem:[#allocation2] sm:$0xff] %v9914
    %10024 = vst [vmem:[#allocation3] sm:$0xff] %v9912
    // Predicated region
    $region98: #{tpu_custom_call.1} parent=1 // pred_check
      _
    $region99: #{tpu_custom_call.1} parent=1 // pred_check_branch
      %10026 = sbr.rel (0) target = $region101
    $region100: #{tpu_custom_call.1} parent=1 // pred_region
      %s10028 = ssub.s32 1024, 1024
      %10029 = vsyncadd [#allocation6], %s10028
      %s10030 = sshll.u32 [#allocation19], 4
      %s10031 = int_to_ptr.vmem [resolvable:$true] %s10030
      %10036 = dma.vmem_to_hbm [thread:$0]  %s10031, 1024, %s14, [#allocation6], 128, 128, 8
    $region101: #{tpu_custom_call.1} parent=1 // pred_fallthru
      _
    // Predicated region
    $region102: #{tpu_custom_call.1} parent=1 // pred_check
      _
    $region103: #{tpu_custom_call.1} parent=1 // pred_check_branch
      %10038 = sbr.rel (0) target = $region105
    $region104: #{tpu_custom_call.1} parent=1 // pred_region
      %10039 = dma.done [#allocation6], 1024
    $region105: #{tpu_custom_call.1} parent=1 // pred_fallthru
      _
    %10040 = vsyncpa [#allocation5], 1
    %10041 = vsyncpa [#allocation8], 1
    %10042 = vsyncpa [#allocation11], 1
    %10043 = vsyncpa [#allocation14], 1
    %10044 = vsyncpa [#allocation17], 1
    %10045 = vsyncpa [#allocation6], 1

</llo_original>
